<compile_context>
chip_gen: v6e
topology: v6e:2x2x1
jax: 0.10.0
libtpu: 0.0.40
codegen_flags: <defaults>
</compile_context>

<pallas_src>
import functools

import jax
import jax.numpy as jnp
from jax.experimental import pallas as pl
from jax.experimental.pallas import tpu as pltpu

LEAKY_SLOPE = 0.2
BN_EPS = 1e-5
KW = 4      # kernel_size
PADW = 1    # padding

MAX_TM = 512                          # output-row tile (multiple of 256 keeps MXU busy)
MAX_TK = 4096                         # im2col-K tile (fewer accumulator RMW passes)
W_RESIDENT_MAX_BYTES = 4 * 1024 * 1024
VMEM_LIMIT_BYTES = 48 * 1024 * 1024   # worst-case working set ~18 MiB; safe on v7x (64 MiB)


def _round_up(x, m):
    return ((x + m - 1) // m) * m


def _choose_tm(m):
    """Row tile: prefer a divisor in {512, 256}; otherwise pad M to a healthy multiple.
    Never degenerates to tiny tiles (padded rows are masked in stats / sliced on host)."""
    if m <= MAX_TM:
        tm = max(16, _round_up(m, 16))          # 16 rows = bf16 sublane packing
        return tm, tm
    if m % MAX_TM == 0:
        return MAX_TM, m
    if m % (MAX_TM // 2) == 0:
        return MAX_TM // 2, m
    return MAX_TM, _round_up(m, MAX_TM)


def _choose_tk(k):
    """K tile: all of K if small, else the largest 128-multiple divisor <= MAX_TK."""
    if k <= MAX_TK:
        return k, k
    for tk in (4096, 2048, 1024, 512, 256, 128):
        if k % tk == 0:
            return tk, k
    return 128, _round_up(k, 128)


def _choose_tc(c):
    """Output-channel tile: 128/256 lanes when C is a 128-multiple (adds a 'parallel'
    axis so small-M deep layers can split across TensorCores); else the full width."""
    if c % 128 != 0:
        return c
    if c % 256 == 0:
        return 256
    return 128


# ----------------------------- Pallas kernels -----------------------------

def _conv_act_kernel(a_ref, w_ref, b_ref, o_ref, acc_ref, *,
                     apply_leaky, w_resident, tk):
    """K-tiled matmul: bf16 operands, f32 VMEM accumulator, bias (+LeakyReLU) epilogue.
    grid = (m, c, k).  When w_resident, the whole [K, TC] weight slab lives in VMEM and
    is sliced per K step (fetched once instead of once per M tile)."""
    k = pl.program_id(2)

    @pl.when(k == 0)
    def _():
        acc_ref[...] = jnp.zeros_like(acc_ref)

    if w_resident:
        w_blk = w_ref[pl.ds(pl.multiple_of(k * tk, tk), tk), :]
    else:
        w_blk = w_ref[...]
    acc_ref[...] += jnp.dot(a_ref[...], w_blk, preferred_element_type=jnp.float32)

    @pl.when(k == pl.num_programs(2) - 1)
    def _():
        y = acc_ref[...] + b_ref[...]
        if apply_leaky:
            y = jnp.where(y >= 0.0, y, LEAKY_SLOPE * y)
        o_ref[...] = y.astype(o_ref.dtype)


def _conv_bn_stats_kernel(a_ref, w_ref, b_ref, o_ref, stats_ref, acc_ref, *,
                          w_resident, tk, tm, m_valid, needs_mask):
    """Same matmul; the epilogue also emits per-M-tile BN partials from the f32
    accumulator: [sum, tile-centered sum of squares] per channel.  They are Chan-merged
    on the host, so there is no E[x^2]-E[x]^2 cancellation.  Rows beyond the true M
    (padded tail tile) are masked out."""
    i = pl.program_id(0)
    k = pl.program_id(2)

    @pl.when(k == 0)
    def _():
        acc_ref[...] = jnp.zeros_like(acc_ref)

    if w_resident:
        w_blk = w_ref[pl.ds(pl.multiple_of(k * tk, tk), tk), :]
    else:
        w_blk = w_ref[...]
    acc_ref[...] += jnp.dot(a_ref[...], w_blk, preferred_element_type=jnp.float32)

    @pl.when(k == pl.num_programs(2) - 1)
    def _():
        y = acc_ref[...] + b_ref[...]          # f32 (bias is zero for BN layers)
        o_ref[...] = y.astype(o_ref.dtype)
        if needs_mask:
            row = jax.lax.broadcasted_iota(jnp.int32, (tm, 1), 0) + i * tm
            mask = (row < m_valid).astype(jnp.float32)
            cnt = jnp.maximum(jnp.minimum(m_valid - i * tm, tm), 1).astype(jnp.float32)
            ym = y * mask
        else:
            mask = None
            cnt = float(tm)
            ym = y
        s1 = jnp.sum(ym, axis=0, keepdims=True)            # [1, TC]
        mu = s1 / cnt
        d = y - mu
        if needs_mask:
            d = d * mask
        s2 = jnp.sum(d * d, axis=0, keepdims=True)          # [1, TC]
        stats_ref[0:1, 0:1, :] = s1[None]
        stats_ref[0:1, 1:2, :] = s2[None]


def _bn_apply_leaky_kernel(x_ref, scale_ref, shift_ref, o_ref):
    """y = x*scale + shift; LeakyReLU(0.2); compute in f32, store bf16."""
    y = x_ref[...].astype(jnp.float32) * scale_ref[...] + shift_ref[...]
    y = jnp.where(y >= 0.0, y, LEAKY_SLOPE * y)
    o_ref[...] = y.astype(o_ref.dtype)


# ----------------------------- Pallas wrappers -----------------------------

def conv_as_matmul(a, w, b, *, apply_leaky, with_stats, out_dtype):
    """a: [M, K], w: [K, C], b: [1, C] -> (y [M_pad, C], moments).
    moments = (mean[C], biased var[C]) (PyTorch training-mode BN stats) when with_stats."""
    M, K = a.shape
    C = w.shape[1]
    TM, M_pad = _choose_tm(M)
    TK, K_pad = _choose_tk(K)
    TC = _choose_tc(C)

    if M_pad != M:
        a = jnp.pad(a, ((0, M_pad - M), (0, 0)))
    if K_pad != K:
        a = jnp.pad(a, ((0, 0), (0, K_pad - K)))
        w = jnp.pad(w, ((0, K_pad - K), (0, 0)))
    a = a.astype(jnp.bfloat16)
    w = w.astype(jnp.bfloat16)
    b = b.astype(jnp.float32).reshape(1, C)

    n_m, n_c, n_k = M_pad // TM, C // TC, K_pad // TK
    grid = (n_m, n_c, n_k)

    # Weight residency: keep the whole [K, TC] slab in VMEM and slice it per K step
    # (DMA'd once, not once per M tile) whenever it is small enough.
    w_resident = K_pad * TC * 2 <= W_RESIDENT_MAX_BYTES
    if w_resident:
        w_spec = pl.BlockSpec((K_pad, TC), lambda i, c, k: (0, c))
    else:
        w_spec = pl.BlockSpec((TK, TC), lambda i, c, k: (k, c))

    in_specs = [pl.BlockSpec((TM, TK), lambda i, c, k: (i, k)),
                w_spec,
                pl.BlockSpec((1, TC), lambda i, c, k: (0, c))]
    o_spec = pl.BlockSpec((TM, TC), lambda i, c, k: (i, c))
    params = pltpu.CompilerParams(
        dimension_semantics=("parallel", "parallel", "arbitrary"),
        vmem_limit_bytes=VMEM_LIMIT_BYTES)
    scratch = [pltpu.VMEM((TM, TC), jnp.float32)]

    if with_stats:
        kernel = functools.partial(_conv_bn_stats_kernel, w_resident=w_resident,
                                   tk=TK, tm=TM, m_valid=M, needs_mask=(M_pad != M))
        y, stats = pl.pallas_call(
            kernel,
            out_shape=(jax.ShapeDtypeStruct((M_pad, C), out_dtype),
                       jax.ShapeDtypeStruct((n_m, 2, C), jnp.float32)),
            grid=grid,
            in_specs=in_specs,
            out_specs=(o_spec, pl.BlockSpec((1, 2, TC), lambda i, c, k: (i, 0, c))),
            scratch_shapes=scratch,
            compiler_params=params,
        )(a, w, b)
        # Chan/Welford merge of the tiny per-tile partials (host-side JAX).
        counts = jnp.minimum(M - jnp.arange(n_m) * TM, TM).astype(jnp.float32)[:, None]
        s1, s2 = stats[:, 0, :], stats[:, 1, :]
        mean = jnp.sum(s1, axis=0) / M
        mu_t = s1 / counts
        m2 = jnp.sum(s2, axis=0) + jnp.sum(counts * jnp.square(mu_t - mean), axis=0)
        var = jnp.maximum(m2 / M, 0.0)          # biased variance (training-mode BN)
        moments = (mean, var)
    else:
        kernel = functools.partial(_conv_act_kernel, apply_leaky=apply_leaky,
                                   w_resident=w_resident, tk=TK)
        y = pl.pallas_call(
            kernel,
            out_shape=jax.ShapeDtypeStruct((M_pad, C), out_dtype),
            grid=grid,
            in_specs=in_specs,
            out_specs=o_spec,
            scratch_shapes=scratch,
            compiler_params=params,
        )(a, w, b)
        moments = None
    return y, moments


def batchnorm_leaky_apply(x, scale, shift):
    """x: [M_pad, C] bf16 pre-BN conv output; y = x*scale + shift then LeakyReLU(0.2),
    computed in f32, stored bf16."""
    Mp, C = x.shape
    TM, Mp2 = _choose_tm(Mp)
    assert Mp2 == Mp, (Mp2, Mp)
    return pl.pallas_call(
        _bn_apply_leaky_kernel,
        out_shape=jax.ShapeDtypeStruct((Mp, C), jnp.bfloat16),
        grid=(Mp // TM,),
        in_specs=[pl.BlockSpec((TM, C), lambda i: (i, 0)),
                  pl.BlockSpec((1, C), lambda i: (0, 0)),
                  pl.BlockSpec((1, C), lambda i: (0, 0))],
        out_specs=pl.BlockSpec((TM, C), lambda i: (i, 0)),
        compiler_params=pltpu.CompilerParams(
            dimension_semantics=("parallel",),
            vmem_limit_bytes=VMEM_LIMIT_BYTES),
    )(x, scale.reshape(1, C).astype(jnp.float32),
      shift.reshape(1, C).astype(jnp.float32))


# ----------------------------- im2col glue (plain JAX) -----------------------------
# TODO(synk): replace with an implicit-GEMM kernel (haloed NDHWC slab DMA + in-kernel
# tap accumulation) to remove the ~8x input replication through HBM.

def extract_patches(x, k, stride, pad):
    """x: [N, D, H, W, C] -> ([N*Do*Ho*Wo, k^3*C] (bf16), (N, Do, Ho, Wo))."""
    N, D, H, W, C = x.shape
    xp = jnp.pad(x, ((0, 0), (pad, pad), (pad, pad), (pad, pad), (0, 0)))
    Do = (D + 2 * pad - k) // stride + 1
    Ho = (H + 2 * pad - k) // stride + 1
    Wo = (W + 2 * pad - k) // stride + 1
    cols = []
    for kd in range(k):
        for kh in range(k):
            for kw in range(k):
                sl = xp[:, kd::stride, kh::stride, kw::stride, :]
                cols.append(sl[:, :Do, :Ho, :Wo, :])
    patches = jnp.stack(cols, axis=-2)            # [N, Do, Ho, Wo, k^3, C]
    a = patches.reshape(N * Do * Ho * Wo, k * k * k * C)
    return a, (N, Do, Ho, Wo)


# ----------------------------- model definition -----------------------------

def init_params(key, input_nc, ndf=64, n_layers=3):
    """Mirrors NLayerDiscriminator.__init__ with norm_layer=BatchNorm3d
    (hence use_bias=False for the BN convs). Conv weights ~ N(0, 0.02)."""
    def conv_w(k, cin, cout):
        return 0.02 * jax.random.normal(k, (KW, KW, KW, cin, cout), jnp.float32)

    keys = iter(jax.random.split(key, 2 * (n_layers + 2) + 2))
    layers = []

    # first conv: bias=True, LeakyReLU, no norm
    layers.append(dict(w=conv_w(next(keys), input_nc, ndf),
                       b=0.02 * jax.random.normal(next(keys), (1, ndf), jnp.float32),
                       stride=2, bn=False, leaky=True, gamma=None, beta=None))

    nf_mult = 1
    for n in range(1, n_layers):
        nf_prev, nf_mult = nf_mult, min(2 ** n, 8)
        cin, cout = ndf * nf_prev, ndf * nf_mult
        layers.append(dict(w=conv_w(next(keys), cin, cout),
                           b=jnp.zeros((1, cout), jnp.float32),   # use_bias=False
                           stride=2, bn=True, leaky=True,
                           gamma=jnp.ones((cout,), jnp.float32),
                           beta=jnp.zeros((cout,), jnp.float32)))

    # conv after the loop: this 3D module uses stride=2 here (per the spec)
    nf_prev, nf_mult = nf_mult, min(2 ** n_layers, 8)
    cin, cout = ndf * nf_prev, ndf * nf_mult
    layers.append(dict(w=conv_w(next(keys), cin, cout),
                       b=jnp.zeros((1, cout), jnp.float32),
                       stride=2, bn=True, leaky=True,
                       gamma=jnp.ones((cout,), jnp.float32),
                       beta=jnp.zeros((cout,), jnp.float32)))

    # final conv: cout -> 1, stride=1, bias=True, no norm / activation (use_sigmoid=False)
    layers.append(dict(w=conv_w(next(keys), cout, 1),
                       b=0.02 * jax.random.normal(next(keys), (1, 1), jnp.float32),
                       stride=1, bn=False, leaky=False, gamma=None, beta=None))
    return layers


def nlayer_discriminator_forward(x_ncdhw, layers):
    x = jnp.transpose(x_ncdhw, (0, 2, 3, 4, 1)).astype(jnp.bfloat16)   # -> NDHWC bf16
    final_cout = layers[-1]['w'].shape[-1]
    for li, layer in enumerate(layers):
        is_final = li == len(layers) - 1
        w = layer['w']
        cout = w.shape[-1]
        # Lane-dense output: the final conv (cout=1) is padded to 128 zero channels so its
        # store is a full-lane vst; channel 0 is sliced at the end.  Intermediate widths at
        # ndf=64 are already 128-multiples; sub-128 widths are intentionally not padded
        # (folding zeros forward would inflate the next layer's im2col K / MXU work more
        # than the masked-store penalty it removes).
        cout_pad = _round_up(cout, 128) if is_final else cout
        wm = w.reshape(-1, cout)
        bb = layer['b']
        if cout_pad != cout:
            wm = jnp.pad(wm, ((0, 0), (0, cout_pad - cout)))
            bb = jnp.pad(bb, ((0, 0), (0, cout_pad - cout)))

        a, (N, Do, Ho, Wo) = extract_patches(x, KW, layer['stride'], PADW)
        M = a.shape[0]
        out_dtype = jnp.float32 if is_final else jnp.bfloat16

        if layer['bn']:
            y, (mean, var) = conv_as_matmul(a, wm, bb, apply_leaky=False,
                                            with_stats=True, out_dtype=out_dtype)
            inv_std = jax.lax.rsqrt(var + BN_EPS)
            scale = layer['gamma'] * inv_std
            shift = layer['beta'] - mean * scale
            y = batchnorm_leaky_apply(y, scale, shift)
        else:
            y, _ = conv_as_matmul(a, wm, bb, apply_leaky=layer['leaky'],
                                  with_stats=False, out_dtype=out_dtype)

        if y.shape[0] != M:
            y = y[:M]
        x = y.reshape(N, Do, Ho, Wo, cout_pad)

    x = x[..., :final_cout]
    return jnp.transpose(x.astype(jnp.float32), (0, 4, 1, 2, 3))       # -> NCDHW


# ----------------------------- pure-JAX reference -----------------------------
# Mirrors the kernel numerics: bf16 conv operands with f32 accumulation, f32 BN stats,
# BN applied to the bf16-stored activation, bf16 inter-layer activations.

def reference_forward(x_ncdhw, layers):
    x = jnp.transpose(x_ncdhw, (0, 2, 3, 4, 1)).astype(jnp.bfloat16)
    for layer in layers:
        s = layer['stride']
        out = jax.lax.conv_general_dilated(
            x, layer['w'].astype(jnp.bfloat16), (s, s, s), [(PADW, PADW)] * 3,
            dimension_numbers=('NDHWC', 'DHWIO', 'NDHWC'),
            preferred_element_type=jnp.float32)
        out = out + layer['b'].reshape(-1)
        if layer['bn']:
            mean = jnp.mean(out, axis=(0, 1, 2, 3))
            var = jnp.mean(jnp.square(out - mean), axis=(0, 1, 2, 3))
            scale = layer['gamma'] * jax.lax.rsqrt(var + BN_EPS)
            shift = layer['beta'] - mean * scale
            yb = out.astype(jnp.bfloat16).astype(jnp.float32)   # mirror bf16 storage
            out = yb * scale + shift
            out = jnp.where(out >= 0, out, LEAKY_SLOPE * out)
            x = out.astype(jnp.bfloat16)
        elif layer['leaky']:
            out = jnp.where(out >= 0, out, LEAKY_SLOPE * out)
            x = out.astype(jnp.bfloat16)
        else:
            x = out
    return jnp.transpose(x, (0, 4, 1, 2, 3))


# ----------------------------- main -----------------------------

if __name__ == "__main__":
    key = jax.random.PRNGKey(0)
    k_x, k_p = jax.random.split(key)

    # Small config consistent with the module: 4 stride-2 convs + final k=4 stride-1 conv
    # require spatial >= 32 for a valid (1x1x1) output patch map.
    N, input_nc, S = 2, 1, 32
    ndf, n_layers = 4, 3

    x = jax.random.normal(k_x, (N, input_nc, S, S, S), jnp.float32)
    layers = init_params(k_p, input_nc=input_nc, ndf=ndf, n_layers=n_layers)

    fwd = jax.jit(lambda inp: nlayer_discriminator_forward(inp, layers))
    ref_fwd = jax.jit(lambda inp: reference_forward(inp, layers))

    out = jax.block_until_ready(fwd(x))
    ref = jax.block_until_ready(ref_fwd(x))

    assert out.shape == (N, 1, 1, 1, 1), out.shape
    assert jnp.allclose(out, ref, rtol=2e-2, atol=2e-2), (out, ref)
    print("KERNEL_OK")
</pallas_src>

<mosaic_0001>
module attributes {stable_mosaic.version = 11 : i64} {
  func.func @_conv_act_kernel(%arg0: i32, %arg1: i32, %arg2: i32, %arg3: memref<512x64xbf16, #tpu.memory_space<vmem>>, %arg4: memref<64x4xbf16, #tpu.memory_space<vmem>>, %arg5: memref<1x4xf32, #tpu.memory_space<vmem>>, %arg6: memref<512x4xbf16, #tpu.memory_space<vmem>>, %arg7: memref<512x4xf32, #tpu.memory_space<vmem>>) attributes {dimension_semantics = [#tpu.dimension_semantics<parallel>, #tpu.dimension_semantics<parallel>, #tpu.dimension_semantics<arbitrary>], iteration_bounds = array<i64: 16, 1, 1>, scalar_prefetch = 0 : i64, scratch_operands = 1 : i64, tpu.core_type = #tpu.core_type<tc>, window_params = [{transform_indices = @transform_0, window_bounds = array<i64: 512, 64>}, {transform_indices = @transform_1, window_bounds = array<i64: 64, 4>}, {transform_indices = @transform_2, window_bounds = array<i64: 1, 4>}, {transform_indices = @transform_3, window_bounds = array<i64: 512, 4>}]} {
    %c0_i32 = arith.constant 0 : i32
    %0 = arith.cmpi eq, %arg2, %c0_i32 : i32
    %1 = arith.extui %0 : i1 to i32
    %c0_i32_0 = arith.constant 0 : i32
    %2 = arith.cmpi ne, %1, %c0_i32_0 : i32
    scf.if %2 {
      %cst_9 = arith.constant 0.000000e+00 : f32
      %15 = vector.broadcast %cst_9 : f32 to vector<512x4xf32>
      %c0_10 = arith.constant 0 : index
      %c0_11 = arith.constant 0 : index
      %16 = vector.load %arg7[%c0_10, %c0_11] : memref<512x4xf32, #tpu.memory_space<vmem>>, vector<512x4xf32>
      tpu.vector_store %arg7[%c0_10, %c0_11], %15 {strides = array<i32>} : memref<512x4xf32, #tpu.memory_space<vmem>>, vector<512x4xf32>,
    } else {
    }
    %c64_i32 = arith.constant 64 : i32
    %3 = arith.muli %arg2, %c64_i32 : i32
    %4 = tpu.assume_multiple %3, 64 : i32
    %5 = arith.index_cast %4 : i32 to index
    %c0 = arith.constant 0 : index
    %6 = vector.load %arg4[%5, %c0] : memref<64x4xbf16, #tpu.memory_space<vmem>>, vector<64x4xbf16>
    %c0_1 = arith.constant 0 : index
    %c0_2 = arith.constant 0 : index
    %7 = vector.load %arg7[%c0_1, %c0_2] : memref<512x4xf32, #tpu.memory_space<vmem>>, vector<512x4xf32>
    %c0_3 = arith.constant 0 : index
    %c0_4 = arith.constant 0 : index
    %8 = vector.load %arg3[%c0_3, %c0_4] : memref<512x64xbf16, #tpu.memory_space<vmem>>, vector<512x64xbf16>
    %cst = arith.constant dense<0.000000e+00> : vector<512x4xf32>
    %9 = tpu.matmul %8, %6, %cst {dimension_numbers = #tpu.dot_dimension_numbers<[1], [0], [0], [1], [0, 0, 1, 1], [], []>} : vector<512x64xbf16>, vector<64x4xbf16>, vector<512x4xf32> -> vector<512x4xf32>
    %10 = arith.addf %7, %9 : vector<512x4xf32>
    %c0_5 = arith.constant 0 : index
    %c0_6 = arith.constant 0 : index
    %11 = vector.load %arg7[%c0_5, %c0_6] : memref<512x4xf32, #tpu.memory_space<vmem>>, vector<512x4xf32>
    tpu.vector_store %arg7[%c0_5, %c0_6], %10 {strides = array<i32>} : memref<512x4xf32, #tpu.memory_space<vmem>>, vector<512x4xf32>,
    %c0_i32_7 = arith.constant 0 : i32
    %12 = arith.cmpi eq, %arg2, %c0_i32_7 : i32
    %13 = arith.extui %12 : i1 to i32
    %c0_i32_8 = arith.constant 0 : i32
    %14 = arith.cmpi ne, %13, %c0_i32_8 : i32
    scf.if %14 {
      %c0_9 = arith.constant 0 : index
      %c0_10 = arith.constant 0 : index
      %15 = vector.load %arg7[%c0_9, %c0_10] : memref<512x4xf32, #tpu.memory_space<vmem>>, vector<512x4xf32>
      %c0_11 = arith.constant 0 : index
      %c0_12 = arith.constant 0 : index
      %16 = vector.load %arg5[%c0_11, %c0_12] : memref<1x4xf32, #tpu.memory_space<vmem>>, vector<1x4xf32>
      %17 = vector.broadcast %16 : vector<1x4xf32> to vector<512x4xf32>
      %18 = arith.addf %15, %17 : vector<512x4xf32>
      %cst_13 = arith.constant 0.000000e+00 : f32
      %19 = vector.broadcast %cst_13 : f32 to vector<512x4xf32>
      %20 = arith.cmpf oge, %18, %19 : vector<512x4xf32>
      %cst_14 = arith.constant 2.000000e-01 : f32
      %21 = vector.broadcast %cst_14 : f32 to vector<512x4xf32>
      %22 = arith.mulf %21, %18 : vector<512x4xf32>
      %23 = arith.select %20, %18, %22 : vector<512x4xi1>, vector<512x4xf32>
      %24 = arith.truncf %23 : vector<512x4xf32> to vector<512x4xbf16>
      %c0_15 = arith.constant 0 : index
      %c0_16 = arith.constant 0 : index
      %25 = vector.load %arg6[%c0_15, %c0_16] : memref<512x4xbf16, #tpu.memory_space<vmem>>, vector<512x4xbf16>
      tpu.vector_store %arg6[%c0_15, %c0_16], %24 {strides = array<i32>} : memref<512x4xbf16, #tpu.memory_space<vmem>>, vector<512x4xbf16>,
    } else {
    }
    return
  }
  func.func @transform_0(%arg0: i32, %arg1: i32, %arg2: i32) -> (i32, i32) {
    %c0_i32 = arith.constant 0 : i32
    return %arg0, %arg2 : i32, i32
  }
  func.func @transform_1(%arg0: i32, %arg1: i32, %arg2: i32) -> (i32, i32) {
    %c0_i32 = arith.constant 0 : i32
    %c0_i32_0 = arith.constant 0 : i32
    return %c0_i32, %arg1 : i32, i32
  }
  func.func @transform_2(%arg0: i32, %arg1: i32, %arg2: i32) -> (i32, i32) {
    %c0_i32 = arith.constant 0 : i32
    %c0_i32_0 = arith.constant 0 : i32
    return %c0_i32, %arg1 : i32, i32
  }
  func.func @transform_3(%arg0: i32, %arg1: i32, %arg2: i32) -> (i32, i32) {
    %c0_i32 = arith.constant 0 : i32
    return %arg0, %arg1 : i32, i32
  }
}

module attributes {stable_mosaic.version = 11 : i64} {
  func.func @_conv_bn_stats_kernel(%arg0: i32, %arg1: i32, %arg2: i32, %arg3: memref<512x256xbf16, #tpu.memory_space<vmem>>, %arg4: memref<256x8xbf16, #tpu.memory_space<vmem>>, %arg5: memref<1x8xf32, #tpu.memory_space<vmem>>, %arg6: memref<512x8xbf16, #tpu.memory_space<vmem>>, %arg7: memref<1x2x8xf32, #tpu.memory_space<vmem>>, %arg8: memref<512x8xf32, #tpu.memory_space<vmem>>) attributes {dimension_semantics = [#tpu.dimension_semantics<parallel>, #tpu.dimension_semantics<parallel>, #tpu.dimension_semantics<arbitrary>], iteration_bounds = array<i64: 2, 1, 1>, scalar_prefetch = 0 : i64, scratch_operands = 1 : i64, tpu.core_type = #tpu.core_type<tc>, window_params = [{transform_indices = @transform_0, window_bounds = array<i64: 512, 256>}, {transform_indices = @transform_1, window_bounds = array<i64: 256, 8>}, {transform_indices = @transform_2, window_bounds = array<i64: 1, 8>}, {transform_indices = @transform_3, window_bounds = array<i64: 512, 8>}, {transform_indices = @transform_4, window_bounds = array<i64: 1, 2, 8>}]} {
    %c0_i32 = arith.constant 0 : i32
    %0 = arith.cmpi eq, %arg2, %c0_i32 : i32
    %1 = arith.extui %0 : i1 to i32
    %c0_i32_0 = arith.constant 0 : i32
    %2 = arith.cmpi ne, %1, %c0_i32_0 : i32
    scf.if %2 {
      %cst_9 = arith.constant 0.000000e+00 : f32
      %15 = vector.broadcast %cst_9 : f32 to vector<512x8xf32>
      %c0_10 = arith.constant 0 : index
      %c0_11 = arith.constant 0 : index
      %16 = vector.load %arg8[%c0_10, %c0_11] : memref<512x8xf32, #tpu.memory_space<vmem>>, vector<512x8xf32>
      tpu.vector_store %arg8[%c0_10, %c0_11], %15 {strides = array<i32>} : memref<512x8xf32, #tpu.memory_space<vmem>>, vector<512x8xf32>,
    } else {
    }
    %c256_i32 = arith.constant 256 : i32
    %3 = arith.muli %arg2, %c256_i32 : i32
    %4 = tpu.assume_multiple %3, 256 : i32
    %5 = arith.index_cast %4 : i32 to index
    %c0 = arith.constant 0 : index
    %6 = vector.load %arg4[%5, %c0] : memref<256x8xbf16, #tpu.memory_space<vmem>>, vector<256x8xbf16>
    %c0_1 = arith.constant 0 : index
    %c0_2 = arith.constant 0 : index
    %7 = vector.load %arg8[%c0_1, %c0_2] : memref<512x8xf32, #tpu.memory_space<vmem>>, vector<512x8xf32>
    %c0_3 = arith.constant 0 : index
    %c0_4 = arith.constant 0 : index
    %8 = vector.load %arg3[%c0_3, %c0_4] : memref<512x256xbf16, #tpu.memory_space<vmem>>, vector<512x256xbf16>
    %cst = arith.constant dense<0.000000e+00> : vector<512x8xf32>
    %9 = tpu.matmul %8, %6, %cst {dimension_numbers = #tpu.dot_dimension_numbers<[1], [0], [0], [1], [0, 0, 1, 1], [], []>} : vector<512x256xbf16>, vector<256x8xbf16>, vector<512x8xf32> -> vector<512x8xf32>
    %10 = arith.addf %7, %9 : vector<512x8xf32>
    %c0_5 = arith.constant 0 : index
    %c0_6 = arith.constant 0 : index
    %11 = vector.load %arg8[%c0_5, %c0_6] : memref<512x8xf32, #tpu.memory_space<vmem>>, vector<512x8xf32>
    tpu.vector_store %arg8[%c0_5, %c0_6], %10 {strides = array<i32>} : memref<512x8xf32, #tpu.memory_space<vmem>>, vector<512x8xf32>,
    %c0_i32_7 = arith.constant 0 : i32
    %12 = arith.cmpi eq, %arg2, %c0_i32_7 : i32
    %13 = arith.extui %12 : i1 to i32
    %c0_i32_8 = arith.constant 0 : i32
    %14 = arith.cmpi ne, %13, %c0_i32_8 : i32
    scf.if %14 {
      %c0_9 = arith.constant 0 : index
      %c0_10 = arith.constant 0 : index
      %15 = vector.load %arg8[%c0_9, %c0_10] : memref<512x8xf32, #tpu.memory_space<vmem>>, vector<512x8xf32>
      %c0_11 = arith.constant 0 : index
      %c0_12 = arith.constant 0 : index
      %16 = vector.load %arg5[%c0_11, %c0_12] : memref<1x8xf32, #tpu.memory_space<vmem>>, vector<1x8xf32>
      %17 = vector.broadcast %16 : vector<1x8xf32> to vector<512x8xf32>
      %18 = arith.addf %15, %17 : vector<512x8xf32>
      %19 = arith.truncf %18 : vector<512x8xf32> to vector<512x8xbf16>
      %c0_13 = arith.constant 0 : index
      %c0_14 = arith.constant 0 : index
      %20 = vector.load %arg6[%c0_13, %c0_14] : memref<512x8xbf16, #tpu.memory_space<vmem>>, vector<512x8xbf16>
      tpu.vector_store %arg6[%c0_13, %c0_14], %19 {strides = array<i32>} : memref<512x8xbf16, #tpu.memory_space<vmem>>, vector<512x8xbf16>,
      %cst_15 = arith.constant dense<0.000000e+00> : vector<8xf32>
      %21 = vector.multi_reduction <add>, %18, %cst_15 [0] : vector<512x8xf32> to vector<8xf32>
      %22 = vector.shape_cast %21 : vector<8xf32> to vector<1x8xf32>
      %cst_16 = arith.constant 5.120000e+02 : f32
      %23 = vector.broadcast %cst_16 : f32 to vector<1x8xf32>
      %24 = arith.divf %22, %23 : vector<1x8xf32>
      %25 = vector.broadcast %24 : vector<1x8xf32> to vector<512x8xf32>
      %26 = arith.subf %18, %25 : vector<512x8xf32>
      %27 = arith.mulf %26, %26 : vector<512x8xf32>
      %cst_17 = arith.constant dense<0.000000e+00> : vector<8xf32>
      %28 = vector.multi_reduction <add>, %27, %cst_17 [0] : vector<512x8xf32> to vector<8xf32>
      %29 = vector.shape_cast %28 : vector<8xf32> to vector<1x8xf32>
      %30 = vector.shape_cast %22 : vector<1x8xf32> to vector<1x1x8xf32>
      %c0_18 = arith.constant 0 : index
      %c0_19 = arith.constant 0 : index
      %c0_20 = arith.constant 0 : index
      %31 = vector.load %arg7[%c0_18, %c0_19, %c0_20] : memref<1x2x8xf32, #tpu.memory_space<vmem>>, vector<1x1x8xf32>
      tpu.vector_store %arg7[%c0_18, %c0_19, %c0_20], %30 {strides = array<i32>} : memref<1x2x8xf32, #tpu.memory_space<vmem>>, vector<1x1x8xf32>,
      %32 = vector.shape_cast %29 : vector<1x8xf32> to vector<1x1x8xf32>
      %c0_21 = arith.constant 0 : index
      %c1 = arith.constant 1 : index
      %c0_22 = arith.constant 0 : index
      %33 = vector.load %arg7[%c0_21, %c1, %c0_22] : memref<1x2x8xf32, #tpu.memory_space<vmem>>, vector<1x1x8xf32>
      tpu.vector_store %arg7[%c0_21, %c1, %c0_22], %32 {strides = array<i32>} : memref<1x2x8xf32, #tpu.memory_space<vmem>>, vector<1x1x8xf32>,
    } else {
    }
    return
  }
  func.func @transform_0(%arg0: i32, %arg1: i32, %arg2: i32) -> (i32, i32) {
    %c0_i32 = arith.constant 0 : i32
    return %arg0, %arg2 : i32, i32
  }
  func.func @transform_1(%arg0: i32, %arg1: i32, %arg2: i32) -> (i32, i32) {
    %c0_i32 = arith.constant 0 : i32
    %c0_i32_0 = arith.constant 0 : i32
    return %c0_i32, %arg1 : i32, i32
  }
  func.func @transform_2(%arg0: i32, %arg1: i32, %arg2: i32) -> (i32, i32) {
    %c0_i32 = arith.constant 0 : i32
    %c0_i32_0 = arith.constant 0 : i32
    return %c0_i32, %arg1 : i32, i32
  }
  func.func @transform_3(%arg0: i32, %arg1: i32, %arg2: i32) -> (i32, i32) {
    %c0_i32 = arith.constant 0 : i32
    return %arg0, %arg1 : i32, i32
  }
  func.func @transform_4(%arg0: i32, %arg1: i32, %arg2: i32) -> (i32, i32, i32) {
    %c0_i32 = arith.constant 0 : i32
    %c0_i32_0 = arith.constant 0 : i32
    return %arg0, %c0_i32, %arg1 : i32, i32, i32
  }
}

module attributes {stable_mosaic.version = 11 : i64} {
  func.func @_bn_apply_leaky_kernel(%arg0: i32, %arg1: memref<512x8xbf16, #tpu.memory_space<vmem>>, %arg2: memref<1x8xf32, #tpu.memory_space<vmem>>, %arg3: memref<1x8xf32, #tpu.memory_space<vmem>>, %arg4: memref<512x8xbf16, #tpu.memory_space<vmem>>) attributes {dimension_semantics = [#tpu.dimension_semantics<parallel>], iteration_bounds = array<i64: 2>, scalar_prefetch = 0 : i64, scratch_operands = 0 : i64, tpu.core_type = #tpu.core_type<tc>, window_params = [{transform_indices = @transform_0, window_bounds = array<i64: 512, 8>}, {pipeline_mode = #tpu.pipeline_mode<synchronous>, transform_indices = @transform_1, window_bounds = array<i64: 1, 8>}, {pipeline_mode = #tpu.pipeline_mode<synchronous>, transform_indices = @transform_2, window_bounds = array<i64: 1, 8>}, {transform_indices = @transform_3, window_bounds = array<i64: 512, 8>}]} {
    %c0 = arith.constant 0 : index
    %c0_0 = arith.constant 0 : index
    %0 = vector.load %arg1[%c0, %c0_0] : memref<512x8xbf16, #tpu.memory_space<vmem>>, vector<512x8xbf16>
    %1 = arith.extf %0 : vector<512x8xbf16> to vector<512x8xf32>
    %c0_1 = arith.constant 0 : index
    %c0_2 = arith.constant 0 : index
    %2 = vector.load %arg2[%c0_1, %c0_2] : memref<1x8xf32, #tpu.memory_space<vmem>>, vector<1x8xf32>
    %3 = vector.broadcast %2 : vector<1x8xf32> to vector<512x8xf32>
    %4 = arith.mulf %1, %3 : vector<512x8xf32>
    %c0_3 = arith.constant 0 : index
    %c0_4 = arith.constant 0 : index
    %5 = vector.load %arg3[%c0_3, %c0_4] : memref<1x8xf32, #tpu.memory_space<vmem>>, vector<1x8xf32>
    %6 = vector.broadcast %5 : vector<1x8xf32> to vector<512x8xf32>
    %7 = arith.addf %4, %6 : vector<512x8xf32>
    %cst = arith.constant 0.000000e+00 : f32
    %8 = vector.broadcast %cst : f32 to vector<512x8xf32>
    %9 = arith.cmpf oge, %7, %8 : vector<512x8xf32>
    %cst_5 = arith.constant 2.000000e-01 : f32
    %10 = vector.broadcast %cst_5 : f32 to vector<512x8xf32>
    %11 = arith.mulf %10, %7 : vector<512x8xf32>
    %12 = arith.select %9, %7, %11 : vector<512x8xi1>, vector<512x8xf32>
    %13 = arith.truncf %12 : vector<512x8xf32> to vector<512x8xbf16>
    %c0_6 = arith.constant 0 : index
    %c0_7 = arith.constant 0 : index
    %14 = vector.load %arg4[%c0_6, %c0_7] : memref<512x8xbf16, #tpu.memory_space<vmem>>, vector<512x8xbf16>
    tpu.vector_store %arg4[%c0_6, %c0_7], %13 {strides = array<i32>} : memref<512x8xbf16, #tpu.memory_space<vmem>>, vector<512x8xbf16>,
    return
  }
  func.func @transform_0(%arg0: i32) -> (i32, i32) {
    %c0_i32 = arith.constant 0 : i32
    %c0_i32_0 = arith.constant 0 : i32
    return %arg0, %c0_i32 : i32, i32
  }
  func.func @transform_1(%arg0: i32) -> (i32, i32) {
    %c0_i32 = arith.constant 0 : i32
    %c0_i32_0 = arith.constant 0 : i32
    %c0_i32_1 = arith.constant 0 : i32
    return %c0_i32, %c0_i32_0 : i32, i32
  }
  func.func @transform_2(%arg0: i32) -> (i32, i32) {
    %c0_i32 = arith.constant 0 : i32
    %c0_i32_0 = arith.constant 0 : i32
    %c0_i32_1 = arith.constant 0 : i32
    return %c0_i32, %c0_i32_0 : i32, i32
  }
  func.func @transform_3(%arg0: i32) -> (i32, i32) {
    %c0_i32 = arith.constant 0 : i32
    %c0_i32_0 = arith.constant 0 : i32
    return %arg0, %c0_i32 : i32, i32
  }
}

module attributes {stable_mosaic.version = 11 : i64} {
  func.func @_conv_bn_stats_kernel(%arg0: i32, %arg1: i32, %arg2: i32, %arg3: memref<128x512xbf16, #tpu.memory_space<vmem>>, %arg4: memref<512x16xbf16, #tpu.memory_space<vmem>>, %arg5: memref<1x16xf32, #tpu.memory_space<vmem>>, %arg6: memref<128x16xbf16, #tpu.memory_space<vmem>>, %arg7: memref<1x2x16xf32, #tpu.memory_space<vmem>>, %arg8: memref<128x16xf32, #tpu.memory_space<vmem>>) attributes {dimension_semantics = [#tpu.dimension_semantics<parallel>, #tpu.dimension_semantics<parallel>, #tpu.dimension_semantics<arbitrary>], iteration_bounds = array<i64: 1, 1, 1>, scalar_prefetch = 0 : i64, scratch_operands = 1 : i64, tpu.core_type = #tpu.core_type<tc>, window_params = [{transform_indices = @transform_0, window_bounds = array<i64: 128, 512>}, {transform_indices = @transform_1, window_bounds = array<i64: 512, 16>}, {transform_indices = @transform_2, window_bounds = array<i64: 1, 16>}, {transform_indices = @transform_3, window_bounds = array<i64: 128, 16>}, {transform_indices = @transform_4, window_bounds = array<i64: 1, 2, 16>}]} {
    %c0_i32 = arith.constant 0 : i32
    %0 = arith.cmpi eq, %arg2, %c0_i32 : i32
    %1 = arith.extui %0 : i1 to i32
    %c0_i32_0 = arith.constant 0 : i32
    %2 = arith.cmpi ne, %1, %c0_i32_0 : i32
    scf.if %2 {
      %cst_9 = arith.constant 0.000000e+00 : f32
      %15 = vector.broadcast %cst_9 : f32 to vector<128x16xf32>
      %c0_10 = arith.constant 0 : index
      %c0_11 = arith.constant 0 : index
      %16 = vector.load %arg8[%c0_10, %c0_11] : memref<128x16xf32, #tpu.memory_space<vmem>>, vector<128x16xf32>
      tpu.vector_store %arg8[%c0_10, %c0_11], %15 {strides = array<i32>} : memref<128x16xf32, #tpu.memory_space<vmem>>, vector<128x16xf32>,
    } else {
    }
    %c512_i32 = arith.constant 512 : i32
    %3 = arith.muli %arg2, %c512_i32 : i32
    %4 = tpu.assume_multiple %3, 512 : i32
    %5 = arith.index_cast %4 : i32 to index
    %c0 = arith.constant 0 : index
    %6 = vector.load %arg4[%5, %c0] : memref<512x16xbf16, #tpu.memory_space<vmem>>, vector<512x16xbf16>
    %c0_1 = arith.constant 0 : index
    %c0_2 = arith.constant 0 : index
    %7 = vector.load %arg8[%c0_1, %c0_2] : memref<128x16xf32, #tpu.memory_space<vmem>>, vector<128x16xf32>
    %c0_3 = arith.constant 0 : index
    %c0_4 = arith.constant 0 : index
    %8 = vector.load %arg3[%c0_3, %c0_4] : memref<128x512xbf16, #tpu.memory_space<vmem>>, vector<128x512xbf16>
    %cst = arith.constant dense<0.000000e+00> : vector<128x16xf32>
    %9 = tpu.matmul %8, %6, %cst {dimension_numbers = #tpu.dot_dimension_numbers<[1], [0], [0], [1], [0, 0, 1, 1], [], []>} : vector<128x512xbf16>, vector<512x16xbf16>, vector<128x16xf32> -> vector<128x16xf32>
    %10 = arith.addf %7, %9 : vector<128x16xf32>
    %c0_5 = arith.constant 0 : index
    %c0_6 = arith.constant 0 : index
    %11 = vector.load %arg8[%c0_5, %c0_6] : memref<128x16xf32, #tpu.memory_space<vmem>>, vector<128x16xf32>
    tpu.vector_store %arg8[%c0_5, %c0_6], %10 {strides = array<i32>} : memref<128x16xf32, #tpu.memory_space<vmem>>, vector<128x16xf32>,
    %c0_i32_7 = arith.constant 0 : i32
    %12 = arith.cmpi eq, %arg2, %c0_i32_7 : i32
    %13 = arith.extui %12 : i1 to i32
    %c0_i32_8 = arith.constant 0 : i32
    %14 = arith.cmpi ne, %13, %c0_i32_8 : i32
    scf.if %14 {
      %c0_9 = arith.constant 0 : index
      %c0_10 = arith.constant 0 : index
      %15 = vector.load %arg8[%c0_9, %c0_10] : memref<128x16xf32, #tpu.memory_space<vmem>>, vector<128x16xf32>
      %c0_11 = arith.constant 0 : index
      %c0_12 = arith.constant 0 : index
      %16 = vector.load %arg5[%c0_11, %c0_12] : memref<1x16xf32, #tpu.memory_space<vmem>>, vector<1x16xf32>
      %17 = vector.broadcast %16 : vector<1x16xf32> to vector<128x16xf32>
      %18 = arith.addf %15, %17 : vector<128x16xf32>
      %19 = arith.truncf %18 : vector<128x16xf32> to vector<128x16xbf16>
      %c0_13 = arith.constant 0 : index
      %c0_14 = arith.constant 0 : index
      %20 = vector.load %arg6[%c0_13, %c0_14] : memref<128x16xbf16, #tpu.memory_space<vmem>>, vector<128x16xbf16>
      tpu.vector_store %arg6[%c0_13, %c0_14], %19 {strides = array<i32>} : memref<128x16xbf16, #tpu.memory_space<vmem>>, vector<128x16xbf16>,
      %cst_15 = arith.constant dense<0.000000e+00> : vector<16xf32>
      %21 = vector.multi_reduction <add>, %18, %cst_15 [0] : vector<128x16xf32> to vector<16xf32>
      %22 = vector.shape_cast %21 : vector<16xf32> to vector<1x16xf32>
      %cst_16 = arith.constant 1.280000e+02 : f32
      %23 = vector.broadcast %cst_16 : f32 to vector<1x16xf32>
      %24 = arith.divf %22, %23 : vector<1x16xf32>
      %25 = vector.broadcast %24 : vector<1x16xf32> to vector<128x16xf32>
      %26 = arith.subf %18, %25 : vector<128x16xf32>
      %27 = arith.mulf %26, %26 : vector<128x16xf32>
      %cst_17 = arith.constant dense<0.000000e+00> : vector<16xf32>
      %28 = vector.multi_reduction <add>, %27, %cst_17 [0] : vector<128x16xf32> to vector<16xf32>
      %29 = vector.shape_cast %28 : vector<16xf32> to vector<1x16xf32>
      %30 = vector.shape_cast %22 : vector<1x16xf32> to vector<1x1x16xf32>
      %c0_18 = arith.constant 0 : index
      %c0_19 = arith.constant 0 : index
      %c0_20 = arith.constant 0 : index
      %31 = vector.load %arg7[%c0_18, %c0_19, %c0_20] : memref<1x2x16xf32, #tpu.memory_space<vmem>>, vector<1x1x16xf32>
      tpu.vector_store %arg7[%c0_18, %c0_19, %c0_20], %30 {strides = array<i32>} : memref<1x2x16xf32, #tpu.memory_space<vmem>>, vector<1x1x16xf32>,
      %32 = vector.shape_cast %29 : vector<1x16xf32> to vector<1x1x16xf32>
      %c0_21 = arith.constant 0 : index
      %c1 = arith.constant 1 : index
      %c0_22 = arith.constant 0 : index
      %33 = vector.load %arg7[%c0_21, %c1, %c0_22] : memref<1x2x16xf32, #tpu.memory_space<vmem>>, vector<1x1x16xf32>
      tpu.vector_store %arg7[%c0_21, %c1, %c0_22], %32 {strides = array<i32>} : memref<1x2x16xf32, #tpu.memory_space<vmem>>, vector<1x1x16xf32>,
    } else {
    }
    return
  }
  func.func @transform_0(%arg0: i32, %arg1: i32, %arg2: i32) -> (i32, i32) {
    %c0_i32 = arith.constant 0 : i32
    return %arg0, %arg2 : i32, i32
  }
  func.func @transform_1(%arg0: i32, %arg1: i32, %arg2: i32) -> (i32, i32) {
    %c0_i32 = arith.constant 0 : i32
    %c0_i32_0 = arith.constant 0 : i32
    return %c0_i32, %arg1 : i32, i32
  }
  func.func @transform_2(%arg0: i32, %arg1: i32, %arg2: i32) -> (i32, i32) {
    %c0_i32 = arith.constant 0 : i32
    %c0_i32_0 = arith.constant 0 : i32
    return %c0_i32, %arg1 : i32, i32
  }
  func.func @transform_3(%arg0: i32, %arg1: i32, %arg2: i32) -> (i32, i32) {
    %c0_i32 = arith.constant 0 : i32
    return %arg0, %arg1 : i32, i32
  }
  func.func @transform_4(%arg0: i32, %arg1: i32, %arg2: i32) -> (i32, i32, i32) {
    %c0_i32 = arith.constant 0 : i32
    %c0_i32_0 = arith.constant 0 : i32
    return %arg0, %c0_i32, %arg1 : i32, i32, i32
  }
}

module attributes {stable_mosaic.version = 11 : i64} {
  func.func @_bn_apply_leaky_kernel(%arg0: i32, %arg1: memref<128x16xbf16, #tpu.memory_space<vmem>>, %arg2: memref<1x16xf32, #tpu.memory_space<vmem>>, %arg3: memref<1x16xf32, #tpu.memory_space<vmem>>, %arg4: memref<128x16xbf16, #tpu.memory_space<vmem>>) attributes {dimension_semantics = [#tpu.dimension_semantics<parallel>], iteration_bounds = array<i64: 1>, scalar_prefetch = 0 : i64, scratch_operands = 0 : i64, tpu.core_type = #tpu.core_type<tc>, window_params = [{transform_indices = @transform_0, window_bounds = array<i64: 128, 16>}, {pipeline_mode = #tpu.pipeline_mode<synchronous>, transform_indices = @transform_1, window_bounds = array<i64: 1, 16>}, {pipeline_mode = #tpu.pipeline_mode<synchronous>, transform_indices = @transform_2, window_bounds = array<i64: 1, 16>}, {transform_indices = @transform_3, window_bounds = array<i64: 128, 16>}]} {
    %c0 = arith.constant 0 : index
    %c0_0 = arith.constant 0 : index
    %0 = vector.load %arg1[%c0, %c0_0] : memref<128x16xbf16, #tpu.memory_space<vmem>>, vector<128x16xbf16>
    %1 = arith.extf %0 : vector<128x16xbf16> to vector<128x16xf32>
    %c0_1 = arith.constant 0 : index
    %c0_2 = arith.constant 0 : index
    %2 = vector.load %arg2[%c0_1, %c0_2] : memref<1x16xf32, #tpu.memory_space<vmem>>, vector<1x16xf32>
    %3 = vector.broadcast %2 : vector<1x16xf32> to vector<128x16xf32>
    %4 = arith.mulf %1, %3 : vector<128x16xf32>
    %c0_3 = arith.constant 0 : index
    %c0_4 = arith.constant 0 : index
    %5 = vector.load %arg3[%c0_3, %c0_4] : memref<1x16xf32, #tpu.memory_space<vmem>>, vector<1x16xf32>
    %6 = vector.broadcast %5 : vector<1x16xf32> to vector<128x16xf32>
    %7 = arith.addf %4, %6 : vector<128x16xf32>
    %cst = arith.constant 0.000000e+00 : f32
    %8 = vector.broadcast %cst : f32 to vector<128x16xf32>
    %9 = arith.cmpf oge, %7, %8 : vector<128x16xf32>
    %cst_5 = arith.constant 2.000000e-01 : f32
    %10 = vector.broadcast %cst_5 : f32 to vector<128x16xf32>
    %11 = arith.mulf %10, %7 : vector<128x16xf32>
    %12 = arith.select %9, %7, %11 : vector<128x16xi1>, vector<128x16xf32>
    %13 = arith.truncf %12 : vector<128x16xf32> to vector<128x16xbf16>
    %c0_6 = arith.constant 0 : index
    %c0_7 = arith.constant 0 : index
    %14 = vector.load %arg4[%c0_6, %c0_7] : memref<128x16xbf16, #tpu.memory_space<vmem>>, vector<128x16xbf16>
    tpu.vector_store %arg4[%c0_6, %c0_7], %13 {strides = array<i32>} : memref<128x16xbf16, #tpu.memory_space<vmem>>, vector<128x16xbf16>,
    return
  }
  func.func @transform_0(%arg0: i32) -> (i32, i32) {
    %c0_i32 = arith.constant 0 : i32
    %c0_i32_0 = arith.constant 0 : i32
    return %arg0, %c0_i32 : i32, i32
  }
  func.func @transform_1(%arg0: i32) -> (i32, i32) {
    %c0_i32 = arith.constant 0 : i32
    %c0_i32_0 = arith.constant 0 : i32
    %c0_i32_1 = arith.constant 0 : i32
    return %c0_i32, %c0_i32_0 : i32, i32
  }
  func.func @transform_2(%arg0: i32) -> (i32, i32) {
    %c0_i32 = arith.constant 0 : i32
    %c0_i32_0 = arith.constant 0 : i32
    %c0_i32_1 = arith.constant 0 : i32
    return %c0_i32, %c0_i32_0 : i32, i32
  }
  func.func @transform_3(%arg0: i32) -> (i32, i32) {
    %c0_i32 = arith.constant 0 : i32
    %c0_i32_0 = arith.constant 0 : i32
    return %arg0, %c0_i32 : i32, i32
  }
}

module attributes {stable_mosaic.version = 11 : i64} {
  func.func @_conv_bn_stats_kernel(%arg0: i32, %arg1: i32, %arg2: i32, %arg3: memref<16x1024xbf16, #tpu.memory_space<vmem>>, %arg4: memref<1024x32xbf16, #tpu.memory_space<vmem>>, %arg5: memref<1x32xf32, #tpu.memory_space<vmem>>, %arg6: memref<16x32xbf16, #tpu.memory_space<vmem>>, %arg7: memref<1x2x32xf32, #tpu.memory_space<vmem>>, %arg8: memref<16x32xf32, #tpu.memory_space<vmem>>) attributes {dimension_semantics = [#tpu.dimension_semantics<parallel>, #tpu.dimension_semantics<parallel>, #tpu.dimension_semantics<arbitrary>], iteration_bounds = array<i64: 1, 1, 1>, scalar_prefetch = 0 : i64, scratch_operands = 1 : i64, tpu.core_type = #tpu.core_type<tc>, window_params = [{transform_indices = @transform_0, window_bounds = array<i64: 16, 1024>}, {transform_indices = @transform_1, window_bounds = array<i64: 1024, 32>}, {transform_indices = @transform_2, window_bounds = array<i64: 1, 32>}, {transform_indices = @transform_3, window_bounds = array<i64: 16, 32>}, {transform_indices = @transform_4, window_bounds = array<i64: 1, 2, 32>}]} {
    %c0_i32 = arith.constant 0 : i32
    %0 = arith.cmpi eq, %arg2, %c0_i32 : i32
    %1 = arith.extui %0 : i1 to i32
    %c0_i32_0 = arith.constant 0 : i32
    %2 = arith.cmpi ne, %1, %c0_i32_0 : i32
    scf.if %2 {
      %cst_9 = arith.constant 0.000000e+00 : f32
      %15 = vector.broadcast %cst_9 : f32 to vector<16x32xf32>
      %c0_10 = arith.constant 0 : index
      %c0_11 = arith.constant 0 : index
      %16 = vector.load %arg8[%c0_10, %c0_11] : memref<16x32xf32, #tpu.memory_space<vmem>>, vector<16x32xf32>
      tpu.vector_store %arg8[%c0_10, %c0_11], %15 {strides = array<i32>} : memref<16x32xf32, #tpu.memory_space<vmem>>, vector<16x32xf32>,
    } else {
    }
    %c1024_i32 = arith.constant 1024 : i32
    %3 = arith.muli %arg2, %c1024_i32 : i32
    %4 = tpu.assume_multiple %3, 1024 : i32
    %5 = arith.index_cast %4 : i32 to index
    %c0 = arith.constant 0 : index
    %6 = vector.load %arg4[%5, %c0] : memref<1024x32xbf16, #tpu.memory_space<vmem>>, vector<1024x32xbf16>
    %c0_1 = arith.constant 0 : index
    %c0_2 = arith.constant 0 : index
    %7 = vector.load %arg8[%c0_1, %c0_2] : memref<16x32xf32, #tpu.memory_space<vmem>>, vector<16x32xf32>
    %c0_3 = arith.constant 0 : index
    %c0_4 = arith.constant 0 : index
    %8 = vector.load %arg3[%c0_3, %c0_4] : memref<16x1024xbf16, #tpu.memory_space<vmem>>, vector<16x1024xbf16>
    %cst = arith.constant dense<0.000000e+00> : vector<16x32xf32>
    %9 = tpu.matmul %8, %6, %cst {dimension_numbers = #tpu.dot_dimension_numbers<[1], [0], [0], [1], [0, 0, 1, 1], [], []>} : vector<16x1024xbf16>, vector<1024x32xbf16>, vector<16x32xf32> -> vector<16x32xf32>
    %10 = arith.addf %7, %9 : vector<16x32xf32>
    %c0_5 = arith.constant 0 : index
    %c0_6 = arith.constant 0 : index
    %11 = vector.load %arg8[%c0_5, %c0_6] : memref<16x32xf32, #tpu.memory_space<vmem>>, vector<16x32xf32>
    tpu.vector_store %arg8[%c0_5, %c0_6], %10 {strides = array<i32>} : memref<16x32xf32, #tpu.memory_space<vmem>>, vector<16x32xf32>,
    %c0_i32_7 = arith.constant 0 : i32
    %12 = arith.cmpi eq, %arg2, %c0_i32_7 : i32
    %13 = arith.extui %12 : i1 to i32
    %c0_i32_8 = arith.constant 0 : i32
    %14 = arith.cmpi ne, %13, %c0_i32_8 : i32
    scf.if %14 {
      %c0_9 = arith.constant 0 : index
      %c0_10 = arith.constant 0 : index
      %15 = vector.load %arg8[%c0_9, %c0_10] : memref<16x32xf32, #tpu.memory_space<vmem>>, vector<16x32xf32>
      %c0_11 = arith.constant 0 : index
      %c0_12 = arith.constant 0 : index
      %16 = vector.load %arg5[%c0_11, %c0_12] : memref<1x32xf32, #tpu.memory_space<vmem>>, vector<1x32xf32>
      %17 = vector.broadcast %16 : vector<1x32xf32> to vector<16x32xf32>
      %18 = arith.addf %15, %17 : vector<16x32xf32>
      %19 = arith.truncf %18 : vector<16x32xf32> to vector<16x32xbf16>
      %c0_13 = arith.constant 0 : index
      %c0_14 = arith.constant 0 : index
      %20 = vector.load %arg6[%c0_13, %c0_14] : memref<16x32xbf16, #tpu.memory_space<vmem>>, vector<16x32xbf16>
      tpu.vector_store %arg6[%c0_13, %c0_14], %19 {strides = array<i32>} : memref<16x32xbf16, #tpu.memory_space<vmem>>, vector<16x32xbf16>,
      %cst_15 = arith.constant dense<0.000000e+00> : vector<32xf32>
      %21 = vector.multi_reduction <add>, %18, %cst_15 [0] : vector<16x32xf32> to vector<32xf32>
      %22 = vector.shape_cast %21 : vector<32xf32> to vector<1x32xf32>
      %cst_16 = arith.constant 1.600000e+01 : f32
      %23 = vector.broadcast %cst_16 : f32 to vector<1x32xf32>
      %24 = arith.divf %22, %23 : vector<1x32xf32>
      %25 = vector.broadcast %24 : vector<1x32xf32> to vector<16x32xf32>
      %26 = arith.subf %18, %25 : vector<16x32xf32>
      %27 = arith.mulf %26, %26 : vector<16x32xf32>
      %cst_17 = arith.constant dense<0.000000e+00> : vector<32xf32>
      %28 = vector.multi_reduction <add>, %27, %cst_17 [0] : vector<16x32xf32> to vector<32xf32>
      %29 = vector.shape_cast %28 : vector<32xf32> to vector<1x32xf32>
      %30 = vector.shape_cast %22 : vector<1x32xf32> to vector<1x1x32xf32>
      %c0_18 = arith.constant 0 : index
      %c0_19 = arith.constant 0 : index
      %c0_20 = arith.constant 0 : index
      %31 = vector.load %arg7[%c0_18, %c0_19, %c0_20] : memref<1x2x32xf32, #tpu.memory_space<vmem>>, vector<1x1x32xf32>
      tpu.vector_store %arg7[%c0_18, %c0_19, %c0_20], %30 {strides = array<i32>} : memref<1x2x32xf32, #tpu.memory_space<vmem>>, vector<1x1x32xf32>,
      %32 = vector.shape_cast %29 : vector<1x32xf32> to vector<1x1x32xf32>
      %c0_21 = arith.constant 0 : index
      %c1 = arith.constant 1 : index
      %c0_22 = arith.constant 0 : index
      %33 = vector.load %arg7[%c0_21, %c1, %c0_22] : memref<1x2x32xf32, #tpu.memory_space<vmem>>, vector<1x1x32xf32>
      tpu.vector_store %arg7[%c0_21, %c1, %c0_22], %32 {strides = array<i32>} : memref<1x2x32xf32, #tpu.memory_space<vmem>>, vector<1x1x32xf32>,
    } else {
    }
    return
  }
  func.func @transform_0(%arg0: i32, %arg1: i32, %arg2: i32) -> (i32, i32) {
    %c0_i32 = arith.constant 0 : i32
    return %arg0, %arg2 : i32, i32
  }
  func.func @transform_1(%arg0: i32, %arg1: i32, %arg2: i32) -> (i32, i32) {
    %c0_i32 = arith.constant 0 : i32
    %c0_i32_0 = arith.constant 0 : i32
    return %c0_i32, %arg1 : i32, i32
  }
  func.func @transform_2(%arg0: i32, %arg1: i32, %arg2: i32) -> (i32, i32) {
    %c0_i32 = arith.constant 0 : i32
    %c0_i32_0 = arith.constant 0 : i32
    return %c0_i32, %arg1 : i32, i32
  }
  func.func @transform_3(%arg0: i32, %arg1: i32, %arg2: i32) -> (i32, i32) {
    %c0_i32 = arith.constant 0 : i32
    return %arg0, %arg1 : i32, i32
  }
  func.func @transform_4(%arg0: i32, %arg1: i32, %arg2: i32) -> (i32, i32, i32) {
    %c0_i32 = arith.constant 0 : i32
    %c0_i32_0 = arith.constant 0 : i32
    return %arg0, %c0_i32, %arg1 : i32, i32, i32
  }
}

module attributes {stable_mosaic.version = 11 : i64} {
  func.func @_bn_apply_leaky_kernel(%arg0: i32, %arg1: memref<16x32xbf16, #tpu.memory_space<vmem>>, %arg2: memref<1x32xf32, #tpu.memory_space<vmem>>, %arg3: memref<1x32xf32, #tpu.memory_space<vmem>>, %arg4: memref<16x32xbf16, #tpu.memory_space<vmem>>) attributes {dimension_semantics = [#tpu.dimension_semantics<parallel>], iteration_bounds = array<i64: 1>, scalar_prefetch = 0 : i64, scratch_operands = 0 : i64, tpu.core_type = #tpu.core_type<tc>, window_params = [{transform_indices = @transform_0, window_bounds = array<i64: 16, 32>}, {pipeline_mode = #tpu.pipeline_mode<synchronous>, transform_indices = @transform_1, window_bounds = array<i64: 1, 32>}, {pipeline_mode = #tpu.pipeline_mode<synchronous>, transform_indices = @transform_2, window_bounds = array<i64: 1, 32>}, {transform_indices = @transform_3, window_bounds = array<i64: 16, 32>}]} {
    %c0 = arith.constant 0 : index
    %c0_0 = arith.constant 0 : index
    %0 = vector.load %arg1[%c0, %c0_0] : memref<16x32xbf16, #tpu.memory_space<vmem>>, vector<16x32xbf16>
    %1 = arith.extf %0 : vector<16x32xbf16> to vector<16x32xf32>
    %c0_1 = arith.constant 0 : index
    %c0_2 = arith.constant 0 : index
    %2 = vector.load %arg2[%c0_1, %c0_2] : memref<1x32xf32, #tpu.memory_space<vmem>>, vector<1x32xf32>
    %3 = vector.broadcast %2 : vector<1x32xf32> to vector<16x32xf32>
    %4 = arith.mulf %1, %3 : vector<16x32xf32>
    %c0_3 = arith.constant 0 : index
    %c0_4 = arith.constant 0 : index
    %5 = vector.load %arg3[%c0_3, %c0_4] : memref<1x32xf32, #tpu.memory_space<vmem>>, vector<1x32xf32>
    %6 = vector.broadcast %5 : vector<1x32xf32> to vector<16x32xf32>
    %7 = arith.addf %4, %6 : vector<16x32xf32>
    %cst = arith.constant 0.000000e+00 : f32
    %8 = vector.broadcast %cst : f32 to vector<16x32xf32>
    %9 = arith.cmpf oge, %7, %8 : vector<16x32xf32>
    %cst_5 = arith.constant 2.000000e-01 : f32
    %10 = vector.broadcast %cst_5 : f32 to vector<16x32xf32>
    %11 = arith.mulf %10, %7 : vector<16x32xf32>
    %12 = arith.select %9, %7, %11 : vector<16x32xi1>, vector<16x32xf32>
    %13 = arith.truncf %12 : vector<16x32xf32> to vector<16x32xbf16>
    %c0_6 = arith.constant 0 : index
    %c0_7 = arith.constant 0 : index
    %14 = vector.load %arg4[%c0_6, %c0_7] : memref<16x32xbf16, #tpu.memory_space<vmem>>, vector<16x32xbf16>
    tpu.vector_store %arg4[%c0_6, %c0_7], %13 {strides = array<i32>} : memref<16x32xbf16, #tpu.memory_space<vmem>>, vector<16x32xbf16>,
    return
  }
  func.func @transform_0(%arg0: i32) -> (i32, i32) {
    %c0_i32 = arith.constant 0 : i32
    %c0_i32_0 = arith.constant 0 : i32
    return %arg0, %c0_i32 : i32, i32
  }
  func.func @transform_1(%arg0: i32) -> (i32, i32) {
    %c0_i32 = arith.constant 0 : i32
    %c0_i32_0 = arith.constant 0 : i32
    %c0_i32_1 = arith.constant 0 : i32
    return %c0_i32, %c0_i32_0 : i32, i32
  }
  func.func @transform_2(%arg0: i32) -> (i32, i32) {
    %c0_i32 = arith.constant 0 : i32
    %c0_i32_0 = arith.constant 0 : i32
    %c0_i32_1 = arith.constant 0 : i32
    return %c0_i32, %c0_i32_0 : i32, i32
  }
  func.func @transform_3(%arg0: i32) -> (i32, i32) {
    %c0_i32 = arith.constant 0 : i32
    %c0_i32_0 = arith.constant 0 : i32
    return %arg0, %c0_i32 : i32, i32
  }
}

module attributes {stable_mosaic.version = 11 : i64} {
  func.func @_conv_act_kernel(%arg0: i32, %arg1: i32, %arg2: i32, %arg3: memref<16x2048xbf16, #tpu.memory_space<vmem>>, %arg4: memref<2048x128xbf16, #tpu.memory_space<vmem>>, %arg5: memref<1x128xf32, #tpu.memory_space<vmem>>, %arg6: memref<16x128xf32, #tpu.memory_space<vmem>>, %arg7: memref<16x128xf32, #tpu.memory_space<vmem>>) attributes {dimension_semantics = [#tpu.dimension_semantics<parallel>, #tpu.dimension_semantics<parallel>, #tpu.dimension_semantics<arbitrary>], iteration_bounds = array<i64: 1, 1, 1>, scalar_prefetch = 0 : i64, scratch_operands = 1 : i64, tpu.core_type = #tpu.core_type<tc>, window_params = [{transform_indices = @transform_0, window_bounds = array<i64: 16, 2048>}, {transform_indices = @transform_1, window_bounds = array<i64: 2048, 128>}, {transform_indices = @transform_2, window_bounds = array<i64: 1, 128>}, {transform_indices = @transform_3, window_bounds = array<i64: 16, 128>}]} {
    %c0_i32 = arith.constant 0 : i32
    %0 = arith.cmpi eq, %arg2, %c0_i32 : i32
    %1 = arith.extui %0 : i1 to i32
    %c0_i32_0 = arith.constant 0 : i32
    %2 = arith.cmpi ne, %1, %c0_i32_0 : i32
    scf.if %2 {
      %cst_9 = arith.constant 0.000000e+00 : f32
      %15 = vector.broadcast %cst_9 : f32 to vector<16x128xf32>
      %c0_10 = arith.constant 0 : index
      %c0_11 = arith.constant 0 : index
      %16 = vector.load %arg7[%c0_10, %c0_11] : memref<16x128xf32, #tpu.memory_space<vmem>>, vector<16x128xf32>
      tpu.vector_store %arg7[%c0_10, %c0_11], %15 {strides = array<i32>} : memref<16x128xf32, #tpu.memory_space<vmem>>, vector<16x128xf32>,
    } else {
    }
    %c2048_i32 = arith.constant 2048 : i32
    %3 = arith.muli %arg2, %c2048_i32 : i32
    %4 = tpu.assume_multiple %3, 2048 : i32
    %5 = arith.index_cast %4 : i32 to index
    %c0 = arith.constant 0 : index
    %6 = vector.load %arg4[%5, %c0] : memref<2048x128xbf16, #tpu.memory_space<vmem>>, vector<2048x128xbf16>
    %c0_1 = arith.constant 0 : index
    %c0_2 = arith.constant 0 : index
    %7 = vector.load %arg7[%c0_1, %c0_2] : memref<16x128xf32, #tpu.memory_space<vmem>>, vector<16x128xf32>
    %c0_3 = arith.constant 0 : index
    %c0_4 = arith.constant 0 : index
    %8 = vector.load %arg3[%c0_3, %c0_4] : memref<16x2048xbf16, #tpu.memory_space<vmem>>, vector<16x2048xbf16>
    %cst = arith.constant dense<0.000000e+00> : vector<16x128xf32>
    %9 = tpu.matmul %8, %6, %cst {dimension_numbers = #tpu.dot_dimension_numbers<[1], [0], [0], [1], [0, 0, 1, 1], [], []>} : vector<16x2048xbf16>, vector<2048x128xbf16>, vector<16x128xf32> -> vector<16x128xf32>
    %10 = arith.addf %7, %9 : vector<16x128xf32>
    %c0_5 = arith.constant 0 : index
    %c0_6 = arith.constant 0 : index
    %11 = vector.load %arg7[%c0_5, %c0_6] : memref<16x128xf32, #tpu.memory_space<vmem>>, vector<16x128xf32>
    tpu.vector_store %arg7[%c0_5, %c0_6], %10 {strides = array<i32>} : memref<16x128xf32, #tpu.memory_space<vmem>>, vector<16x128xf32>,
    %c0_i32_7 = arith.constant 0 : i32
    %12 = arith.cmpi eq, %arg2, %c0_i32_7 : i32
    %13 = arith.extui %12 : i1 to i32
    %c0_i32_8 = arith.constant 0 : i32
    %14 = arith.cmpi ne, %13, %c0_i32_8 : i32
    scf.if %14 {
      %c0_9 = arith.constant 0 : index
      %c0_10 = arith.constant 0 : index
      %15 = vector.load %arg7[%c0_9, %c0_10] : memref<16x128xf32, #tpu.memory_space<vmem>>, vector<16x128xf32>
      %c0_11 = arith.constant 0 : index
      %c0_12 = arith.constant 0 : index
      %16 = vector.load %arg5[%c0_11, %c0_12] : memref<1x128xf32, #tpu.memory_space<vmem>>, vector<1x128xf32>
      %17 = vector.broadcast %16 : vector<1x128xf32> to vector<16x128xf32>
      %18 = arith.addf %15, %17 : vector<16x128xf32>
      %c0_13 = arith.constant 0 : index
      %c0_14 = arith.constant 0 : index
      %19 = vector.load %arg6[%c0_13, %c0_14] : memref<16x128xf32, #tpu.memory_space<vmem>>, vector<16x128xf32>
      tpu.vector_store %arg6[%c0_13, %c0_14], %18 {strides = array<i32>} : memref<16x128xf32, #tpu.memory_space<vmem>>, vector<16x128xf32>,
    } else {
    }
    return
  }
  func.func @transform_0(%arg0: i32, %arg1: i32, %arg2: i32) -> (i32, i32) {
    %c0_i32 = arith.constant 0 : i32
    return %arg0, %arg2 : i32, i32
  }
  func.func @transform_1(%arg0: i32, %arg1: i32, %arg2: i32) -> (i32, i32) {
    %c0_i32 = arith.constant 0 : i32
    %c0_i32_0 = arith.constant 0 : i32
    return %c0_i32, %arg1 : i32, i32
  }
  func.func @transform_2(%arg0: i32, %arg1: i32, %arg2: i32) -> (i32, i32) {
    %c0_i32 = arith.constant 0 : i32
    %c0_i32_0 = arith.constant 0 : i32
    return %c0_i32, %arg1 : i32, i32
  }
  func.func @transform_3(%arg0: i32, %arg1: i32, %arg2: i32) -> (i32, i32) {
    %c0_i32 = arith.constant 0 : i32
    return %arg0, %arg1 : i32, i32
  }
}

</mosaic_0001>

<llo_original>
// kernel: _lambda_.8
$region0: #{_lambda_.8}
  #allocation0 [shape = 'u32[]', space=smem, size = 0x4, offset = 0x4, fixed_abs, tag = 'smem constant byte address 0x4 - core index']
  #allocation1 [shape = 'u32[144,128]{1,0:T(1,128)}', space=vmem, size = 0x12000, scoped, tag = 'internal scratch']
  #allocation2 [shape = 'f32[512,4]{1,0:T(8,128)}', space=vmem, size = 0x40000, scoped, tag = 'scratch operand']
  %s0 = inlined_call_operand.hbm [shape: bf16[8192,64], index: 0, kind: input, shape index: {}]
  %s1 = inlined_call_operand.vmem [shape: bf16[64,4], index: 1, kind: input, shape index: {}]
  %s2 = inlined_call_operand.vmem [shape: f32[1,4], index: 2, kind: input, shape index: {}]
  %s3 = inlined_call_operand.vmem [shape: bf16[8192,4], index: 3, kind: output, shape index: {}]
  %s4 = sld [smem:[#allocation0]]
  $region57: #{_lambda_.8} parent=0
    _
  %s6 = ssub.s32 1, %s4
  %s7 = scalar_select 0, %s6, %s4
  $region1: #{_lambda_.8} parent=0
    #allocation3 [shape = 'u8[262144]{0}', space=vmem, size = 0x40000, scoped, tag = 'input window, operand 0']
    #allocation4 [shape = 's32[2]{0}', space=sflag, size = 0x8, scoped, tag = 'scoped memory for _lambda_.8']
    %8 = vsyncpa [#allocation4], 0
    %s9 = scalar_lea.sflag [#allocation4], 1
    %10 = vsyncpa %s9, 0
    loop: start=0, step=1, limit=18
    $region2: #{_lambda_.8} parent=1 // loop_pre_header
      _
    $region3: #{_lambda_.8} parent=1 // loop_header
      %s12 = sphi 0, %s16
      %p13 = scmp.ge.s32.totalorder %s12, 18
      %s19 = sphi 0, %s38
      %s20 = sphi 0, %s34
      %s21 = sphi 0, %s30
      %s22 = sphi 0, %s19
      %s23 = sphi 0, %s20
      %s24 = sphi 0, %s21
      %s25 = sphi 0, %s22
      %s26 = sphi 0, %s23
      %s27 = sphi 0, %s24
      %s43 = sphi 0, %s45
      %s46 = sphi 0, %s43
      %s47 = sphi 0, %s46
      %s63 = sphi 0, %s47
      %s69 = sphi 0, %s71
      %s72 = sphi 0, %s69
      %s73 = sphi 0, %s72
      %s89 = sphi 0, %s73
      %s95 = sphi 0, %s97
      %s98 = sphi 0, %s95
      %s99 = sphi 0, %s98
      %s115 = sphi 0, %s99
      %s123 = sphi 0, %s125
      %s126 = sphi 0, %s123
      %s127 = sphi 0, %s126
      %s143 = sphi 0, %s127
    $region4: #{_lambda_.8} parent=1 // loop_header_branch
      %15 = sbr.rel (%p13) target = $region8
    $region5: #{_lambda_.8} parent=1 // loop_body
      %s17 = ssub.s32 %s12, 1
      %s18 = ssub.s32 %s12, 2
      %s28 = sadd.s32 1, %s21
      %p29 = scmp.ge.s32.totalorder %s28, 1
      %s30 = scalar_select %p29, 0, %s28
      %s31 = sadd.s32 1, %s20
      %s32 = scalar_select %p29, %s31, %s20
      %p33 = scmp.ge.s32.totalorder %s32, 1
      %s34 = scalar_select %p33, 0, %s32
      %s35 = sadd.s32 1, %s19
      %s36 = scalar_select %p33, %s35, %s19
      %p37 = scmp.ge.s32.totalorder %s36, 16
      %s38 = scalar_select %p37, 0, %s36
      %s39 = ssub.s32 %s19, %s38
      %s40 = ssub.s32 %s21, %s30
      %s41 = sor.u32 %s39, %s40
      %p42 = scmp.eq.s32.totalorder %s41, 0
      %s44 = sadd.s32 %s43, 1
      %s45 = scalar_select %p42, %s43, %s44
      %p48 = pneg %p42
      %p49 = scmp.eq.s32.totalorder %s12, 15
      %p50 = por %p48, %p49
      %p51 = scmp.ne.s32.totalorder %s43, %s46
      %p52 = scmp.eq.s32.totalorder %s12, 0
      %p53 = por %p51, %p52
      %p54 = scmp.ne.s32.totalorder %s43, %s46
      %p55 = scmp.eq.s32.totalorder %s17, 15
      %p56 = por %p54, %p55
      %p57 = scmp.ne.s32.totalorder %s46, %s47
      %p58 = scmp.eq.s32.totalorder %s17, 0
      %p59 = por %p57, %p58
      %p60 = scmp.ne.s32.totalorder %s46, %s47
      %p61 = scmp.eq.s32.totalorder %s18, 15
      %p62 = por %p60, %p61
      %p64 = scmp.ne.s32.totalorder %s47, %s63
      %p65 = scmp.eq.s32.totalorder %s18, 0
      %p66 = por %p64, %p65
      %s67 = ssub.s32 %s20, %s34
      %p68 = scmp.eq.s32.totalorder %s67, 0
      %s70 = sadd.s32 %s69, 1
      %s71 = scalar_select %p68, %s69, %s70
      %p74 = pneg %p68
      %p75 = scmp.eq.s32.totalorder %s12, 15
      %p76 = por %p74, %p75
      %p77 = scmp.ne.s32.totalorder %s69, %s72
      %p78 = scmp.eq.s32.totalorder %s12, 0
      %p79 = por %p77, %p78
      %p80 = scmp.ne.s32.totalorder %s69, %s72
      %p81 = scmp.eq.s32.totalorder %s17, 15
      %p82 = por %p80, %p81
      %p83 = scmp.ne.s32.totalorder %s72, %s73
      %p84 = scmp.eq.s32.totalorder %s17, 0
      %p85 = por %p83, %p84
      %p86 = scmp.ne.s32.totalorder %s72, %s73
      %p87 = scmp.eq.s32.totalorder %s18, 15
      %p88 = por %p86, %p87
      %p90 = scmp.ne.s32.totalorder %s73, %s89
      %p91 = scmp.eq.s32.totalorder %s18, 0
      %p92 = por %p90, %p91
      %s93 = ssub.s32 %s20, %s34
      %p94 = scmp.eq.s32.totalorder %s93, 0
      %s96 = sadd.s32 %s95, 1
      %s97 = scalar_select %p94, %s95, %s96
      %p100 = pneg %p94
      %p101 = scmp.eq.s32.totalorder %s12, 15
      %p102 = por %p100, %p101
      %p103 = scmp.ne.s32.totalorder %s95, %s98
      %p104 = scmp.eq.s32.totalorder %s12, 0
      %p105 = por %p103, %p104
      %p106 = scmp.ne.s32.totalorder %s95, %s98
      %p107 = scmp.eq.s32.totalorder %s17, 15
      %p108 = por %p106, %p107
      %p109 = scmp.ne.s32.totalorder %s98, %s99
      %p110 = scmp.eq.s32.totalorder %s17, 0
      %p111 = por %p109, %p110
      %p112 = scmp.ne.s32.totalorder %s98, %s99
      %p113 = scmp.eq.s32.totalorder %s18, 15
      %p114 = por %p112, %p113
      %p116 = scmp.ne.s32.totalorder %s99, %s115
      %p117 = scmp.eq.s32.totalorder %s18, 0
      %p118 = por %p116, %p117
      %s119 = ssub.s32 %s19, %s38
      %s120 = ssub.s32 %s20, %s34
      %s121 = sor.u32 %s119, %s120
      %p122 = scmp.eq.s32.totalorder %s121, 0
      %s124 = sadd.s32 %s123, 1
      %s125 = scalar_select %p122, %s123, %s124
      %p128 = pneg %p122
      %p129 = scmp.eq.s32.totalorder %s12, 15
      %p130 = por %p128, %p129
      %p131 = scmp.ne.s32.totalorder %s123, %s126
      %p132 = scmp.eq.s32.totalorder %s12, 0
      %p133 = por %p131, %p132
      %p134 = scmp.ne.s32.totalorder %s123, %s126
      %p135 = scmp.eq.s32.totalorder %s17, 15
      %p136 = por %p134, %p135
      %p137 = scmp.ne.s32.totalorder %s126, %s127
      %p138 = scmp.eq.s32.totalorder %s17, 0
      %p139 = por %p137, %p138
      %p140 = scmp.ne.s32.totalorder %s126, %s127
      %p141 = scmp.eq.s32.totalorder %s18, 15
      %p142 = por %p140, %p141
      %p144 = scmp.ne.s32.totalorder %s127, %s143
      %p145 = scmp.eq.s32.totalorder %s18, 0
      %p146 = por %p144, %p145
      %p147 = scmp.le.s32.totalorder 1, %s12
      %p148 = scmp.lt.s32.totalorder %s12, 17
      %p149 = pnand %p147, %p148
      %p150 = pneg %p149
      // Predicated region
      $region9: #{_lambda_.8} parent=5 // pred_check
        _
      $region10: #{_lambda_.8} parent=5 // pred_check_branch
        %152 = sbr.rel (%p149) target = $region12
      $region11: #{_lambda_.8} parent=5 // pred_region
        %s153 = ssub.s32 %s12, 1
        // Predicated region
        $region13: #{_lambda_.8} parent=11 // pred_check
          %p154 = pneg %p85
        $region14: #{_lambda_.8} parent=11 // pred_check_branch
          %156 = sbr.rel (%p154) target = $region16
        $region15: #{_lambda_.8} parent=11 // pred_region
          %p157 = scmp.lt.s32.totalorder %s23, 0
          %s158 = scalar_select %p157, %s23, 0
          %s159 = smul.addr %s158, 4
          %s160 = scalar_lea.vmem %s1, %s159
        $region16: #{_lambda_.8} parent=11 // pred_fallthru
          _
        // Predicated region
        $region17: #{_lambda_.8} parent=11 // pred_check
          %p161 = pneg %p111
        $region18: #{_lambda_.8} parent=11 // pred_check_branch
          %163 = sbr.rel (%p161) target = $region20
        $region19: #{_lambda_.8} parent=11 // pred_region
          %p164 = scmp.lt.s32.totalorder %s23, 0
          %s165 = scalar_select %p164, %s23, 0
          %s166 = scalar_lea.vmem %s2, %s165
        $region20: #{_lambda_.8} parent=11 // pred_fallthru
          _
      $region12: #{_lambda_.8} parent=5 // pred_fallthru
        _
      %p167 = scmp.lt.s32.totalorder %s12, 16
      // Predicated region
      $region21: #{_lambda_.8} parent=5 // pred_check
        %p168 = pneg %p167
      $region22: #{_lambda_.8} parent=5 // pred_check_branch
        %170 = sbr.rel (%p168) target = $region24
      $region23: #{_lambda_.8} parent=5 // pred_region
        // Predicated region
        $region25: #{_lambda_.8} parent=23 // pred_check
          %p171 = pneg %p53
        $region26: #{_lambda_.8} parent=23 // pred_check_branch
          %173 = sbr.rel (%p171) target = $region28
        $region27: #{_lambda_.8} parent=23 // pred_region
          %s174 = sand.u32 %s43, 1
          %s175 = scalar_lea.sflag [#allocation4], %s174
          %s176 = sand.u32 %s43, 1
          %s177 = smul.addr %s176, 256
          %s178 = scalar_lea.vmem [#allocation3], %s177
          %s179 = smul.u32 64, %s19
          %s181 = ssub.s32 4096, 4096
          %182 = vsyncadd %s175, %s181
          %s183 = sadd.s32 %s21, %s179
          %s184 = smul.addr %s183, 64
          %s185 = scalar_lea.hbm %s0, %s184
          %s186 = sshll.u32 %s178, 4
          %s187 = int_to_ptr.vmem [resolvable:$true] %s186
          %192 = dma.hbm_to_vmem [thread:$0]  %s185, 4096, %s187, %s175, 64, 64, 4
        $region28: #{_lambda_.8} parent=23 // pred_fallthru
          _
      $region24: #{_lambda_.8} parent=5 // pred_fallthru
        _
      %p193 = scmp.le.s32.totalorder 1, %s12
      %p194 = scmp.lt.s32.totalorder %s12, 17
      %p195 = pnand %p193, %p194
      %p196 = pneg %p195
      // Predicated region
      $region29: #{_lambda_.8} parent=5 // pred_check
        _
      $region30: #{_lambda_.8} parent=5 // pred_check_branch
        %198 = sbr.rel (%p195) target = $region32
      $region31: #{_lambda_.8} parent=5 // pred_region
        %s199 = ssub.s32 %s12, 1
        %s200 = sand.u32 %s46, 1
        %s201 = scalar_lea.sflag [#allocation4], %s200
        %s202 = sand.u32 %s46, 1
        %s203 = smul.addr %s202, 256
        %s204 = scalar_lea.vmem [#allocation3], %s203
        // Predicated region
        $region33: #{_lambda_.8} parent=31 // pred_check
          %p205 = pneg %p59
        $region34: #{_lambda_.8} parent=31 // pred_check_branch
          %207 = sbr.rel (%p205) target = $region36
        $region35: #{_lambda_.8} parent=31 // pred_region
          %208 = dma.done %s201, 4096
        $region36: #{_lambda_.8} parent=31 // pred_fallthru
          _
        %s209 = sand.u32 %s46, 1
        %s210 = scalar_lea.sflag [#allocation4], %s209
        %s211 = sand.u32 %s46, 1
        %s212 = smul.addr %s211, 256
        %s213 = scalar_lea.vmem [#allocation3], %s212
        %p214 = pneg %p59
        %p215 = pneg %p56
        %p216 = scmp.lt.s32.totalorder %s23, 0
        %s217 = scalar_select %p216, %s23, 0
        %s218 = smul.addr %s217, 4
        %s219 = scalar_lea.vmem %s1, %s218
        %p220 = pneg %p85
        %p221 = pneg %p82
        %p222 = scmp.lt.s32.totalorder %s23, 0
        %s223 = scalar_select %p222, %s23, 0
        %s224 = scalar_lea.vmem %s2, %s223
        %p225 = pneg %p111
        %p226 = pneg %p108
        %p227 = pneg %p139
        %p228 = pneg %p136
        %s229 = smul.u32 64, %s22
        %p230 = scmp.lt.s32.totalorder %s229, 1023
        %s231 = scalar_select %p230, %s229, 1023
        %p232 = scmp.lt.s32.totalorder %s23, 0
        %s233 = scalar_select %p232, %s23, 0
        %s234 = sadd.s32 %s233, %s231
        %s235 = smul.addr %s234, 4
        %s236 = scalar_lea.vmem %s3, %s235
        %s237 = smul.u32 64, %s22
        %p238 = scmp.lt.s32.totalorder %s23, 0
        %s239 = scalar_select %p238, %s23, 0
        %s240 = smul.addr %s239, 4
        %s241 = scalar_lea.vmem %s1, %s240
        %p242 = scmp.lt.s32.totalorder %s23, 0
        %s243 = scalar_select %p242, %s23, 0
        %s244 = scalar_lea.vmem %s2, %s243
        %s245 = smul.u32 64, %s22
        %p246 = scmp.lt.s32.totalorder %s245, 1023
        %s247 = scalar_select %p246, %s245, 1023
        %p248 = scmp.lt.s32.totalorder %s23, 0
        %s249 = scalar_select %p248, %s23, 0
        %s250 = sadd.s32 %s249, %s247
        %s251 = smul.addr %s250, 4
        %s252 = scalar_lea.vmem %s3, %s251
        %s253 = smul.u32 64, %s22
        %p255 = scmp.eq.s32.totalorder %s24, 0
        // Predicated region
        $region37: #{_lambda_.8} parent=31 // pred_check
          %p256 = pneg %p255
        $region38: #{_lambda_.8} parent=31 // pred_check_branch
          %258 = sbr.rel (%p256) target = $region40
        $region39: #{_lambda_.8} parent=31 // pred_region
          %vm259 = vcmask 31744
          %260 = vst.msk [vmem:[#allocation2] sm:$0xff] %vm259, 0.0
          %261 = vst.msk [vmem:[#allocation2 + $0x8] sm:$0xff] %vm259, 0.0
          %262 = vst.msk [vmem:[#allocation2 + $0x10] sm:$0xff] %vm259, 0.0
          %263 = vst.msk [vmem:[#allocation2 + $0x18] sm:$0xff] %vm259, 0.0
          %264 = vst.msk [vmem:[#allocation2 + $0x20] sm:$0xff] %vm259, 0.0
          %265 = vst.msk [vmem:[#allocation2 + $0x28] sm:$0xff] %vm259, 0.0
          %266 = vst.msk [vmem:[#allocation2 + $0x30] sm:$0xff] %vm259, 0.0
          %267 = vst.msk [vmem:[#allocation2 + $0x38] sm:$0xff] %vm259, 0.0
          %268 = vst.msk [vmem:[#allocation2 + $0x40] sm:$0xff] %vm259, 0.0
          %269 = vst.msk [vmem:[#allocation2 + $0x48] sm:$0xff] %vm259, 0.0
          %270 = vst.msk [vmem:[#allocation2 + $0x50] sm:$0xff] %vm259, 0.0
          %271 = vst.msk [vmem:[#allocation2 + $0x58] sm:$0xff] %vm259, 0.0
          %272 = vst.msk [vmem:[#allocation2 + $0x60] sm:$0xff] %vm259, 0.0
          %273 = vst.msk [vmem:[#allocation2 + $0x68] sm:$0xff] %vm259, 0.0
          %274 = vst.msk [vmem:[#allocation2 + $0x70] sm:$0xff] %vm259, 0.0
          %275 = vst.msk [vmem:[#allocation2 + $0x78] sm:$0xff] %vm259, 0.0
          %276 = vst.msk [vmem:[#allocation2 + $0x80] sm:$0xff] %vm259, 0.0
          %277 = vst.msk [vmem:[#allocation2 + $0x88] sm:$0xff] %vm259, 0.0
          %278 = vst.msk [vmem:[#allocation2 + $0x90] sm:$0xff] %vm259, 0.0
          %279 = vst.msk [vmem:[#allocation2 + $0x98] sm:$0xff] %vm259, 0.0
          %280 = vst.msk [vmem:[#allocation2 + $0xa0] sm:$0xff] %vm259, 0.0
          %281 = vst.msk [vmem:[#allocation2 + $0xa8] sm:$0xff] %vm259, 0.0
          %282 = vst.msk [vmem:[#allocation2 + $0xb0] sm:$0xff] %vm259, 0.0
          %283 = vst.msk [vmem:[#allocation2 + $0xb8] sm:$0xff] %vm259, 0.0
          %284 = vst.msk [vmem:[#allocation2 + $0xc0] sm:$0xff] %vm259, 0.0
          %285 = vst.msk [vmem:[#allocation2 + $0xc8] sm:$0xff] %vm259, 0.0
          %286 = vst.msk [vmem:[#allocation2 + $0xd0] sm:$0xff] %vm259, 0.0
          %287 = vst.msk [vmem:[#allocation2 + $0xd8] sm:$0xff] %vm259, 0.0
          %288 = vst.msk [vmem:[#allocation2 + $0xe0] sm:$0xff] %vm259, 0.0
          %289 = vst.msk [vmem:[#allocation2 + $0xe8] sm:$0xff] %vm259, 0.0
          %290 = vst.msk [vmem:[#allocation2 + $0xf0] sm:$0xff] %vm259, 0.0
          %291 = vst.msk [vmem:[#allocation2 + $0xf8] sm:$0xff] %vm259, 0.0
          %292 = vst.msk [vmem:[#allocation2 + $0x100] sm:$0xff] %vm259, 0.0
          %293 = vst.msk [vmem:[#allocation2 + $0x108] sm:$0xff] %vm259, 0.0
          %294 = vst.msk [vmem:[#allocation2 + $0x110] sm:$0xff] %vm259, 0.0
          %295 = vst.msk [vmem:[#allocation2 + $0x118] sm:$0xff] %vm259, 0.0
          %296 = vst.msk [vmem:[#allocation2 + $0x120] sm:$0xff] %vm259, 0.0
          %297 = vst.msk [vmem:[#allocation2 + $0x128] sm:$0xff] %vm259, 0.0
          %298 = vst.msk [vmem:[#allocation2 + $0x130] sm:$0xff] %vm259, 0.0
          %299 = vst.msk [vmem:[#allocation2 + $0x138] sm:$0xff] %vm259, 0.0
          %300 = vst.msk [vmem:[#allocation2 + $0x140] sm:$0xff] %vm259, 0.0
          %301 = vst.msk [vmem:[#allocation2 + $0x148] sm:$0xff] %vm259, 0.0
          %302 = vst.msk [vmem:[#allocation2 + $0x150] sm:$0xff] %vm259, 0.0
          %303 = vst.msk [vmem:[#allocation2 + $0x158] sm:$0xff] %vm259, 0.0
          %304 = vst.msk [vmem:[#allocation2 + $0x160] sm:$0xff] %vm259, 0.0
          %305 = vst.msk [vmem:[#allocation2 + $0x168] sm:$0xff] %vm259, 0.0
          %306 = vst.msk [vmem:[#allocation2 + $0x170] sm:$0xff] %vm259, 0.0
          %307 = vst.msk [vmem:[#allocation2 + $0x178] sm:$0xff] %vm259, 0.0
          %308 = vst.msk [vmem:[#allocation2 + $0x180] sm:$0xff] %vm259, 0.0
          %309 = vst.msk [vmem:[#allocation2 + $0x188] sm:$0xff] %vm259, 0.0
          %310 = vst.msk [vmem:[#allocation2 + $0x190] sm:$0xff] %vm259, 0.0
          %311 = vst.msk [vmem:[#allocation2 + $0x198] sm:$0xff] %vm259, 0.0
          %312 = vst.msk [vmem:[#allocation2 + $0x1a0] sm:$0xff] %vm259, 0.0
          %313 = vst.msk [vmem:[#allocation2 + $0x1a8] sm:$0xff] %vm259, 0.0
          %314 = vst.msk [vmem:[#allocation2 + $0x1b0] sm:$0xff] %vm259, 0.0
          %315 = vst.msk [vmem:[#allocation2 + $0x1b8] sm:$0xff] %vm259, 0.0
          %316 = vst.msk [vmem:[#allocation2 + $0x1c0] sm:$0xff] %vm259, 0.0
          %317 = vst.msk [vmem:[#allocation2 + $0x1c8] sm:$0xff] %vm259, 0.0
          %318 = vst.msk [vmem:[#allocation2 + $0x1d0] sm:$0xff] %vm259, 0.0
          %319 = vst.msk [vmem:[#allocation2 + $0x1d8] sm:$0xff] %vm259, 0.0
          %320 = vst.msk [vmem:[#allocation2 + $0x1e0] sm:$0xff] %vm259, 0.0
          %321 = vst.msk [vmem:[#allocation2 + $0x1e8] sm:$0xff] %vm259, 0.0
          %322 = vst.msk [vmem:[#allocation2 + $0x1f0] sm:$0xff] %vm259, 0.0
          %323 = vst.msk [vmem:[#allocation2 + $0x1f8] sm:$0xff] %vm259, 0.0
        $region40: #{_lambda_.8} parent=31 // pred_fallthru
          _
        %s324 = smul.u32 %s24, 64
        %s325 = sshra.s32 %s324, 3
        %s326 = sand.u32 %s324, 7
        %s327 = smul.addr %s325, 4
        %s328 = scalar_lea.vmem %s241, %s327
        %v329 = vld [vmem:[%s328] sm:$0xf]
        %v330 = vld [vmem:[%s328 + $0x4] sm:$0xf]
        %v331 = vld [vmem:[%s328 + $0x8] sm:$0xf]
        %v332 = vld [vmem:[%s328 + $0xc] sm:$0xf]
        %v333 = vld [vmem:[%s328 + $0x10] sm:$0xf]
        %v334 = vld [vmem:[%s328 + $0x14] sm:$0xf]
        %v335 = vld [vmem:[%s328 + $0x18] sm:$0xf]
        %v336 = vld [vmem:[%s328 + $0x1c] sm:$0xf]
        %v337 = vld [vmem:[#allocation2] sm:$0xff]
        %v338 = vld [vmem:[#allocation2 + $0x8] sm:$0xff]
        %v339 = vld [vmem:[#allocation2 + $0x10] sm:$0xff]
        %v340 = vld [vmem:[#allocation2 + $0x18] sm:$0xff]
        %v341 = vld [vmem:[#allocation2 + $0x20] sm:$0xff]
        %v342 = vld [vmem:[#allocation2 + $0x28] sm:$0xff]
        %v343 = vld [vmem:[#allocation2 + $0x30] sm:$0xff]
        %v344 = vld [vmem:[#allocation2 + $0x38] sm:$0xff]
        %v345 = vld [vmem:[#allocation2 + $0x40] sm:$0xff]
        %v346 = vld [vmem:[#allocation2 + $0x48] sm:$0xff]
        %v347 = vld [vmem:[#allocation2 + $0x50] sm:$0xff]
        %v348 = vld [vmem:[#allocation2 + $0x58] sm:$0xff]
        %v349 = vld [vmem:[#allocation2 + $0x60] sm:$0xff]
        %v350 = vld [vmem:[#allocation2 + $0x68] sm:$0xff]
        %v351 = vld [vmem:[#allocation2 + $0x70] sm:$0xff]
        %v352 = vld [vmem:[#allocation2 + $0x78] sm:$0xff]
        %v353 = vld [vmem:[#allocation2 + $0x80] sm:$0xff]
        %v354 = vld [vmem:[#allocation2 + $0x88] sm:$0xff]
        %v355 = vld [vmem:[#allocation2 + $0x90] sm:$0xff]
        %v356 = vld [vmem:[#allocation2 + $0x98] sm:$0xff]
        %v357 = vld [vmem:[#allocation2 + $0xa0] sm:$0xff]
        %v358 = vld [vmem:[#allocation2 + $0xa8] sm:$0xff]
        %v359 = vld [vmem:[#allocation2 + $0xb0] sm:$0xff]
        %v360 = vld [vmem:[#allocation2 + $0xb8] sm:$0xff]
        %v361 = vld [vmem:[#allocation2 + $0xc0] sm:$0xff]
        %v362 = vld [vmem:[#allocation2 + $0xc8] sm:$0xff]
        %v363 = vld [vmem:[#allocation2 + $0xd0] sm:$0xff]
        %v364 = vld [vmem:[#allocation2 + $0xd8] sm:$0xff]
        %v365 = vld [vmem:[#allocation2 + $0xe0] sm:$0xff]
        %v366 = vld [vmem:[#allocation2 + $0xe8] sm:$0xff]
        %v367 = vld [vmem:[#allocation2 + $0xf0] sm:$0xff]
        %v368 = vld [vmem:[#allocation2 + $0xf8] sm:$0xff]
        %v369 = vld [vmem:[#allocation2 + $0x100] sm:$0xff]
        %v370 = vld [vmem:[#allocation2 + $0x108] sm:$0xff]
        %v371 = vld [vmem:[#allocation2 + $0x110] sm:$0xff]
        %v372 = vld [vmem:[#allocation2 + $0x118] sm:$0xff]
        %v373 = vld [vmem:[#allocation2 + $0x120] sm:$0xff]
        %v374 = vld [vmem:[#allocation2 + $0x128] sm:$0xff]
        %v375 = vld [vmem:[#allocation2 + $0x130] sm:$0xff]
        %v376 = vld [vmem:[#allocation2 + $0x138] sm:$0xff]
        %v377 = vld [vmem:[#allocation2 + $0x140] sm:$0xff]
        %v378 = vld [vmem:[#allocation2 + $0x148] sm:$0xff]
        %v379 = vld [vmem:[#allocation2 + $0x150] sm:$0xff]
        %v380 = vld [vmem:[#allocation2 + $0x158] sm:$0xff]
        %v381 = vld [vmem:[#allocation2 + $0x160] sm:$0xff]
        %v382 = vld [vmem:[#allocation2 + $0x168] sm:$0xff]
        %v383 = vld [vmem:[#allocation2 + $0x170] sm:$0xff]
        %v384 = vld [vmem:[#allocation2 + $0x178] sm:$0xff]
        %v385 = vld [vmem:[#allocation2 + $0x180] sm:$0xff]
        %v386 = vld [vmem:[#allocation2 + $0x188] sm:$0xff]
        %v387 = vld [vmem:[#allocation2 + $0x190] sm:$0xff]
        %v388 = vld [vmem:[#allocation2 + $0x198] sm:$0xff]
        %v389 = vld [vmem:[#allocation2 + $0x1a0] sm:$0xff]
        %v390 = vld [vmem:[#allocation2 + $0x1a8] sm:$0xff]
        %v391 = vld [vmem:[#allocation2 + $0x1b0] sm:$0xff]
        %v392 = vld [vmem:[#allocation2 + $0x1b8] sm:$0xff]
        %v393 = vld [vmem:[#allocation2 + $0x1c0] sm:$0xff]
        %v394 = vld [vmem:[#allocation2 + $0x1c8] sm:$0xff]
        %v395 = vld [vmem:[#allocation2 + $0x1d0] sm:$0xff]
        %v396 = vld [vmem:[#allocation2 + $0x1d8] sm:$0xff]
        %v397 = vld [vmem:[#allocation2 + $0x1e0] sm:$0xff]
        %v398 = vld [vmem:[#allocation2 + $0x1e8] sm:$0xff]
        %v399 = vld [vmem:[#allocation2 + $0x1f0] sm:$0xff]
        %v400 = vld [vmem:[#allocation2 + $0x1f8] sm:$0xff]
        %v401 = vld [vmem:[%s204] sm:$0xf]
        %v402 = vld [vmem:[%s204 + $0x4] sm:$0xf]
        %v403 = vld [vmem:[%s204 + $0x8] sm:$0xf]
        %v404 = vld [vmem:[%s204 + $0xc] sm:$0xf]
        %v405 = vld [vmem:[%s204 + $0x10] sm:$0xf]
        %v406 = vld [vmem:[%s204 + $0x14] sm:$0xf]
        %v407 = vld [vmem:[%s204 + $0x18] sm:$0xf]
        %v408 = vld [vmem:[%s204 + $0x1c] sm:$0xf]
        %v409 = vld [vmem:[%s204 + $0x20] sm:$0xf]
        %v410 = vld [vmem:[%s204 + $0x24] sm:$0xf]
        %v411 = vld [vmem:[%s204 + $0x28] sm:$0xf]
        %v412 = vld [vmem:[%s204 + $0x2c] sm:$0xf]
        %v413 = vld [vmem:[%s204 + $0x30] sm:$0xf]
        %v414 = vld [vmem:[%s204 + $0x34] sm:$0xf]
        %v415 = vld [vmem:[%s204 + $0x38] sm:$0xf]
        %v416 = vld [vmem:[%s204 + $0x3c] sm:$0xf]
        %v417 = vld [vmem:[%s204 + $0x40] sm:$0xf]
        %v418 = vld [vmem:[%s204 + $0x44] sm:$0xf]
        %v419 = vld [vmem:[%s204 + $0x48] sm:$0xf]
        %v420 = vld [vmem:[%s204 + $0x4c] sm:$0xf]
        %v421 = vld [vmem:[%s204 + $0x50] sm:$0xf]
        %v422 = vld [vmem:[%s204 + $0x54] sm:$0xf]
        %v423 = vld [vmem:[%s204 + $0x58] sm:$0xf]
        %v424 = vld [vmem:[%s204 + $0x5c] sm:$0xf]
        %v425 = vld [vmem:[%s204 + $0x60] sm:$0xf]
        %v426 = vld [vmem:[%s204 + $0x64] sm:$0xf]
        %v427 = vld [vmem:[%s204 + $0x68] sm:$0xf]
        %v428 = vld [vmem:[%s204 + $0x6c] sm:$0xf]
        %v429 = vld [vmem:[%s204 + $0x70] sm:$0xf]
        %v430 = vld [vmem:[%s204 + $0x74] sm:$0xf]
        %v431 = vld [vmem:[%s204 + $0x78] sm:$0xf]
        %v432 = vld [vmem:[%s204 + $0x7c] sm:$0xf]
        %v433 = vld [vmem:[%s204 + $0x80] sm:$0xf]
        %v434 = vld [vmem:[%s204 + $0x84] sm:$0xf]
        %v435 = vld [vmem:[%s204 + $0x88] sm:$0xf]
        %v436 = vld [vmem:[%s204 + $0x8c] sm:$0xf]
        %v437 = vld [vmem:[%s204 + $0x90] sm:$0xf]
        %v438 = vld [vmem:[%s204 + $0x94] sm:$0xf]
        %v439 = vld [vmem:[%s204 + $0x98] sm:$0xf]
        %v440 = vld [vmem:[%s204 + $0x9c] sm:$0xf]
        %v441 = vld [vmem:[%s204 + $0xa0] sm:$0xf]
        %v442 = vld [vmem:[%s204 + $0xa4] sm:$0xf]
        %v443 = vld [vmem:[%s204 + $0xa8] sm:$0xf]
        %v444 = vld [vmem:[%s204 + $0xac] sm:$0xf]
        %v445 = vld [vmem:[%s204 + $0xb0] sm:$0xf]
        %v446 = vld [vmem:[%s204 + $0xb4] sm:$0xf]
        %v447 = vld [vmem:[%s204 + $0xb8] sm:$0xf]
        %v448 = vld [vmem:[%s204 + $0xbc] sm:$0xf]
        %v449 = vld [vmem:[%s204 + $0xc0] sm:$0xf]
        %v450 = vld [vmem:[%s204 + $0xc4] sm:$0xf]
        %v451 = vld [vmem:[%s204 + $0xc8] sm:$0xf]
        %v452 = vld [vmem:[%s204 + $0xcc] sm:$0xf]
        %v453 = vld [vmem:[%s204 + $0xd0] sm:$0xf]
        %v454 = vld [vmem:[%s204 + $0xd4] sm:$0xf]
        %v455 = vld [vmem:[%s204 + $0xd8] sm:$0xf]
        %v456 = vld [vmem:[%s204 + $0xdc] sm:$0xf]
        %v457 = vld [vmem:[%s204 + $0xe0] sm:$0xf]
        %v458 = vld [vmem:[%s204 + $0xe4] sm:$0xf]
        %v459 = vld [vmem:[%s204 + $0xe8] sm:$0xf]
        %v460 = vld [vmem:[%s204 + $0xec] sm:$0xf]
        %v461 = vld [vmem:[%s204 + $0xf0] sm:$0xf]
        %v462 = vld [vmem:[%s204 + $0xf4] sm:$0xf]
        %v463 = vld [vmem:[%s204 + $0xf8] sm:$0xf]
        %v464 = vld [vmem:[%s204 + $0xfc] sm:$0xf]
        %v529 = vunpack.c.l.b16 %v401
        %v530 = vunpack.c.l.b16 %v402
        %v531 = vunpack.c.l.b16 %v403
        %v532 = vunpack.c.l.b16 %v404
        %v533 = vunpack.c.l.b16 %v405
        %v534 = vunpack.c.l.b16 %v406
        %v535 = vunpack.c.l.b16 %v407
        %v536 = vunpack.c.l.b16 %v408
        %v537 = vunpack.c.l.b16 %v409
        %v538 = vunpack.c.l.b16 %v410
        %v539 = vunpack.c.l.b16 %v411
        %v540 = vunpack.c.l.b16 %v412
        %v541 = vunpack.c.l.b16 %v413
        %v542 = vunpack.c.l.b16 %v414
        %v543 = vunpack.c.l.b16 %v415
        %v544 = vunpack.c.l.b16 %v416
        %v545 = vunpack.c.l.b16 %v417
        %v546 = vunpack.c.l.b16 %v418
        %v547 = vunpack.c.l.b16 %v419
        %v548 = vunpack.c.l.b16 %v420
        %v549 = vunpack.c.l.b16 %v421
        %v550 = vunpack.c.l.b16 %v422
        %v551 = vunpack.c.l.b16 %v423
        %v552 = vunpack.c.l.b16 %v424
        %v553 = vunpack.c.l.b16 %v425
        %v554 = vunpack.c.l.b16 %v426
        %v555 = vunpack.c.l.b16 %v427
        %v556 = vunpack.c.l.b16 %v428
        %v557 = vunpack.c.l.b16 %v429
        %v558 = vunpack.c.l.b16 %v430
        %v559 = vunpack.c.l.b16 %v431
        %v560 = vunpack.c.l.b16 %v432
        %v561 = vunpack.c.l.b16 %v433
        %v562 = vunpack.c.l.b16 %v434
        %v563 = vunpack.c.l.b16 %v435
        %v564 = vunpack.c.l.b16 %v436
        %v565 = vunpack.c.l.b16 %v437
        %v566 = vunpack.c.l.b16 %v438
        %v567 = vunpack.c.l.b16 %v439
        %v568 = vunpack.c.l.b16 %v440
        %v569 = vunpack.c.l.b16 %v441
        %v570 = vunpack.c.l.b16 %v442
        %v571 = vunpack.c.l.b16 %v443
        %v572 = vunpack.c.l.b16 %v444
        %v573 = vunpack.c.l.b16 %v445
        %v574 = vunpack.c.l.b16 %v446
        %v575 = vunpack.c.l.b16 %v447
        %v576 = vunpack.c.l.b16 %v448
        %v577 = vunpack.c.l.b16 %v449
        %v578 = vunpack.c.l.b16 %v450
        %v579 = vunpack.c.l.b16 %v451
        %v580 = vunpack.c.l.b16 %v452
        %v581 = vunpack.c.l.b16 %v453
        %v582 = vunpack.c.l.b16 %v454
        %v583 = vunpack.c.l.b16 %v455
        %v584 = vunpack.c.l.b16 %v456
        %v585 = vunpack.c.l.b16 %v457
        %v586 = vunpack.c.l.b16 %v458
        %v587 = vunpack.c.l.b16 %v459
        %v588 = vunpack.c.l.b16 %v460
        %v589 = vunpack.c.l.b16 %v461
        %v590 = vunpack.c.l.b16 %v462
        %v591 = vunpack.c.l.b16 %v463
        %v592 = vunpack.c.l.b16 %v464
        %v593 = vpack.c.b16 %v530, %v529
        %v594 = vpack.c.b16 %v532, %v531
        %v595 = vpack.c.b16 %v534, %v533
        %v596 = vpack.c.b16 %v536, %v535
        %v597 = vpack.c.b16 %v538, %v537
        %v598 = vpack.c.b16 %v540, %v539
        %v599 = vpack.c.b16 %v542, %v541
        %v600 = vpack.c.b16 %v544, %v543
        %v601 = vpack.c.b16 %v546, %v545
        %v602 = vpack.c.b16 %v548, %v547
        %v603 = vpack.c.b16 %v550, %v549
        %v604 = vpack.c.b16 %v552, %v551
        %v605 = vpack.c.b16 %v554, %v553
        %v606 = vpack.c.b16 %v556, %v555
        %v607 = vpack.c.b16 %v558, %v557
        %v608 = vpack.c.b16 %v560, %v559
        %v609 = vpack.c.b16 %v562, %v561
        %v610 = vpack.c.b16 %v564, %v563
        %v611 = vpack.c.b16 %v566, %v565
        %v612 = vpack.c.b16 %v568, %v567
        %v613 = vpack.c.b16 %v570, %v569
        %v614 = vpack.c.b16 %v572, %v571
        %v615 = vpack.c.b16 %v574, %v573
        %v616 = vpack.c.b16 %v576, %v575
        %v617 = vpack.c.b16 %v578, %v577
        %v618 = vpack.c.b16 %v580, %v579
        %v619 = vpack.c.b16 %v582, %v581
        %v620 = vpack.c.b16 %v584, %v583
        %v621 = vpack.c.b16 %v586, %v585
        %v622 = vpack.c.b16 %v588, %v587
        %v623 = vpack.c.b16 %v590, %v589
        %v624 = vpack.c.b16 %v592, %v591
        %v633 = vunpack.c.l.b16 %v329
        %v634 = vunpack.c.l.b16 %v330
        %v635 = vunpack.c.l.b16 %v331
        %v636 = vunpack.c.l.b16 %v332
        %v637 = vunpack.c.l.b16 %v333
        %v638 = vunpack.c.l.b16 %v334
        %v639 = vunpack.c.l.b16 %v335
        %v640 = vunpack.c.l.b16 %v336
        %v641 = vpack.c.b16 %v634, %v633
        %v642 = vpack.c.b16 %v636, %v635
        %v643 = vpack.c.b16 %v638, %v637
        %v644 = vpack.c.b16 %v640, %v639
        %vm649 = vcmask 523264
        %v651 = vsel %vm649, %v593, 0
        %v654 = vsel %vm649, %v594, 0
        %v657 = vsel %vm649, %v595, 0
        %v660 = vsel %vm649, %v596, 0
        %v663 = vsel %vm649, %v597, 0
        %v666 = vsel %vm649, %v598, 0
        %v669 = vsel %vm649, %v599, 0
        %v672 = vsel %vm649, %v600, 0
        %v675 = vsel %vm649, %v601, 0
        %v678 = vsel %vm649, %v602, 0
        %v681 = vsel %vm649, %v603, 0
        %v684 = vsel %vm649, %v604, 0
        %v687 = vsel %vm649, %v605, 0
        %v690 = vsel %vm649, %v606, 0
        %v693 = vsel %vm649, %v607, 0
        %v696 = vsel %vm649, %v608, 0
        %v699 = vsel %vm649, %v609, 0
        %v702 = vsel %vm649, %v610, 0
        %v705 = vsel %vm649, %v611, 0
        %v708 = vsel %vm649, %v612, 0
        %v711 = vsel %vm649, %v613, 0
        %v714 = vsel %vm649, %v614, 0
        %v717 = vsel %vm649, %v615, 0
        %v720 = vsel %vm649, %v616, 0
        %v723 = vsel %vm649, %v617, 0
        %v726 = vsel %vm649, %v618, 0
        %v729 = vsel %vm649, %v619, 0
        %v732 = vsel %vm649, %v620, 0
        %v735 = vsel %vm649, %v621, 0
        %v738 = vsel %vm649, %v622, 0
        %v741 = vsel %vm649, %v623, 0
        %v744 = vsel %vm649, %v624, 0
        %746 = vmatprep.subr.bf16.mxu0 0
        %747 = vmatpush1.bf16.msra.mxu0 0
        %748 = vmatprep.subr.bf16.mxu0 0
        %749 = vmatpush1.bf16.msra.mxu0 0
        %750 = vmatprep.subr.bf16.mxu0 0
        %751 = vmatpush1.bf16.msra.mxu0 0
        %752 = vmatprep.subr.bf16.mxu0 0
        %753 = vmatpush1.bf16.msra.mxu0 0
        %754 = vmatprep.subr.bf16.mxu0 0
        %755 = vmatpush1.bf16.msra.mxu0 %v644
        %756 = vmatprep.subr.bf16.mxu0 0
        %757 = vmatpush1.bf16.msra.mxu0 %v643
        %758 = vmatprep.subr.bf16.mxu0 0
        %759 = vmatpush1.bf16.msra.mxu0 %v642
        %760 = vmatprep.subr.bf16.mxu0 0
        %761 = vmatpush1.bf16.msra.mxu0 %v641
        %762 = vmatprep.subr.bf16.mxu0 0
        %763 = vmatpush2.bf16.msra.mxu0 0
        %764 = vmatprep.subr.bf16.mxu0 0
        %765 = vmatpush2.bf16.msra.mxu0 0
        %766 = vmatprep.subr.bf16.mxu0 0
        %767 = vmatpush2.bf16.msra.mxu0 0
        %768 = vmatprep.subr.bf16.mxu0 0
        %769 = vmatpush2.bf16.msra.mxu0 0
        %770 = vmatprep.subr.bf16.mxu0 0
        %771 = vmatpush2.bf16.msra.mxu0 0
        %772 = vmatprep.subr.bf16.mxu0 0
        %773 = vmatpush2.bf16.msra.mxu0 0
        %774 = vmatprep.subr.bf16.mxu0 0
        %775 = vmatpush2.bf16.msra.mxu0 0
        %776 = vmatprep.subr.bf16.mxu0 0
        %777 = vmatpush2.bf16.msra.mxu0 0
        %778 = vmatprep.mubr.bf16.mxu0 0
        %779 = vmatmul.mubr.bf16.gmra.mxu0 %v651
        %v780 = vpop.f32.mrf.mxu0
        %v781 = vadd.f32 0.0, %v780
        %v782 = vpop.f32.mrf.mxu0
        %v783 = vpop.f32.mrf.mxu0
        %v784 = vadd.f32 0.0, %v783
        %v785 = vpop.f32.mrf.mxu0
        %786 = vmatprep.mubr.bf16.mxu0 0
        %787 = vmatmul.mubr.bf16.gmra.mxu0 %v654
        %v788 = vpop.f32.mrf.mxu0
        %v789 = vadd.f32 0.0, %v788
        %v790 = vpop.f32.mrf.mxu0
        %v791 = vpop.f32.mrf.mxu0
        %v792 = vadd.f32 0.0, %v791
        %v793 = vpop.f32.mrf.mxu0
        %794 = vmatprep.mubr.bf16.mxu0 0
        %795 = vmatmul.mubr.bf16.gmra.mxu0 %v657
        %v796 = vpop.f32.mrf.mxu0
        %v797 = vadd.f32 0.0, %v796
        %v798 = vpop.f32.mrf.mxu0
        %v799 = vpop.f32.mrf.mxu0
        %v800 = vadd.f32 0.0, %v799
        %v801 = vpop.f32.mrf.mxu0
        %802 = vmatprep.mubr.bf16.mxu0 0
        %803 = vmatmul.mubr.bf16.gmra.mxu0 %v660
        %v804 = vpop.f32.mrf.mxu0
        %v805 = vadd.f32 0.0, %v804
        %v806 = vpop.f32.mrf.mxu0
        %v807 = vpop.f32.mrf.mxu0
        %v808 = vadd.f32 0.0, %v807
        %v809 = vpop.f32.mrf.mxu0
        %810 = vmatprep.mubr.bf16.mxu0 0
        %811 = vmatmul.mubr.bf16.gmra.mxu0 %v663
        %v812 = vpop.f32.mrf.mxu0
        %v813 = vadd.f32 0.0, %v812
        %v814 = vpop.f32.mrf.mxu0
        %v815 = vpop.f32.mrf.mxu0
        %v816 = vadd.f32 0.0, %v815
        %v817 = vpop.f32.mrf.mxu0
        %818 = vmatprep.mubr.bf16.mxu0 0
        %819 = vmatmul.mubr.bf16.gmra.mxu0 %v666
        %v820 = vpop.f32.mrf.mxu0
        %v821 = vadd.f32 0.0, %v820
        %v822 = vpop.f32.mrf.mxu0
        %v823 = vpop.f32.mrf.mxu0
        %v824 = vadd.f32 0.0, %v823
        %v825 = vpop.f32.mrf.mxu0
        %826 = vmatprep.mubr.bf16.mxu0 0
        %827 = vmatmul.mubr.bf16.gmra.mxu0 %v669
        %v828 = vpop.f32.mrf.mxu0
        %v829 = vadd.f32 0.0, %v828
        %v830 = vpop.f32.mrf.mxu0
        %v831 = vpop.f32.mrf.mxu0
        %v832 = vadd.f32 0.0, %v831
        %v833 = vpop.f32.mrf.mxu0
        %834 = vmatprep.mubr.bf16.mxu0 0
        %835 = vmatmul.mubr.bf16.gmra.mxu0 %v672
        %v836 = vpop.f32.mrf.mxu0
        %v837 = vadd.f32 0.0, %v836
        %v838 = vpop.f32.mrf.mxu0
        %v839 = vpop.f32.mrf.mxu0
        %v840 = vadd.f32 0.0, %v839
        %v841 = vpop.f32.mrf.mxu0
        %842 = vmatprep.mubr.bf16.mxu0 0
        %843 = vmatmul.mubr.bf16.gmra.mxu0 %v675
        %v844 = vpop.f32.mrf.mxu0
        %v845 = vadd.f32 0.0, %v844
        %v846 = vpop.f32.mrf.mxu0
        %v847 = vpop.f32.mrf.mxu0
        %v848 = vadd.f32 0.0, %v847
        %v849 = vpop.f32.mrf.mxu0
        %850 = vmatprep.mubr.bf16.mxu0 0
        %851 = vmatmul.mubr.bf16.gmra.mxu0 %v678
        %v852 = vpop.f32.mrf.mxu0
        %v853 = vadd.f32 0.0, %v852
        %v854 = vpop.f32.mrf.mxu0
        %v855 = vpop.f32.mrf.mxu0
        %v856 = vadd.f32 0.0, %v855
        %v857 = vpop.f32.mrf.mxu0
        %858 = vmatprep.mubr.bf16.mxu0 0
        %859 = vmatmul.mubr.bf16.gmra.mxu0 %v681
        %v860 = vpop.f32.mrf.mxu0
        %v861 = vadd.f32 0.0, %v860
        %v862 = vpop.f32.mrf.mxu0
        %v863 = vpop.f32.mrf.mxu0
        %v864 = vadd.f32 0.0, %v863
        %v865 = vpop.f32.mrf.mxu0
        %866 = vmatprep.mubr.bf16.mxu0 0
        %867 = vmatmul.mubr.bf16.gmra.mxu0 %v684
        %v868 = vpop.f32.mrf.mxu0
        %v869 = vadd.f32 0.0, %v868
        %v870 = vpop.f32.mrf.mxu0
        %v871 = vpop.f32.mrf.mxu0
        %v872 = vadd.f32 0.0, %v871
        %v873 = vpop.f32.mrf.mxu0
        %874 = vmatprep.mubr.bf16.mxu0 0
        %875 = vmatmul.mubr.bf16.gmra.mxu0 %v687
        %v876 = vpop.f32.mrf.mxu0
        %v877 = vadd.f32 0.0, %v876
        %v878 = vpop.f32.mrf.mxu0
        %v879 = vpop.f32.mrf.mxu0
        %v880 = vadd.f32 0.0, %v879
        %v881 = vpop.f32.mrf.mxu0
        %882 = vmatprep.mubr.bf16.mxu0 0
        %883 = vmatmul.mubr.bf16.gmra.mxu0 %v690
        %v884 = vpop.f32.mrf.mxu0
        %v885 = vadd.f32 0.0, %v884
        %v886 = vpop.f32.mrf.mxu0
        %v887 = vpop.f32.mrf.mxu0
        %v888 = vadd.f32 0.0, %v887
        %v889 = vpop.f32.mrf.mxu0
        %890 = vmatprep.mubr.bf16.mxu0 0
        %891 = vmatmul.mubr.bf16.gmra.mxu0 %v693
        %v892 = vpop.f32.mrf.mxu0
        %v893 = vadd.f32 0.0, %v892
        %v894 = vpop.f32.mrf.mxu0
        %v895 = vpop.f32.mrf.mxu0
        %v896 = vadd.f32 0.0, %v895
        %v897 = vpop.f32.mrf.mxu0
        %898 = vmatprep.mubr.bf16.mxu0 0
        %899 = vmatmul.mubr.bf16.gmra.mxu0 %v696
        %v900 = vpop.f32.mrf.mxu0
        %v901 = vadd.f32 0.0, %v900
        %v902 = vpop.f32.mrf.mxu0
        %v903 = vpop.f32.mrf.mxu0
        %v904 = vadd.f32 0.0, %v903
        %v905 = vpop.f32.mrf.mxu0
        %906 = vmatprep.mubr.bf16.mxu0 0
        %907 = vmatmul.mubr.bf16.gmra.mxu0 %v699
        %v908 = vpop.f32.mrf.mxu0
        %v909 = vadd.f32 0.0, %v908
        %v910 = vpop.f32.mrf.mxu0
        %v911 = vpop.f32.mrf.mxu0
        %v912 = vadd.f32 0.0, %v911
        %v913 = vpop.f32.mrf.mxu0
        %914 = vmatprep.mubr.bf16.mxu0 0
        %915 = vmatmul.mubr.bf16.gmra.mxu0 %v702
        %v916 = vpop.f32.mrf.mxu0
        %v917 = vadd.f32 0.0, %v916
        %v918 = vpop.f32.mrf.mxu0
        %v919 = vpop.f32.mrf.mxu0
        %v920 = vadd.f32 0.0, %v919
        %v921 = vpop.f32.mrf.mxu0
        %922 = vmatprep.mubr.bf16.mxu0 0
        %923 = vmatmul.mubr.bf16.gmra.mxu0 %v705
        %v924 = vpop.f32.mrf.mxu0
        %v925 = vadd.f32 0.0, %v924
        %v926 = vpop.f32.mrf.mxu0
        %v927 = vpop.f32.mrf.mxu0
        %v928 = vadd.f32 0.0, %v927
        %v929 = vpop.f32.mrf.mxu0
        %930 = vmatprep.mubr.bf16.mxu0 0
        %931 = vmatmul.mubr.bf16.gmra.mxu0 %v708
        %v932 = vpop.f32.mrf.mxu0
        %v933 = vadd.f32 0.0, %v932
        %v934 = vpop.f32.mrf.mxu0
        %v935 = vpop.f32.mrf.mxu0
        %v936 = vadd.f32 0.0, %v935
        %v937 = vpop.f32.mrf.mxu0
        %938 = vmatprep.mubr.bf16.mxu0 0
        %939 = vmatmul.mubr.bf16.gmra.mxu0 %v711
        %v940 = vpop.f32.mrf.mxu0
        %v941 = vadd.f32 0.0, %v940
        %v942 = vpop.f32.mrf.mxu0
        %v943 = vpop.f32.mrf.mxu0
        %v944 = vadd.f32 0.0, %v943
        %v945 = vpop.f32.mrf.mxu0
        %946 = vmatprep.mubr.bf16.mxu0 0
        %947 = vmatmul.mubr.bf16.gmra.mxu0 %v714
        %v948 = vpop.f32.mrf.mxu0
        %v949 = vadd.f32 0.0, %v948
        %v950 = vpop.f32.mrf.mxu0
        %v951 = vpop.f32.mrf.mxu0
        %v952 = vadd.f32 0.0, %v951
        %v953 = vpop.f32.mrf.mxu0
        %954 = vmatprep.mubr.bf16.mxu0 0
        %955 = vmatmul.mubr.bf16.gmra.mxu0 %v717
        %v956 = vpop.f32.mrf.mxu0
        %v957 = vadd.f32 0.0, %v956
        %v958 = vpop.f32.mrf.mxu0
        %v959 = vpop.f32.mrf.mxu0
        %v960 = vadd.f32 0.0, %v959
        %v961 = vpop.f32.mrf.mxu0
        %962 = vmatprep.mubr.bf16.mxu0 0
        %963 = vmatmul.mubr.bf16.gmra.mxu0 %v720
        %v964 = vpop.f32.mrf.mxu0
        %v965 = vadd.f32 0.0, %v964
        %v966 = vpop.f32.mrf.mxu0
        %v967 = vpop.f32.mrf.mxu0
        %v968 = vadd.f32 0.0, %v967
        %v969 = vpop.f32.mrf.mxu0
        %970 = vmatprep.mubr.bf16.mxu0 0
        %971 = vmatmul.mubr.bf16.gmra.mxu0 %v723
        %v972 = vpop.f32.mrf.mxu0
        %v973 = vadd.f32 0.0, %v972
        %v974 = vpop.f32.mrf.mxu0
        %v975 = vpop.f32.mrf.mxu0
        %v976 = vadd.f32 0.0, %v975
        %v977 = vpop.f32.mrf.mxu0
        %978 = vmatprep.mubr.bf16.mxu0 0
        %979 = vmatmul.mubr.bf16.gmra.mxu0 %v726
        %v980 = vpop.f32.mrf.mxu0
        %v981 = vadd.f32 0.0, %v980
        %v982 = vpop.f32.mrf.mxu0
        %v983 = vpop.f32.mrf.mxu0
        %v984 = vadd.f32 0.0, %v983
        %v985 = vpop.f32.mrf.mxu0
        %986 = vmatprep.mubr.bf16.mxu0 0
        %987 = vmatmul.mubr.bf16.gmra.mxu0 %v729
        %v988 = vpop.f32.mrf.mxu0
        %v989 = vadd.f32 0.0, %v988
        %v990 = vpop.f32.mrf.mxu0
        %v991 = vpop.f32.mrf.mxu0
        %v992 = vadd.f32 0.0, %v991
        %v993 = vpop.f32.mrf.mxu0
        %994 = vmatprep.mubr.bf16.mxu0 0
        %995 = vmatmul.mubr.bf16.gmra.mxu0 %v732
        %v996 = vpop.f32.mrf.mxu0
        %v997 = vadd.f32 0.0, %v996
        %v998 = vpop.f32.mrf.mxu0
        %v999 = vpop.f32.mrf.mxu0
        %v1000 = vadd.f32 0.0, %v999
        %v1001 = vpop.f32.mrf.mxu0
        %1002 = vmatprep.mubr.bf16.mxu0 0
        %1003 = vmatmul.mubr.bf16.gmra.mxu0 %v735
        %v1004 = vpop.f32.mrf.mxu0
        %v1005 = vadd.f32 0.0, %v1004
        %v1006 = vpop.f32.mrf.mxu0
        %v1007 = vpop.f32.mrf.mxu0
        %v1008 = vadd.f32 0.0, %v1007
        %v1009 = vpop.f32.mrf.mxu0
        %1010 = vmatprep.mubr.bf16.mxu0 0
        %1011 = vmatmul.mubr.bf16.gmra.mxu0 %v738
        %v1012 = vpop.f32.mrf.mxu0
        %v1013 = vadd.f32 0.0, %v1012
        %v1014 = vpop.f32.mrf.mxu0
        %v1015 = vpop.f32.mrf.mxu0
        %v1016 = vadd.f32 0.0, %v1015
        %v1017 = vpop.f32.mrf.mxu0
        %1018 = vmatprep.mubr.bf16.mxu0 0
        %1019 = vmatmul.mubr.bf16.gmra.mxu0 %v741
        %v1020 = vpop.f32.mrf.mxu0
        %v1021 = vadd.f32 0.0, %v1020
        %v1022 = vpop.f32.mrf.mxu0
        %v1023 = vpop.f32.mrf.mxu0
        %v1024 = vadd.f32 0.0, %v1023
        %v1025 = vpop.f32.mrf.mxu0
        %1026 = vmatprep.mubr.bf16.mxu0 0
        %1027 = vmatmul.mubr.bf16.gmra.mxu0 %v744
        %v1028 = vpop.f32.mrf.mxu0
        %v1029 = vadd.f32 0.0, %v1028
        %v1030 = vpop.f32.mrf.mxu0
        %v1031 = vpop.f32.mrf.mxu0
        %v1032 = vadd.f32 0.0, %v1031
        %v1033 = vpop.f32.mrf.mxu0
        %1034 = vdwg.mxu0
        %v1035 = vadd.f32 %v337, %v781
        %v1036 = vadd.f32 %v338, %v784
        %v1037 = vadd.f32 %v339, %v789
        %v1038 = vadd.f32 %v340, %v792
        %v1039 = vadd.f32 %v341, %v797
        %v1040 = vadd.f32 %v342, %v800
        %v1041 = vadd.f32 %v343, %v805
        %v1042 = vadd.f32 %v344, %v808
        %v1043 = vadd.f32 %v345, %v813
        %v1044 = vadd.f32 %v346, %v816
        %v1045 = vadd.f32 %v347, %v821
        %v1046 = vadd.f32 %v348, %v824
        %v1047 = vadd.f32 %v349, %v829
        %v1048 = vadd.f32 %v350, %v832
        %v1049 = vadd.f32 %v351, %v837
        %v1050 = vadd.f32 %v352, %v840
        %v1051 = vadd.f32 %v353, %v845
        %v1052 = vadd.f32 %v354, %v848
        %v1053 = vadd.f32 %v355, %v853
        %v1054 = vadd.f32 %v356, %v856
        %v1055 = vadd.f32 %v357, %v861
        %v1056 = vadd.f32 %v358, %v864
        %v1057 = vadd.f32 %v359, %v869
        %v1058 = vadd.f32 %v360, %v872
        %v1059 = vadd.f32 %v361, %v877
        %v1060 = vadd.f32 %v362, %v880
        %v1061 = vadd.f32 %v363, %v885
        %v1062 = vadd.f32 %v364, %v888
        %v1063 = vadd.f32 %v365, %v893
        %v1064 = vadd.f32 %v366, %v896
        %v1065 = vadd.f32 %v367, %v901
        %v1066 = vadd.f32 %v368, %v904
        %v1067 = vadd.f32 %v369, %v909
        %v1068 = vadd.f32 %v370, %v912
        %v1069 = vadd.f32 %v371, %v917
        %v1070 = vadd.f32 %v372, %v920
        %v1071 = vadd.f32 %v373, %v925
        %v1072 = vadd.f32 %v374, %v928
        %v1073 = vadd.f32 %v375, %v933
        %v1074 = vadd.f32 %v376, %v936
        %v1075 = vadd.f32 %v377, %v941
        %v1076 = vadd.f32 %v378, %v944
        %v1077 = vadd.f32 %v379, %v949
        %v1078 = vadd.f32 %v380, %v952
        %v1079 = vadd.f32 %v381, %v957
        %v1080 = vadd.f32 %v382, %v960
        %v1081 = vadd.f32 %v383, %v965
        %v1082 = vadd.f32 %v384, %v968
        %v1083 = vadd.f32 %v385, %v973
        %v1084 = vadd.f32 %v386, %v976
        %v1085 = vadd.f32 %v387, %v981
        %v1086 = vadd.f32 %v388, %v984
        %v1087 = vadd.f32 %v389, %v989
        %v1088 = vadd.f32 %v390, %v992
        %v1089 = vadd.f32 %v391, %v997
        %v1090 = vadd.f32 %v392, %v1000
        %v1091 = vadd.f32 %v393, %v1005
        %v1092 = vadd.f32 %v394, %v1008
        %v1093 = vadd.f32 %v395, %v1013
        %v1094 = vadd.f32 %v396, %v1016
        %v1095 = vadd.f32 %v397, %v1021
        %v1096 = vadd.f32 %v398, %v1024
        %v1097 = vadd.f32 %v399, %v1029
        %v1098 = vadd.f32 %v400, %v1032
        %vm1099 = vcmask 31744
        %1100 = vst.msk [vmem:[#allocation2] sm:$0xff] %vm1099, %v1035
        %1101 = vst.msk [vmem:[#allocation2 + $0x8] sm:$0xff] %vm1099, %v1036
        %1102 = vst.msk [vmem:[#allocation2 + $0x10] sm:$0xff] %vm1099, %v1037
        %1103 = vst.msk [vmem:[#allocation2 + $0x18] sm:$0xff] %vm1099, %v1038
        %1104 = vst.msk [vmem:[#allocation2 + $0x20] sm:$0xff] %vm1099, %v1039
        %1105 = vst.msk [vmem:[#allocation2 + $0x28] sm:$0xff] %vm1099, %v1040
        %1106 = vst.msk [vmem:[#allocation2 + $0x30] sm:$0xff] %vm1099, %v1041
        %1107 = vst.msk [vmem:[#allocation2 + $0x38] sm:$0xff] %vm1099, %v1042
        %1108 = vst.msk [vmem:[#allocation2 + $0x40] sm:$0xff] %vm1099, %v1043
        %1109 = vst.msk [vmem:[#allocation2 + $0x48] sm:$0xff] %vm1099, %v1044
        %1110 = vst.msk [vmem:[#allocation2 + $0x50] sm:$0xff] %vm1099, %v1045
        %1111 = vst.msk [vmem:[#allocation2 + $0x58] sm:$0xff] %vm1099, %v1046
        %1112 = vst.msk [vmem:[#allocation2 + $0x60] sm:$0xff] %vm1099, %v1047
        %1113 = vst.msk [vmem:[#allocation2 + $0x68] sm:$0xff] %vm1099, %v1048
        %1114 = vst.msk [vmem:[#allocation2 + $0x70] sm:$0xff] %vm1099, %v1049
        %1115 = vst.msk [vmem:[#allocation2 + $0x78] sm:$0xff] %vm1099, %v1050
        %1116 = vst.msk [vmem:[#allocation2 + $0x80] sm:$0xff] %vm1099, %v1051
        %1117 = vst.msk [vmem:[#allocation2 + $0x88] sm:$0xff] %vm1099, %v1052
        %1118 = vst.msk [vmem:[#allocation2 + $0x90] sm:$0xff] %vm1099, %v1053
        %1119 = vst.msk [vmem:[#allocation2 + $0x98] sm:$0xff] %vm1099, %v1054
        %1120 = vst.msk [vmem:[#allocation2 + $0xa0] sm:$0xff] %vm1099, %v1055
        %1121 = vst.msk [vmem:[#allocation2 + $0xa8] sm:$0xff] %vm1099, %v1056
        %1122 = vst.msk [vmem:[#allocation2 + $0xb0] sm:$0xff] %vm1099, %v1057
        %1123 = vst.msk [vmem:[#allocation2 + $0xb8] sm:$0xff] %vm1099, %v1058
        %1124 = vst.msk [vmem:[#allocation2 + $0xc0] sm:$0xff] %vm1099, %v1059
        %1125 = vst.msk [vmem:[#allocation2 + $0xc8] sm:$0xff] %vm1099, %v1060
        %1126 = vst.msk [vmem:[#allocation2 + $0xd0] sm:$0xff] %vm1099, %v1061
        %1127 = vst.msk [vmem:[#allocation2 + $0xd8] sm:$0xff] %vm1099, %v1062
        %1128 = vst.msk [vmem:[#allocation2 + $0xe0] sm:$0xff] %vm1099, %v1063
        %1129 = vst.msk [vmem:[#allocation2 + $0xe8] sm:$0xff] %vm1099, %v1064
        %1130 = vst.msk [vmem:[#allocation2 + $0xf0] sm:$0xff] %vm1099, %v1065
        %1131 = vst.msk [vmem:[#allocation2 + $0xf8] sm:$0xff] %vm1099, %v1066
        %1132 = vst.msk [vmem:[#allocation2 + $0x100] sm:$0xff] %vm1099, %v1067
        %1133 = vst.msk [vmem:[#allocation2 + $0x108] sm:$0xff] %vm1099, %v1068
        %1134 = vst.msk [vmem:[#allocation2 + $0x110] sm:$0xff] %vm1099, %v1069
        %1135 = vst.msk [vmem:[#allocation2 + $0x118] sm:$0xff] %vm1099, %v1070
        %1136 = vst.msk [vmem:[#allocation2 + $0x120] sm:$0xff] %vm1099, %v1071
        %1137 = vst.msk [vmem:[#allocation2 + $0x128] sm:$0xff] %vm1099, %v1072
        %1138 = vst.msk [vmem:[#allocation2 + $0x130] sm:$0xff] %vm1099, %v1073
        %1139 = vst.msk [vmem:[#allocation2 + $0x138] sm:$0xff] %vm1099, %v1074
        %1140 = vst.msk [vmem:[#allocation2 + $0x140] sm:$0xff] %vm1099, %v1075
        %1141 = vst.msk [vmem:[#allocation2 + $0x148] sm:$0xff] %vm1099, %v1076
        %1142 = vst.msk [vmem:[#allocation2 + $0x150] sm:$0xff] %vm1099, %v1077
        %1143 = vst.msk [vmem:[#allocation2 + $0x158] sm:$0xff] %vm1099, %v1078
        %1144 = vst.msk [vmem:[#allocation2 + $0x160] sm:$0xff] %vm1099, %v1079
        %1145 = vst.msk [vmem:[#allocation2 + $0x168] sm:$0xff] %vm1099, %v1080
        %1146 = vst.msk [vmem:[#allocation2 + $0x170] sm:$0xff] %vm1099, %v1081
        %1147 = vst.msk [vmem:[#allocation2 + $0x178] sm:$0xff] %vm1099, %v1082
        %1148 = vst.msk [vmem:[#allocation2 + $0x180] sm:$0xff] %vm1099, %v1083
        %1149 = vst.msk [vmem:[#allocation2 + $0x188] sm:$0xff] %vm1099, %v1084
        %1150 = vst.msk [vmem:[#allocation2 + $0x190] sm:$0xff] %vm1099, %v1085
        %1151 = vst.msk [vmem:[#allocation2 + $0x198] sm:$0xff] %vm1099, %v1086
        %1152 = vst.msk [vmem:[#allocation2 + $0x1a0] sm:$0xff] %vm1099, %v1087
        %1153 = vst.msk [vmem:[#allocation2 + $0x1a8] sm:$0xff] %vm1099, %v1088
        %1154 = vst.msk [vmem:[#allocation2 + $0x1b0] sm:$0xff] %vm1099, %v1089
        %1155 = vst.msk [vmem:[#allocation2 + $0x1b8] sm:$0xff] %vm1099, %v1090
        %1156 = vst.msk [vmem:[#allocation2 + $0x1c0] sm:$0xff] %vm1099, %v1091
        %1157 = vst.msk [vmem:[#allocation2 + $0x1c8] sm:$0xff] %vm1099, %v1092
        %1158 = vst.msk [vmem:[#allocation2 + $0x1d0] sm:$0xff] %vm1099, %v1093
        %1159 = vst.msk [vmem:[#allocation2 + $0x1d8] sm:$0xff] %vm1099, %v1094
        %1160 = vst.msk [vmem:[#allocation2 + $0x1e0] sm:$0xff] %vm1099, %v1095
        %1161 = vst.msk [vmem:[#allocation2 + $0x1e8] sm:$0xff] %vm1099, %v1096
        %1162 = vst.msk [vmem:[#allocation2 + $0x1f0] sm:$0xff] %vm1099, %v1097
        %1163 = vst.msk [vmem:[#allocation2 + $0x1f8] sm:$0xff] %vm1099, %v1098
        // Predicated region
        $region41: #{_lambda_.8} parent=31 // pred_check
          %p1164 = pneg %p255
        $region42: #{_lambda_.8} parent=31 // pred_check_branch
          %1166 = sbr.rel (%p1164) target = $region44
        $region43: #{_lambda_.8} parent=31 // pred_region
          %v1167 = vld [vmem:[#allocation2] sm:$0xff]
          %v1168 = vld [vmem:[#allocation2 + $0x8] sm:$0xff]
          %v1169 = vld [vmem:[#allocation2 + $0x10] sm:$0xff]
          %v1170 = vld [vmem:[#allocation2 + $0x18] sm:$0xff]
          %v1171 = vld [vmem:[#allocation2 + $0x20] sm:$0xff]
          %v1172 = vld [vmem:[#allocation2 + $0x28] sm:$0xff]
          %v1173 = vld [vmem:[#allocation2 + $0x30] sm:$0xff]
          %v1174 = vld [vmem:[#allocation2 + $0x38] sm:$0xff]
          %v1175 = vld [vmem:[#allocation2 + $0x40] sm:$0xff]
          %v1176 = vld [vmem:[#allocation2 + $0x48] sm:$0xff]
          %v1177 = vld [vmem:[#allocation2 + $0x50] sm:$0xff]
          %v1178 = vld [vmem:[#allocation2 + $0x58] sm:$0xff]
          %v1179 = vld [vmem:[#allocation2 + $0x60] sm:$0xff]
          %v1180 = vld [vmem:[#allocation2 + $0x68] sm:$0xff]
          %v1181 = vld [vmem:[#allocation2 + $0x70] sm:$0xff]
          %v1182 = vld [vmem:[#allocation2 + $0x78] sm:$0xff]
          %v1183 = vld [vmem:[#allocation2 + $0x80] sm:$0xff]
          %v1184 = vld [vmem:[#allocation2 + $0x88] sm:$0xff]
          %v1185 = vld [vmem:[#allocation2 + $0x90] sm:$0xff]
          %v1186 = vld [vmem:[#allocation2 + $0x98] sm:$0xff]
          %v1187 = vld [vmem:[#allocation2 + $0xa0] sm:$0xff]
          %v1188 = vld [vmem:[#allocation2 + $0xa8] sm:$0xff]
          %v1189 = vld [vmem:[#allocation2 + $0xb0] sm:$0xff]
          %v1190 = vld [vmem:[#allocation2 + $0xb8] sm:$0xff]
          %v1191 = vld [vmem:[#allocation2 + $0xc0] sm:$0xff]
          %v1192 = vld [vmem:[#allocation2 + $0xc8] sm:$0xff]
          %v1193 = vld [vmem:[#allocation2 + $0xd0] sm:$0xff]
          %v1194 = vld [vmem:[#allocation2 + $0xd8] sm:$0xff]
          %v1195 = vld [vmem:[#allocation2 + $0xe0] sm:$0xff]
          %v1196 = vld [vmem:[#allocation2 + $0xe8] sm:$0xff]
          %v1197 = vld [vmem:[#allocation2 + $0xf0] sm:$0xff]
          %v1198 = vld [vmem:[#allocation2 + $0xf8] sm:$0xff]
          %v1199 = vld [vmem:[#allocation2 + $0x100] sm:$0xff]
          %v1200 = vld [vmem:[#allocation2 + $0x108] sm:$0xff]
          %v1201 = vld [vmem:[#allocation2 + $0x110] sm:$0xff]
          %v1202 = vld [vmem:[#allocation2 + $0x118] sm:$0xff]
          %v1203 = vld [vmem:[#allocation2 + $0x120] sm:$0xff]
          %v1204 = vld [vmem:[#allocation2 + $0x128] sm:$0xff]
          %v1205 = vld [vmem:[#allocation2 + $0x130] sm:$0xff]
          %v1206 = vld [vmem:[#allocation2 + $0x138] sm:$0xff]
          %v1207 = vld [vmem:[#allocation2 + $0x140] sm:$0xff]
          %v1208 = vld [vmem:[#allocation2 + $0x148] sm:$0xff]
          %v1209 = vld [vmem:[#allocation2 + $0x150] sm:$0xff]
          %v1210 = vld [vmem:[#allocation2 + $0x158] sm:$0xff]
          %v1211 = vld [vmem:[#allocation2 + $0x160] sm:$0xff]
          %v1212 = vld [vmem:[#allocation2 + $0x168] sm:$0xff]
          %v1213 = vld [vmem:[#allocation2 + $0x170] sm:$0xff]
          %v1214 = vld [vmem:[#allocation2 + $0x178] sm:$0xff]
          %v1215 = vld [vmem:[#allocation2 + $0x180] sm:$0xff]
          %v1216 = vld [vmem:[#allocation2 + $0x188] sm:$0xff]
          %v1217 = vld [vmem:[#allocation2 + $0x190] sm:$0xff]
          %v1218 = vld [vmem:[#allocation2 + $0x198] sm:$0xff]
          %v1219 = vld [vmem:[#allocation2 + $0x1a0] sm:$0xff]
          %v1220 = vld [vmem:[#allocation2 + $0x1a8] sm:$0xff]
          %v1221 = vld [vmem:[#allocation2 + $0x1b0] sm:$0xff]
          %v1222 = vld [vmem:[#allocation2 + $0x1b8] sm:$0xff]
          %v1223 = vld [vmem:[#allocation2 + $0x1c0] sm:$0xff]
          %v1224 = vld [vmem:[#allocation2 + $0x1c8] sm:$0xff]
          %v1225 = vld [vmem:[#allocation2 + $0x1d0] sm:$0xff]
          %v1226 = vld [vmem:[#allocation2 + $0x1d8] sm:$0xff]
          %v1227 = vld [vmem:[#allocation2 + $0x1e0] sm:$0xff]
          %v1228 = vld [vmem:[#allocation2 + $0x1e8] sm:$0xff]
          %v1229 = vld [vmem:[#allocation2 + $0x1f0] sm:$0xff]
          %v1230 = vld [vmem:[#allocation2 + $0x1f8] sm:$0xff]
          %v1231 = vld [vmem:[%s244] sm:$0x1]
          %v1233 = vlaneseq
          %v1234 = vshrl.u32 %v1233, 7
          %v1235 = vsub.s32 0, %v1234
          %v1236 = vrot.slane %v1231, %v1235
          %v1238 = vadd.f32 %v1167, %v1236
          %v1239 = vadd.f32 %v1168, %v1236
          %v1240 = vadd.f32 %v1169, %v1236
          %v1241 = vadd.f32 %v1170, %v1236
          %v1242 = vadd.f32 %v1171, %v1236
          %v1243 = vadd.f32 %v1172, %v1236
          %v1244 = vadd.f32 %v1173, %v1236
          %v1245 = vadd.f32 %v1174, %v1236
          %v1246 = vadd.f32 %v1175, %v1236
          %v1247 = vadd.f32 %v1176, %v1236
          %v1248 = vadd.f32 %v1177, %v1236
          %v1249 = vadd.f32 %v1178, %v1236
          %v1250 = vadd.f32 %v1179, %v1236
          %v1251 = vadd.f32 %v1180, %v1236
          %v1252 = vadd.f32 %v1181, %v1236
          %v1253 = vadd.f32 %v1182, %v1236
          %v1254 = vadd.f32 %v1183, %v1236
          %v1255 = vadd.f32 %v1184, %v1236
          %v1256 = vadd.f32 %v1185, %v1236
          %v1257 = vadd.f32 %v1186, %v1236
          %v1258 = vadd.f32 %v1187, %v1236
          %v1259 = vadd.f32 %v1188, %v1236
          %v1260 = vadd.f32 %v1189, %v1236
          %v1261 = vadd.f32 %v1190, %v1236
          %v1262 = vadd.f32 %v1191, %v1236
          %v1263 = vadd.f32 %v1192, %v1236
          %v1264 = vadd.f32 %v1193, %v1236
          %v1265 = vadd.f32 %v1194, %v1236
          %v1266 = vadd.f32 %v1195, %v1236
          %v1267 = vadd.f32 %v1196, %v1236
          %v1268 = vadd.f32 %v1197, %v1236
          %v1269 = vadd.f32 %v1198, %v1236
          %v1270 = vadd.f32 %v1199, %v1236
          %v1271 = vadd.f32 %v1200, %v1236
          %v1272 = vadd.f32 %v1201, %v1236
          %v1273 = vadd.f32 %v1202, %v1236
          %v1274 = vadd.f32 %v1203, %v1236
          %v1275 = vadd.f32 %v1204, %v1236
          %v1276 = vadd.f32 %v1205, %v1236
          %v1277 = vadd.f32 %v1206, %v1236
          %v1278 = vadd.f32 %v1207, %v1236
          %v1279 = vadd.f32 %v1208, %v1236
          %v1280 = vadd.f32 %v1209, %v1236
          %v1281 = vadd.f32 %v1210, %v1236
          %v1282 = vadd.f32 %v1211, %v1236
          %v1283 = vadd.f32 %v1212, %v1236
          %v1284 = vadd.f32 %v1213, %v1236
          %v1285 = vadd.f32 %v1214, %v1236
          %v1286 = vadd.f32 %v1215, %v1236
          %v1287 = vadd.f32 %v1216, %v1236
          %v1288 = vadd.f32 %v1217, %v1236
          %v1289 = vadd.f32 %v1218, %v1236
          %v1290 = vadd.f32 %v1219, %v1236
          %v1291 = vadd.f32 %v1220, %v1236
          %v1292 = vadd.f32 %v1221, %v1236
          %v1293 = vadd.f32 %v1222, %v1236
          %v1294 = vadd.f32 %v1223, %v1236
          %v1295 = vadd.f32 %v1224, %v1236
          %v1296 = vadd.f32 %v1225, %v1236
          %v1297 = vadd.f32 %v1226, %v1236
          %v1298 = vadd.f32 %v1227, %v1236
          %v1299 = vadd.f32 %v1228, %v1236
          %v1300 = vadd.f32 %v1229, %v1236
          %v1301 = vadd.f32 %v1230, %v1236
          %vm1302 = vcmp.ge.f32.partialorder %v1238, 0.0
          %vm1303 = vcmp.ge.f32.partialorder %v1239, 0.0
          %vm1304 = vcmp.ge.f32.partialorder %v1240, 0.0
          %vm1305 = vcmp.ge.f32.partialorder %v1241, 0.0
          %vm1306 = vcmp.ge.f32.partialorder %v1242, 0.0
          %vm1307 = vcmp.ge.f32.partialorder %v1243, 0.0
          %vm1308 = vcmp.ge.f32.partialorder %v1244, 0.0
          %vm1309 = vcmp.ge.f32.partialorder %v1245, 0.0
          %vm1310 = vcmp.ge.f32.partialorder %v1246, 0.0
          %vm1311 = vcmp.ge.f32.partialorder %v1247, 0.0
          %vm1312 = vcmp.ge.f32.partialorder %v1248, 0.0
          %vm1313 = vcmp.ge.f32.partialorder %v1249, 0.0
          %vm1314 = vcmp.ge.f32.partialorder %v1250, 0.0
          %vm1315 = vcmp.ge.f32.partialorder %v1251, 0.0
          %vm1316 = vcmp.ge.f32.partialorder %v1252, 0.0
          %vm1317 = vcmp.ge.f32.partialorder %v1253, 0.0
          %vm1318 = vcmp.ge.f32.partialorder %v1254, 0.0
          %vm1319 = vcmp.ge.f32.partialorder %v1255, 0.0
          %vm1320 = vcmp.ge.f32.partialorder %v1256, 0.0
          %vm1321 = vcmp.ge.f32.partialorder %v1257, 0.0
          %vm1322 = vcmp.ge.f32.partialorder %v1258, 0.0
          %vm1323 = vcmp.ge.f32.partialorder %v1259, 0.0
          %vm1324 = vcmp.ge.f32.partialorder %v1260, 0.0
          %vm1325 = vcmp.ge.f32.partialorder %v1261, 0.0
          %vm1326 = vcmp.ge.f32.partialorder %v1262, 0.0
          %vm1327 = vcmp.ge.f32.partialorder %v1263, 0.0
          %vm1328 = vcmp.ge.f32.partialorder %v1264, 0.0
          %vm1329 = vcmp.ge.f32.partialorder %v1265, 0.0
          %vm1330 = vcmp.ge.f32.partialorder %v1266, 0.0
          %vm1331 = vcmp.ge.f32.partialorder %v1267, 0.0
          %vm1332 = vcmp.ge.f32.partialorder %v1268, 0.0
          %vm1333 = vcmp.ge.f32.partialorder %v1269, 0.0
          %vm1334 = vcmp.ge.f32.partialorder %v1270, 0.0
          %vm1335 = vcmp.ge.f32.partialorder %v1271, 0.0
          %vm1336 = vcmp.ge.f32.partialorder %v1272, 0.0
          %vm1337 = vcmp.ge.f32.partialorder %v1273, 0.0
          %vm1338 = vcmp.ge.f32.partialorder %v1274, 0.0
          %vm1339 = vcmp.ge.f32.partialorder %v1275, 0.0
          %vm1340 = vcmp.ge.f32.partialorder %v1276, 0.0
          %vm1341 = vcmp.ge.f32.partialorder %v1277, 0.0
          %vm1342 = vcmp.ge.f32.partialorder %v1278, 0.0
          %vm1343 = vcmp.ge.f32.partialorder %v1279, 0.0
          %vm1344 = vcmp.ge.f32.partialorder %v1280, 0.0
          %vm1345 = vcmp.ge.f32.partialorder %v1281, 0.0
          %vm1346 = vcmp.ge.f32.partialorder %v1282, 0.0
          %vm1347 = vcmp.ge.f32.partialorder %v1283, 0.0
          %vm1348 = vcmp.ge.f32.partialorder %v1284, 0.0
          %vm1349 = vcmp.ge.f32.partialorder %v1285, 0.0
          %vm1350 = vcmp.ge.f32.partialorder %v1286, 0.0
          %vm1351 = vcmp.ge.f32.partialorder %v1287, 0.0
          %vm1352 = vcmp.ge.f32.partialorder %v1288, 0.0
          %vm1353 = vcmp.ge.f32.partialorder %v1289, 0.0
          %vm1354 = vcmp.ge.f32.partialorder %v1290, 0.0
          %vm1355 = vcmp.ge.f32.partialorder %v1291, 0.0
          %vm1356 = vcmp.ge.f32.partialorder %v1292, 0.0
          %vm1357 = vcmp.ge.f32.partialorder %v1293, 0.0
          %vm1358 = vcmp.ge.f32.partialorder %v1294, 0.0
          %vm1359 = vcmp.ge.f32.partialorder %v1295, 0.0
          %vm1360 = vcmp.ge.f32.partialorder %v1296, 0.0
          %vm1361 = vcmp.ge.f32.partialorder %v1297, 0.0
          %vm1362 = vcmp.ge.f32.partialorder %v1298, 0.0
          %vm1363 = vcmp.ge.f32.partialorder %v1299, 0.0
          %vm1364 = vcmp.ge.f32.partialorder %v1300, 0.0
          %vm1365 = vcmp.ge.f32.partialorder %v1301, 0.0
          %v1366 = vmul.f32 %v1238, 0.2
          %v1367 = vmul.f32 %v1239, 0.2
          %v1368 = vmul.f32 %v1240, 0.2
          %v1369 = vmul.f32 %v1241, 0.2
          %v1370 = vmul.f32 %v1242, 0.2
          %v1371 = vmul.f32 %v1243, 0.2
          %v1372 = vmul.f32 %v1244, 0.2
          %v1373 = vmul.f32 %v1245, 0.2
          %v1374 = vmul.f32 %v1246, 0.2
          %v1375 = vmul.f32 %v1247, 0.2
          %v1376 = vmul.f32 %v1248, 0.2
          %v1377 = vmul.f32 %v1249, 0.2
          %v1378 = vmul.f32 %v1250, 0.2
          %v1379 = vmul.f32 %v1251, 0.2
          %v1380 = vmul.f32 %v1252, 0.2
          %v1381 = vmul.f32 %v1253, 0.2
          %v1382 = vmul.f32 %v1254, 0.2
          %v1383 = vmul.f32 %v1255, 0.2
          %v1384 = vmul.f32 %v1256, 0.2
          %v1385 = vmul.f32 %v1257, 0.2
          %v1386 = vmul.f32 %v1258, 0.2
          %v1387 = vmul.f32 %v1259, 0.2
          %v1388 = vmul.f32 %v1260, 0.2
          %v1389 = vmul.f32 %v1261, 0.2
          %v1390 = vmul.f32 %v1262, 0.2
          %v1391 = vmul.f32 %v1263, 0.2
          %v1392 = vmul.f32 %v1264, 0.2
          %v1393 = vmul.f32 %v1265, 0.2
          %v1394 = vmul.f32 %v1266, 0.2
          %v1395 = vmul.f32 %v1267, 0.2
          %v1396 = vmul.f32 %v1268, 0.2
          %v1397 = vmul.f32 %v1269, 0.2
          %v1398 = vmul.f32 %v1270, 0.2
          %v1399 = vmul.f32 %v1271, 0.2
          %v1400 = vmul.f32 %v1272, 0.2
          %v1401 = vmul.f32 %v1273, 0.2
          %v1402 = vmul.f32 %v1274, 0.2
          %v1403 = vmul.f32 %v1275, 0.2
          %v1404 = vmul.f32 %v1276, 0.2
          %v1405 = vmul.f32 %v1277, 0.2
          %v1406 = vmul.f32 %v1278, 0.2
          %v1407 = vmul.f32 %v1279, 0.2
          %v1408 = vmul.f32 %v1280, 0.2
          %v1409 = vmul.f32 %v1281, 0.2
          %v1410 = vmul.f32 %v1282, 0.2
          %v1411 = vmul.f32 %v1283, 0.2
          %v1412 = vmul.f32 %v1284, 0.2
          %v1413 = vmul.f32 %v1285, 0.2
          %v1414 = vmul.f32 %v1286, 0.2
          %v1415 = vmul.f32 %v1287, 0.2
          %v1416 = vmul.f32 %v1288, 0.2
          %v1417 = vmul.f32 %v1289, 0.2
          %v1418 = vmul.f32 %v1290, 0.2
          %v1419 = vmul.f32 %v1291, 0.2
          %v1420 = vmul.f32 %v1292, 0.2
          %v1421 = vmul.f32 %v1293, 0.2
          %v1422 = vmul.f32 %v1294, 0.2
          %v1423 = vmul.f32 %v1295, 0.2
          %v1424 = vmul.f32 %v1296, 0.2
          %v1425 = vmul.f32 %v1297, 0.2
          %v1426 = vmul.f32 %v1298, 0.2
          %v1427 = vmul.f32 %v1299, 0.2
          %v1428 = vmul.f32 %v1300, 0.2
          %v1429 = vmul.f32 %v1301, 0.2
          %v1430 = vsel %vm1302, %v1238, %v1366
          %v1431 = vsel %vm1303, %v1239, %v1367
          %v1432 = vsel %vm1304, %v1240, %v1368
          %v1433 = vsel %vm1305, %v1241, %v1369
          %v1434 = vsel %vm1306, %v1242, %v1370
          %v1435 = vsel %vm1307, %v1243, %v1371
          %v1436 = vsel %vm1308, %v1244, %v1372
          %v1437 = vsel %vm1309, %v1245, %v1373
          %v1438 = vsel %vm1310, %v1246, %v1374
          %v1439 = vsel %vm1311, %v1247, %v1375
          %v1440 = vsel %vm1312, %v1248, %v1376
          %v1441 = vsel %vm1313, %v1249, %v1377
          %v1442 = vsel %vm1314, %v1250, %v1378
          %v1443 = vsel %vm1315, %v1251, %v1379
          %v1444 = vsel %vm1316, %v1252, %v1380
          %v1445 = vsel %vm1317, %v1253, %v1381
          %v1446 = vsel %vm1318, %v1254, %v1382
          %v1447 = vsel %vm1319, %v1255, %v1383
          %v1448 = vsel %vm1320, %v1256, %v1384
          %v1449 = vsel %vm1321, %v1257, %v1385
          %v1450 = vsel %vm1322, %v1258, %v1386
          %v1451 = vsel %vm1323, %v1259, %v1387
          %v1452 = vsel %vm1324, %v1260, %v1388
          %v1453 = vsel %vm1325, %v1261, %v1389
          %v1454 = vsel %vm1326, %v1262, %v1390
          %v1455 = vsel %vm1327, %v1263, %v1391
          %v1456 = vsel %vm1328, %v1264, %v1392
          %v1457 = vsel %vm1329, %v1265, %v1393
          %v1458 = vsel %vm1330, %v1266, %v1394
          %v1459 = vsel %vm1331, %v1267, %v1395
          %v1460 = vsel %vm1332, %v1268, %v1396
          %v1461 = vsel %vm1333, %v1269, %v1397
          %v1462 = vsel %vm1334, %v1270, %v1398
          %v1463 = vsel %vm1335, %v1271, %v1399
          %v1464 = vsel %vm1336, %v1272, %v1400
          %v1465 = vsel %vm1337, %v1273, %v1401
          %v1466 = vsel %vm1338, %v1274, %v1402
          %v1467 = vsel %vm1339, %v1275, %v1403
          %v1468 = vsel %vm1340, %v1276, %v1404
          %v1469 = vsel %vm1341, %v1277, %v1405
          %v1470 = vsel %vm1342, %v1278, %v1406
          %v1471 = vsel %vm1343, %v1279, %v1407
          %v1472 = vsel %vm1344, %v1280, %v1408
          %v1473 = vsel %vm1345, %v1281, %v1409
          %v1474 = vsel %vm1346, %v1282, %v1410
          %v1475 = vsel %vm1347, %v1283, %v1411
          %v1476 = vsel %vm1348, %v1284, %v1412
          %v1477 = vsel %vm1349, %v1285, %v1413
          %v1478 = vsel %vm1350, %v1286, %v1414
          %v1479 = vsel %vm1351, %v1287, %v1415
          %v1480 = vsel %vm1352, %v1288, %v1416
          %v1481 = vsel %vm1353, %v1289, %v1417
          %v1482 = vsel %vm1354, %v1290, %v1418
          %v1483 = vsel %vm1355, %v1291, %v1419
          %v1484 = vsel %vm1356, %v1292, %v1420
          %v1485 = vsel %vm1357, %v1293, %v1421
          %v1486 = vsel %vm1358, %v1294, %v1422
          %v1487 = vsel %vm1359, %v1295, %v1423
          %v1488 = vsel %vm1360, %v1296, %v1424
          %v1489 = vsel %vm1361, %v1297, %v1425
          %v1490 = vsel %vm1362, %v1298, %v1426
          %v1491 = vsel %vm1363, %v1299, %v1427
          %v1492 = vsel %vm1364, %v1300, %v1428
          %v1493 = vsel %vm1365, %v1301, %v1429
          %v1494 = vpack.c.bf16 %v1431, %v1430
          %v1495 = vpack.c.bf16 %v1433, %v1432
          %v1496 = vpack.c.bf16 %v1435, %v1434
          %v1497 = vpack.c.bf16 %v1437, %v1436
          %v1498 = vpack.c.bf16 %v1439, %v1438
          %v1499 = vpack.c.bf16 %v1441, %v1440
          %v1500 = vpack.c.bf16 %v1443, %v1442
          %v1501 = vpack.c.bf16 %v1445, %v1444
          %v1502 = vpack.c.bf16 %v1447, %v1446
          %v1503 = vpack.c.bf16 %v1449, %v1448
          %v1504 = vpack.c.bf16 %v1451, %v1450
          %v1505 = vpack.c.bf16 %v1453, %v1452
          %v1506 = vpack.c.bf16 %v1455, %v1454
          %v1507 = vpack.c.bf16 %v1457, %v1456
          %v1508 = vpack.c.bf16 %v1459, %v1458
          %v1509 = vpack.c.bf16 %v1461, %v1460
          %v1510 = vpack.c.bf16 %v1463, %v1462
          %v1511 = vpack.c.bf16 %v1465, %v1464
          %v1512 = vpack.c.bf16 %v1467, %v1466
          %v1513 = vpack.c.bf16 %v1469, %v1468
          %v1514 = vpack.c.bf16 %v1471, %v1470
          %v1515 = vpack.c.bf16 %v1473, %v1472
          %v1516 = vpack.c.bf16 %v1475, %v1474
          %v1517 = vpack.c.bf16 %v1477, %v1476
          %v1518 = vpack.c.bf16 %v1479, %v1478
          %v1519 = vpack.c.bf16 %v1481, %v1480
          %v1520 = vpack.c.bf16 %v1483, %v1482
          %v1521 = vpack.c.bf16 %v1485, %v1484
          %v1522 = vpack.c.bf16 %v1487, %v1486
          %v1523 = vpack.c.bf16 %v1489, %v1488
          %v1524 = vpack.c.bf16 %v1491, %v1490
          %v1525 = vpack.c.bf16 %v1493, %v1492
          %v1558 = vunpack.c.l.b16 %v1494
          %v1559 = vunpack.c.h.b16 %v1494
          %v1560 = vunpack.c.l.b16 %v1495
          %v1561 = vunpack.c.h.b16 %v1495
          %v1562 = vunpack.c.l.b16 %v1496
          %v1563 = vunpack.c.h.b16 %v1496
          %v1564 = vunpack.c.l.b16 %v1497
          %v1565 = vunpack.c.h.b16 %v1497
          %v1566 = vunpack.c.l.b16 %v1498
          %v1567 = vunpack.c.h.b16 %v1498
          %v1568 = vunpack.c.l.b16 %v1499
          %v1569 = vunpack.c.h.b16 %v1499
          %v1570 = vunpack.c.l.b16 %v1500
          %v1571 = vunpack.c.h.b16 %v1500
          %v1572 = vunpack.c.l.b16 %v1501
          %v1573 = vunpack.c.h.b16 %v1501
          %v1574 = vunpack.c.l.b16 %v1502
          %v1575 = vunpack.c.h.b16 %v1502
          %v1576 = vunpack.c.l.b16 %v1503
          %v1577 = vunpack.c.h.b16 %v1503
          %v1578 = vunpack.c.l.b16 %v1504
          %v1579 = vunpack.c.h.b16 %v1504
          %v1580 = vunpack.c.l.b16 %v1505
          %v1581 = vunpack.c.h.b16 %v1505
          %v1582 = vunpack.c.l.b16 %v1506
          %v1583 = vunpack.c.h.b16 %v1506
          %v1584 = vunpack.c.l.b16 %v1507
          %v1585 = vunpack.c.h.b16 %v1507
          %v1586 = vunpack.c.l.b16 %v1508
          %v1587 = vunpack.c.h.b16 %v1508
          %v1588 = vunpack.c.l.b16 %v1509
          %v1589 = vunpack.c.h.b16 %v1509
          %v1590 = vunpack.c.l.b16 %v1510
          %v1591 = vunpack.c.h.b16 %v1510
          %v1592 = vunpack.c.l.b16 %v1511
          %v1593 = vunpack.c.h.b16 %v1511
          %v1594 = vunpack.c.l.b16 %v1512
          %v1595 = vunpack.c.h.b16 %v1512
          %v1596 = vunpack.c.l.b16 %v1513
          %v1597 = vunpack.c.h.b16 %v1513
          %v1598 = vunpack.c.l.b16 %v1514
          %v1599 = vunpack.c.h.b16 %v1514
          %v1600 = vunpack.c.l.b16 %v1515
          %v1601 = vunpack.c.h.b16 %v1515
          %v1602 = vunpack.c.l.b16 %v1516
          %v1603 = vunpack.c.h.b16 %v1516
          %v1604 = vunpack.c.l.b16 %v1517
          %v1605 = vunpack.c.h.b16 %v1517
          %v1606 = vunpack.c.l.b16 %v1518
          %v1607 = vunpack.c.h.b16 %v1518
          %v1608 = vunpack.c.l.b16 %v1519
          %v1609 = vunpack.c.h.b16 %v1519
          %v1610 = vunpack.c.l.b16 %v1520
          %v1611 = vunpack.c.h.b16 %v1520
          %v1612 = vunpack.c.l.b16 %v1521
          %v1613 = vunpack.c.h.b16 %v1521
          %v1614 = vunpack.c.l.b16 %v1522
          %v1615 = vunpack.c.h.b16 %v1522
          %v1616 = vunpack.c.l.b16 %v1523
          %v1617 = vunpack.c.h.b16 %v1523
          %v1618 = vunpack.c.l.b16 %v1524
          %v1619 = vunpack.c.h.b16 %v1524
          %v1620 = vunpack.c.l.b16 %v1525
          %v1621 = vunpack.c.h.b16 %v1525
          %v1622 = vpack.c.b16 %v1558, %v1558
          %v1623 = vpack.c.b16 %v1559, %v1559
          %v1624 = vpack.c.b16 %v1560, %v1560
          %v1625 = vpack.c.b16 %v1561, %v1561
          %v1626 = vpack.c.b16 %v1562, %v1562
          %v1627 = vpack.c.b16 %v1563, %v1563
          %v1628 = vpack.c.b16 %v1564, %v1564
          %v1629 = vpack.c.b16 %v1565, %v1565
          %v1630 = vpack.c.b16 %v1566, %v1566
          %v1631 = vpack.c.b16 %v1567, %v1567
          %v1632 = vpack.c.b16 %v1568, %v1568
          %v1633 = vpack.c.b16 %v1569, %v1569
          %v1634 = vpack.c.b16 %v1570, %v1570
          %v1635 = vpack.c.b16 %v1571, %v1571
          %v1636 = vpack.c.b16 %v1572, %v1572
          %v1637 = vpack.c.b16 %v1573, %v1573
          %v1638 = vpack.c.b16 %v1574, %v1574
          %v1639 = vpack.c.b16 %v1575, %v1575
          %v1640 = vpack.c.b16 %v1576, %v1576
          %v1641 = vpack.c.b16 %v1577, %v1577
          %v1642 = vpack.c.b16 %v1578, %v1578
          %v1643 = vpack.c.b16 %v1579, %v1579
          %v1644 = vpack.c.b16 %v1580, %v1580
          %v1645 = vpack.c.b16 %v1581, %v1581
          %v1646 = vpack.c.b16 %v1582, %v1582
          %v1647 = vpack.c.b16 %v1583, %v1583
          %v1648 = vpack.c.b16 %v1584, %v1584
          %v1649 = vpack.c.b16 %v1585, %v1585
          %v1650 = vpack.c.b16 %v1586, %v1586
          %v1651 = vpack.c.b16 %v1587, %v1587
          %v1652 = vpack.c.b16 %v1588, %v1588
          %v1653 = vpack.c.b16 %v1589, %v1589
          %v1654 = vpack.c.b16 %v1590, %v1590
          %v1655 = vpack.c.b16 %v1591, %v1591
          %v1656 = vpack.c.b16 %v1592, %v1592
          %v1657 = vpack.c.b16 %v1593, %v1593
          %v1658 = vpack.c.b16 %v1594, %v1594
          %v1659 = vpack.c.b16 %v1595, %v1595
          %v1660 = vpack.c.b16 %v1596, %v1596
          %v1661 = vpack.c.b16 %v1597, %v1597
          %v1662 = vpack.c.b16 %v1598, %v1598
          %v1663 = vpack.c.b16 %v1599, %v1599
          %v1664 = vpack.c.b16 %v1600, %v1600
          %v1665 = vpack.c.b16 %v1601, %v1601
          %v1666 = vpack.c.b16 %v1602, %v1602
          %v1667 = vpack.c.b16 %v1603, %v1603
          %v1668 = vpack.c.b16 %v1604, %v1604
          %v1669 = vpack.c.b16 %v1605, %v1605
          %v1670 = vpack.c.b16 %v1606, %v1606
          %v1671 = vpack.c.b16 %v1607, %v1607
          %v1672 = vpack.c.b16 %v1608, %v1608
          %v1673 = vpack.c.b16 %v1609, %v1609
          %v1674 = vpack.c.b16 %v1610, %v1610
          %v1675 = vpack.c.b16 %v1611, %v1611
          %v1676 = vpack.c.b16 %v1612, %v1612
          %v1677 = vpack.c.b16 %v1613, %v1613
          %v1678 = vpack.c.b16 %v1614, %v1614
          %v1679 = vpack.c.b16 %v1615, %v1615
          %v1680 = vpack.c.b16 %v1616, %v1616
          %v1681 = vpack.c.b16 %v1617, %v1617
          %v1682 = vpack.c.b16 %v1618, %v1618
          %v1683 = vpack.c.b16 %v1619, %v1619
          %v1684 = vpack.c.b16 %v1620, %v1620
          %v1685 = vpack.c.b16 %v1621, %v1621
          %vm1750 = vcmask 27648
          %1751 = vst.msk [vmem:[%s252] sm:$0xf] %vm1750, %v1622
          %1752 = vst.msk [vmem:[%s252 + $0x4] sm:$0xf] %vm1750, %v1623
          %1753 = vst.msk [vmem:[%s252 + $0x8] sm:$0xf] %vm1750, %v1624
          %1754 = vst.msk [vmem:[%s252 + $0xc] sm:$0xf] %vm1750, %v1625
          %1755 = vst.msk [vmem:[%s252 + $0x10] sm:$0xf] %vm1750, %v1626
          %1756 = vst.msk [vmem:[%s252 + $0x14] sm:$0xf] %vm1750, %v1627
          %1757 = vst.msk [vmem:[%s252 + $0x18] sm:$0xf] %vm1750, %v1628
          %1758 = vst.msk [vmem:[%s252 + $0x1c] sm:$0xf] %vm1750, %v1629
          %1759 = vst.msk [vmem:[%s252 + $0x20] sm:$0xf] %vm1750, %v1630
          %1760 = vst.msk [vmem:[%s252 + $0x24] sm:$0xf] %vm1750, %v1631
          %1761 = vst.msk [vmem:[%s252 + $0x28] sm:$0xf] %vm1750, %v1632
          %1762 = vst.msk [vmem:[%s252 + $0x2c] sm:$0xf] %vm1750, %v1633
          %1763 = vst.msk [vmem:[%s252 + $0x30] sm:$0xf] %vm1750, %v1634
          %1764 = vst.msk [vmem:[%s252 + $0x34] sm:$0xf] %vm1750, %v1635
          %1765 = vst.msk [vmem:[%s252 + $0x38] sm:$0xf] %vm1750, %v1636
          %1766 = vst.msk [vmem:[%s252 + $0x3c] sm:$0xf] %vm1750, %v1637
          %1767 = vst.msk [vmem:[%s252 + $0x40] sm:$0xf] %vm1750, %v1638
          %1768 = vst.msk [vmem:[%s252 + $0x44] sm:$0xf] %vm1750, %v1639
          %1769 = vst.msk [vmem:[%s252 + $0x48] sm:$0xf] %vm1750, %v1640
          %1770 = vst.msk [vmem:[%s252 + $0x4c] sm:$0xf] %vm1750, %v1641
          %1771 = vst.msk [vmem:[%s252 + $0x50] sm:$0xf] %vm1750, %v1642
          %1772 = vst.msk [vmem:[%s252 + $0x54] sm:$0xf] %vm1750, %v1643
          %1773 = vst.msk [vmem:[%s252 + $0x58] sm:$0xf] %vm1750, %v1644
          %1774 = vst.msk [vmem:[%s252 + $0x5c] sm:$0xf] %vm1750, %v1645
          %1775 = vst.msk [vmem:[%s252 + $0x60] sm:$0xf] %vm1750, %v1646
          %1776 = vst.msk [vmem:[%s252 + $0x64] sm:$0xf] %vm1750, %v1647
          %1777 = vst.msk [vmem:[%s252 + $0x68] sm:$0xf] %vm1750, %v1648
          %1778 = vst.msk [vmem:[%s252 + $0x6c] sm:$0xf] %vm1750, %v1649
          %1779 = vst.msk [vmem:[%s252 + $0x70] sm:$0xf] %vm1750, %v1650
          %1780 = vst.msk [vmem:[%s252 + $0x74] sm:$0xf] %vm1750, %v1651
          %1781 = vst.msk [vmem:[%s252 + $0x78] sm:$0xf] %vm1750, %v1652
          %1782 = vst.msk [vmem:[%s252 + $0x7c] sm:$0xf] %vm1750, %v1653
          %1783 = vst.msk [vmem:[%s252 + $0x80] sm:$0xf] %vm1750, %v1654
          %1784 = vst.msk [vmem:[%s252 + $0x84] sm:$0xf] %vm1750, %v1655
          %1785 = vst.msk [vmem:[%s252 + $0x88] sm:$0xf] %vm1750, %v1656
          %1786 = vst.msk [vmem:[%s252 + $0x8c] sm:$0xf] %vm1750, %v1657
          %1787 = vst.msk [vmem:[%s252 + $0x90] sm:$0xf] %vm1750, %v1658
          %1788 = vst.msk [vmem:[%s252 + $0x94] sm:$0xf] %vm1750, %v1659
          %1789 = vst.msk [vmem:[%s252 + $0x98] sm:$0xf] %vm1750, %v1660
          %1790 = vst.msk [vmem:[%s252 + $0x9c] sm:$0xf] %vm1750, %v1661
          %1791 = vst.msk [vmem:[%s252 + $0xa0] sm:$0xf] %vm1750, %v1662
          %1792 = vst.msk [vmem:[%s252 + $0xa4] sm:$0xf] %vm1750, %v1663
          %1793 = vst.msk [vmem:[%s252 + $0xa8] sm:$0xf] %vm1750, %v1664
          %1794 = vst.msk [vmem:[%s252 + $0xac] sm:$0xf] %vm1750, %v1665
          %1795 = vst.msk [vmem:[%s252 + $0xb0] sm:$0xf] %vm1750, %v1666
          %1796 = vst.msk [vmem:[%s252 + $0xb4] sm:$0xf] %vm1750, %v1667
          %1797 = vst.msk [vmem:[%s252 + $0xb8] sm:$0xf] %vm1750, %v1668
          %1798 = vst.msk [vmem:[%s252 + $0xbc] sm:$0xf] %vm1750, %v1669
          %1799 = vst.msk [vmem:[%s252 + $0xc0] sm:$0xf] %vm1750, %v1670
          %1800 = vst.msk [vmem:[%s252 + $0xc4] sm:$0xf] %vm1750, %v1671
          %1801 = vst.msk [vmem:[%s252 + $0xc8] sm:$0xf] %vm1750, %v1672
          %1802 = vst.msk [vmem:[%s252 + $0xcc] sm:$0xf] %vm1750, %v1673
          %1803 = vst.msk [vmem:[%s252 + $0xd0] sm:$0xf] %vm1750, %v1674
          %1804 = vst.msk [vmem:[%s252 + $0xd4] sm:$0xf] %vm1750, %v1675
          %1805 = vst.msk [vmem:[%s252 + $0xd8] sm:$0xf] %vm1750, %v1676
          %1806 = vst.msk [vmem:[%s252 + $0xdc] sm:$0xf] %vm1750, %v1677
          %1807 = vst.msk [vmem:[%s252 + $0xe0] sm:$0xf] %vm1750, %v1678
          %1808 = vst.msk [vmem:[%s252 + $0xe4] sm:$0xf] %vm1750, %v1679
          %1809 = vst.msk [vmem:[%s252 + $0xe8] sm:$0xf] %vm1750, %v1680
          %1810 = vst.msk [vmem:[%s252 + $0xec] sm:$0xf] %vm1750, %v1681
          %1811 = vst.msk [vmem:[%s252 + $0xf0] sm:$0xf] %vm1750, %v1682
          %1812 = vst.msk [vmem:[%s252 + $0xf4] sm:$0xf] %vm1750, %v1683
          %1813 = vst.msk [vmem:[%s252 + $0xf8] sm:$0xf] %vm1750, %v1684
          %1814 = vst.msk [vmem:[%s252 + $0xfc] sm:$0xf] %vm1750, %v1685
        $region44: #{_lambda_.8} parent=31 // pred_fallthru
          _
        %s1815 = smul.u32 64, %s22
        %p1816 = scmp.lt.s32.totalorder %s1815, 1023
        %s1817 = scalar_select %p1816, %s1815, 1023
        %p1818 = scmp.lt.s32.totalorder %s23, 0
        %s1819 = scalar_select %p1818, %s23, 0
        %s1820 = sadd.s32 %s1819, %s1817
        %s1821 = smul.addr %s1820, 4
        %s1822 = scalar_lea.vmem %s3, %s1821
        // Predicated region
        $region45: #{_lambda_.8} parent=31 // pred_check
          %p1823 = pneg %p136
        $region46: #{_lambda_.8} parent=31 // pred_check_branch
          %1825 = sbr.rel (%p1823) target = $region48
        $region47: #{_lambda_.8} parent=31 // pred_region
          %s1826 = smul.u32 64, %s22
        $region48: #{_lambda_.8} parent=31 // pred_fallthru
          _
      $region32: #{_lambda_.8} parent=5 // pred_fallthru
        _
      %p1827 = scmp.le.s32.totalorder 2, %s12
      // Predicated region
      $region49: #{_lambda_.8} parent=5 // pred_check
        %p1828 = pneg %p1827
      $region50: #{_lambda_.8} parent=5 // pred_check_branch
        %1830 = sbr.rel (%p1828) target = $region52
      $region51: #{_lambda_.8} parent=5 // pred_region
        %s1831 = ssub.s32 %s12, 2
        // Predicated region
        $region53: #{_lambda_.8} parent=51 // pred_check
          %p1832 = pneg %p142
        $region54: #{_lambda_.8} parent=51 // pred_check_branch
          %1834 = sbr.rel (%p1832) target = $region56
        $region55: #{_lambda_.8} parent=51 // pred_region
          %s1835 = smul.u32 64, %s25
          %p1836 = scmp.lt.s32.totalorder %s1835, 1023
          %s1837 = scalar_select %p1836, %s1835, 1023
          %p1838 = scmp.lt.s32.totalorder %s26, 0
          %s1839 = scalar_select %p1838, %s26, 0
          %s1840 = sadd.s32 %s1839, %s1837
          %s1841 = smul.addr %s1840, 4
          %s1842 = scalar_lea.vmem %s3, %s1841
        $region56: #{_lambda_.8} parent=51 // pred_fallthru
          _
      $region52: #{_lambda_.8} parent=5 // pred_fallthru
        _
    $region6: #{_lambda_.8} parent=1 // loop_footer
      %s16 = sadd.s32 1, %s12
    $region7: #{_lambda_.8} parent=1 // loop_footer_branch
      %11 = sbr.rel target = $region3
    $region8: #{_lambda_.8} parent=1 // loop_exit
      _
    %1843 = vsyncpa [#allocation4], 1
    %s1844 = scalar_lea.sflag [#allocation4], 1
    %1845 = vsyncpa %s1844, 1

// kernel: _lambda_.9
$region0: #{_lambda_.9}
  #allocation0 [shape = 'u32[]', space=smem, size = 0x4, offset = 0x4, fixed_abs, tag = 'smem constant byte address 0x4 - core index']
  #allocation1 [shape = 'u32[144,128]{1,0:T(1,128)}', space=vmem, size = 0x12000, scoped, tag = 'internal scratch']
  #allocation2 [shape = 'f32[512,8]{1,0:T(8,128)}', space=vmem, size = 0x40000, scoped, tag = 'scratch operand']
  %s0 = inlined_call_operand.vmem [shape: bf16[1024,256], index: 0, kind: input, shape index: {}]
  %s1 = inlined_call_operand.vmem [shape: bf16[256,8], index: 1, kind: input, shape index: {}]
  %s2 = inlined_call_operand.vmem [shape: f32[1,8], index: 2, kind: input, shape index: {}]
  %s3 = inlined_call_operand.vmem [shape: bf16[1024,8], index: 3, kind: output, shape index: {0}]
  %s4 = inlined_call_operand.vmem [shape: f32[2,2,8], index: 4, kind: output, shape index: {1}]
  %5 = xla_tuple %s3, %s4
  %s6 = sld [smem:[#allocation0]]
  $region61: #{_lambda_.9} parent=0
    _
  %s8 = ssub.s32 1, %s6
  %s9 = scalar_select 0, %s8, %s6
  loop: start=0, step=1, limit=4
  $region2: #{_lambda_.9} parent=0 // loop_pre_header
    _
  $region3: #{_lambda_.9} parent=0 // loop_header
    %s11 = sphi 0, %s15
    %p12 = scmp.ge.s32.totalorder %s11, 4
    %s18 = sphi 0, %s37
    %s19 = sphi 0, %s33
    %s20 = sphi 0, %s29
    %s21 = sphi 0, %s18
    %s22 = sphi 0, %s19
    %s23 = sphi 0, %s20
    %s24 = sphi 0, %s21
    %s25 = sphi 0, %s22
    %s26 = sphi 0, %s23
    %s42 = sphi 0, %s44
    %s45 = sphi 0, %s42
    %s46 = sphi 0, %s45
    %s62 = sphi 0, %s46
    %s68 = sphi 0, %s70
    %s71 = sphi 0, %s68
    %s72 = sphi 0, %s71
    %s88 = sphi 0, %s72
    %s94 = sphi 0, %s96
    %s97 = sphi 0, %s94
    %s98 = sphi 0, %s97
    %s114 = sphi 0, %s98
    %s122 = sphi 0, %s124
    %s125 = sphi 0, %s122
    %s126 = sphi 0, %s125
    %s142 = sphi 0, %s126
    %s150 = sphi 0, %s152
    %s153 = sphi 0, %s150
    %s154 = sphi 0, %s153
    %s170 = sphi 0, %s154
  $region4: #{_lambda_.9} parent=0 // loop_header_branch
    %14 = sbr.rel (%p12) target = $region8
  $region5: #{_lambda_.9} parent=0 // loop_body
    %s16 = ssub.s32 %s11, 1
    %s17 = ssub.s32 %s11, 2
    %s27 = sadd.s32 1, %s20
    %p28 = scmp.ge.s32.totalorder %s27, 1
    %s29 = scalar_select %p28, 0, %s27
    %s30 = sadd.s32 1, %s19
    %s31 = scalar_select %p28, %s30, %s19
    %p32 = scmp.ge.s32.totalorder %s31, 1
    %s33 = scalar_select %p32, 0, %s31
    %s34 = sadd.s32 1, %s18
    %s35 = scalar_select %p32, %s34, %s18
    %p36 = scmp.ge.s32.totalorder %s35, 2
    %s37 = scalar_select %p36, 0, %s35
    %s38 = ssub.s32 %s18, %s37
    %s39 = ssub.s32 %s20, %s29
    %s40 = sor.u32 %s38, %s39
    %p41 = scmp.eq.s32.totalorder %s40, 0
    %s43 = sadd.s32 %s42, 1
    %s44 = scalar_select %p41, %s42, %s43
    %p47 = pneg %p41
    %p48 = scmp.eq.s32.totalorder %s11, 1
    %p49 = por %p47, %p48
    %p50 = scmp.ne.s32.totalorder %s42, %s45
    %p51 = scmp.eq.s32.totalorder %s11, 0
    %p52 = por %p50, %p51
    %p53 = scmp.ne.s32.totalorder %s42, %s45
    %p54 = scmp.eq.s32.totalorder %s16, 1
    %p55 = por %p53, %p54
    %p56 = scmp.ne.s32.totalorder %s45, %s46
    %p57 = scmp.eq.s32.totalorder %s16, 0
    %p58 = por %p56, %p57
    %p59 = scmp.ne.s32.totalorder %s45, %s46
    %p60 = scmp.eq.s32.totalorder %s17, 1
    %p61 = por %p59, %p60
    %p63 = scmp.ne.s32.totalorder %s46, %s62
    %p64 = scmp.eq.s32.totalorder %s17, 0
    %p65 = por %p63, %p64
    %s66 = ssub.s32 %s19, %s33
    %p67 = scmp.eq.s32.totalorder %s66, 0
    %s69 = sadd.s32 %s68, 1
    %s70 = scalar_select %p67, %s68, %s69
    %p73 = pneg %p67
    %p74 = scmp.eq.s32.totalorder %s11, 1
    %p75 = por %p73, %p74
    %p76 = scmp.ne.s32.totalorder %s68, %s71
    %p77 = scmp.eq.s32.totalorder %s11, 0
    %p78 = por %p76, %p77
    %p79 = scmp.ne.s32.totalorder %s68, %s71
    %p80 = scmp.eq.s32.totalorder %s16, 1
    %p81 = por %p79, %p80
    %p82 = scmp.ne.s32.totalorder %s71, %s72
    %p83 = scmp.eq.s32.totalorder %s16, 0
    %p84 = por %p82, %p83
    %p85 = scmp.ne.s32.totalorder %s71, %s72
    %p86 = scmp.eq.s32.totalorder %s17, 1
    %p87 = por %p85, %p86
    %p89 = scmp.ne.s32.totalorder %s72, %s88
    %p90 = scmp.eq.s32.totalorder %s17, 0
    %p91 = por %p89, %p90
    %s92 = ssub.s32 %s19, %s33
    %p93 = scmp.eq.s32.totalorder %s92, 0
    %s95 = sadd.s32 %s94, 1
    %s96 = scalar_select %p93, %s94, %s95
    %p99 = pneg %p93
    %p100 = scmp.eq.s32.totalorder %s11, 1
    %p101 = por %p99, %p100
    %p102 = scmp.ne.s32.totalorder %s94, %s97
    %p103 = scmp.eq.s32.totalorder %s11, 0
    %p104 = por %p102, %p103
    %p105 = scmp.ne.s32.totalorder %s94, %s97
    %p106 = scmp.eq.s32.totalorder %s16, 1
    %p107 = por %p105, %p106
    %p108 = scmp.ne.s32.totalorder %s97, %s98
    %p109 = scmp.eq.s32.totalorder %s16, 0
    %p110 = por %p108, %p109
    %p111 = scmp.ne.s32.totalorder %s97, %s98
    %p112 = scmp.eq.s32.totalorder %s17, 1
    %p113 = por %p111, %p112
    %p115 = scmp.ne.s32.totalorder %s98, %s114
    %p116 = scmp.eq.s32.totalorder %s17, 0
    %p117 = por %p115, %p116
    %s118 = ssub.s32 %s18, %s37
    %s119 = ssub.s32 %s19, %s33
    %s120 = sor.u32 %s118, %s119
    %p121 = scmp.eq.s32.totalorder %s120, 0
    %s123 = sadd.s32 %s122, 1
    %s124 = scalar_select %p121, %s122, %s123
    %p127 = pneg %p121
    %p128 = scmp.eq.s32.totalorder %s11, 1
    %p129 = por %p127, %p128
    %p130 = scmp.ne.s32.totalorder %s122, %s125
    %p131 = scmp.eq.s32.totalorder %s11, 0
    %p132 = por %p130, %p131
    %p133 = scmp.ne.s32.totalorder %s122, %s125
    %p134 = scmp.eq.s32.totalorder %s16, 1
    %p135 = por %p133, %p134
    %p136 = scmp.ne.s32.totalorder %s125, %s126
    %p137 = scmp.eq.s32.totalorder %s16, 0
    %p138 = por %p136, %p137
    %p139 = scmp.ne.s32.totalorder %s125, %s126
    %p140 = scmp.eq.s32.totalorder %s17, 1
    %p141 = por %p139, %p140
    %p143 = scmp.ne.s32.totalorder %s126, %s142
    %p144 = scmp.eq.s32.totalorder %s17, 0
    %p145 = por %p143, %p144
    %s146 = ssub.s32 %s18, %s37
    %s147 = ssub.s32 %s19, %s33
    %s148 = sor.u32 %s146, %s147
    %p149 = scmp.eq.s32.totalorder %s148, 0
    %s151 = sadd.s32 %s150, 1
    %s152 = scalar_select %p149, %s150, %s151
    %p155 = pneg %p149
    %p156 = scmp.eq.s32.totalorder %s11, 1
    %p157 = por %p155, %p156
    %p158 = scmp.ne.s32.totalorder %s150, %s153
    %p159 = scmp.eq.s32.totalorder %s11, 0
    %p160 = por %p158, %p159
    %p161 = scmp.ne.s32.totalorder %s150, %s153
    %p162 = scmp.eq.s32.totalorder %s16, 1
    %p163 = por %p161, %p162
    %p164 = scmp.ne.s32.totalorder %s153, %s154
    %p165 = scmp.eq.s32.totalorder %s16, 0
    %p166 = por %p164, %p165
    %p167 = scmp.ne.s32.totalorder %s153, %s154
    %p168 = scmp.eq.s32.totalorder %s17, 1
    %p169 = por %p167, %p168
    %p171 = scmp.ne.s32.totalorder %s154, %s170
    %p172 = scmp.eq.s32.totalorder %s17, 0
    %p173 = por %p171, %p172
    %p174 = scmp.le.s32.totalorder 1, %s11
    %p175 = scmp.lt.s32.totalorder %s11, 3
    %p176 = pnand %p174, %p175
    %p177 = pneg %p176
    // Predicated region
    $region9: #{_lambda_.9} parent=5 // pred_check
      _
    $region10: #{_lambda_.9} parent=5 // pred_check_branch
      %179 = sbr.rel (%p176) target = $region12
    $region11: #{_lambda_.9} parent=5 // pred_region
      %s180 = ssub.s32 %s11, 1
      // Predicated region
      $region13: #{_lambda_.9} parent=11 // pred_check
        %p181 = pneg %p84
      $region14: #{_lambda_.9} parent=11 // pred_check_branch
        %183 = sbr.rel (%p181) target = $region16
      $region15: #{_lambda_.9} parent=11 // pred_region
        %p184 = scmp.lt.s32.totalorder %s22, 0
        %s185 = scalar_select %p184, %s22, 0
        %s186 = smul.addr %s185, 4
        %s187 = scalar_lea.vmem %s1, %s186
      $region16: #{_lambda_.9} parent=11 // pred_fallthru
        _
      // Predicated region
      $region17: #{_lambda_.9} parent=11 // pred_check
        %p188 = pneg %p110
      $region18: #{_lambda_.9} parent=11 // pred_check_branch
        %190 = sbr.rel (%p188) target = $region20
      $region19: #{_lambda_.9} parent=11 // pred_region
        %p191 = scmp.lt.s32.totalorder %s22, 0
        %s192 = scalar_select %p191, %s22, 0
        %s193 = scalar_lea.vmem %s2, %s192
      $region20: #{_lambda_.9} parent=11 // pred_fallthru
        _
    $region12: #{_lambda_.9} parent=5 // pred_fallthru
      _
    %p194 = scmp.lt.s32.totalorder %s11, 2
    // Predicated region
    $region21: #{_lambda_.9} parent=5 // pred_check
      %p195 = pneg %p194
    $region22: #{_lambda_.9} parent=5 // pred_check_branch
      %197 = sbr.rel (%p195) target = $region24
    $region23: #{_lambda_.9} parent=5 // pred_region
      // Predicated region
      $region25: #{_lambda_.9} parent=23 // pred_check
        %p198 = pneg %p52
      $region26: #{_lambda_.9} parent=23 // pred_check_branch
        %200 = sbr.rel (%p198) target = $region28
      $region27: #{_lambda_.9} parent=23 // pred_region
        %s201 = smul.u32 64, %s18
        %s202 = smul.u32 2, %s20
        %p203 = scmp.lt.s32.totalorder %s201, 127
        %s204 = scalar_select %p203, %s201, 127
        %p205 = scmp.lt.s32.totalorder %s202, 1
        %s206 = scalar_select %p205, %s202, 1
        %s207 = smul.addr %s204, 2
        %s208 = sadd.s32 %s206, %s207
        %s209 = smul.addr %s208, 4
        %s210 = scalar_lea.vmem %s0, %s209
        %s211 = smul.u32 64, %s18
        %s212 = smul.u32 2, %s20
      $region28: #{_lambda_.9} parent=23 // pred_fallthru
        _
    $region24: #{_lambda_.9} parent=5 // pred_fallthru
      _
    %p213 = scmp.le.s32.totalorder 1, %s11
    %p214 = scmp.lt.s32.totalorder %s11, 3
    %p215 = pnand %p213, %p214
    %p216 = pneg %p215
    // Predicated region
    $region29: #{_lambda_.9} parent=5 // pred_check
      _
    $region30: #{_lambda_.9} parent=5 // pred_check_branch
      %218 = sbr.rel (%p215) target = $region32
    $region31: #{_lambda_.9} parent=5 // pred_region
      %s219 = ssub.s32 %s11, 1
      %s220 = smul.u32 64, %s21
      %s221 = smul.u32 2, %s23
      %p222 = scmp.lt.s32.totalorder %s220, 127
      %s223 = scalar_select %p222, %s220, 127
      %p224 = scmp.lt.s32.totalorder %s221, 1
      %s225 = scalar_select %p224, %s221, 1
      %s226 = smul.addr %s223, 2
      %s227 = sadd.s32 %s225, %s226
      %s228 = smul.addr %s227, 4
      %s229 = scalar_lea.vmem %s0, %s228
      %p230 = pneg %p58
      %p231 = pneg %p55
      %p232 = scmp.lt.s32.totalorder %s22, 0
      %s233 = scalar_select %p232, %s22, 0
      %s234 = smul.addr %s233, 4
      %s235 = scalar_lea.vmem %s1, %s234
      %p236 = pneg %p84
      %p237 = pneg %p81
      %p238 = scmp.lt.s32.totalorder %s22, 0
      %s239 = scalar_select %p238, %s22, 0
      %s240 = scalar_lea.vmem %s2, %s239
      %p241 = pneg %p110
      %p242 = pneg %p107
      %p243 = pneg %p138
      %p244 = pneg %p135
      %s245 = smul.u32 64, %s21
      %p246 = scmp.lt.s32.totalorder %s245, 127
      %s247 = scalar_select %p246, %s245, 127
      %p248 = scmp.lt.s32.totalorder %s22, 0
      %s249 = scalar_select %p248, %s22, 0
      %s250 = sadd.s32 %s249, %s247
      %s251 = smul.addr %s250, 4
      %s252 = scalar_lea.vmem %s3, %s251
      %p253 = pneg %p166
      %p254 = pneg %p163
      %p255 = scmp.lt.s32.totalorder %s21, 1
      %s256 = scalar_select %p255, %s21, 1
      %p257 = scmp.lt.s32.totalorder %s22, 0
      %s258 = scalar_select %p257, %s22, 0
      %s259 = sadd.s32 %s258, %s256
      %s260 = smul.addr %s259, 2
      %s261 = scalar_lea.vmem %s4, %s260
      %s262 = smul.u32 64, %s21
      %s263 = smul.u32 2, %s23
      %p264 = scmp.lt.s32.totalorder %s262, 127
      %s265 = scalar_select %p264, %s262, 127
      %p266 = scmp.lt.s32.totalorder %s263, 1
      %s267 = scalar_select %p266, %s263, 1
      %s268 = smul.addr %s265, 2
      %s269 = sadd.s32 %s267, %s268
      %s270 = smul.addr %s269, 4
      %s271 = scalar_lea.vmem %s0, %s270
      %s272 = smul.u32 64, %s21
      %s273 = smul.u32 2, %s23
      %p274 = scmp.lt.s32.totalorder %s22, 0
      %s275 = scalar_select %p274, %s22, 0
      %s276 = smul.addr %s275, 4
      %s277 = scalar_lea.vmem %s1, %s276
      %p278 = scmp.lt.s32.totalorder %s22, 0
      %s279 = scalar_select %p278, %s22, 0
      %s280 = scalar_lea.vmem %s2, %s279
      %s281 = smul.u32 64, %s21
      %p282 = scmp.lt.s32.totalorder %s281, 127
      %s283 = scalar_select %p282, %s281, 127
      %p284 = scmp.lt.s32.totalorder %s22, 0
      %s285 = scalar_select %p284, %s22, 0
      %s286 = sadd.s32 %s285, %s283
      %s287 = smul.addr %s286, 4
      %s288 = scalar_lea.vmem %s3, %s287
      %s289 = smul.u32 64, %s21
      %p290 = scmp.lt.s32.totalorder %s21, 1
      %s291 = scalar_select %p290, %s21, 1
      %p292 = scmp.lt.s32.totalorder %s22, 0
      %s293 = scalar_select %p292, %s22, 0
      %s294 = sadd.s32 %s293, %s291
      %s295 = smul.addr %s294, 2
      %s296 = scalar_lea.vmem %s4, %s295
      %p298 = scmp.eq.s32.totalorder %s23, 0
      // Predicated region
      $region33: #{_lambda_.9} parent=31 // pred_check
        %p299 = pneg %p298
      $region34: #{_lambda_.9} parent=31 // pred_check_branch
        %301 = sbr.rel (%p299) target = $region36
      $region35: #{_lambda_.9} parent=31 // pred_region
        %vm302 = vcmask 64512
        %303 = vst.msk [vmem:[#allocation2] sm:$0xff] %vm302, 0.0
        %304 = vst.msk [vmem:[#allocation2 + $0x8] sm:$0xff] %vm302, 0.0
        %305 = vst.msk [vmem:[#allocation2 + $0x10] sm:$0xff] %vm302, 0.0
        %306 = vst.msk [vmem:[#allocation2 + $0x18] sm:$0xff] %vm302, 0.0
        %307 = vst.msk [vmem:[#allocation2 + $0x20] sm:$0xff] %vm302, 0.0
        %308 = vst.msk [vmem:[#allocation2 + $0x28] sm:$0xff] %vm302, 0.0
        %309 = vst.msk [vmem:[#allocation2 + $0x30] sm:$0xff] %vm302, 0.0
        %310 = vst.msk [vmem:[#allocation2 + $0x38] sm:$0xff] %vm302, 0.0
        %311 = vst.msk [vmem:[#allocation2 + $0x40] sm:$0xff] %vm302, 0.0
        %312 = vst.msk [vmem:[#allocation2 + $0x48] sm:$0xff] %vm302, 0.0
        %313 = vst.msk [vmem:[#allocation2 + $0x50] sm:$0xff] %vm302, 0.0
        %314 = vst.msk [vmem:[#allocation2 + $0x58] sm:$0xff] %vm302, 0.0
        %315 = vst.msk [vmem:[#allocation2 + $0x60] sm:$0xff] %vm302, 0.0
        %316 = vst.msk [vmem:[#allocation2 + $0x68] sm:$0xff] %vm302, 0.0
        %317 = vst.msk [vmem:[#allocation2 + $0x70] sm:$0xff] %vm302, 0.0
        %318 = vst.msk [vmem:[#allocation2 + $0x78] sm:$0xff] %vm302, 0.0
        %319 = vst.msk [vmem:[#allocation2 + $0x80] sm:$0xff] %vm302, 0.0
        %320 = vst.msk [vmem:[#allocation2 + $0x88] sm:$0xff] %vm302, 0.0
        %321 = vst.msk [vmem:[#allocation2 + $0x90] sm:$0xff] %vm302, 0.0
        %322 = vst.msk [vmem:[#allocation2 + $0x98] sm:$0xff] %vm302, 0.0
        %323 = vst.msk [vmem:[#allocation2 + $0xa0] sm:$0xff] %vm302, 0.0
        %324 = vst.msk [vmem:[#allocation2 + $0xa8] sm:$0xff] %vm302, 0.0
        %325 = vst.msk [vmem:[#allocation2 + $0xb0] sm:$0xff] %vm302, 0.0
        %326 = vst.msk [vmem:[#allocation2 + $0xb8] sm:$0xff] %vm302, 0.0
        %327 = vst.msk [vmem:[#allocation2 + $0xc0] sm:$0xff] %vm302, 0.0
        %328 = vst.msk [vmem:[#allocation2 + $0xc8] sm:$0xff] %vm302, 0.0
        %329 = vst.msk [vmem:[#allocation2 + $0xd0] sm:$0xff] %vm302, 0.0
        %330 = vst.msk [vmem:[#allocation2 + $0xd8] sm:$0xff] %vm302, 0.0
        %331 = vst.msk [vmem:[#allocation2 + $0xe0] sm:$0xff] %vm302, 0.0
        %332 = vst.msk [vmem:[#allocation2 + $0xe8] sm:$0xff] %vm302, 0.0
        %333 = vst.msk [vmem:[#allocation2 + $0xf0] sm:$0xff] %vm302, 0.0
        %334 = vst.msk [vmem:[#allocation2 + $0xf8] sm:$0xff] %vm302, 0.0
        %335 = vst.msk [vmem:[#allocation2 + $0x100] sm:$0xff] %vm302, 0.0
        %336 = vst.msk [vmem:[#allocation2 + $0x108] sm:$0xff] %vm302, 0.0
        %337 = vst.msk [vmem:[#allocation2 + $0x110] sm:$0xff] %vm302, 0.0
        %338 = vst.msk [vmem:[#allocation2 + $0x118] sm:$0xff] %vm302, 0.0
        %339 = vst.msk [vmem:[#allocation2 + $0x120] sm:$0xff] %vm302, 0.0
        %340 = vst.msk [vmem:[#allocation2 + $0x128] sm:$0xff] %vm302, 0.0
        %341 = vst.msk [vmem:[#allocation2 + $0x130] sm:$0xff] %vm302, 0.0
        %342 = vst.msk [vmem:[#allocation2 + $0x138] sm:$0xff] %vm302, 0.0
        %343 = vst.msk [vmem:[#allocation2 + $0x140] sm:$0xff] %vm302, 0.0
        %344 = vst.msk [vmem:[#allocation2 + $0x148] sm:$0xff] %vm302, 0.0
        %345 = vst.msk [vmem:[#allocation2 + $0x150] sm:$0xff] %vm302, 0.0
        %346 = vst.msk [vmem:[#allocation2 + $0x158] sm:$0xff] %vm302, 0.0
        %347 = vst.msk [vmem:[#allocation2 + $0x160] sm:$0xff] %vm302, 0.0
        %348 = vst.msk [vmem:[#allocation2 + $0x168] sm:$0xff] %vm302, 0.0
        %349 = vst.msk [vmem:[#allocation2 + $0x170] sm:$0xff] %vm302, 0.0
        %350 = vst.msk [vmem:[#allocation2 + $0x178] sm:$0xff] %vm302, 0.0
        %351 = vst.msk [vmem:[#allocation2 + $0x180] sm:$0xff] %vm302, 0.0
        %352 = vst.msk [vmem:[#allocation2 + $0x188] sm:$0xff] %vm302, 0.0
        %353 = vst.msk [vmem:[#allocation2 + $0x190] sm:$0xff] %vm302, 0.0
        %354 = vst.msk [vmem:[#allocation2 + $0x198] sm:$0xff] %vm302, 0.0
        %355 = vst.msk [vmem:[#allocation2 + $0x1a0] sm:$0xff] %vm302, 0.0
        %356 = vst.msk [vmem:[#allocation2 + $0x1a8] sm:$0xff] %vm302, 0.0
        %357 = vst.msk [vmem:[#allocation2 + $0x1b0] sm:$0xff] %vm302, 0.0
        %358 = vst.msk [vmem:[#allocation2 + $0x1b8] sm:$0xff] %vm302, 0.0
        %359 = vst.msk [vmem:[#allocation2 + $0x1c0] sm:$0xff] %vm302, 0.0
        %360 = vst.msk [vmem:[#allocation2 + $0x1c8] sm:$0xff] %vm302, 0.0
        %361 = vst.msk [vmem:[#allocation2 + $0x1d0] sm:$0xff] %vm302, 0.0
        %362 = vst.msk [vmem:[#allocation2 + $0x1d8] sm:$0xff] %vm302, 0.0
        %363 = vst.msk [vmem:[#allocation2 + $0x1e0] sm:$0xff] %vm302, 0.0
        %364 = vst.msk [vmem:[#allocation2 + $0x1e8] sm:$0xff] %vm302, 0.0
        %365 = vst.msk [vmem:[#allocation2 + $0x1f0] sm:$0xff] %vm302, 0.0
        %366 = vst.msk [vmem:[#allocation2 + $0x1f8] sm:$0xff] %vm302, 0.0
      $region36: #{_lambda_.9} parent=31 // pred_fallthru
        _
      %s367 = smul.u32 %s23, 256
      %s368 = sshra.s32 %s367, 3
      %s369 = sand.u32 %s367, 7
      %s370 = smul.addr %s368, 4
      %s371 = scalar_lea.vmem %s277, %s370
      %v372 = vld [vmem:[%s371] sm:$0xf]
      %v373 = vld [vmem:[%s371 + $0x4] sm:$0xf]
      %v374 = vld [vmem:[%s371 + $0x8] sm:$0xf]
      %v375 = vld [vmem:[%s371 + $0xc] sm:$0xf]
      %v376 = vld [vmem:[%s371 + $0x10] sm:$0xf]
      %v377 = vld [vmem:[%s371 + $0x14] sm:$0xf]
      %v378 = vld [vmem:[%s371 + $0x18] sm:$0xf]
      %v379 = vld [vmem:[%s371 + $0x1c] sm:$0xf]
      %v380 = vld [vmem:[%s371 + $0x20] sm:$0xf]
      %v381 = vld [vmem:[%s371 + $0x24] sm:$0xf]
      %v382 = vld [vmem:[%s371 + $0x28] sm:$0xf]
      %v383 = vld [vmem:[%s371 + $0x2c] sm:$0xf]
      %v384 = vld [vmem:[%s371 + $0x30] sm:$0xf]
      %v385 = vld [vmem:[%s371 + $0x34] sm:$0xf]
      %v386 = vld [vmem:[%s371 + $0x38] sm:$0xf]
      %v387 = vld [vmem:[%s371 + $0x3c] sm:$0xf]
      %v388 = vld [vmem:[%s371 + $0x40] sm:$0xf]
      %v389 = vld [vmem:[%s371 + $0x44] sm:$0xf]
      %v390 = vld [vmem:[%s371 + $0x48] sm:$0xf]
      %v391 = vld [vmem:[%s371 + $0x4c] sm:$0xf]
      %v392 = vld [vmem:[%s371 + $0x50] sm:$0xf]
      %v393 = vld [vmem:[%s371 + $0x54] sm:$0xf]
      %v394 = vld [vmem:[%s371 + $0x58] sm:$0xf]
      %v395 = vld [vmem:[%s371 + $0x5c] sm:$0xf]
      %v396 = vld [vmem:[%s371 + $0x60] sm:$0xf]
      %v397 = vld [vmem:[%s371 + $0x64] sm:$0xf]
      %v398 = vld [vmem:[%s371 + $0x68] sm:$0xf]
      %v399 = vld [vmem:[%s371 + $0x6c] sm:$0xf]
      %v400 = vld [vmem:[%s371 + $0x70] sm:$0xf]
      %v401 = vld [vmem:[%s371 + $0x74] sm:$0xf]
      %v402 = vld [vmem:[%s371 + $0x78] sm:$0xf]
      %v403 = vld [vmem:[%s371 + $0x7c] sm:$0xf]
      %v404 = vld [vmem:[#allocation2] sm:$0xff]
      %v405 = vld [vmem:[#allocation2 + $0x8] sm:$0xff]
      %v406 = vld [vmem:[#allocation2 + $0x10] sm:$0xff]
      %v407 = vld [vmem:[#allocation2 + $0x18] sm:$0xff]
      %v408 = vld [vmem:[#allocation2 + $0x20] sm:$0xff]
      %v409 = vld [vmem:[#allocation2 + $0x28] sm:$0xff]
      %v410 = vld [vmem:[#allocation2 + $0x30] sm:$0xff]
      %v411 = vld [vmem:[#allocation2 + $0x38] sm:$0xff]
      %v412 = vld [vmem:[#allocation2 + $0x40] sm:$0xff]
      %v413 = vld [vmem:[#allocation2 + $0x48] sm:$0xff]
      %v414 = vld [vmem:[#allocation2 + $0x50] sm:$0xff]
      %v415 = vld [vmem:[#allocation2 + $0x58] sm:$0xff]
      %v416 = vld [vmem:[#allocation2 + $0x60] sm:$0xff]
      %v417 = vld [vmem:[#allocation2 + $0x68] sm:$0xff]
      %v418 = vld [vmem:[#allocation2 + $0x70] sm:$0xff]
      %v419 = vld [vmem:[#allocation2 + $0x78] sm:$0xff]
      %v420 = vld [vmem:[#allocation2 + $0x80] sm:$0xff]
      %v421 = vld [vmem:[#allocation2 + $0x88] sm:$0xff]
      %v422 = vld [vmem:[#allocation2 + $0x90] sm:$0xff]
      %v423 = vld [vmem:[#allocation2 + $0x98] sm:$0xff]
      %v424 = vld [vmem:[#allocation2 + $0xa0] sm:$0xff]
      %v425 = vld [vmem:[#allocation2 + $0xa8] sm:$0xff]
      %v426 = vld [vmem:[#allocation2 + $0xb0] sm:$0xff]
      %v427 = vld [vmem:[#allocation2 + $0xb8] sm:$0xff]
      %v428 = vld [vmem:[#allocation2 + $0xc0] sm:$0xff]
      %v429 = vld [vmem:[#allocation2 + $0xc8] sm:$0xff]
      %v430 = vld [vmem:[#allocation2 + $0xd0] sm:$0xff]
      %v431 = vld [vmem:[#allocation2 + $0xd8] sm:$0xff]
      %v432 = vld [vmem:[#allocation2 + $0xe0] sm:$0xff]
      %v433 = vld [vmem:[#allocation2 + $0xe8] sm:$0xff]
      %v434 = vld [vmem:[#allocation2 + $0xf0] sm:$0xff]
      %v435 = vld [vmem:[#allocation2 + $0xf8] sm:$0xff]
      %v436 = vld [vmem:[#allocation2 + $0x100] sm:$0xff]
      %v437 = vld [vmem:[#allocation2 + $0x108] sm:$0xff]
      %v438 = vld [vmem:[#allocation2 + $0x110] sm:$0xff]
      %v439 = vld [vmem:[#allocation2 + $0x118] sm:$0xff]
      %v440 = vld [vmem:[#allocation2 + $0x120] sm:$0xff]
      %v441 = vld [vmem:[#allocation2 + $0x128] sm:$0xff]
      %v442 = vld [vmem:[#allocation2 + $0x130] sm:$0xff]
      %v443 = vld [vmem:[#allocation2 + $0x138] sm:$0xff]
      %v444 = vld [vmem:[#allocation2 + $0x140] sm:$0xff]
      %v445 = vld [vmem:[#allocation2 + $0x148] sm:$0xff]
      %v446 = vld [vmem:[#allocation2 + $0x150] sm:$0xff]
      %v447 = vld [vmem:[#allocation2 + $0x158] sm:$0xff]
      %v448 = vld [vmem:[#allocation2 + $0x160] sm:$0xff]
      %v449 = vld [vmem:[#allocation2 + $0x168] sm:$0xff]
      %v450 = vld [vmem:[#allocation2 + $0x170] sm:$0xff]
      %v451 = vld [vmem:[#allocation2 + $0x178] sm:$0xff]
      %v452 = vld [vmem:[#allocation2 + $0x180] sm:$0xff]
      %v453 = vld [vmem:[#allocation2 + $0x188] sm:$0xff]
      %v454 = vld [vmem:[#allocation2 + $0x190] sm:$0xff]
      %v455 = vld [vmem:[#allocation2 + $0x198] sm:$0xff]
      %v456 = vld [vmem:[#allocation2 + $0x1a0] sm:$0xff]
      %v457 = vld [vmem:[#allocation2 + $0x1a8] sm:$0xff]
      %v458 = vld [vmem:[#allocation2 + $0x1b0] sm:$0xff]
      %v459 = vld [vmem:[#allocation2 + $0x1b8] sm:$0xff]
      %v460 = vld [vmem:[#allocation2 + $0x1c0] sm:$0xff]
      %v461 = vld [vmem:[#allocation2 + $0x1c8] sm:$0xff]
      %v462 = vld [vmem:[#allocation2 + $0x1d0] sm:$0xff]
      %v463 = vld [vmem:[#allocation2 + $0x1d8] sm:$0xff]
      %v464 = vld [vmem:[#allocation2 + $0x1e0] sm:$0xff]
      %v465 = vld [vmem:[#allocation2 + $0x1e8] sm:$0xff]
      %v466 = vld [vmem:[#allocation2 + $0x1f0] sm:$0xff]
      %v467 = vld [vmem:[#allocation2 + $0x1f8] sm:$0xff]
      %v468 = vld [vmem:[%s271] sm:$0xff]
      %v469 = vld [vmem:[%s271 + $0x8] sm:$0xff]
      %v470 = vld [vmem:[%s271 + $0x10] sm:$0xff]
      %v471 = vld [vmem:[%s271 + $0x18] sm:$0xff]
      %v472 = vld [vmem:[%s271 + $0x20] sm:$0xff]
      %v473 = vld [vmem:[%s271 + $0x28] sm:$0xff]
      %v474 = vld [vmem:[%s271 + $0x30] sm:$0xff]
      %v475 = vld [vmem:[%s271 + $0x38] sm:$0xff]
      %v476 = vld [vmem:[%s271 + $0x40] sm:$0xff]
      %v477 = vld [vmem:[%s271 + $0x48] sm:$0xff]
      %v478 = vld [vmem:[%s271 + $0x50] sm:$0xff]
      %v479 = vld [vmem:[%s271 + $0x58] sm:$0xff]
      %v480 = vld [vmem:[%s271 + $0x60] sm:$0xff]
      %v481 = vld [vmem:[%s271 + $0x68] sm:$0xff]
      %v482 = vld [vmem:[%s271 + $0x70] sm:$0xff]
      %v483 = vld [vmem:[%s271 + $0x78] sm:$0xff]
      %v484 = vld [vmem:[%s271 + $0x80] sm:$0xff]
      %v485 = vld [vmem:[%s271 + $0x88] sm:$0xff]
      %v486 = vld [vmem:[%s271 + $0x90] sm:$0xff]
      %v487 = vld [vmem:[%s271 + $0x98] sm:$0xff]
      %v488 = vld [vmem:[%s271 + $0xa0] sm:$0xff]
      %v489 = vld [vmem:[%s271 + $0xa8] sm:$0xff]
      %v490 = vld [vmem:[%s271 + $0xb0] sm:$0xff]
      %v491 = vld [vmem:[%s271 + $0xb8] sm:$0xff]
      %v492 = vld [vmem:[%s271 + $0xc0] sm:$0xff]
      %v493 = vld [vmem:[%s271 + $0xc8] sm:$0xff]
      %v494 = vld [vmem:[%s271 + $0xd0] sm:$0xff]
      %v495 = vld [vmem:[%s271 + $0xd8] sm:$0xff]
      %v496 = vld [vmem:[%s271 + $0xe0] sm:$0xff]
      %v497 = vld [vmem:[%s271 + $0xe8] sm:$0xff]
      %v498 = vld [vmem:[%s271 + $0xf0] sm:$0xff]
      %v499 = vld [vmem:[%s271 + $0xf8] sm:$0xff]
      %v500 = vld [vmem:[%s271 + $0x100] sm:$0xff]
      %v501 = vld [vmem:[%s271 + $0x108] sm:$0xff]
      %v502 = vld [vmem:[%s271 + $0x110] sm:$0xff]
      %v503 = vld [vmem:[%s271 + $0x118] sm:$0xff]
      %v504 = vld [vmem:[%s271 + $0x120] sm:$0xff]
      %v505 = vld [vmem:[%s271 + $0x128] sm:$0xff]
      %v506 = vld [vmem:[%s271 + $0x130] sm:$0xff]
      %v507 = vld [vmem:[%s271 + $0x138] sm:$0xff]
      %v508 = vld [vmem:[%s271 + $0x140] sm:$0xff]
      %v509 = vld [vmem:[%s271 + $0x148] sm:$0xff]
      %v510 = vld [vmem:[%s271 + $0x150] sm:$0xff]
      %v511 = vld [vmem:[%s271 + $0x158] sm:$0xff]
      %v512 = vld [vmem:[%s271 + $0x160] sm:$0xff]
      %v513 = vld [vmem:[%s271 + $0x168] sm:$0xff]
      %v514 = vld [vmem:[%s271 + $0x170] sm:$0xff]
      %v515 = vld [vmem:[%s271 + $0x178] sm:$0xff]
      %v516 = vld [vmem:[%s271 + $0x180] sm:$0xff]
      %v517 = vld [vmem:[%s271 + $0x188] sm:$0xff]
      %v518 = vld [vmem:[%s271 + $0x190] sm:$0xff]
      %v519 = vld [vmem:[%s271 + $0x198] sm:$0xff]
      %v520 = vld [vmem:[%s271 + $0x1a0] sm:$0xff]
      %v521 = vld [vmem:[%s271 + $0x1a8] sm:$0xff]
      %v522 = vld [vmem:[%s271 + $0x1b0] sm:$0xff]
      %v523 = vld [vmem:[%s271 + $0x1b8] sm:$0xff]
      %v524 = vld [vmem:[%s271 + $0x1c0] sm:$0xff]
      %v525 = vld [vmem:[%s271 + $0x1c8] sm:$0xff]
      %v526 = vld [vmem:[%s271 + $0x1d0] sm:$0xff]
      %v527 = vld [vmem:[%s271 + $0x1d8] sm:$0xff]
      %v528 = vld [vmem:[%s271 + $0x1e0] sm:$0xff]
      %v529 = vld [vmem:[%s271 + $0x1e8] sm:$0xff]
      %v530 = vld [vmem:[%s271 + $0x1f0] sm:$0xff]
      %v531 = vld [vmem:[%s271 + $0x1f8] sm:$0xff]
      %v596 = vunpack.c.l.b16 %v468
      %v597 = vunpack.c.h.b16 %v468
      %v598 = vunpack.c.l.b16 %v469
      %v599 = vunpack.c.h.b16 %v469
      %v600 = vunpack.c.l.b16 %v470
      %v601 = vunpack.c.h.b16 %v470
      %v602 = vunpack.c.l.b16 %v471
      %v603 = vunpack.c.h.b16 %v471
      %v604 = vunpack.c.l.b16 %v472
      %v605 = vunpack.c.h.b16 %v472
      %v606 = vunpack.c.l.b16 %v473
      %v607 = vunpack.c.h.b16 %v473
      %v608 = vunpack.c.l.b16 %v474
      %v609 = vunpack.c.h.b16 %v474
      %v610 = vunpack.c.l.b16 %v475
      %v611 = vunpack.c.h.b16 %v475
      %v612 = vunpack.c.l.b16 %v476
      %v613 = vunpack.c.h.b16 %v476
      %v614 = vunpack.c.l.b16 %v477
      %v615 = vunpack.c.h.b16 %v477
      %v616 = vunpack.c.l.b16 %v478
      %v617 = vunpack.c.h.b16 %v478
      %v618 = vunpack.c.l.b16 %v479
      %v619 = vunpack.c.h.b16 %v479
      %v620 = vunpack.c.l.b16 %v480
      %v621 = vunpack.c.h.b16 %v480
      %v622 = vunpack.c.l.b16 %v481
      %v623 = vunpack.c.h.b16 %v481
      %v624 = vunpack.c.l.b16 %v482
      %v625 = vunpack.c.h.b16 %v482
      %v626 = vunpack.c.l.b16 %v483
      %v627 = vunpack.c.h.b16 %v483
      %v628 = vunpack.c.l.b16 %v484
      %v629 = vunpack.c.h.b16 %v484
      %v630 = vunpack.c.l.b16 %v485
      %v631 = vunpack.c.h.b16 %v485
      %v632 = vunpack.c.l.b16 %v486
      %v633 = vunpack.c.h.b16 %v486
      %v634 = vunpack.c.l.b16 %v487
      %v635 = vunpack.c.h.b16 %v487
      %v636 = vunpack.c.l.b16 %v488
      %v637 = vunpack.c.h.b16 %v488
      %v638 = vunpack.c.l.b16 %v489
      %v639 = vunpack.c.h.b16 %v489
      %v640 = vunpack.c.l.b16 %v490
      %v641 = vunpack.c.h.b16 %v490
      %v642 = vunpack.c.l.b16 %v491
      %v643 = vunpack.c.h.b16 %v491
      %v644 = vunpack.c.l.b16 %v492
      %v645 = vunpack.c.h.b16 %v492
      %v646 = vunpack.c.l.b16 %v493
      %v647 = vunpack.c.h.b16 %v493
      %v648 = vunpack.c.l.b16 %v494
      %v649 = vunpack.c.h.b16 %v494
      %v650 = vunpack.c.l.b16 %v495
      %v651 = vunpack.c.h.b16 %v495
      %v652 = vunpack.c.l.b16 %v496
      %v653 = vunpack.c.h.b16 %v496
      %v654 = vunpack.c.l.b16 %v497
      %v655 = vunpack.c.h.b16 %v497
      %v656 = vunpack.c.l.b16 %v498
      %v657 = vunpack.c.h.b16 %v498
      %v658 = vunpack.c.l.b16 %v499
      %v659 = vunpack.c.h.b16 %v499
      %v660 = vunpack.c.l.b16 %v500
      %v661 = vunpack.c.h.b16 %v500
      %v662 = vunpack.c.l.b16 %v501
      %v663 = vunpack.c.h.b16 %v501
      %v664 = vunpack.c.l.b16 %v502
      %v665 = vunpack.c.h.b16 %v502
      %v666 = vunpack.c.l.b16 %v503
      %v667 = vunpack.c.h.b16 %v503
      %v668 = vunpack.c.l.b16 %v504
      %v669 = vunpack.c.h.b16 %v504
      %v670 = vunpack.c.l.b16 %v505
      %v671 = vunpack.c.h.b16 %v505
      %v672 = vunpack.c.l.b16 %v506
      %v673 = vunpack.c.h.b16 %v506
      %v674 = vunpack.c.l.b16 %v507
      %v675 = vunpack.c.h.b16 %v507
      %v676 = vunpack.c.l.b16 %v508
      %v677 = vunpack.c.h.b16 %v508
      %v678 = vunpack.c.l.b16 %v509
      %v679 = vunpack.c.h.b16 %v509
      %v680 = vunpack.c.l.b16 %v510
      %v681 = vunpack.c.h.b16 %v510
      %v682 = vunpack.c.l.b16 %v511
      %v683 = vunpack.c.h.b16 %v511
      %v684 = vunpack.c.l.b16 %v512
      %v685 = vunpack.c.h.b16 %v512
      %v686 = vunpack.c.l.b16 %v513
      %v687 = vunpack.c.h.b16 %v513
      %v688 = vunpack.c.l.b16 %v514
      %v689 = vunpack.c.h.b16 %v514
      %v690 = vunpack.c.l.b16 %v515
      %v691 = vunpack.c.h.b16 %v515
      %v692 = vunpack.c.l.b16 %v516
      %v693 = vunpack.c.h.b16 %v516
      %v694 = vunpack.c.l.b16 %v517
      %v695 = vunpack.c.h.b16 %v517
      %v696 = vunpack.c.l.b16 %v518
      %v697 = vunpack.c.h.b16 %v518
      %v698 = vunpack.c.l.b16 %v519
      %v699 = vunpack.c.h.b16 %v519
      %v700 = vunpack.c.l.b16 %v520
      %v701 = vunpack.c.h.b16 %v520
      %v702 = vunpack.c.l.b16 %v521
      %v703 = vunpack.c.h.b16 %v521
      %v704 = vunpack.c.l.b16 %v522
      %v705 = vunpack.c.h.b16 %v522
      %v706 = vunpack.c.l.b16 %v523
      %v707 = vunpack.c.h.b16 %v523
      %v708 = vunpack.c.l.b16 %v524
      %v709 = vunpack.c.h.b16 %v524
      %v710 = vunpack.c.l.b16 %v525
      %v711 = vunpack.c.h.b16 %v525
      %v712 = vunpack.c.l.b16 %v526
      %v713 = vunpack.c.h.b16 %v526
      %v714 = vunpack.c.l.b16 %v527
      %v715 = vunpack.c.h.b16 %v527
      %v716 = vunpack.c.l.b16 %v528
      %v717 = vunpack.c.h.b16 %v528
      %v718 = vunpack.c.l.b16 %v529
      %v719 = vunpack.c.h.b16 %v529
      %v720 = vunpack.c.l.b16 %v530
      %v721 = vunpack.c.h.b16 %v530
      %v722 = vunpack.c.l.b16 %v531
      %v723 = vunpack.c.h.b16 %v531
      %v724 = vpack.c.b16 %v598, %v596
      %v725 = vpack.c.b16 %v599, %v597
      %v726 = vpack.c.b16 %v602, %v600
      %v727 = vpack.c.b16 %v603, %v601
      %v728 = vpack.c.b16 %v606, %v604
      %v729 = vpack.c.b16 %v607, %v605
      %v730 = vpack.c.b16 %v610, %v608
      %v731 = vpack.c.b16 %v611, %v609
      %v732 = vpack.c.b16 %v614, %v612
      %v733 = vpack.c.b16 %v615, %v613
      %v734 = vpack.c.b16 %v618, %v616
      %v735 = vpack.c.b16 %v619, %v617
      %v736 = vpack.c.b16 %v622, %v620
      %v737 = vpack.c.b16 %v623, %v621
      %v738 = vpack.c.b16 %v626, %v624
      %v739 = vpack.c.b16 %v627, %v625
      %v740 = vpack.c.b16 %v630, %v628
      %v741 = vpack.c.b16 %v631, %v629
      %v742 = vpack.c.b16 %v634, %v632
      %v743 = vpack.c.b16 %v635, %v633
      %v744 = vpack.c.b16 %v638, %v636
      %v745 = vpack.c.b16 %v639, %v637
      %v746 = vpack.c.b16 %v642, %v640
      %v747 = vpack.c.b16 %v643, %v641
      %v748 = vpack.c.b16 %v646, %v644
      %v749 = vpack.c.b16 %v647, %v645
      %v750 = vpack.c.b16 %v650, %v648
      %v751 = vpack.c.b16 %v651, %v649
      %v752 = vpack.c.b16 %v654, %v652
      %v753 = vpack.c.b16 %v655, %v653
      %v754 = vpack.c.b16 %v658, %v656
      %v755 = vpack.c.b16 %v659, %v657
      %v756 = vpack.c.b16 %v662, %v660
      %v757 = vpack.c.b16 %v663, %v661
      %v758 = vpack.c.b16 %v666, %v664
      %v759 = vpack.c.b16 %v667, %v665
      %v760 = vpack.c.b16 %v670, %v668
      %v761 = vpack.c.b16 %v671, %v669
      %v762 = vpack.c.b16 %v674, %v672
      %v763 = vpack.c.b16 %v675, %v673
      %v764 = vpack.c.b16 %v678, %v676
      %v765 = vpack.c.b16 %v679, %v677
      %v766 = vpack.c.b16 %v682, %v680
      %v767 = vpack.c.b16 %v683, %v681
      %v768 = vpack.c.b16 %v686, %v684
      %v769 = vpack.c.b16 %v687, %v685
      %v770 = vpack.c.b16 %v690, %v688
      %v771 = vpack.c.b16 %v691, %v689
      %v772 = vpack.c.b16 %v694, %v692
      %v773 = vpack.c.b16 %v695, %v693
      %v774 = vpack.c.b16 %v698, %v696
      %v775 = vpack.c.b16 %v699, %v697
      %v776 = vpack.c.b16 %v702, %v700
      %v777 = vpack.c.b16 %v703, %v701
      %v778 = vpack.c.b16 %v706, %v704
      %v779 = vpack.c.b16 %v707, %v705
      %v780 = vpack.c.b16 %v710, %v708
      %v781 = vpack.c.b16 %v711, %v709
      %v782 = vpack.c.b16 %v714, %v712
      %v783 = vpack.c.b16 %v715, %v713
      %v784 = vpack.c.b16 %v718, %v716
      %v785 = vpack.c.b16 %v719, %v717
      %v786 = vpack.c.b16 %v722, %v720
      %v787 = vpack.c.b16 %v723, %v721
      %v884 = vunpack.c.l.b16 %v372
      %v885 = vunpack.c.l.b16 %v373
      %v886 = vunpack.c.l.b16 %v374
      %v887 = vunpack.c.l.b16 %v375
      %v888 = vunpack.c.l.b16 %v376
      %v889 = vunpack.c.l.b16 %v377
      %v890 = vunpack.c.l.b16 %v378
      %v891 = vunpack.c.l.b16 %v379
      %v892 = vunpack.c.l.b16 %v380
      %v893 = vunpack.c.l.b16 %v381
      %v894 = vunpack.c.l.b16 %v382
      %v895 = vunpack.c.l.b16 %v383
      %v896 = vunpack.c.l.b16 %v384
      %v897 = vunpack.c.l.b16 %v385
      %v898 = vunpack.c.l.b16 %v386
      %v899 = vunpack.c.l.b16 %v387
      %v900 = vunpack.c.l.b16 %v388
      %v901 = vunpack.c.l.b16 %v389
      %v902 = vunpack.c.l.b16 %v390
      %v903 = vunpack.c.l.b16 %v391
      %v904 = vunpack.c.l.b16 %v392
      %v905 = vunpack.c.l.b16 %v393
      %v906 = vunpack.c.l.b16 %v394
      %v907 = vunpack.c.l.b16 %v395
      %v908 = vunpack.c.l.b16 %v396
      %v909 = vunpack.c.l.b16 %v397
      %v910 = vunpack.c.l.b16 %v398
      %v911 = vunpack.c.l.b16 %v399
      %v912 = vunpack.c.l.b16 %v400
      %v913 = vunpack.c.l.b16 %v401
      %v914 = vunpack.c.l.b16 %v402
      %v915 = vunpack.c.l.b16 %v403
      %v916 = vpack.c.b16 %v885, %v884
      %v917 = vpack.c.b16 %v887, %v886
      %v918 = vpack.c.b16 %v889, %v888
      %v919 = vpack.c.b16 %v891, %v890
      %v920 = vpack.c.b16 %v893, %v892
      %v921 = vpack.c.b16 %v895, %v894
      %v922 = vpack.c.b16 %v897, %v896
      %v923 = vpack.c.b16 %v899, %v898
      %v924 = vpack.c.b16 %v901, %v900
      %v925 = vpack.c.b16 %v903, %v902
      %v926 = vpack.c.b16 %v905, %v904
      %v927 = vpack.c.b16 %v907, %v906
      %v928 = vpack.c.b16 %v909, %v908
      %v929 = vpack.c.b16 %v911, %v910
      %v930 = vpack.c.b16 %v913, %v912
      %v931 = vpack.c.b16 %v915, %v914
      %948 = vmatprep.subr.bf16.mxu0 0
      %949 = vmatpush1.bf16.msra.mxu0 %v923
      %950 = vmatprep.subr.bf16.mxu0 0
      %951 = vmatpush1.bf16.msra.mxu0 %v922
      %952 = vmatprep.subr.bf16.mxu0 0
      %953 = vmatpush1.bf16.msra.mxu0 %v921
      %954 = vmatprep.subr.bf16.mxu0 0
      %955 = vmatpush1.bf16.msra.mxu0 %v920
      %956 = vmatprep.subr.bf16.mxu0 0
      %957 = vmatpush1.bf16.msra.mxu0 %v919
      %958 = vmatprep.subr.bf16.mxu0 0
      %959 = vmatpush1.bf16.msra.mxu0 %v918
      %960 = vmatprep.subr.bf16.mxu0 0
      %961 = vmatpush1.bf16.msra.mxu0 %v917
      %962 = vmatprep.subr.bf16.mxu0 0
      %963 = vmatpush1.bf16.msra.mxu0 %v916
      %964 = vmatprep.subr.bf16.mxu0 0
      %965 = vmatpush2.bf16.msra.mxu0 %v931
      %966 = vmatprep.subr.bf16.mxu0 0
      %967 = vmatpush2.bf16.msra.mxu0 %v930
      %968 = vmatprep.subr.bf16.mxu0 0
      %969 = vmatpush2.bf16.msra.mxu0 %v929
      %970 = vmatprep.subr.bf16.mxu0 0
      %971 = vmatpush2.bf16.msra.mxu0 %v928
      %972 = vmatprep.subr.bf16.mxu0 0
      %973 = vmatpush2.bf16.msra.mxu0 %v927
      %974 = vmatprep.subr.bf16.mxu0 0
      %975 = vmatpush2.bf16.msra.mxu0 %v926
      %976 = vmatprep.subr.bf16.mxu0 0
      %977 = vmatpush2.bf16.msra.mxu0 %v925
      %978 = vmatprep.subr.bf16.mxu0 0
      %979 = vmatpush2.bf16.msra.mxu0 %v924
      %980 = vmatprep.mubr.bf16.mxu0 %v725
      %981 = vmatmul.mubr.bf16.gmra.mxu0 %v724
      %v982 = vpop.f32.mrf.mxu0
      %v983 = vadd.f32 0.0, %v982
      %v984 = vpop.f32.mrf.mxu0
      %v985 = vpop.f32.mrf.mxu0
      %v986 = vadd.f32 0.0, %v985
      %v987 = vpop.f32.mrf.mxu0
      %988 = vmatprep.mubr.bf16.mxu0 %v727
      %989 = vmatmul.mubr.bf16.gmra.mxu0 %v726
      %v990 = vpop.f32.mrf.mxu0
      %v991 = vadd.f32 0.0, %v990
      %v992 = vpop.f32.mrf.mxu0
      %v993 = vpop.f32.mrf.mxu0
      %v994 = vadd.f32 0.0, %v993
      %v995 = vpop.f32.mrf.mxu0
      %996 = vmatprep.mubr.bf16.mxu0 %v729
      %997 = vmatmul.mubr.bf16.gmra.mxu0 %v728
      %v998 = vpop.f32.mrf.mxu0
      %v999 = vadd.f32 0.0, %v998
      %v1000 = vpop.f32.mrf.mxu0
      %v1001 = vpop.f32.mrf.mxu0
      %v1002 = vadd.f32 0.0, %v1001
      %v1003 = vpop.f32.mrf.mxu0
      %1004 = vmatprep.mubr.bf16.mxu0 %v731
      %1005 = vmatmul.mubr.bf16.gmra.mxu0 %v730
      %v1006 = vpop.f32.mrf.mxu0
      %v1007 = vadd.f32 0.0, %v1006
      %v1008 = vpop.f32.mrf.mxu0
      %v1009 = vpop.f32.mrf.mxu0
      %v1010 = vadd.f32 0.0, %v1009
      %v1011 = vpop.f32.mrf.mxu0
      %1012 = vmatprep.mubr.bf16.mxu0 %v733
      %1013 = vmatmul.mubr.bf16.gmra.mxu0 %v732
      %v1014 = vpop.f32.mrf.mxu0
      %v1015 = vadd.f32 0.0, %v1014
      %v1016 = vpop.f32.mrf.mxu0
      %v1017 = vpop.f32.mrf.mxu0
      %v1018 = vadd.f32 0.0, %v1017
      %v1019 = vpop.f32.mrf.mxu0
      %1020 = vmatprep.mubr.bf16.mxu0 %v735
      %1021 = vmatmul.mubr.bf16.gmra.mxu0 %v734
      %v1022 = vpop.f32.mrf.mxu0
      %v1023 = vadd.f32 0.0, %v1022
      %v1024 = vpop.f32.mrf.mxu0
      %v1025 = vpop.f32.mrf.mxu0
      %v1026 = vadd.f32 0.0, %v1025
      %v1027 = vpop.f32.mrf.mxu0
      %1028 = vmatprep.mubr.bf16.mxu0 %v737
      %1029 = vmatmul.mubr.bf16.gmra.mxu0 %v736
      %v1030 = vpop.f32.mrf.mxu0
      %v1031 = vadd.f32 0.0, %v1030
      %v1032 = vpop.f32.mrf.mxu0
      %v1033 = vpop.f32.mrf.mxu0
      %v1034 = vadd.f32 0.0, %v1033
      %v1035 = vpop.f32.mrf.mxu0
      %1036 = vmatprep.mubr.bf16.mxu0 %v739
      %1037 = vmatmul.mubr.bf16.gmra.mxu0 %v738
      %v1038 = vpop.f32.mrf.mxu0
      %v1039 = vadd.f32 0.0, %v1038
      %v1040 = vpop.f32.mrf.mxu0
      %v1041 = vpop.f32.mrf.mxu0
      %v1042 = vadd.f32 0.0, %v1041
      %v1043 = vpop.f32.mrf.mxu0
      %1044 = vmatprep.mubr.bf16.mxu0 %v741
      %1045 = vmatmul.mubr.bf16.gmra.mxu0 %v740
      %v1046 = vpop.f32.mrf.mxu0
      %v1047 = vadd.f32 0.0, %v1046
      %v1048 = vpop.f32.mrf.mxu0
      %v1049 = vpop.f32.mrf.mxu0
      %v1050 = vadd.f32 0.0, %v1049
      %v1051 = vpop.f32.mrf.mxu0
      %1052 = vmatprep.mubr.bf16.mxu0 %v743
      %1053 = vmatmul.mubr.bf16.gmra.mxu0 %v742
      %v1054 = vpop.f32.mrf.mxu0
      %v1055 = vadd.f32 0.0, %v1054
      %v1056 = vpop.f32.mrf.mxu0
      %v1057 = vpop.f32.mrf.mxu0
      %v1058 = vadd.f32 0.0, %v1057
      %v1059 = vpop.f32.mrf.mxu0
      %1060 = vmatprep.mubr.bf16.mxu0 %v745
      %1061 = vmatmul.mubr.bf16.gmra.mxu0 %v744
      %v1062 = vpop.f32.mrf.mxu0
      %v1063 = vadd.f32 0.0, %v1062
      %v1064 = vpop.f32.mrf.mxu0
      %v1065 = vpop.f32.mrf.mxu0
      %v1066 = vadd.f32 0.0, %v1065
      %v1067 = vpop.f32.mrf.mxu0
      %1068 = vmatprep.mubr.bf16.mxu0 %v747
      %1069 = vmatmul.mubr.bf16.gmra.mxu0 %v746
      %v1070 = vpop.f32.mrf.mxu0
      %v1071 = vadd.f32 0.0, %v1070
      %v1072 = vpop.f32.mrf.mxu0
      %v1073 = vpop.f32.mrf.mxu0
      %v1074 = vadd.f32 0.0, %v1073
      %v1075 = vpop.f32.mrf.mxu0
      %1076 = vmatprep.mubr.bf16.mxu0 %v749
      %1077 = vmatmul.mubr.bf16.gmra.mxu0 %v748
      %v1078 = vpop.f32.mrf.mxu0
      %v1079 = vadd.f32 0.0, %v1078
      %v1080 = vpop.f32.mrf.mxu0
      %v1081 = vpop.f32.mrf.mxu0
      %v1082 = vadd.f32 0.0, %v1081
      %v1083 = vpop.f32.mrf.mxu0
      %1084 = vmatprep.mubr.bf16.mxu0 %v751
      %1085 = vmatmul.mubr.bf16.gmra.mxu0 %v750
      %v1086 = vpop.f32.mrf.mxu0
      %v1087 = vadd.f32 0.0, %v1086
      %v1088 = vpop.f32.mrf.mxu0
      %v1089 = vpop.f32.mrf.mxu0
      %v1090 = vadd.f32 0.0, %v1089
      %v1091 = vpop.f32.mrf.mxu0
      %1092 = vmatprep.mubr.bf16.mxu0 %v753
      %1093 = vmatmul.mubr.bf16.gmra.mxu0 %v752
      %v1094 = vpop.f32.mrf.mxu0
      %v1095 = vadd.f32 0.0, %v1094
      %v1096 = vpop.f32.mrf.mxu0
      %v1097 = vpop.f32.mrf.mxu0
      %v1098 = vadd.f32 0.0, %v1097
      %v1099 = vpop.f32.mrf.mxu0
      %1100 = vmatprep.mubr.bf16.mxu0 %v755
      %1101 = vmatmul.mubr.bf16.gmra.mxu0 %v754
      %v1102 = vpop.f32.mrf.mxu0
      %v1103 = vadd.f32 0.0, %v1102
      %v1104 = vpop.f32.mrf.mxu0
      %v1105 = vpop.f32.mrf.mxu0
      %v1106 = vadd.f32 0.0, %v1105
      %v1107 = vpop.f32.mrf.mxu0
      %1108 = vmatprep.mubr.bf16.mxu0 %v757
      %1109 = vmatmul.mubr.bf16.gmra.mxu0 %v756
      %v1110 = vpop.f32.mrf.mxu0
      %v1111 = vadd.f32 0.0, %v1110
      %v1112 = vpop.f32.mrf.mxu0
      %v1113 = vpop.f32.mrf.mxu0
      %v1114 = vadd.f32 0.0, %v1113
      %v1115 = vpop.f32.mrf.mxu0
      %1116 = vmatprep.mubr.bf16.mxu0 %v759
      %1117 = vmatmul.mubr.bf16.gmra.mxu0 %v758
      %v1118 = vpop.f32.mrf.mxu0
      %v1119 = vadd.f32 0.0, %v1118
      %v1120 = vpop.f32.mrf.mxu0
      %v1121 = vpop.f32.mrf.mxu0
      %v1122 = vadd.f32 0.0, %v1121
      %v1123 = vpop.f32.mrf.mxu0
      %1124 = vmatprep.mubr.bf16.mxu0 %v761
      %1125 = vmatmul.mubr.bf16.gmra.mxu0 %v760
      %v1126 = vpop.f32.mrf.mxu0
      %v1127 = vadd.f32 0.0, %v1126
      %v1128 = vpop.f32.mrf.mxu0
      %v1129 = vpop.f32.mrf.mxu0
      %v1130 = vadd.f32 0.0, %v1129
      %v1131 = vpop.f32.mrf.mxu0
      %1132 = vmatprep.mubr.bf16.mxu0 %v763
      %1133 = vmatmul.mubr.bf16.gmra.mxu0 %v762
      %v1134 = vpop.f32.mrf.mxu0
      %v1135 = vadd.f32 0.0, %v1134
      %v1136 = vpop.f32.mrf.mxu0
      %v1137 = vpop.f32.mrf.mxu0
      %v1138 = vadd.f32 0.0, %v1137
      %v1139 = vpop.f32.mrf.mxu0
      %1140 = vmatprep.mubr.bf16.mxu0 %v765
      %1141 = vmatmul.mubr.bf16.gmra.mxu0 %v764
      %v1142 = vpop.f32.mrf.mxu0
      %v1143 = vadd.f32 0.0, %v1142
      %v1144 = vpop.f32.mrf.mxu0
      %v1145 = vpop.f32.mrf.mxu0
      %v1146 = vadd.f32 0.0, %v1145
      %v1147 = vpop.f32.mrf.mxu0
      %1148 = vmatprep.mubr.bf16.mxu0 %v767
      %1149 = vmatmul.mubr.bf16.gmra.mxu0 %v766
      %v1150 = vpop.f32.mrf.mxu0
      %v1151 = vadd.f32 0.0, %v1150
      %v1152 = vpop.f32.mrf.mxu0
      %v1153 = vpop.f32.mrf.mxu0
      %v1154 = vadd.f32 0.0, %v1153
      %v1155 = vpop.f32.mrf.mxu0
      %1156 = vmatprep.mubr.bf16.mxu0 %v769
      %1157 = vmatmul.mubr.bf16.gmra.mxu0 %v768
      %v1158 = vpop.f32.mrf.mxu0
      %v1159 = vadd.f32 0.0, %v1158
      %v1160 = vpop.f32.mrf.mxu0
      %v1161 = vpop.f32.mrf.mxu0
      %v1162 = vadd.f32 0.0, %v1161
      %v1163 = vpop.f32.mrf.mxu0
      %1164 = vmatprep.mubr.bf16.mxu0 %v771
      %1165 = vmatmul.mubr.bf16.gmra.mxu0 %v770
      %v1166 = vpop.f32.mrf.mxu0
      %v1167 = vadd.f32 0.0, %v1166
      %v1168 = vpop.f32.mrf.mxu0
      %v1169 = vpop.f32.mrf.mxu0
      %v1170 = vadd.f32 0.0, %v1169
      %v1171 = vpop.f32.mrf.mxu0
      %1172 = vmatprep.mubr.bf16.mxu0 %v773
      %1173 = vmatmul.mubr.bf16.gmra.mxu0 %v772
      %v1174 = vpop.f32.mrf.mxu0
      %v1175 = vadd.f32 0.0, %v1174
      %v1176 = vpop.f32.mrf.mxu0
      %v1177 = vpop.f32.mrf.mxu0
      %v1178 = vadd.f32 0.0, %v1177
      %v1179 = vpop.f32.mrf.mxu0
      %1180 = vmatprep.mubr.bf16.mxu0 %v775
      %1181 = vmatmul.mubr.bf16.gmra.mxu0 %v774
      %v1182 = vpop.f32.mrf.mxu0
      %v1183 = vadd.f32 0.0, %v1182
      %v1184 = vpop.f32.mrf.mxu0
      %v1185 = vpop.f32.mrf.mxu0
      %v1186 = vadd.f32 0.0, %v1185
      %v1187 = vpop.f32.mrf.mxu0
      %1188 = vmatprep.mubr.bf16.mxu0 %v777
      %1189 = vmatmul.mubr.bf16.gmra.mxu0 %v776
      %v1190 = vpop.f32.mrf.mxu0
      %v1191 = vadd.f32 0.0, %v1190
      %v1192 = vpop.f32.mrf.mxu0
      %v1193 = vpop.f32.mrf.mxu0
      %v1194 = vadd.f32 0.0, %v1193
      %v1195 = vpop.f32.mrf.mxu0
      %1196 = vmatprep.mubr.bf16.mxu0 %v779
      %1197 = vmatmul.mubr.bf16.gmra.mxu0 %v778
      %v1198 = vpop.f32.mrf.mxu0
      %v1199 = vadd.f32 0.0, %v1198
      %v1200 = vpop.f32.mrf.mxu0
      %v1201 = vpop.f32.mrf.mxu0
      %v1202 = vadd.f32 0.0, %v1201
      %v1203 = vpop.f32.mrf.mxu0
      %1204 = vmatprep.mubr.bf16.mxu0 %v781
      %1205 = vmatmul.mubr.bf16.gmra.mxu0 %v780
      %v1206 = vpop.f32.mrf.mxu0
      %v1207 = vadd.f32 0.0, %v1206
      %v1208 = vpop.f32.mrf.mxu0
      %v1209 = vpop.f32.mrf.mxu0
      %v1210 = vadd.f32 0.0, %v1209
      %v1211 = vpop.f32.mrf.mxu0
      %1212 = vmatprep.mubr.bf16.mxu0 %v783
      %1213 = vmatmul.mubr.bf16.gmra.mxu0 %v782
      %v1214 = vpop.f32.mrf.mxu0
      %v1215 = vadd.f32 0.0, %v1214
      %v1216 = vpop.f32.mrf.mxu0
      %v1217 = vpop.f32.mrf.mxu0
      %v1218 = vadd.f32 0.0, %v1217
      %v1219 = vpop.f32.mrf.mxu0
      %1220 = vmatprep.mubr.bf16.mxu0 %v785
      %1221 = vmatmul.mubr.bf16.gmra.mxu0 %v784
      %v1222 = vpop.f32.mrf.mxu0
      %v1223 = vadd.f32 0.0, %v1222
      %v1224 = vpop.f32.mrf.mxu0
      %v1225 = vpop.f32.mrf.mxu0
      %v1226 = vadd.f32 0.0, %v1225
      %v1227 = vpop.f32.mrf.mxu0
      %1228 = vmatprep.mubr.bf16.mxu0 %v787
      %1229 = vmatmul.mubr.bf16.gmra.mxu0 %v786
      %v1230 = vpop.f32.mrf.mxu0
      %v1231 = vadd.f32 0.0, %v1230
      %v1232 = vpop.f32.mrf.mxu0
      %v1233 = vpop.f32.mrf.mxu0
      %v1234 = vadd.f32 0.0, %v1233
      %v1235 = vpop.f32.mrf.mxu0
      %1236 = vdwg.mxu0
      %v1237 = vadd.f32 %v404, %v983
      %v1238 = vadd.f32 %v405, %v986
      %v1239 = vadd.f32 %v406, %v991
      %v1240 = vadd.f32 %v407, %v994
      %v1241 = vadd.f32 %v408, %v999
      %v1242 = vadd.f32 %v409, %v1002
      %v1243 = vadd.f32 %v410, %v1007
      %v1244 = vadd.f32 %v411, %v1010
      %v1245 = vadd.f32 %v412, %v1015
      %v1246 = vadd.f32 %v413, %v1018
      %v1247 = vadd.f32 %v414, %v1023
      %v1248 = vadd.f32 %v415, %v1026
      %v1249 = vadd.f32 %v416, %v1031
      %v1250 = vadd.f32 %v417, %v1034
      %v1251 = vadd.f32 %v418, %v1039
      %v1252 = vadd.f32 %v419, %v1042
      %v1253 = vadd.f32 %v420, %v1047
      %v1254 = vadd.f32 %v421, %v1050
      %v1255 = vadd.f32 %v422, %v1055
      %v1256 = vadd.f32 %v423, %v1058
      %v1257 = vadd.f32 %v424, %v1063
      %v1258 = vadd.f32 %v425, %v1066
      %v1259 = vadd.f32 %v426, %v1071
      %v1260 = vadd.f32 %v427, %v1074
      %v1261 = vadd.f32 %v428, %v1079
      %v1262 = vadd.f32 %v429, %v1082
      %v1263 = vadd.f32 %v430, %v1087
      %v1264 = vadd.f32 %v431, %v1090
      %v1265 = vadd.f32 %v432, %v1095
      %v1266 = vadd.f32 %v433, %v1098
      %v1267 = vadd.f32 %v434, %v1103
      %v1268 = vadd.f32 %v435, %v1106
      %v1269 = vadd.f32 %v436, %v1111
      %v1270 = vadd.f32 %v437, %v1114
      %v1271 = vadd.f32 %v438, %v1119
      %v1272 = vadd.f32 %v439, %v1122
      %v1273 = vadd.f32 %v440, %v1127
      %v1274 = vadd.f32 %v441, %v1130
      %v1275 = vadd.f32 %v442, %v1135
      %v1276 = vadd.f32 %v443, %v1138
      %v1277 = vadd.f32 %v444, %v1143
      %v1278 = vadd.f32 %v445, %v1146
      %v1279 = vadd.f32 %v446, %v1151
      %v1280 = vadd.f32 %v447, %v1154
      %v1281 = vadd.f32 %v448, %v1159
      %v1282 = vadd.f32 %v449, %v1162
      %v1283 = vadd.f32 %v450, %v1167
      %v1284 = vadd.f32 %v451, %v1170
      %v1285 = vadd.f32 %v452, %v1175
      %v1286 = vadd.f32 %v453, %v1178
      %v1287 = vadd.f32 %v454, %v1183
      %v1288 = vadd.f32 %v455, %v1186
      %v1289 = vadd.f32 %v456, %v1191
      %v1290 = vadd.f32 %v457, %v1194
      %v1291 = vadd.f32 %v458, %v1199
      %v1292 = vadd.f32 %v459, %v1202
      %v1293 = vadd.f32 %v460, %v1207
      %v1294 = vadd.f32 %v461, %v1210
      %v1295 = vadd.f32 %v462, %v1215
      %v1296 = vadd.f32 %v463, %v1218
      %v1297 = vadd.f32 %v464, %v1223
      %v1298 = vadd.f32 %v465, %v1226
      %v1299 = vadd.f32 %v466, %v1231
      %v1300 = vadd.f32 %v467, %v1234
      %vm1301 = vcmask 64512
      %1302 = vst.msk [vmem:[#allocation2] sm:$0xff] %vm1301, %v1237
      %1303 = vst.msk [vmem:[#allocation2 + $0x8] sm:$0xff] %vm1301, %v1238
      %1304 = vst.msk [vmem:[#allocation2 + $0x10] sm:$0xff] %vm1301, %v1239
      %1305 = vst.msk [vmem:[#allocation2 + $0x18] sm:$0xff] %vm1301, %v1240
      %1306 = vst.msk [vmem:[#allocation2 + $0x20] sm:$0xff] %vm1301, %v1241
      %1307 = vst.msk [vmem:[#allocation2 + $0x28] sm:$0xff] %vm1301, %v1242
      %1308 = vst.msk [vmem:[#allocation2 + $0x30] sm:$0xff] %vm1301, %v1243
      %1309 = vst.msk [vmem:[#allocation2 + $0x38] sm:$0xff] %vm1301, %v1244
      %1310 = vst.msk [vmem:[#allocation2 + $0x40] sm:$0xff] %vm1301, %v1245
      %1311 = vst.msk [vmem:[#allocation2 + $0x48] sm:$0xff] %vm1301, %v1246
      %1312 = vst.msk [vmem:[#allocation2 + $0x50] sm:$0xff] %vm1301, %v1247
      %1313 = vst.msk [vmem:[#allocation2 + $0x58] sm:$0xff] %vm1301, %v1248
      %1314 = vst.msk [vmem:[#allocation2 + $0x60] sm:$0xff] %vm1301, %v1249
      %1315 = vst.msk [vmem:[#allocation2 + $0x68] sm:$0xff] %vm1301, %v1250
      %1316 = vst.msk [vmem:[#allocation2 + $0x70] sm:$0xff] %vm1301, %v1251
      %1317 = vst.msk [vmem:[#allocation2 + $0x78] sm:$0xff] %vm1301, %v1252
      %1318 = vst.msk [vmem:[#allocation2 + $0x80] sm:$0xff] %vm1301, %v1253
      %1319 = vst.msk [vmem:[#allocation2 + $0x88] sm:$0xff] %vm1301, %v1254
      %1320 = vst.msk [vmem:[#allocation2 + $0x90] sm:$0xff] %vm1301, %v1255
      %1321 = vst.msk [vmem:[#allocation2 + $0x98] sm:$0xff] %vm1301, %v1256
      %1322 = vst.msk [vmem:[#allocation2 + $0xa0] sm:$0xff] %vm1301, %v1257
      %1323 = vst.msk [vmem:[#allocation2 + $0xa8] sm:$0xff] %vm1301, %v1258
      %1324 = vst.msk [vmem:[#allocation2 + $0xb0] sm:$0xff] %vm1301, %v1259
      %1325 = vst.msk [vmem:[#allocation2 + $0xb8] sm:$0xff] %vm1301, %v1260
      %1326 = vst.msk [vmem:[#allocation2 + $0xc0] sm:$0xff] %vm1301, %v1261
      %1327 = vst.msk [vmem:[#allocation2 + $0xc8] sm:$0xff] %vm1301, %v1262
      %1328 = vst.msk [vmem:[#allocation2 + $0xd0] sm:$0xff] %vm1301, %v1263
      %1329 = vst.msk [vmem:[#allocation2 + $0xd8] sm:$0xff] %vm1301, %v1264
      %1330 = vst.msk [vmem:[#allocation2 + $0xe0] sm:$0xff] %vm1301, %v1265
      %1331 = vst.msk [vmem:[#allocation2 + $0xe8] sm:$0xff] %vm1301, %v1266
      %1332 = vst.msk [vmem:[#allocation2 + $0xf0] sm:$0xff] %vm1301, %v1267
      %1333 = vst.msk [vmem:[#allocation2 + $0xf8] sm:$0xff] %vm1301, %v1268
      %1334 = vst.msk [vmem:[#allocation2 + $0x100] sm:$0xff] %vm1301, %v1269
      %1335 = vst.msk [vmem:[#allocation2 + $0x108] sm:$0xff] %vm1301, %v1270
      %1336 = vst.msk [vmem:[#allocation2 + $0x110] sm:$0xff] %vm1301, %v1271
      %1337 = vst.msk [vmem:[#allocation2 + $0x118] sm:$0xff] %vm1301, %v1272
      %1338 = vst.msk [vmem:[#allocation2 + $0x120] sm:$0xff] %vm1301, %v1273
      %1339 = vst.msk [vmem:[#allocation2 + $0x128] sm:$0xff] %vm1301, %v1274
      %1340 = vst.msk [vmem:[#allocation2 + $0x130] sm:$0xff] %vm1301, %v1275
      %1341 = vst.msk [vmem:[#allocation2 + $0x138] sm:$0xff] %vm1301, %v1276
      %1342 = vst.msk [vmem:[#allocation2 + $0x140] sm:$0xff] %vm1301, %v1277
      %1343 = vst.msk [vmem:[#allocation2 + $0x148] sm:$0xff] %vm1301, %v1278
      %1344 = vst.msk [vmem:[#allocation2 + $0x150] sm:$0xff] %vm1301, %v1279
      %1345 = vst.msk [vmem:[#allocation2 + $0x158] sm:$0xff] %vm1301, %v1280
      %1346 = vst.msk [vmem:[#allocation2 + $0x160] sm:$0xff] %vm1301, %v1281
      %1347 = vst.msk [vmem:[#allocation2 + $0x168] sm:$0xff] %vm1301, %v1282
      %1348 = vst.msk [vmem:[#allocation2 + $0x170] sm:$0xff] %vm1301, %v1283
      %1349 = vst.msk [vmem:[#allocation2 + $0x178] sm:$0xff] %vm1301, %v1284
      %1350 = vst.msk [vmem:[#allocation2 + $0x180] sm:$0xff] %vm1301, %v1285
      %1351 = vst.msk [vmem:[#allocation2 + $0x188] sm:$0xff] %vm1301, %v1286
      %1352 = vst.msk [vmem:[#allocation2 + $0x190] sm:$0xff] %vm1301, %v1287
      %1353 = vst.msk [vmem:[#allocation2 + $0x198] sm:$0xff] %vm1301, %v1288
      %1354 = vst.msk [vmem:[#allocation2 + $0x1a0] sm:$0xff] %vm1301, %v1289
      %1355 = vst.msk [vmem:[#allocation2 + $0x1a8] sm:$0xff] %vm1301, %v1290
      %1356 = vst.msk [vmem:[#allocation2 + $0x1b0] sm:$0xff] %vm1301, %v1291
      %1357 = vst.msk [vmem:[#allocation2 + $0x1b8] sm:$0xff] %vm1301, %v1292
      %1358 = vst.msk [vmem:[#allocation2 + $0x1c0] sm:$0xff] %vm1301, %v1293
      %1359 = vst.msk [vmem:[#allocation2 + $0x1c8] sm:$0xff] %vm1301, %v1294
      %1360 = vst.msk [vmem:[#allocation2 + $0x1d0] sm:$0xff] %vm1301, %v1295
      %1361 = vst.msk [vmem:[#allocation2 + $0x1d8] sm:$0xff] %vm1301, %v1296
      %1362 = vst.msk [vmem:[#allocation2 + $0x1e0] sm:$0xff] %vm1301, %v1297
      %1363 = vst.msk [vmem:[#allocation2 + $0x1e8] sm:$0xff] %vm1301, %v1298
      %1364 = vst.msk [vmem:[#allocation2 + $0x1f0] sm:$0xff] %vm1301, %v1299
      %1365 = vst.msk [vmem:[#allocation2 + $0x1f8] sm:$0xff] %vm1301, %v1300
      // Predicated region
      $region37: #{_lambda_.9} parent=31 // pred_check
        %p1366 = pneg %p298
      $region38: #{_lambda_.9} parent=31 // pred_check_branch
        %1368 = sbr.rel (%p1366) target = $region40
      $region39: #{_lambda_.9} parent=31 // pred_region
        %v1369 = vld [vmem:[#allocation2] sm:$0xff]
        %v1370 = vld [vmem:[#allocation2 + $0x8] sm:$0xff]
        %v1371 = vld [vmem:[#allocation2 + $0x10] sm:$0xff]
        %v1372 = vld [vmem:[#allocation2 + $0x18] sm:$0xff]
        %v1373 = vld [vmem:[#allocation2 + $0x20] sm:$0xff]
        %v1374 = vld [vmem:[#allocation2 + $0x28] sm:$0xff]
        %v1375 = vld [vmem:[#allocation2 + $0x30] sm:$0xff]
        %v1376 = vld [vmem:[#allocation2 + $0x38] sm:$0xff]
        %v1377 = vld [vmem:[#allocation2 + $0x40] sm:$0xff]
        %v1378 = vld [vmem:[#allocation2 + $0x48] sm:$0xff]
        %v1379 = vld [vmem:[#allocation2 + $0x50] sm:$0xff]
        %v1380 = vld [vmem:[#allocation2 + $0x58] sm:$0xff]
        %v1381 = vld [vmem:[#allocation2 + $0x60] sm:$0xff]
        %v1382 = vld [vmem:[#allocation2 + $0x68] sm:$0xff]
        %v1383 = vld [vmem:[#allocation2 + $0x70] sm:$0xff]
        %v1384 = vld [vmem:[#allocation2 + $0x78] sm:$0xff]
        %v1385 = vld [vmem:[#allocation2 + $0x80] sm:$0xff]
        %v1386 = vld [vmem:[#allocation2 + $0x88] sm:$0xff]
        %v1387 = vld [vmem:[#allocation2 + $0x90] sm:$0xff]
        %v1388 = vld [vmem:[#allocation2 + $0x98] sm:$0xff]
        %v1389 = vld [vmem:[#allocation2 + $0xa0] sm:$0xff]
        %v1390 = vld [vmem:[#allocation2 + $0xa8] sm:$0xff]
        %v1391 = vld [vmem:[#allocation2 + $0xb0] sm:$0xff]
        %v1392 = vld [vmem:[#allocation2 + $0xb8] sm:$0xff]
        %v1393 = vld [vmem:[#allocation2 + $0xc0] sm:$0xff]
        %v1394 = vld [vmem:[#allocation2 + $0xc8] sm:$0xff]
        %v1395 = vld [vmem:[#allocation2 + $0xd0] sm:$0xff]
        %v1396 = vld [vmem:[#allocation2 + $0xd8] sm:$0xff]
        %v1397 = vld [vmem:[#allocation2 + $0xe0] sm:$0xff]
        %v1398 = vld [vmem:[#allocation2 + $0xe8] sm:$0xff]
        %v1399 = vld [vmem:[#allocation2 + $0xf0] sm:$0xff]
        %v1400 = vld [vmem:[#allocation2 + $0xf8] sm:$0xff]
        %v1401 = vld [vmem:[#allocation2 + $0x100] sm:$0xff]
        %v1402 = vld [vmem:[#allocation2 + $0x108] sm:$0xff]
        %v1403 = vld [vmem:[#allocation2 + $0x110] sm:$0xff]
        %v1404 = vld [vmem:[#allocation2 + $0x118] sm:$0xff]
        %v1405 = vld [vmem:[#allocation2 + $0x120] sm:$0xff]
        %v1406 = vld [vmem:[#allocation2 + $0x128] sm:$0xff]
        %v1407 = vld [vmem:[#allocation2 + $0x130] sm:$0xff]
        %v1408 = vld [vmem:[#allocation2 + $0x138] sm:$0xff]
        %v1409 = vld [vmem:[#allocation2 + $0x140] sm:$0xff]
        %v1410 = vld [vmem:[#allocation2 + $0x148] sm:$0xff]
        %v1411 = vld [vmem:[#allocation2 + $0x150] sm:$0xff]
        %v1412 = vld [vmem:[#allocation2 + $0x158] sm:$0xff]
        %v1413 = vld [vmem:[#allocation2 + $0x160] sm:$0xff]
        %v1414 = vld [vmem:[#allocation2 + $0x168] sm:$0xff]
        %v1415 = vld [vmem:[#allocation2 + $0x170] sm:$0xff]
        %v1416 = vld [vmem:[#allocation2 + $0x178] sm:$0xff]
        %v1417 = vld [vmem:[#allocation2 + $0x180] sm:$0xff]
        %v1418 = vld [vmem:[#allocation2 + $0x188] sm:$0xff]
        %v1419 = vld [vmem:[#allocation2 + $0x190] sm:$0xff]
        %v1420 = vld [vmem:[#allocation2 + $0x198] sm:$0xff]
        %v1421 = vld [vmem:[#allocation2 + $0x1a0] sm:$0xff]
        %v1422 = vld [vmem:[#allocation2 + $0x1a8] sm:$0xff]
        %v1423 = vld [vmem:[#allocation2 + $0x1b0] sm:$0xff]
        %v1424 = vld [vmem:[#allocation2 + $0x1b8] sm:$0xff]
        %v1425 = vld [vmem:[#allocation2 + $0x1c0] sm:$0xff]
        %v1426 = vld [vmem:[#allocation2 + $0x1c8] sm:$0xff]
        %v1427 = vld [vmem:[#allocation2 + $0x1d0] sm:$0xff]
        %v1428 = vld [vmem:[#allocation2 + $0x1d8] sm:$0xff]
        %v1429 = vld [vmem:[#allocation2 + $0x1e0] sm:$0xff]
        %v1430 = vld [vmem:[#allocation2 + $0x1e8] sm:$0xff]
        %v1431 = vld [vmem:[#allocation2 + $0x1f0] sm:$0xff]
        %v1432 = vld [vmem:[#allocation2 + $0x1f8] sm:$0xff]
        %v1433 = vld [vmem:[%s280] sm:$0x1]
        %v1435 = vlaneseq
        %v1436 = vshrl.u32 %v1435, 7
        %v1437 = vsub.s32 0, %v1436
        %v1438 = vrot.slane %v1433, %v1437
        %v1440 = vadd.f32 %v1369, %v1438
        %v1441 = vadd.f32 %v1370, %v1438
        %v1442 = vadd.f32 %v1371, %v1438
        %v1443 = vadd.f32 %v1372, %v1438
        %v1444 = vadd.f32 %v1373, %v1438
        %v1445 = vadd.f32 %v1374, %v1438
        %v1446 = vadd.f32 %v1375, %v1438
        %v1447 = vadd.f32 %v1376, %v1438
        %v1448 = vadd.f32 %v1377, %v1438
        %v1449 = vadd.f32 %v1378, %v1438
        %v1450 = vadd.f32 %v1379, %v1438
        %v1451 = vadd.f32 %v1380, %v1438
        %v1452 = vadd.f32 %v1381, %v1438
        %v1453 = vadd.f32 %v1382, %v1438
        %v1454 = vadd.f32 %v1383, %v1438
        %v1455 = vadd.f32 %v1384, %v1438
        %v1456 = vadd.f32 %v1385, %v1438
        %v1457 = vadd.f32 %v1386, %v1438
        %v1458 = vadd.f32 %v1387, %v1438
        %v1459 = vadd.f32 %v1388, %v1438
        %v1460 = vadd.f32 %v1389, %v1438
        %v1461 = vadd.f32 %v1390, %v1438
        %v1462 = vadd.f32 %v1391, %v1438
        %v1463 = vadd.f32 %v1392, %v1438
        %v1464 = vadd.f32 %v1393, %v1438
        %v1465 = vadd.f32 %v1394, %v1438
        %v1466 = vadd.f32 %v1395, %v1438
        %v1467 = vadd.f32 %v1396, %v1438
        %v1468 = vadd.f32 %v1397, %v1438
        %v1469 = vadd.f32 %v1398, %v1438
        %v1470 = vadd.f32 %v1399, %v1438
        %v1471 = vadd.f32 %v1400, %v1438
        %v1472 = vadd.f32 %v1401, %v1438
        %v1473 = vadd.f32 %v1402, %v1438
        %v1474 = vadd.f32 %v1403, %v1438
        %v1475 = vadd.f32 %v1404, %v1438
        %v1476 = vadd.f32 %v1405, %v1438
        %v1477 = vadd.f32 %v1406, %v1438
        %v1478 = vadd.f32 %v1407, %v1438
        %v1479 = vadd.f32 %v1408, %v1438
        %v1480 = vadd.f32 %v1409, %v1438
        %v1481 = vadd.f32 %v1410, %v1438
        %v1482 = vadd.f32 %v1411, %v1438
        %v1483 = vadd.f32 %v1412, %v1438
        %v1484 = vadd.f32 %v1413, %v1438
        %v1485 = vadd.f32 %v1414, %v1438
        %v1486 = vadd.f32 %v1415, %v1438
        %v1487 = vadd.f32 %v1416, %v1438
        %v1488 = vadd.f32 %v1417, %v1438
        %v1489 = vadd.f32 %v1418, %v1438
        %v1490 = vadd.f32 %v1419, %v1438
        %v1491 = vadd.f32 %v1420, %v1438
        %v1492 = vadd.f32 %v1421, %v1438
        %v1493 = vadd.f32 %v1422, %v1438
        %v1494 = vadd.f32 %v1423, %v1438
        %v1495 = vadd.f32 %v1424, %v1438
        %v1496 = vadd.f32 %v1425, %v1438
        %v1497 = vadd.f32 %v1426, %v1438
        %v1498 = vadd.f32 %v1427, %v1438
        %v1499 = vadd.f32 %v1428, %v1438
        %v1500 = vadd.f32 %v1429, %v1438
        %v1501 = vadd.f32 %v1430, %v1438
        %v1502 = vadd.f32 %v1431, %v1438
        %v1503 = vadd.f32 %v1432, %v1438
        %v1504 = vpack.c.bf16 %v1441, %v1440
        %v1505 = vpack.c.bf16 %v1443, %v1442
        %v1506 = vpack.c.bf16 %v1445, %v1444
        %v1507 = vpack.c.bf16 %v1447, %v1446
        %v1508 = vpack.c.bf16 %v1449, %v1448
        %v1509 = vpack.c.bf16 %v1451, %v1450
        %v1510 = vpack.c.bf16 %v1453, %v1452
        %v1511 = vpack.c.bf16 %v1455, %v1454
        %v1512 = vpack.c.bf16 %v1457, %v1456
        %v1513 = vpack.c.bf16 %v1459, %v1458
        %v1514 = vpack.c.bf16 %v1461, %v1460
        %v1515 = vpack.c.bf16 %v1463, %v1462
        %v1516 = vpack.c.bf16 %v1465, %v1464
        %v1517 = vpack.c.bf16 %v1467, %v1466
        %v1518 = vpack.c.bf16 %v1469, %v1468
        %v1519 = vpack.c.bf16 %v1471, %v1470
        %v1520 = vpack.c.bf16 %v1473, %v1472
        %v1521 = vpack.c.bf16 %v1475, %v1474
        %v1522 = vpack.c.bf16 %v1477, %v1476
        %v1523 = vpack.c.bf16 %v1479, %v1478
        %v1524 = vpack.c.bf16 %v1481, %v1480
        %v1525 = vpack.c.bf16 %v1483, %v1482
        %v1526 = vpack.c.bf16 %v1485, %v1484
        %v1527 = vpack.c.bf16 %v1487, %v1486
        %v1528 = vpack.c.bf16 %v1489, %v1488
        %v1529 = vpack.c.bf16 %v1491, %v1490
        %v1530 = vpack.c.bf16 %v1493, %v1492
        %v1531 = vpack.c.bf16 %v1495, %v1494
        %v1532 = vpack.c.bf16 %v1497, %v1496
        %v1533 = vpack.c.bf16 %v1499, %v1498
        %v1534 = vpack.c.bf16 %v1501, %v1500
        %v1535 = vpack.c.bf16 %v1503, %v1502
        %v1568 = vunpack.c.l.b16 %v1504
        %v1569 = vunpack.c.h.b16 %v1504
        %v1570 = vunpack.c.l.b16 %v1505
        %v1571 = vunpack.c.h.b16 %v1505
        %v1572 = vunpack.c.l.b16 %v1506
        %v1573 = vunpack.c.h.b16 %v1506
        %v1574 = vunpack.c.l.b16 %v1507
        %v1575 = vunpack.c.h.b16 %v1507
        %v1576 = vunpack.c.l.b16 %v1508
        %v1577 = vunpack.c.h.b16 %v1508
        %v1578 = vunpack.c.l.b16 %v1509
        %v1579 = vunpack.c.h.b16 %v1509
        %v1580 = vunpack.c.l.b16 %v1510
        %v1581 = vunpack.c.h.b16 %v1510
        %v1582 = vunpack.c.l.b16 %v1511
        %v1583 = vunpack.c.h.b16 %v1511
        %v1584 = vunpack.c.l.b16 %v1512
        %v1585 = vunpack.c.h.b16 %v1512
        %v1586 = vunpack.c.l.b16 %v1513
        %v1587 = vunpack.c.h.b16 %v1513
        %v1588 = vunpack.c.l.b16 %v1514
        %v1589 = vunpack.c.h.b16 %v1514
        %v1590 = vunpack.c.l.b16 %v1515
        %v1591 = vunpack.c.h.b16 %v1515
        %v1592 = vunpack.c.l.b16 %v1516
        %v1593 = vunpack.c.h.b16 %v1516
        %v1594 = vunpack.c.l.b16 %v1517
        %v1595 = vunpack.c.h.b16 %v1517
        %v1596 = vunpack.c.l.b16 %v1518
        %v1597 = vunpack.c.h.b16 %v1518
        %v1598 = vunpack.c.l.b16 %v1519
        %v1599 = vunpack.c.h.b16 %v1519
        %v1600 = vunpack.c.l.b16 %v1520
        %v1601 = vunpack.c.h.b16 %v1520
        %v1602 = vunpack.c.l.b16 %v1521
        %v1603 = vunpack.c.h.b16 %v1521
        %v1604 = vunpack.c.l.b16 %v1522
        %v1605 = vunpack.c.h.b16 %v1522
        %v1606 = vunpack.c.l.b16 %v1523
        %v1607 = vunpack.c.h.b16 %v1523
        %v1608 = vunpack.c.l.b16 %v1524
        %v1609 = vunpack.c.h.b16 %v1524
        %v1610 = vunpack.c.l.b16 %v1525
        %v1611 = vunpack.c.h.b16 %v1525
        %v1612 = vunpack.c.l.b16 %v1526
        %v1613 = vunpack.c.h.b16 %v1526
        %v1614 = vunpack.c.l.b16 %v1527
        %v1615 = vunpack.c.h.b16 %v1527
        %v1616 = vunpack.c.l.b16 %v1528
        %v1617 = vunpack.c.h.b16 %v1528
        %v1618 = vunpack.c.l.b16 %v1529
        %v1619 = vunpack.c.h.b16 %v1529
        %v1620 = vunpack.c.l.b16 %v1530
        %v1621 = vunpack.c.h.b16 %v1530
        %v1622 = vunpack.c.l.b16 %v1531
        %v1623 = vunpack.c.h.b16 %v1531
        %v1624 = vunpack.c.l.b16 %v1532
        %v1625 = vunpack.c.h.b16 %v1532
        %v1626 = vunpack.c.l.b16 %v1533
        %v1627 = vunpack.c.h.b16 %v1533
        %v1628 = vunpack.c.l.b16 %v1534
        %v1629 = vunpack.c.h.b16 %v1534
        %v1630 = vunpack.c.l.b16 %v1535
        %v1631 = vunpack.c.h.b16 %v1535
        %v1632 = vpack.c.b16 %v1568, %v1568
        %v1633 = vpack.c.b16 %v1569, %v1569
        %v1634 = vpack.c.b16 %v1570, %v1570
        %v1635 = vpack.c.b16 %v1571, %v1571
        %v1636 = vpack.c.b16 %v1572, %v1572
        %v1637 = vpack.c.b16 %v1573, %v1573
        %v1638 = vpack.c.b16 %v1574, %v1574
        %v1639 = vpack.c.b16 %v1575, %v1575
        %v1640 = vpack.c.b16 %v1576, %v1576
        %v1641 = vpack.c.b16 %v1577, %v1577
        %v1642 = vpack.c.b16 %v1578, %v1578
        %v1643 = vpack.c.b16 %v1579, %v1579
        %v1644 = vpack.c.b16 %v1580, %v1580
        %v1645 = vpack.c.b16 %v1581, %v1581
        %v1646 = vpack.c.b16 %v1582, %v1582
        %v1647 = vpack.c.b16 %v1583, %v1583
        %v1648 = vpack.c.b16 %v1584, %v1584
        %v1649 = vpack.c.b16 %v1585, %v1585
        %v1650 = vpack.c.b16 %v1586, %v1586
        %v1651 = vpack.c.b16 %v1587, %v1587
        %v1652 = vpack.c.b16 %v1588, %v1588
        %v1653 = vpack.c.b16 %v1589, %v1589
        %v1654 = vpack.c.b16 %v1590, %v1590
        %v1655 = vpack.c.b16 %v1591, %v1591
        %v1656 = vpack.c.b16 %v1592, %v1592
        %v1657 = vpack.c.b16 %v1593, %v1593
        %v1658 = vpack.c.b16 %v1594, %v1594
        %v1659 = vpack.c.b16 %v1595, %v1595
        %v1660 = vpack.c.b16 %v1596, %v1596
        %v1661 = vpack.c.b16 %v1597, %v1597
        %v1662 = vpack.c.b16 %v1598, %v1598
        %v1663 = vpack.c.b16 %v1599, %v1599
        %v1664 = vpack.c.b16 %v1600, %v1600
        %v1665 = vpack.c.b16 %v1601, %v1601
        %v1666 = vpack.c.b16 %v1602, %v1602
        %v1667 = vpack.c.b16 %v1603, %v1603
        %v1668 = vpack.c.b16 %v1604, %v1604
        %v1669 = vpack.c.b16 %v1605, %v1605
        %v1670 = vpack.c.b16 %v1606, %v1606
        %v1671 = vpack.c.b16 %v1607, %v1607
        %v1672 = vpack.c.b16 %v1608, %v1608
        %v1673 = vpack.c.b16 %v1609, %v1609
        %v1674 = vpack.c.b16 %v1610, %v1610
        %v1675 = vpack.c.b16 %v1611, %v1611
        %v1676 = vpack.c.b16 %v1612, %v1612
        %v1677 = vpack.c.b16 %v1613, %v1613
        %v1678 = vpack.c.b16 %v1614, %v1614
        %v1679 = vpack.c.b16 %v1615, %v1615
        %v1680 = vpack.c.b16 %v1616, %v1616
        %v1681 = vpack.c.b16 %v1617, %v1617
        %v1682 = vpack.c.b16 %v1618, %v1618
        %v1683 = vpack.c.b16 %v1619, %v1619
        %v1684 = vpack.c.b16 %v1620, %v1620
        %v1685 = vpack.c.b16 %v1621, %v1621
        %v1686 = vpack.c.b16 %v1622, %v1622
        %v1687 = vpack.c.b16 %v1623, %v1623
        %v1688 = vpack.c.b16 %v1624, %v1624
        %v1689 = vpack.c.b16 %v1625, %v1625
        %v1690 = vpack.c.b16 %v1626, %v1626
        %v1691 = vpack.c.b16 %v1627, %v1627
        %v1692 = vpack.c.b16 %v1628, %v1628
        %v1693 = vpack.c.b16 %v1629, %v1629
        %v1694 = vpack.c.b16 %v1630, %v1630
        %v1695 = vpack.c.b16 %v1631, %v1631
        %vm1760 = vcmask 60416
        %1761 = vst.msk [vmem:[%s288] sm:$0xf] %vm1760, %v1632
        %1762 = vst.msk [vmem:[%s288 + $0x4] sm:$0xf] %vm1760, %v1633
        %1763 = vst.msk [vmem:[%s288 + $0x8] sm:$0xf] %vm1760, %v1634
        %1764 = vst.msk [vmem:[%s288 + $0xc] sm:$0xf] %vm1760, %v1635
        %1765 = vst.msk [vmem:[%s288 + $0x10] sm:$0xf] %vm1760, %v1636
        %1766 = vst.msk [vmem:[%s288 + $0x14] sm:$0xf] %vm1760, %v1637
        %1767 = vst.msk [vmem:[%s288 + $0x18] sm:$0xf] %vm1760, %v1638
        %1768 = vst.msk [vmem:[%s288 + $0x1c] sm:$0xf] %vm1760, %v1639
        %1769 = vst.msk [vmem:[%s288 + $0x20] sm:$0xf] %vm1760, %v1640
        %1770 = vst.msk [vmem:[%s288 + $0x24] sm:$0xf] %vm1760, %v1641
        %1771 = vst.msk [vmem:[%s288 + $0x28] sm:$0xf] %vm1760, %v1642
        %1772 = vst.msk [vmem:[%s288 + $0x2c] sm:$0xf] %vm1760, %v1643
        %1773 = vst.msk [vmem:[%s288 + $0x30] sm:$0xf] %vm1760, %v1644
        %1774 = vst.msk [vmem:[%s288 + $0x34] sm:$0xf] %vm1760, %v1645
        %1775 = vst.msk [vmem:[%s288 + $0x38] sm:$0xf] %vm1760, %v1646
        %1776 = vst.msk [vmem:[%s288 + $0x3c] sm:$0xf] %vm1760, %v1647
        %1777 = vst.msk [vmem:[%s288 + $0x40] sm:$0xf] %vm1760, %v1648
        %1778 = vst.msk [vmem:[%s288 + $0x44] sm:$0xf] %vm1760, %v1649
        %1779 = vst.msk [vmem:[%s288 + $0x48] sm:$0xf] %vm1760, %v1650
        %1780 = vst.msk [vmem:[%s288 + $0x4c] sm:$0xf] %vm1760, %v1651
        %1781 = vst.msk [vmem:[%s288 + $0x50] sm:$0xf] %vm1760, %v1652
        %1782 = vst.msk [vmem:[%s288 + $0x54] sm:$0xf] %vm1760, %v1653
        %1783 = vst.msk [vmem:[%s288 + $0x58] sm:$0xf] %vm1760, %v1654
        %1784 = vst.msk [vmem:[%s288 + $0x5c] sm:$0xf] %vm1760, %v1655
        %1785 = vst.msk [vmem:[%s288 + $0x60] sm:$0xf] %vm1760, %v1656
        %1786 = vst.msk [vmem:[%s288 + $0x64] sm:$0xf] %vm1760, %v1657
        %1787 = vst.msk [vmem:[%s288 + $0x68] sm:$0xf] %vm1760, %v1658
        %1788 = vst.msk [vmem:[%s288 + $0x6c] sm:$0xf] %vm1760, %v1659
        %1789 = vst.msk [vmem:[%s288 + $0x70] sm:$0xf] %vm1760, %v1660
        %1790 = vst.msk [vmem:[%s288 + $0x74] sm:$0xf] %vm1760, %v1661
        %1791 = vst.msk [vmem:[%s288 + $0x78] sm:$0xf] %vm1760, %v1662
        %1792 = vst.msk [vmem:[%s288 + $0x7c] sm:$0xf] %vm1760, %v1663
        %1793 = vst.msk [vmem:[%s288 + $0x80] sm:$0xf] %vm1760, %v1664
        %1794 = vst.msk [vmem:[%s288 + $0x84] sm:$0xf] %vm1760, %v1665
        %1795 = vst.msk [vmem:[%s288 + $0x88] sm:$0xf] %vm1760, %v1666
        %1796 = vst.msk [vmem:[%s288 + $0x8c] sm:$0xf] %vm1760, %v1667
        %1797 = vst.msk [vmem:[%s288 + $0x90] sm:$0xf] %vm1760, %v1668
        %1798 = vst.msk [vmem:[%s288 + $0x94] sm:$0xf] %vm1760, %v1669
        %1799 = vst.msk [vmem:[%s288 + $0x98] sm:$0xf] %vm1760, %v1670
        %1800 = vst.msk [vmem:[%s288 + $0x9c] sm:$0xf] %vm1760, %v1671
        %1801 = vst.msk [vmem:[%s288 + $0xa0] sm:$0xf] %vm1760, %v1672
        %1802 = vst.msk [vmem:[%s288 + $0xa4] sm:$0xf] %vm1760, %v1673
        %1803 = vst.msk [vmem:[%s288 + $0xa8] sm:$0xf] %vm1760, %v1674
        %1804 = vst.msk [vmem:[%s288 + $0xac] sm:$0xf] %vm1760, %v1675
        %1805 = vst.msk [vmem:[%s288 + $0xb0] sm:$0xf] %vm1760, %v1676
        %1806 = vst.msk [vmem:[%s288 + $0xb4] sm:$0xf] %vm1760, %v1677
        %1807 = vst.msk [vmem:[%s288 + $0xb8] sm:$0xf] %vm1760, %v1678
        %1808 = vst.msk [vmem:[%s288 + $0xbc] sm:$0xf] %vm1760, %v1679
        %1809 = vst.msk [vmem:[%s288 + $0xc0] sm:$0xf] %vm1760, %v1680
        %1810 = vst.msk [vmem:[%s288 + $0xc4] sm:$0xf] %vm1760, %v1681
        %1811 = vst.msk [vmem:[%s288 + $0xc8] sm:$0xf] %vm1760, %v1682
        %1812 = vst.msk [vmem:[%s288 + $0xcc] sm:$0xf] %vm1760, %v1683
        %1813 = vst.msk [vmem:[%s288 + $0xd0] sm:$0xf] %vm1760, %v1684
        %1814 = vst.msk [vmem:[%s288 + $0xd4] sm:$0xf] %vm1760, %v1685
        %1815 = vst.msk [vmem:[%s288 + $0xd8] sm:$0xf] %vm1760, %v1686
        %1816 = vst.msk [vmem:[%s288 + $0xdc] sm:$0xf] %vm1760, %v1687
        %1817 = vst.msk [vmem:[%s288 + $0xe0] sm:$0xf] %vm1760, %v1688
        %1818 = vst.msk [vmem:[%s288 + $0xe4] sm:$0xf] %vm1760, %v1689
        %1819 = vst.msk [vmem:[%s288 + $0xe8] sm:$0xf] %vm1760, %v1690
        %1820 = vst.msk [vmem:[%s288 + $0xec] sm:$0xf] %vm1760, %v1691
        %1821 = vst.msk [vmem:[%s288 + $0xf0] sm:$0xf] %vm1760, %v1692
        %1822 = vst.msk [vmem:[%s288 + $0xf4] sm:$0xf] %vm1760, %v1693
        %1823 = vst.msk [vmem:[%s288 + $0xf8] sm:$0xf] %vm1760, %v1694
        %1824 = vst.msk [vmem:[%s288 + $0xfc] sm:$0xf] %vm1760, %v1695
        %v1825 = vsel %vm1301, %v1440, 0.0
        %v1826 = vsel %vm1301, %v1441, 0.0
        %v1827 = vadd.f32 %v1825, %v1826
        %v1828 = vsel %vm1301, %v1442, 0.0
        %v1829 = vadd.f32 %v1827, %v1828
        %v1830 = vsel %vm1301, %v1443, 0.0
        %v1831 = vadd.f32 %v1829, %v1830
        %v1832 = vsel %vm1301, %v1444, 0.0
        %v1833 = vadd.f32 %v1831, %v1832
        %v1834 = vsel %vm1301, %v1445, 0.0
        %v1835 = vadd.f32 %v1833, %v1834
        %v1836 = vsel %vm1301, %v1446, 0.0
        %v1837 = vadd.f32 %v1835, %v1836
        %v1838 = vsel %vm1301, %v1447, 0.0
        %v1839 = vadd.f32 %v1837, %v1838
        %v1840 = vsel %vm1301, %v1448, 0.0
        %v1841 = vadd.f32 %v1839, %v1840
        %v1842 = vsel %vm1301, %v1449, 0.0
        %v1843 = vadd.f32 %v1841, %v1842
        %v1844 = vsel %vm1301, %v1450, 0.0
        %v1845 = vadd.f32 %v1843, %v1844
        %v1846 = vsel %vm1301, %v1451, 0.0
        %v1847 = vadd.f32 %v1845, %v1846
        %v1848 = vsel %vm1301, %v1452, 0.0
        %v1849 = vadd.f32 %v1847, %v1848
        %v1850 = vsel %vm1301, %v1453, 0.0
        %v1851 = vadd.f32 %v1849, %v1850
        %v1852 = vsel %vm1301, %v1454, 0.0
        %v1853 = vadd.f32 %v1851, %v1852
        %v1854 = vsel %vm1301, %v1455, 0.0
        %v1855 = vadd.f32 %v1853, %v1854
        %v1856 = vsel %vm1301, %v1456, 0.0
        %v1857 = vadd.f32 %v1855, %v1856
        %v1858 = vsel %vm1301, %v1457, 0.0
        %v1859 = vadd.f32 %v1857, %v1858
        %v1860 = vsel %vm1301, %v1458, 0.0
        %v1861 = vadd.f32 %v1859, %v1860
        %v1862 = vsel %vm1301, %v1459, 0.0
        %v1863 = vadd.f32 %v1861, %v1862
        %v1864 = vsel %vm1301, %v1460, 0.0
        %v1865 = vadd.f32 %v1863, %v1864
        %v1866 = vsel %vm1301, %v1461, 0.0
        %v1867 = vadd.f32 %v1865, %v1866
        %v1868 = vsel %vm1301, %v1462, 0.0
        %v1869 = vadd.f32 %v1867, %v1868
        %v1870 = vsel %vm1301, %v1463, 0.0
        %v1871 = vadd.f32 %v1869, %v1870
        %v1872 = vsel %vm1301, %v1464, 0.0
        %v1873 = vadd.f32 %v1871, %v1872
        %v1874 = vsel %vm1301, %v1465, 0.0
        %v1875 = vadd.f32 %v1873, %v1874
        %v1876 = vsel %vm1301, %v1466, 0.0
        %v1877 = vadd.f32 %v1875, %v1876
        %v1878 = vsel %vm1301, %v1467, 0.0
        %v1879 = vadd.f32 %v1877, %v1878
        %v1880 = vsel %vm1301, %v1468, 0.0
        %v1881 = vadd.f32 %v1879, %v1880
        %v1882 = vsel %vm1301, %v1469, 0.0
        %v1883 = vadd.f32 %v1881, %v1882
        %v1884 = vsel %vm1301, %v1470, 0.0
        %v1885 = vadd.f32 %v1883, %v1884
        %v1886 = vsel %vm1301, %v1471, 0.0
        %v1887 = vadd.f32 %v1885, %v1886
        %v1888 = vsel %vm1301, %v1472, 0.0
        %v1889 = vadd.f32 %v1887, %v1888
        %v1890 = vsel %vm1301, %v1473, 0.0
        %v1891 = vadd.f32 %v1889, %v1890
        %v1892 = vsel %vm1301, %v1474, 0.0
        %v1893 = vadd.f32 %v1891, %v1892
        %v1894 = vsel %vm1301, %v1475, 0.0
        %v1895 = vadd.f32 %v1893, %v1894
        %v1896 = vsel %vm1301, %v1476, 0.0
        %v1897 = vadd.f32 %v1895, %v1896
        %v1898 = vsel %vm1301, %v1477, 0.0
        %v1899 = vadd.f32 %v1897, %v1898
        %v1900 = vsel %vm1301, %v1478, 0.0
        %v1901 = vadd.f32 %v1899, %v1900
        %v1902 = vsel %vm1301, %v1479, 0.0
        %v1903 = vadd.f32 %v1901, %v1902
        %v1904 = vsel %vm1301, %v1480, 0.0
        %v1905 = vadd.f32 %v1903, %v1904
        %v1906 = vsel %vm1301, %v1481, 0.0
        %v1907 = vadd.f32 %v1905, %v1906
        %v1908 = vsel %vm1301, %v1482, 0.0
        %v1909 = vadd.f32 %v1907, %v1908
        %v1910 = vsel %vm1301, %v1483, 0.0
        %v1911 = vadd.f32 %v1909, %v1910
        %v1912 = vsel %vm1301, %v1484, 0.0
        %v1913 = vadd.f32 %v1911, %v1912
        %v1914 = vsel %vm1301, %v1485, 0.0
        %v1915 = vadd.f32 %v1913, %v1914
        %v1916 = vsel %vm1301, %v1486, 0.0
        %v1917 = vadd.f32 %v1915, %v1916
        %v1918 = vsel %vm1301, %v1487, 0.0
        %v1919 = vadd.f32 %v1917, %v1918
        %v1920 = vsel %vm1301, %v1488, 0.0
        %v1921 = vadd.f32 %v1919, %v1920
        %v1922 = vsel %vm1301, %v1489, 0.0
        %v1923 = vadd.f32 %v1921, %v1922
        %v1924 = vsel %vm1301, %v1490, 0.0
        %v1925 = vadd.f32 %v1923, %v1924
        %v1926 = vsel %vm1301, %v1491, 0.0
        %v1927 = vadd.f32 %v1925, %v1926
        %v1928 = vsel %vm1301, %v1492, 0.0
        %v1929 = vadd.f32 %v1927, %v1928
        %v1930 = vsel %vm1301, %v1493, 0.0
        %v1931 = vadd.f32 %v1929, %v1930
        %v1932 = vsel %vm1301, %v1494, 0.0
        %v1933 = vadd.f32 %v1931, %v1932
        %v1934 = vsel %vm1301, %v1495, 0.0
        %v1935 = vadd.f32 %v1933, %v1934
        %v1936 = vsel %vm1301, %v1496, 0.0
        %v1937 = vadd.f32 %v1935, %v1936
        %v1938 = vsel %vm1301, %v1497, 0.0
        %v1939 = vadd.f32 %v1937, %v1938
        %v1940 = vsel %vm1301, %v1498, 0.0
        %v1941 = vadd.f32 %v1939, %v1940
        %v1942 = vsel %vm1301, %v1499, 0.0
        %v1943 = vadd.f32 %v1941, %v1942
        %v1944 = vsel %vm1301, %v1500, 0.0
        %v1945 = vadd.f32 %v1943, %v1944
        %v1946 = vsel %vm1301, %v1501, 0.0
        %v1947 = vadd.f32 %v1945, %v1946
        %v1948 = vsel %vm1301, %v1502, 0.0
        %v1949 = vadd.f32 %v1947, %v1948
        %v1950 = vsel %vm1301, %v1503, 0.0
        %v1951 = vadd.f32 %v1949, %v1950
        %v1952 = vrot.slane %v1951, 4
        %v1953 = vadd.f32 %v1951, %v1952
        %v1954 = vrot.slane %v1953, 2
        %v1955 = vadd.f32 %v1953, %v1954
        %v1956 = vrot.slane %v1955, 1
        %v1957 = vadd.f32 %v1955, %v1956
        %v1958 = vrcp.pop 512.0
        %v1959 = vmul.f32 %v1957, %v1958
        %v1960 = vsub.f32 %v1440, %v1959
        %v1961 = vsub.f32 %v1441, %v1959
        %v1962 = vsub.f32 %v1442, %v1959
        %v1963 = vsub.f32 %v1443, %v1959
        %v1964 = vsub.f32 %v1444, %v1959
        %v1965 = vsub.f32 %v1445, %v1959
        %v1966 = vsub.f32 %v1446, %v1959
        %v1967 = vsub.f32 %v1447, %v1959
        %v1968 = vsub.f32 %v1448, %v1959
        %v1969 = vsub.f32 %v1449, %v1959
        %v1970 = vsub.f32 %v1450, %v1959
        %v1971 = vsub.f32 %v1451, %v1959
        %v1972 = vsub.f32 %v1452, %v1959
        %v1973 = vsub.f32 %v1453, %v1959
        %v1974 = vsub.f32 %v1454, %v1959
        %v1975 = vsub.f32 %v1455, %v1959
        %v1976 = vsub.f32 %v1456, %v1959
        %v1977 = vsub.f32 %v1457, %v1959
        %v1978 = vsub.f32 %v1458, %v1959
        %v1979 = vsub.f32 %v1459, %v1959
        %v1980 = vsub.f32 %v1460, %v1959
        %v1981 = vsub.f32 %v1461, %v1959
        %v1982 = vsub.f32 %v1462, %v1959
        %v1983 = vsub.f32 %v1463, %v1959
        %v1984 = vsub.f32 %v1464, %v1959
        %v1985 = vsub.f32 %v1465, %v1959
        %v1986 = vsub.f32 %v1466, %v1959
        %v1987 = vsub.f32 %v1467, %v1959
        %v1988 = vsub.f32 %v1468, %v1959
        %v1989 = vsub.f32 %v1469, %v1959
        %v1990 = vsub.f32 %v1470, %v1959
        %v1991 = vsub.f32 %v1471, %v1959
        %v1992 = vsub.f32 %v1472, %v1959
        %v1993 = vsub.f32 %v1473, %v1959
        %v1994 = vsub.f32 %v1474, %v1959
        %v1995 = vsub.f32 %v1475, %v1959
        %v1996 = vsub.f32 %v1476, %v1959
        %v1997 = vsub.f32 %v1477, %v1959
        %v1998 = vsub.f32 %v1478, %v1959
        %v1999 = vsub.f32 %v1479, %v1959
        %v2000 = vsub.f32 %v1480, %v1959
        %v2001 = vsub.f32 %v1481, %v1959
        %v2002 = vsub.f32 %v1482, %v1959
        %v2003 = vsub.f32 %v1483, %v1959
        %v2004 = vsub.f32 %v1484, %v1959
        %v2005 = vsub.f32 %v1485, %v1959
        %v2006 = vsub.f32 %v1486, %v1959
        %v2007 = vsub.f32 %v1487, %v1959
        %v2008 = vsub.f32 %v1488, %v1959
        %v2009 = vsub.f32 %v1489, %v1959
        %v2010 = vsub.f32 %v1490, %v1959
        %v2011 = vsub.f32 %v1491, %v1959
        %v2012 = vsub.f32 %v1492, %v1959
        %v2013 = vsub.f32 %v1493, %v1959
        %v2014 = vsub.f32 %v1494, %v1959
        %v2015 = vsub.f32 %v1495, %v1959
        %v2016 = vsub.f32 %v1496, %v1959
        %v2017 = vsub.f32 %v1497, %v1959
        %v2018 = vsub.f32 %v1498, %v1959
        %v2019 = vsub.f32 %v1499, %v1959
        %v2020 = vsub.f32 %v1500, %v1959
        %v2021 = vsub.f32 %v1501, %v1959
        %v2022 = vsub.f32 %v1502, %v1959
        %v2023 = vsub.f32 %v1503, %v1959
        %v2024 = vmul.f32 %v1960, %v1960
        %v2025 = vmul.f32 %v1961, %v1961
        %v2026 = vmul.f32 %v1962, %v1962
        %v2027 = vmul.f32 %v1963, %v1963
        %v2028 = vmul.f32 %v1964, %v1964
        %v2029 = vmul.f32 %v1965, %v1965
        %v2030 = vmul.f32 %v1966, %v1966
        %v2031 = vmul.f32 %v1967, %v1967
        %v2032 = vmul.f32 %v1968, %v1968
        %v2033 = vmul.f32 %v1969, %v1969
        %v2034 = vmul.f32 %v1970, %v1970
        %v2035 = vmul.f32 %v1971, %v1971
        %v2036 = vmul.f32 %v1972, %v1972
        %v2037 = vmul.f32 %v1973, %v1973
        %v2038 = vmul.f32 %v1974, %v1974
        %v2039 = vmul.f32 %v1975, %v1975
        %v2040 = vmul.f32 %v1976, %v1976
        %v2041 = vmul.f32 %v1977, %v1977
        %v2042 = vmul.f32 %v1978, %v1978
        %v2043 = vmul.f32 %v1979, %v1979
        %v2044 = vmul.f32 %v1980, %v1980
        %v2045 = vmul.f32 %v1981, %v1981
        %v2046 = vmul.f32 %v1982, %v1982
        %v2047 = vmul.f32 %v1983, %v1983
        %v2048 = vmul.f32 %v1984, %v1984
        %v2049 = vmul.f32 %v1985, %v1985
        %v2050 = vmul.f32 %v1986, %v1986
        %v2051 = vmul.f32 %v1987, %v1987
        %v2052 = vmul.f32 %v1988, %v1988
        %v2053 = vmul.f32 %v1989, %v1989
        %v2054 = vmul.f32 %v1990, %v1990
        %v2055 = vmul.f32 %v1991, %v1991
        %v2056 = vmul.f32 %v1992, %v1992
        %v2057 = vmul.f32 %v1993, %v1993
        %v2058 = vmul.f32 %v1994, %v1994
        %v2059 = vmul.f32 %v1995, %v1995
        %v2060 = vmul.f32 %v1996, %v1996
        %v2061 = vmul.f32 %v1997, %v1997
        %v2062 = vmul.f32 %v1998, %v1998
        %v2063 = vmul.f32 %v1999, %v1999
        %v2064 = vmul.f32 %v2000, %v2000
        %v2065 = vmul.f32 %v2001, %v2001
        %v2066 = vmul.f32 %v2002, %v2002
        %v2067 = vmul.f32 %v2003, %v2003
        %v2068 = vmul.f32 %v2004, %v2004
        %v2069 = vmul.f32 %v2005, %v2005
        %v2070 = vmul.f32 %v2006, %v2006
        %v2071 = vmul.f32 %v2007, %v2007
        %v2072 = vmul.f32 %v2008, %v2008
        %v2073 = vmul.f32 %v2009, %v2009
        %v2074 = vmul.f32 %v2010, %v2010
        %v2075 = vmul.f32 %v2011, %v2011
        %v2076 = vmul.f32 %v2012, %v2012
        %v2077 = vmul.f32 %v2013, %v2013
        %v2078 = vmul.f32 %v2014, %v2014
        %v2079 = vmul.f32 %v2015, %v2015
        %v2080 = vmul.f32 %v2016, %v2016
        %v2081 = vmul.f32 %v2017, %v2017
        %v2082 = vmul.f32 %v2018, %v2018
        %v2083 = vmul.f32 %v2019, %v2019
        %v2084 = vmul.f32 %v2020, %v2020
        %v2085 = vmul.f32 %v2021, %v2021
        %v2086 = vmul.f32 %v2022, %v2022
        %v2087 = vmul.f32 %v2023, %v2023
        %v2088 = vsel %vm1301, %v2024, 0.0
        %v2089 = vsel %vm1301, %v2025, 0.0
        %v2090 = vadd.f32 %v2088, %v2089
        %v2091 = vsel %vm1301, %v2026, 0.0
        %v2092 = vadd.f32 %v2090, %v2091
        %v2093 = vsel %vm1301, %v2027, 0.0
        %v2094 = vadd.f32 %v2092, %v2093
        %v2095 = vsel %vm1301, %v2028, 0.0
        %v2096 = vadd.f32 %v2094, %v2095
        %v2097 = vsel %vm1301, %v2029, 0.0
        %v2098 = vadd.f32 %v2096, %v2097
        %v2099 = vsel %vm1301, %v2030, 0.0
        %v2100 = vadd.f32 %v2098, %v2099
        %v2101 = vsel %vm1301, %v2031, 0.0
        %v2102 = vadd.f32 %v2100, %v2101
        %v2103 = vsel %vm1301, %v2032, 0.0
        %v2104 = vadd.f32 %v2102, %v2103
        %v2105 = vsel %vm1301, %v2033, 0.0
        %v2106 = vadd.f32 %v2104, %v2105
        %v2107 = vsel %vm1301, %v2034, 0.0
        %v2108 = vadd.f32 %v2106, %v2107
        %v2109 = vsel %vm1301, %v2035, 0.0
        %v2110 = vadd.f32 %v2108, %v2109
        %v2111 = vsel %vm1301, %v2036, 0.0
        %v2112 = vadd.f32 %v2110, %v2111
        %v2113 = vsel %vm1301, %v2037, 0.0
        %v2114 = vadd.f32 %v2112, %v2113
        %v2115 = vsel %vm1301, %v2038, 0.0
        %v2116 = vadd.f32 %v2114, %v2115
        %v2117 = vsel %vm1301, %v2039, 0.0
        %v2118 = vadd.f32 %v2116, %v2117
        %v2119 = vsel %vm1301, %v2040, 0.0
        %v2120 = vadd.f32 %v2118, %v2119
        %v2121 = vsel %vm1301, %v2041, 0.0
        %v2122 = vadd.f32 %v2120, %v2121
        %v2123 = vsel %vm1301, %v2042, 0.0
        %v2124 = vadd.f32 %v2122, %v2123
        %v2125 = vsel %vm1301, %v2043, 0.0
        %v2126 = vadd.f32 %v2124, %v2125
        %v2127 = vsel %vm1301, %v2044, 0.0
        %v2128 = vadd.f32 %v2126, %v2127
        %v2129 = vsel %vm1301, %v2045, 0.0
        %v2130 = vadd.f32 %v2128, %v2129
        %v2131 = vsel %vm1301, %v2046, 0.0
        %v2132 = vadd.f32 %v2130, %v2131
        %v2133 = vsel %vm1301, %v2047, 0.0
        %v2134 = vadd.f32 %v2132, %v2133
        %v2135 = vsel %vm1301, %v2048, 0.0
        %v2136 = vadd.f32 %v2134, %v2135
        %v2137 = vsel %vm1301, %v2049, 0.0
        %v2138 = vadd.f32 %v2136, %v2137
        %v2139 = vsel %vm1301, %v2050, 0.0
        %v2140 = vadd.f32 %v2138, %v2139
        %v2141 = vsel %vm1301, %v2051, 0.0
        %v2142 = vadd.f32 %v2140, %v2141
        %v2143 = vsel %vm1301, %v2052, 0.0
        %v2144 = vadd.f32 %v2142, %v2143
        %v2145 = vsel %vm1301, %v2053, 0.0
        %v2146 = vadd.f32 %v2144, %v2145
        %v2147 = vsel %vm1301, %v2054, 0.0
        %v2148 = vadd.f32 %v2146, %v2147
        %v2149 = vsel %vm1301, %v2055, 0.0
        %v2150 = vadd.f32 %v2148, %v2149
        %v2151 = vsel %vm1301, %v2056, 0.0
        %v2152 = vadd.f32 %v2150, %v2151
        %v2153 = vsel %vm1301, %v2057, 0.0
        %v2154 = vadd.f32 %v2152, %v2153
        %v2155 = vsel %vm1301, %v2058, 0.0
        %v2156 = vadd.f32 %v2154, %v2155
        %v2157 = vsel %vm1301, %v2059, 0.0
        %v2158 = vadd.f32 %v2156, %v2157
        %v2159 = vsel %vm1301, %v2060, 0.0
        %v2160 = vadd.f32 %v2158, %v2159
        %v2161 = vsel %vm1301, %v2061, 0.0
        %v2162 = vadd.f32 %v2160, %v2161
        %v2163 = vsel %vm1301, %v2062, 0.0
        %v2164 = vadd.f32 %v2162, %v2163
        %v2165 = vsel %vm1301, %v2063, 0.0
        %v2166 = vadd.f32 %v2164, %v2165
        %v2167 = vsel %vm1301, %v2064, 0.0
        %v2168 = vadd.f32 %v2166, %v2167
        %v2169 = vsel %vm1301, %v2065, 0.0
        %v2170 = vadd.f32 %v2168, %v2169
        %v2171 = vsel %vm1301, %v2066, 0.0
        %v2172 = vadd.f32 %v2170, %v2171
        %v2173 = vsel %vm1301, %v2067, 0.0
        %v2174 = vadd.f32 %v2172, %v2173
        %v2175 = vsel %vm1301, %v2068, 0.0
        %v2176 = vadd.f32 %v2174, %v2175
        %v2177 = vsel %vm1301, %v2069, 0.0
        %v2178 = vadd.f32 %v2176, %v2177
        %v2179 = vsel %vm1301, %v2070, 0.0
        %v2180 = vadd.f32 %v2178, %v2179
        %v2181 = vsel %vm1301, %v2071, 0.0
        %v2182 = vadd.f32 %v2180, %v2181
        %v2183 = vsel %vm1301, %v2072, 0.0
        %v2184 = vadd.f32 %v2182, %v2183
        %v2185 = vsel %vm1301, %v2073, 0.0
        %v2186 = vadd.f32 %v2184, %v2185
        %v2187 = vsel %vm1301, %v2074, 0.0
        %v2188 = vadd.f32 %v2186, %v2187
        %v2189 = vsel %vm1301, %v2075, 0.0
        %v2190 = vadd.f32 %v2188, %v2189
        %v2191 = vsel %vm1301, %v2076, 0.0
        %v2192 = vadd.f32 %v2190, %v2191
        %v2193 = vsel %vm1301, %v2077, 0.0
        %v2194 = vadd.f32 %v2192, %v2193
        %v2195 = vsel %vm1301, %v2078, 0.0
        %v2196 = vadd.f32 %v2194, %v2195
        %v2197 = vsel %vm1301, %v2079, 0.0
        %v2198 = vadd.f32 %v2196, %v2197
        %v2199 = vsel %vm1301, %v2080, 0.0
        %v2200 = vadd.f32 %v2198, %v2199
        %v2201 = vsel %vm1301, %v2081, 0.0
        %v2202 = vadd.f32 %v2200, %v2201
        %v2203 = vsel %vm1301, %v2082, 0.0
        %v2204 = vadd.f32 %v2202, %v2203
        %v2205 = vsel %vm1301, %v2083, 0.0
        %v2206 = vadd.f32 %v2204, %v2205
        %v2207 = vsel %vm1301, %v2084, 0.0
        %v2208 = vadd.f32 %v2206, %v2207
        %v2209 = vsel %vm1301, %v2085, 0.0
        %v2210 = vadd.f32 %v2208, %v2209
        %v2211 = vsel %vm1301, %v2086, 0.0
        %v2212 = vadd.f32 %v2210, %v2211
        %v2213 = vsel %vm1301, %v2087, 0.0
        %v2214 = vadd.f32 %v2212, %v2213
        %v2215 = vrot.slane %v2214, 4
        %v2216 = vadd.f32 %v2214, %v2215
        %v2217 = vrot.slane %v2216, 2
        %v2218 = vadd.f32 %v2216, %v2217
        %v2219 = vrot.slane %v2218, 1
        %v2220 = vadd.f32 %v2218, %v2219
        %vm2221 = vcmask 57344
        %2222 = vst.msk [vmem:[%s296] sm:$0x1] %vm2221, %v1957
        %2223 = vst.msk [vmem:[%s296 + $0x1] sm:$0x1] %vm2221, %v2220
      $region40: #{_lambda_.9} parent=31 // pred_fallthru
        _
      %s2224 = smul.u32 64, %s21
      %p2225 = scmp.lt.s32.totalorder %s2224, 127
      %s2226 = scalar_select %p2225, %s2224, 127
      %p2227 = scmp.lt.s32.totalorder %s22, 0
      %s2228 = scalar_select %p2227, %s22, 0
      %s2229 = sadd.s32 %s2228, %s2226
      %s2230 = smul.addr %s2229, 4
      %s2231 = scalar_lea.vmem %s3, %s2230
      %p2232 = scmp.lt.s32.totalorder %s21, 1
      %s2233 = scalar_select %p2232, %s21, 1
      %p2234 = scmp.lt.s32.totalorder %s22, 0
      %s2235 = scalar_select %p2234, %s22, 0
      %s2236 = sadd.s32 %s2235, %s2233
      %s2237 = smul.addr %s2236, 2
      %s2238 = scalar_lea.vmem %s4, %s2237
      // Predicated region
      $region41: #{_lambda_.9} parent=31 // pred_check
        %p2239 = pneg %p135
      $region42: #{_lambda_.9} parent=31 // pred_check_branch
        %2241 = sbr.rel (%p2239) target = $region44
      $region43: #{_lambda_.9} parent=31 // pred_region
        %s2242 = smul.u32 64, %s21
      $region44: #{_lambda_.9} parent=31 // pred_fallthru
        _
      // Predicated region
      $region45: #{_lambda_.9} parent=31 // pred_check
        %p2243 = pneg %p163
      $region46: #{_lambda_.9} parent=31 // pred_check_branch
        %2245 = sbr.rel (%p2243) target = $region48
      $region47: #{_lambda_.9} parent=31 // pred_region
        _
      $region48: #{_lambda_.9} parent=31 // pred_fallthru
        _
    $region32: #{_lambda_.9} parent=5 // pred_fallthru
      _
    %p2246 = scmp.le.s32.totalorder 2, %s11
    // Predicated region
    $region49: #{_lambda_.9} parent=5 // pred_check
      %p2247 = pneg %p2246
    $region50: #{_lambda_.9} parent=5 // pred_check_branch
      %2249 = sbr.rel (%p2247) target = $region52
    $region51: #{_lambda_.9} parent=5 // pred_region
      %s2250 = ssub.s32 %s11, 2
      // Predicated region
      $region53: #{_lambda_.9} parent=51 // pred_check
        %p2251 = pneg %p141
      $region54: #{_lambda_.9} parent=51 // pred_check_branch
        %2253 = sbr.rel (%p2251) target = $region56
      $region55: #{_lambda_.9} parent=51 // pred_region
        %s2254 = smul.u32 64, %s24
        %p2255 = scmp.lt.s32.totalorder %s2254, 127
        %s2256 = scalar_select %p2255, %s2254, 127
        %p2257 = scmp.lt.s32.totalorder %s25, 0
        %s2258 = scalar_select %p2257, %s25, 0
        %s2259 = sadd.s32 %s2258, %s2256
        %s2260 = smul.addr %s2259, 4
        %s2261 = scalar_lea.vmem %s3, %s2260
      $region56: #{_lambda_.9} parent=51 // pred_fallthru
        _
      // Predicated region
      $region57: #{_lambda_.9} parent=51 // pred_check
        %p2262 = pneg %p169
      $region58: #{_lambda_.9} parent=51 // pred_check_branch
        %2264 = sbr.rel (%p2262) target = $region60
      $region59: #{_lambda_.9} parent=51 // pred_region
        %p2265 = scmp.lt.s32.totalorder %s24, 1
        %s2266 = scalar_select %p2265, %s24, 1
        %p2267 = scmp.lt.s32.totalorder %s25, 0
        %s2268 = scalar_select %p2267, %s25, 0
        %s2269 = sadd.s32 %s2268, %s2266
        %s2270 = smul.addr %s2269, 2
        %s2271 = scalar_lea.vmem %s4, %s2270
      $region60: #{_lambda_.9} parent=51 // pred_fallthru
        _
    $region52: #{_lambda_.9} parent=5 // pred_fallthru
      _
  $region6: #{_lambda_.9} parent=0 // loop_footer
    %s15 = sadd.s32 1, %s11
  $region7: #{_lambda_.9} parent=0 // loop_footer_branch
    %10 = sbr.rel target = $region3
  $region8: #{_lambda_.9} parent=0 // loop_exit
    _

// kernel: _lambda_.10
$region0: #{_lambda_.10}
  #allocation0 [shape = 'u32[]', space=smem, size = 0x4, offset = 0x4, fixed_abs, tag = 'smem constant byte address 0x4 - core index']
  #allocation1 [shape = 'u32[144,128]{1,0:T(1,128)}', space=vmem, size = 0x12000, scoped, tag = 'internal scratch']
  %s0 = inlined_call_operand.vmem [shape: bf16[1024,8], index: 0, kind: input, shape index: {}]
  %s1 = inlined_call_operand.vmem [shape: f32[1,8], index: 1, kind: input, shape index: {}]
  %s2 = inlined_call_operand.vmem [shape: f32[1,8], index: 2, kind: input, shape index: {}]
  %s3 = inlined_call_operand.vmem [shape: bf16[1024,8], index: 3, kind: output, shape index: {}]
  %s4 = sld [smem:[#allocation0]]
  $region45: #{_lambda_.10} parent=0
    _
  %s6 = ssub.s32 1, %s4
  %s7 = scalar_select 0, %s6, %s4
  loop: start=0, step=1, limit=4
  $region2: #{_lambda_.10} parent=0 // loop_pre_header
    _
  $region3: #{_lambda_.10} parent=0 // loop_header
    %s9 = sphi 0, %s13
    %p10 = scmp.ge.s32.totalorder %s9, 4
    %s19 = sphi 0, %s21
    %s22 = sphi 0, %s19
    %s23 = sphi 0, %s22
    %s39 = sphi 0, %s23
    %s43 = sphi 0, %s43
    %s45 = sphi 0, %s43
    %s46 = sphi 0, %s45
    %s60 = sphi 0, %s46
    %s64 = sphi 0, %s64
    %s66 = sphi 0, %s64
    %s67 = sphi 0, %s66
    %s81 = sphi 0, %s67
    %s87 = sphi 0, %s89
    %s90 = sphi 0, %s87
    %s91 = sphi 0, %s90
    %s107 = sphi 0, %s91
  $region4: #{_lambda_.10} parent=0 // loop_header_branch
    %12 = sbr.rel (%p10) target = $region8
  $region5: #{_lambda_.10} parent=0 // loop_body
    %s14 = ssub.s32 %s9, 1
    %s15 = ssub.s32 %s9, 2
    %s16 = sadd.s32 %s9, 1
    %s17 = ssub.s32 %s9, %s16
    %p18 = scmp.eq.s32.totalorder %s17, 0
    %s20 = sadd.s32 %s19, 1
    %s21 = scalar_select %p18, %s19, %s20
    %p24 = pneg %p18
    %p25 = scmp.eq.s32.totalorder %s9, 1
    %p26 = por %p24, %p25
    %p27 = scmp.ne.s32.totalorder %s19, %s22
    %p28 = scmp.eq.s32.totalorder %s9, 0
    %p29 = por %p27, %p28
    %p30 = scmp.ne.s32.totalorder %s19, %s22
    %p31 = scmp.eq.s32.totalorder %s14, 1
    %p32 = por %p30, %p31
    %p33 = scmp.ne.s32.totalorder %s22, %s23
    %p34 = scmp.eq.s32.totalorder %s14, 0
    %p35 = por %p33, %p34
    %p36 = scmp.ne.s32.totalorder %s22, %s23
    %p37 = scmp.eq.s32.totalorder %s15, 1
    %p38 = por %p36, %p37
    %p40 = scmp.ne.s32.totalorder %s23, %s39
    %p41 = scmp.eq.s32.totalorder %s15, 0
    %p42 = por %p40, %p41
    %s44 = sadd.s32 %s43, 1
    %p47 = scmp.eq.s32.totalorder %s9, 1
    %p48 = scmp.ne.s32.totalorder %s43, %s45
    %p49 = scmp.eq.s32.totalorder %s9, 0
    %p50 = por %p48, %p49
    %p51 = scmp.ne.s32.totalorder %s43, %s45
    %p52 = scmp.eq.s32.totalorder %s14, 1
    %p53 = por %p51, %p52
    %p54 = scmp.ne.s32.totalorder %s45, %s46
    %p55 = scmp.eq.s32.totalorder %s14, 0
    %p56 = por %p54, %p55
    %p57 = scmp.ne.s32.totalorder %s45, %s46
    %p58 = scmp.eq.s32.totalorder %s15, 1
    %p59 = por %p57, %p58
    %p61 = scmp.ne.s32.totalorder %s46, %s60
    %p62 = scmp.eq.s32.totalorder %s15, 0
    %p63 = por %p61, %p62
    %s65 = sadd.s32 %s64, 1
    %p68 = scmp.eq.s32.totalorder %s9, 1
    %p69 = scmp.ne.s32.totalorder %s64, %s66
    %p70 = scmp.eq.s32.totalorder %s9, 0
    %p71 = por %p69, %p70
    %p72 = scmp.ne.s32.totalorder %s64, %s66
    %p73 = scmp.eq.s32.totalorder %s14, 1
    %p74 = por %p72, %p73
    %p75 = scmp.ne.s32.totalorder %s66, %s67
    %p76 = scmp.eq.s32.totalorder %s14, 0
    %p77 = por %p75, %p76
    %p78 = scmp.ne.s32.totalorder %s66, %s67
    %p79 = scmp.eq.s32.totalorder %s15, 1
    %p80 = por %p78, %p79
    %p82 = scmp.ne.s32.totalorder %s67, %s81
    %p83 = scmp.eq.s32.totalorder %s15, 0
    %p84 = por %p82, %p83
    %s85 = ssub.s32 %s9, %s16
    %p86 = scmp.eq.s32.totalorder %s85, 0
    %s88 = sadd.s32 %s87, 1
    %s89 = scalar_select %p86, %s87, %s88
    %p92 = pneg %p86
    %p93 = scmp.eq.s32.totalorder %s9, 1
    %p94 = por %p92, %p93
    %p95 = scmp.ne.s32.totalorder %s87, %s90
    %p96 = scmp.eq.s32.totalorder %s9, 0
    %p97 = por %p95, %p96
    %p98 = scmp.ne.s32.totalorder %s87, %s90
    %p99 = scmp.eq.s32.totalorder %s14, 1
    %p100 = por %p98, %p99
    %p101 = scmp.ne.s32.totalorder %s90, %s91
    %p102 = scmp.eq.s32.totalorder %s14, 0
    %p103 = por %p101, %p102
    %p104 = scmp.ne.s32.totalorder %s90, %s91
    %p105 = scmp.eq.s32.totalorder %s15, 1
    %p106 = por %p104, %p105
    %p108 = scmp.ne.s32.totalorder %s91, %s107
    %p109 = scmp.eq.s32.totalorder %s15, 0
    %p110 = por %p108, %p109
    %p111 = scmp.le.s32.totalorder 1, %s9
    %p112 = scmp.lt.s32.totalorder %s9, 3
    %p113 = pnand %p111, %p112
    %p114 = pneg %p113
    // Predicated region
    $region9: #{_lambda_.10} parent=5 // pred_check
      _
    $region10: #{_lambda_.10} parent=5 // pred_check_branch
      %116 = sbr.rel (%p113) target = $region12
    $region11: #{_lambda_.10} parent=5 // pred_region
      %s117 = ssub.s32 %s9, 1
      // Predicated region
      $region13: #{_lambda_.10} parent=11 // pred_check
        %p118 = pneg %p56
      $region14: #{_lambda_.10} parent=11 // pred_check_branch
        %120 = sbr.rel (%p118) target = $region16
      $region15: #{_lambda_.10} parent=11 // pred_region
        _
      $region16: #{_lambda_.10} parent=11 // pred_fallthru
        _
      // Predicated region
      $region17: #{_lambda_.10} parent=11 // pred_check
        %p121 = pneg %p77
      $region18: #{_lambda_.10} parent=11 // pred_check_branch
        %123 = sbr.rel (%p121) target = $region20
      $region19: #{_lambda_.10} parent=11 // pred_region
        _
      $region20: #{_lambda_.10} parent=11 // pred_fallthru
        _
    $region12: #{_lambda_.10} parent=5 // pred_fallthru
      _
    %p124 = scmp.lt.s32.totalorder %s9, 2
    // Predicated region
    $region21: #{_lambda_.10} parent=5 // pred_check
      %p125 = pneg %p124
    $region22: #{_lambda_.10} parent=5 // pred_check_branch
      %127 = sbr.rel (%p125) target = $region24
    $region23: #{_lambda_.10} parent=5 // pred_region
      // Predicated region
      $region25: #{_lambda_.10} parent=23 // pred_check
        %p128 = pneg %p29
      $region26: #{_lambda_.10} parent=23 // pred_check_branch
        %130 = sbr.rel (%p128) target = $region28
      $region27: #{_lambda_.10} parent=23 // pred_region
        %s131 = smul.u32 64, %s9
        %p132 = scmp.lt.s32.totalorder %s131, 127
        %s133 = scalar_select %p132, %s131, 127
        %s134 = smul.addr %s133, 4
        %s135 = scalar_lea.vmem %s0, %s134
        %s136 = smul.u32 64, %s9
      $region28: #{_lambda_.10} parent=23 // pred_fallthru
        _
    $region24: #{_lambda_.10} parent=5 // pred_fallthru
      _
    %p137 = scmp.le.s32.totalorder 1, %s9
    %p138 = scmp.lt.s32.totalorder %s9, 3
    %p139 = pnand %p137, %p138
    %p140 = pneg %p139
    // Predicated region
    $region29: #{_lambda_.10} parent=5 // pred_check
      _
    $region30: #{_lambda_.10} parent=5 // pred_check_branch
      %142 = sbr.rel (%p139) target = $region32
    $region31: #{_lambda_.10} parent=5 // pred_region
      %s143 = ssub.s32 %s9, 1
      %s144 = smul.u32 64, %s14
      %p145 = scmp.lt.s32.totalorder %s144, 127
      %s146 = scalar_select %p145, %s144, 127
      %s147 = smul.addr %s146, 4
      %s148 = scalar_lea.vmem %s0, %s147
      %p149 = pneg %p35
      %p150 = pneg %p32
      %p151 = pneg %p56
      %p152 = pneg %p53
      %p153 = pneg %p77
      %p154 = pneg %p74
      %p155 = pneg %p103
      %p156 = pneg %p100
      %s157 = smul.u32 64, %s14
      %p158 = scmp.lt.s32.totalorder %s157, 127
      %s159 = scalar_select %p158, %s157, 127
      %s160 = smul.addr %s159, 4
      %s161 = scalar_lea.vmem %s3, %s160
      %s162 = smul.u32 64, %s14
      %p163 = scmp.lt.s32.totalorder %s162, 127
      %s164 = scalar_select %p163, %s162, 127
      %s165 = smul.addr %s164, 4
      %s166 = scalar_lea.vmem %s0, %s165
      %s167 = smul.u32 64, %s14
      %s168 = smul.u32 64, %s14
      %p169 = scmp.lt.s32.totalorder %s168, 127
      %s170 = scalar_select %p169, %s168, 127
      %s171 = smul.addr %s170, 4
      %s172 = scalar_lea.vmem %s3, %s171
      %s173 = smul.u32 64, %s14
      %v174 = vld [vmem:[%s166] sm:$0xf]
      %v175 = vld [vmem:[%s166 + $0x4] sm:$0xf]
      %v176 = vld [vmem:[%s166 + $0x8] sm:$0xf]
      %v177 = vld [vmem:[%s166 + $0xc] sm:$0xf]
      %v178 = vld [vmem:[%s166 + $0x10] sm:$0xf]
      %v179 = vld [vmem:[%s166 + $0x14] sm:$0xf]
      %v180 = vld [vmem:[%s166 + $0x18] sm:$0xf]
      %v181 = vld [vmem:[%s166 + $0x1c] sm:$0xf]
      %v182 = vld [vmem:[%s166 + $0x20] sm:$0xf]
      %v183 = vld [vmem:[%s166 + $0x24] sm:$0xf]
      %v184 = vld [vmem:[%s166 + $0x28] sm:$0xf]
      %v185 = vld [vmem:[%s166 + $0x2c] sm:$0xf]
      %v186 = vld [vmem:[%s166 + $0x30] sm:$0xf]
      %v187 = vld [vmem:[%s166 + $0x34] sm:$0xf]
      %v188 = vld [vmem:[%s166 + $0x38] sm:$0xf]
      %v189 = vld [vmem:[%s166 + $0x3c] sm:$0xf]
      %v190 = vld [vmem:[%s166 + $0x40] sm:$0xf]
      %v191 = vld [vmem:[%s166 + $0x44] sm:$0xf]
      %v192 = vld [vmem:[%s166 + $0x48] sm:$0xf]
      %v193 = vld [vmem:[%s166 + $0x4c] sm:$0xf]
      %v194 = vld [vmem:[%s166 + $0x50] sm:$0xf]
      %v195 = vld [vmem:[%s166 + $0x54] sm:$0xf]
      %v196 = vld [vmem:[%s166 + $0x58] sm:$0xf]
      %v197 = vld [vmem:[%s166 + $0x5c] sm:$0xf]
      %v198 = vld [vmem:[%s166 + $0x60] sm:$0xf]
      %v199 = vld [vmem:[%s166 + $0x64] sm:$0xf]
      %v200 = vld [vmem:[%s166 + $0x68] sm:$0xf]
      %v201 = vld [vmem:[%s166 + $0x6c] sm:$0xf]
      %v202 = vld [vmem:[%s166 + $0x70] sm:$0xf]
      %v203 = vld [vmem:[%s166 + $0x74] sm:$0xf]
      %v204 = vld [vmem:[%s166 + $0x78] sm:$0xf]
      %v205 = vld [vmem:[%s166 + $0x7c] sm:$0xf]
      %v206 = vld [vmem:[%s166 + $0x80] sm:$0xf]
      %v207 = vld [vmem:[%s166 + $0x84] sm:$0xf]
      %v208 = vld [vmem:[%s166 + $0x88] sm:$0xf]
      %v209 = vld [vmem:[%s166 + $0x8c] sm:$0xf]
      %v210 = vld [vmem:[%s166 + $0x90] sm:$0xf]
      %v211 = vld [vmem:[%s166 + $0x94] sm:$0xf]
      %v212 = vld [vmem:[%s166 + $0x98] sm:$0xf]
      %v213 = vld [vmem:[%s166 + $0x9c] sm:$0xf]
      %v214 = vld [vmem:[%s166 + $0xa0] sm:$0xf]
      %v215 = vld [vmem:[%s166 + $0xa4] sm:$0xf]
      %v216 = vld [vmem:[%s166 + $0xa8] sm:$0xf]
      %v217 = vld [vmem:[%s166 + $0xac] sm:$0xf]
      %v218 = vld [vmem:[%s166 + $0xb0] sm:$0xf]
      %v219 = vld [vmem:[%s166 + $0xb4] sm:$0xf]
      %v220 = vld [vmem:[%s166 + $0xb8] sm:$0xf]
      %v221 = vld [vmem:[%s166 + $0xbc] sm:$0xf]
      %v222 = vld [vmem:[%s166 + $0xc0] sm:$0xf]
      %v223 = vld [vmem:[%s166 + $0xc4] sm:$0xf]
      %v224 = vld [vmem:[%s166 + $0xc8] sm:$0xf]
      %v225 = vld [vmem:[%s166 + $0xcc] sm:$0xf]
      %v226 = vld [vmem:[%s166 + $0xd0] sm:$0xf]
      %v227 = vld [vmem:[%s166 + $0xd4] sm:$0xf]
      %v228 = vld [vmem:[%s166 + $0xd8] sm:$0xf]
      %v229 = vld [vmem:[%s166 + $0xdc] sm:$0xf]
      %v230 = vld [vmem:[%s166 + $0xe0] sm:$0xf]
      %v231 = vld [vmem:[%s166 + $0xe4] sm:$0xf]
      %v232 = vld [vmem:[%s166 + $0xe8] sm:$0xf]
      %v233 = vld [vmem:[%s166 + $0xec] sm:$0xf]
      %v234 = vld [vmem:[%s166 + $0xf0] sm:$0xf]
      %v235 = vld [vmem:[%s166 + $0xf4] sm:$0xf]
      %v236 = vld [vmem:[%s166 + $0xf8] sm:$0xf]
      %v237 = vld [vmem:[%s166 + $0xfc] sm:$0xf]
      %v238 = vunpack.c.l.bf16 %v174
      %v239 = vunpack.c.l.bf16 %v175
      %v240 = vunpack.c.l.bf16 %v176
      %v241 = vunpack.c.l.bf16 %v177
      %v242 = vunpack.c.l.bf16 %v178
      %v243 = vunpack.c.l.bf16 %v179
      %v244 = vunpack.c.l.bf16 %v180
      %v245 = vunpack.c.l.bf16 %v181
      %v246 = vunpack.c.l.bf16 %v182
      %v247 = vunpack.c.l.bf16 %v183
      %v248 = vunpack.c.l.bf16 %v184
      %v249 = vunpack.c.l.bf16 %v185
      %v250 = vunpack.c.l.bf16 %v186
      %v251 = vunpack.c.l.bf16 %v187
      %v252 = vunpack.c.l.bf16 %v188
      %v253 = vunpack.c.l.bf16 %v189
      %v254 = vunpack.c.l.bf16 %v190
      %v255 = vunpack.c.l.bf16 %v191
      %v256 = vunpack.c.l.bf16 %v192
      %v257 = vunpack.c.l.bf16 %v193
      %v258 = vunpack.c.l.bf16 %v194
      %v259 = vunpack.c.l.bf16 %v195
      %v260 = vunpack.c.l.bf16 %v196
      %v261 = vunpack.c.l.bf16 %v197
      %v262 = vunpack.c.l.bf16 %v198
      %v263 = vunpack.c.l.bf16 %v199
      %v264 = vunpack.c.l.bf16 %v200
      %v265 = vunpack.c.l.bf16 %v201
      %v266 = vunpack.c.l.bf16 %v202
      %v267 = vunpack.c.l.bf16 %v203
      %v268 = vunpack.c.l.bf16 %v204
      %v269 = vunpack.c.l.bf16 %v205
      %v270 = vunpack.c.l.bf16 %v206
      %v271 = vunpack.c.l.bf16 %v207
      %v272 = vunpack.c.l.bf16 %v208
      %v273 = vunpack.c.l.bf16 %v209
      %v274 = vunpack.c.l.bf16 %v210
      %v275 = vunpack.c.l.bf16 %v211
      %v276 = vunpack.c.l.bf16 %v212
      %v277 = vunpack.c.l.bf16 %v213
      %v278 = vunpack.c.l.bf16 %v214
      %v279 = vunpack.c.l.bf16 %v215
      %v280 = vunpack.c.l.bf16 %v216
      %v281 = vunpack.c.l.bf16 %v217
      %v282 = vunpack.c.l.bf16 %v218
      %v283 = vunpack.c.l.bf16 %v219
      %v284 = vunpack.c.l.bf16 %v220
      %v285 = vunpack.c.l.bf16 %v221
      %v286 = vunpack.c.l.bf16 %v222
      %v287 = vunpack.c.l.bf16 %v223
      %v288 = vunpack.c.l.bf16 %v224
      %v289 = vunpack.c.l.bf16 %v225
      %v290 = vunpack.c.l.bf16 %v226
      %v291 = vunpack.c.l.bf16 %v227
      %v292 = vunpack.c.l.bf16 %v228
      %v293 = vunpack.c.l.bf16 %v229
      %v294 = vunpack.c.l.bf16 %v230
      %v295 = vunpack.c.l.bf16 %v231
      %v296 = vunpack.c.l.bf16 %v232
      %v297 = vunpack.c.l.bf16 %v233
      %v298 = vunpack.c.l.bf16 %v234
      %v299 = vunpack.c.l.bf16 %v235
      %v300 = vunpack.c.l.bf16 %v236
      %v301 = vunpack.c.l.bf16 %v237
      %v302 = vld [vmem:[%s1] sm:$0x1]
      %v304 = vlaneseq
      %v305 = vshrl.u32 %v304, 7
      %v306 = vsub.s32 0, %v305
      %v307 = vrot.slane %v302, %v306
      %v309 = vmul.f32 %v238, %v307
      %v310 = vmul.f32 %v239, %v307
      %v311 = vmul.f32 %v240, %v307
      %v312 = vmul.f32 %v241, %v307
      %v313 = vmul.f32 %v242, %v307
      %v314 = vmul.f32 %v243, %v307
      %v315 = vmul.f32 %v244, %v307
      %v316 = vmul.f32 %v245, %v307
      %v317 = vmul.f32 %v246, %v307
      %v318 = vmul.f32 %v247, %v307
      %v319 = vmul.f32 %v248, %v307
      %v320 = vmul.f32 %v249, %v307
      %v321 = vmul.f32 %v250, %v307
      %v322 = vmul.f32 %v251, %v307
      %v323 = vmul.f32 %v252, %v307
      %v324 = vmul.f32 %v253, %v307
      %v325 = vmul.f32 %v254, %v307
      %v326 = vmul.f32 %v255, %v307
      %v327 = vmul.f32 %v256, %v307
      %v328 = vmul.f32 %v257, %v307
      %v329 = vmul.f32 %v258, %v307
      %v330 = vmul.f32 %v259, %v307
      %v331 = vmul.f32 %v260, %v307
      %v332 = vmul.f32 %v261, %v307
      %v333 = vmul.f32 %v262, %v307
      %v334 = vmul.f32 %v263, %v307
      %v335 = vmul.f32 %v264, %v307
      %v336 = vmul.f32 %v265, %v307
      %v337 = vmul.f32 %v266, %v307
      %v338 = vmul.f32 %v267, %v307
      %v339 = vmul.f32 %v268, %v307
      %v340 = vmul.f32 %v269, %v307
      %v341 = vmul.f32 %v270, %v307
      %v342 = vmul.f32 %v271, %v307
      %v343 = vmul.f32 %v272, %v307
      %v344 = vmul.f32 %v273, %v307
      %v345 = vmul.f32 %v274, %v307
      %v346 = vmul.f32 %v275, %v307
      %v347 = vmul.f32 %v276, %v307
      %v348 = vmul.f32 %v277, %v307
      %v349 = vmul.f32 %v278, %v307
      %v350 = vmul.f32 %v279, %v307
      %v351 = vmul.f32 %v280, %v307
      %v352 = vmul.f32 %v281, %v307
      %v353 = vmul.f32 %v282, %v307
      %v354 = vmul.f32 %v283, %v307
      %v355 = vmul.f32 %v284, %v307
      %v356 = vmul.f32 %v285, %v307
      %v357 = vmul.f32 %v286, %v307
      %v358 = vmul.f32 %v287, %v307
      %v359 = vmul.f32 %v288, %v307
      %v360 = vmul.f32 %v289, %v307
      %v361 = vmul.f32 %v290, %v307
      %v362 = vmul.f32 %v291, %v307
      %v363 = vmul.f32 %v292, %v307
      %v364 = vmul.f32 %v293, %v307
      %v365 = vmul.f32 %v294, %v307
      %v366 = vmul.f32 %v295, %v307
      %v367 = vmul.f32 %v296, %v307
      %v368 = vmul.f32 %v297, %v307
      %v369 = vmul.f32 %v298, %v307
      %v370 = vmul.f32 %v299, %v307
      %v371 = vmul.f32 %v300, %v307
      %v372 = vmul.f32 %v301, %v307
      %v373 = vld [vmem:[%s2] sm:$0x1]
      %v375 = vlaneseq
      %v376 = vshrl.u32 %v375, 7
      %v377 = vsub.s32 0, %v376
      %v378 = vrot.slane %v373, %v377
      %v380 = vadd.f32 %v309, %v378
      %v381 = vadd.f32 %v310, %v378
      %v382 = vadd.f32 %v311, %v378
      %v383 = vadd.f32 %v312, %v378
      %v384 = vadd.f32 %v313, %v378
      %v385 = vadd.f32 %v314, %v378
      %v386 = vadd.f32 %v315, %v378
      %v387 = vadd.f32 %v316, %v378
      %v388 = vadd.f32 %v317, %v378
      %v389 = vadd.f32 %v318, %v378
      %v390 = vadd.f32 %v319, %v378
      %v391 = vadd.f32 %v320, %v378
      %v392 = vadd.f32 %v321, %v378
      %v393 = vadd.f32 %v322, %v378
      %v394 = vadd.f32 %v323, %v378
      %v395 = vadd.f32 %v324, %v378
      %v396 = vadd.f32 %v325, %v378
      %v397 = vadd.f32 %v326, %v378
      %v398 = vadd.f32 %v327, %v378
      %v399 = vadd.f32 %v328, %v378
      %v400 = vadd.f32 %v329, %v378
      %v401 = vadd.f32 %v330, %v378
      %v402 = vadd.f32 %v331, %v378
      %v403 = vadd.f32 %v332, %v378
      %v404 = vadd.f32 %v333, %v378
      %v405 = vadd.f32 %v334, %v378
      %v406 = vadd.f32 %v335, %v378
      %v407 = vadd.f32 %v336, %v378
      %v408 = vadd.f32 %v337, %v378
      %v409 = vadd.f32 %v338, %v378
      %v410 = vadd.f32 %v339, %v378
      %v411 = vadd.f32 %v340, %v378
      %v412 = vadd.f32 %v341, %v378
      %v413 = vadd.f32 %v342, %v378
      %v414 = vadd.f32 %v343, %v378
      %v415 = vadd.f32 %v344, %v378
      %v416 = vadd.f32 %v345, %v378
      %v417 = vadd.f32 %v346, %v378
      %v418 = vadd.f32 %v347, %v378
      %v419 = vadd.f32 %v348, %v378
      %v420 = vadd.f32 %v349, %v378
      %v421 = vadd.f32 %v350, %v378
      %v422 = vadd.f32 %v351, %v378
      %v423 = vadd.f32 %v352, %v378
      %v424 = vadd.f32 %v353, %v378
      %v425 = vadd.f32 %v354, %v378
      %v426 = vadd.f32 %v355, %v378
      %v427 = vadd.f32 %v356, %v378
      %v428 = vadd.f32 %v357, %v378
      %v429 = vadd.f32 %v358, %v378
      %v430 = vadd.f32 %v359, %v378
      %v431 = vadd.f32 %v360, %v378
      %v432 = vadd.f32 %v361, %v378
      %v433 = vadd.f32 %v362, %v378
      %v434 = vadd.f32 %v363, %v378
      %v435 = vadd.f32 %v364, %v378
      %v436 = vadd.f32 %v365, %v378
      %v437 = vadd.f32 %v366, %v378
      %v438 = vadd.f32 %v367, %v378
      %v439 = vadd.f32 %v368, %v378
      %v440 = vadd.f32 %v369, %v378
      %v441 = vadd.f32 %v370, %v378
      %v442 = vadd.f32 %v371, %v378
      %v443 = vadd.f32 %v372, %v378
      %vm444 = vcmp.ge.f32.partialorder %v380, 0.0
      %vm445 = vcmp.ge.f32.partialorder %v381, 0.0
      %vm446 = vcmp.ge.f32.partialorder %v382, 0.0
      %vm447 = vcmp.ge.f32.partialorder %v383, 0.0
      %vm448 = vcmp.ge.f32.partialorder %v384, 0.0
      %vm449 = vcmp.ge.f32.partialorder %v385, 0.0
      %vm450 = vcmp.ge.f32.partialorder %v386, 0.0
      %vm451 = vcmp.ge.f32.partialorder %v387, 0.0
      %vm452 = vcmp.ge.f32.partialorder %v388, 0.0
      %vm453 = vcmp.ge.f32.partialorder %v389, 0.0
      %vm454 = vcmp.ge.f32.partialorder %v390, 0.0
      %vm455 = vcmp.ge.f32.partialorder %v391, 0.0
      %vm456 = vcmp.ge.f32.partialorder %v392, 0.0
      %vm457 = vcmp.ge.f32.partialorder %v393, 0.0
      %vm458 = vcmp.ge.f32.partialorder %v394, 0.0
      %vm459 = vcmp.ge.f32.partialorder %v395, 0.0
      %vm460 = vcmp.ge.f32.partialorder %v396, 0.0
      %vm461 = vcmp.ge.f32.partialorder %v397, 0.0
      %vm462 = vcmp.ge.f32.partialorder %v398, 0.0
      %vm463 = vcmp.ge.f32.partialorder %v399, 0.0
      %vm464 = vcmp.ge.f32.partialorder %v400, 0.0
      %vm465 = vcmp.ge.f32.partialorder %v401, 0.0
      %vm466 = vcmp.ge.f32.partialorder %v402, 0.0
      %vm467 = vcmp.ge.f32.partialorder %v403, 0.0
      %vm468 = vcmp.ge.f32.partialorder %v404, 0.0
      %vm469 = vcmp.ge.f32.partialorder %v405, 0.0
      %vm470 = vcmp.ge.f32.partialorder %v406, 0.0
      %vm471 = vcmp.ge.f32.partialorder %v407, 0.0
      %vm472 = vcmp.ge.f32.partialorder %v408, 0.0
      %vm473 = vcmp.ge.f32.partialorder %v409, 0.0
      %vm474 = vcmp.ge.f32.partialorder %v410, 0.0
      %vm475 = vcmp.ge.f32.partialorder %v411, 0.0
      %vm476 = vcmp.ge.f32.partialorder %v412, 0.0
      %vm477 = vcmp.ge.f32.partialorder %v413, 0.0
      %vm478 = vcmp.ge.f32.partialorder %v414, 0.0
      %vm479 = vcmp.ge.f32.partialorder %v415, 0.0
      %vm480 = vcmp.ge.f32.partialorder %v416, 0.0
      %vm481 = vcmp.ge.f32.partialorder %v417, 0.0
      %vm482 = vcmp.ge.f32.partialorder %v418, 0.0
      %vm483 = vcmp.ge.f32.partialorder %v419, 0.0
      %vm484 = vcmp.ge.f32.partialorder %v420, 0.0
      %vm485 = vcmp.ge.f32.partialorder %v421, 0.0
      %vm486 = vcmp.ge.f32.partialorder %v422, 0.0
      %vm487 = vcmp.ge.f32.partialorder %v423, 0.0
      %vm488 = vcmp.ge.f32.partialorder %v424, 0.0
      %vm489 = vcmp.ge.f32.partialorder %v425, 0.0
      %vm490 = vcmp.ge.f32.partialorder %v426, 0.0
      %vm491 = vcmp.ge.f32.partialorder %v427, 0.0
      %vm492 = vcmp.ge.f32.partialorder %v428, 0.0
      %vm493 = vcmp.ge.f32.partialorder %v429, 0.0
      %vm494 = vcmp.ge.f32.partialorder %v430, 0.0
      %vm495 = vcmp.ge.f32.partialorder %v431, 0.0
      %vm496 = vcmp.ge.f32.partialorder %v432, 0.0
      %vm497 = vcmp.ge.f32.partialorder %v433, 0.0
      %vm498 = vcmp.ge.f32.partialorder %v434, 0.0
      %vm499 = vcmp.ge.f32.partialorder %v435, 0.0
      %vm500 = vcmp.ge.f32.partialorder %v436, 0.0
      %vm501 = vcmp.ge.f32.partialorder %v437, 0.0
      %vm502 = vcmp.ge.f32.partialorder %v438, 0.0
      %vm503 = vcmp.ge.f32.partialorder %v439, 0.0
      %vm504 = vcmp.ge.f32.partialorder %v440, 0.0
      %vm505 = vcmp.ge.f32.partialorder %v441, 0.0
      %vm506 = vcmp.ge.f32.partialorder %v442, 0.0
      %vm507 = vcmp.ge.f32.partialorder %v443, 0.0
      %v508 = vmul.f32 %v380, 0.2
      %v509 = vmul.f32 %v381, 0.2
      %v510 = vmul.f32 %v382, 0.2
      %v511 = vmul.f32 %v383, 0.2
      %v512 = vmul.f32 %v384, 0.2
      %v513 = vmul.f32 %v385, 0.2
      %v514 = vmul.f32 %v386, 0.2
      %v515 = vmul.f32 %v387, 0.2
      %v516 = vmul.f32 %v388, 0.2
      %v517 = vmul.f32 %v389, 0.2
      %v518 = vmul.f32 %v390, 0.2
      %v519 = vmul.f32 %v391, 0.2
      %v520 = vmul.f32 %v392, 0.2
      %v521 = vmul.f32 %v393, 0.2
      %v522 = vmul.f32 %v394, 0.2
      %v523 = vmul.f32 %v395, 0.2
      %v524 = vmul.f32 %v396, 0.2
      %v525 = vmul.f32 %v397, 0.2
      %v526 = vmul.f32 %v398, 0.2
      %v527 = vmul.f32 %v399, 0.2
      %v528 = vmul.f32 %v400, 0.2
      %v529 = vmul.f32 %v401, 0.2
      %v530 = vmul.f32 %v402, 0.2
      %v531 = vmul.f32 %v403, 0.2
      %v532 = vmul.f32 %v404, 0.2
      %v533 = vmul.f32 %v405, 0.2
      %v534 = vmul.f32 %v406, 0.2
      %v535 = vmul.f32 %v407, 0.2
      %v536 = vmul.f32 %v408, 0.2
      %v537 = vmul.f32 %v409, 0.2
      %v538 = vmul.f32 %v410, 0.2
      %v539 = vmul.f32 %v411, 0.2
      %v540 = vmul.f32 %v412, 0.2
      %v541 = vmul.f32 %v413, 0.2
      %v542 = vmul.f32 %v414, 0.2
      %v543 = vmul.f32 %v415, 0.2
      %v544 = vmul.f32 %v416, 0.2
      %v545 = vmul.f32 %v417, 0.2
      %v546 = vmul.f32 %v418, 0.2
      %v547 = vmul.f32 %v419, 0.2
      %v548 = vmul.f32 %v420, 0.2
      %v549 = vmul.f32 %v421, 0.2
      %v550 = vmul.f32 %v422, 0.2
      %v551 = vmul.f32 %v423, 0.2
      %v552 = vmul.f32 %v424, 0.2
      %v553 = vmul.f32 %v425, 0.2
      %v554 = vmul.f32 %v426, 0.2
      %v555 = vmul.f32 %v427, 0.2
      %v556 = vmul.f32 %v428, 0.2
      %v557 = vmul.f32 %v429, 0.2
      %v558 = vmul.f32 %v430, 0.2
      %v559 = vmul.f32 %v431, 0.2
      %v560 = vmul.f32 %v432, 0.2
      %v561 = vmul.f32 %v433, 0.2
      %v562 = vmul.f32 %v434, 0.2
      %v563 = vmul.f32 %v435, 0.2
      %v564 = vmul.f32 %v436, 0.2
      %v565 = vmul.f32 %v437, 0.2
      %v566 = vmul.f32 %v438, 0.2
      %v567 = vmul.f32 %v439, 0.2
      %v568 = vmul.f32 %v440, 0.2
      %v569 = vmul.f32 %v441, 0.2
      %v570 = vmul.f32 %v442, 0.2
      %v571 = vmul.f32 %v443, 0.2
      %v572 = vsel %vm444, %v380, %v508
      %v573 = vsel %vm445, %v381, %v509
      %v574 = vsel %vm446, %v382, %v510
      %v575 = vsel %vm447, %v383, %v511
      %v576 = vsel %vm448, %v384, %v512
      %v577 = vsel %vm449, %v385, %v513
      %v578 = vsel %vm450, %v386, %v514
      %v579 = vsel %vm451, %v387, %v515
      %v580 = vsel %vm452, %v388, %v516
      %v581 = vsel %vm453, %v389, %v517
      %v582 = vsel %vm454, %v390, %v518
      %v583 = vsel %vm455, %v391, %v519
      %v584 = vsel %vm456, %v392, %v520
      %v585 = vsel %vm457, %v393, %v521
      %v586 = vsel %vm458, %v394, %v522
      %v587 = vsel %vm459, %v395, %v523
      %v588 = vsel %vm460, %v396, %v524
      %v589 = vsel %vm461, %v397, %v525
      %v590 = vsel %vm462, %v398, %v526
      %v591 = vsel %vm463, %v399, %v527
      %v592 = vsel %vm464, %v400, %v528
      %v593 = vsel %vm465, %v401, %v529
      %v594 = vsel %vm466, %v402, %v530
      %v595 = vsel %vm467, %v403, %v531
      %v596 = vsel %vm468, %v404, %v532
      %v597 = vsel %vm469, %v405, %v533
      %v598 = vsel %vm470, %v406, %v534
      %v599 = vsel %vm471, %v407, %v535
      %v600 = vsel %vm472, %v408, %v536
      %v601 = vsel %vm473, %v409, %v537
      %v602 = vsel %vm474, %v410, %v538
      %v603 = vsel %vm475, %v411, %v539
      %v604 = vsel %vm476, %v412, %v540
      %v605 = vsel %vm477, %v413, %v541
      %v606 = vsel %vm478, %v414, %v542
      %v607 = vsel %vm479, %v415, %v543
      %v608 = vsel %vm480, %v416, %v544
      %v609 = vsel %vm481, %v417, %v545
      %v610 = vsel %vm482, %v418, %v546
      %v611 = vsel %vm483, %v419, %v547
      %v612 = vsel %vm484, %v420, %v548
      %v613 = vsel %vm485, %v421, %v549
      %v614 = vsel %vm486, %v422, %v550
      %v615 = vsel %vm487, %v423, %v551
      %v616 = vsel %vm488, %v424, %v552
      %v617 = vsel %vm489, %v425, %v553
      %v618 = vsel %vm490, %v426, %v554
      %v619 = vsel %vm491, %v427, %v555
      %v620 = vsel %vm492, %v428, %v556
      %v621 = vsel %vm493, %v429, %v557
      %v622 = vsel %vm494, %v430, %v558
      %v623 = vsel %vm495, %v431, %v559
      %v624 = vsel %vm496, %v432, %v560
      %v625 = vsel %vm497, %v433, %v561
      %v626 = vsel %vm498, %v434, %v562
      %v627 = vsel %vm499, %v435, %v563
      %v628 = vsel %vm500, %v436, %v564
      %v629 = vsel %vm501, %v437, %v565
      %v630 = vsel %vm502, %v438, %v566
      %v631 = vsel %vm503, %v439, %v567
      %v632 = vsel %vm504, %v440, %v568
      %v633 = vsel %vm505, %v441, %v569
      %v634 = vsel %vm506, %v442, %v570
      %v635 = vsel %vm507, %v443, %v571
      %v636 = vpack.c.bf16 %v573, %v572
      %v637 = vpack.c.bf16 %v575, %v574
      %v638 = vpack.c.bf16 %v577, %v576
      %v639 = vpack.c.bf16 %v579, %v578
      %v640 = vpack.c.bf16 %v581, %v580
      %v641 = vpack.c.bf16 %v583, %v582
      %v642 = vpack.c.bf16 %v585, %v584
      %v643 = vpack.c.bf16 %v587, %v586
      %v644 = vpack.c.bf16 %v589, %v588
      %v645 = vpack.c.bf16 %v591, %v590
      %v646 = vpack.c.bf16 %v593, %v592
      %v647 = vpack.c.bf16 %v595, %v594
      %v648 = vpack.c.bf16 %v597, %v596
      %v649 = vpack.c.bf16 %v599, %v598
      %v650 = vpack.c.bf16 %v601, %v600
      %v651 = vpack.c.bf16 %v603, %v602
      %v652 = vpack.c.bf16 %v605, %v604
      %v653 = vpack.c.bf16 %v607, %v606
      %v654 = vpack.c.bf16 %v609, %v608
      %v655 = vpack.c.bf16 %v611, %v610
      %v656 = vpack.c.bf16 %v613, %v612
      %v657 = vpack.c.bf16 %v615, %v614
      %v658 = vpack.c.bf16 %v617, %v616
      %v659 = vpack.c.bf16 %v619, %v618
      %v660 = vpack.c.bf16 %v621, %v620
      %v661 = vpack.c.bf16 %v623, %v622
      %v662 = vpack.c.bf16 %v625, %v624
      %v663 = vpack.c.bf16 %v627, %v626
      %v664 = vpack.c.bf16 %v629, %v628
      %v665 = vpack.c.bf16 %v631, %v630
      %v666 = vpack.c.bf16 %v633, %v632
      %v667 = vpack.c.bf16 %v635, %v634
      %v700 = vunpack.c.l.b16 %v636
      %v701 = vunpack.c.h.b16 %v636
      %v702 = vunpack.c.l.b16 %v637
      %v703 = vunpack.c.h.b16 %v637
      %v704 = vunpack.c.l.b16 %v638
      %v705 = vunpack.c.h.b16 %v638
      %v706 = vunpack.c.l.b16 %v639
      %v707 = vunpack.c.h.b16 %v639
      %v708 = vunpack.c.l.b16 %v640
      %v709 = vunpack.c.h.b16 %v640
      %v710 = vunpack.c.l.b16 %v641
      %v711 = vunpack.c.h.b16 %v641
      %v712 = vunpack.c.l.b16 %v642
      %v713 = vunpack.c.h.b16 %v642
      %v714 = vunpack.c.l.b16 %v643
      %v715 = vunpack.c.h.b16 %v643
      %v716 = vunpack.c.l.b16 %v644
      %v717 = vunpack.c.h.b16 %v644
      %v718 = vunpack.c.l.b16 %v645
      %v719 = vunpack.c.h.b16 %v645
      %v720 = vunpack.c.l.b16 %v646
      %v721 = vunpack.c.h.b16 %v646
      %v722 = vunpack.c.l.b16 %v647
      %v723 = vunpack.c.h.b16 %v647
      %v724 = vunpack.c.l.b16 %v648
      %v725 = vunpack.c.h.b16 %v648
      %v726 = vunpack.c.l.b16 %v649
      %v727 = vunpack.c.h.b16 %v649
      %v728 = vunpack.c.l.b16 %v650
      %v729 = vunpack.c.h.b16 %v650
      %v730 = vunpack.c.l.b16 %v651
      %v731 = vunpack.c.h.b16 %v651
      %v732 = vunpack.c.l.b16 %v652
      %v733 = vunpack.c.h.b16 %v652
      %v734 = vunpack.c.l.b16 %v653
      %v735 = vunpack.c.h.b16 %v653
      %v736 = vunpack.c.l.b16 %v654
      %v737 = vunpack.c.h.b16 %v654
      %v738 = vunpack.c.l.b16 %v655
      %v739 = vunpack.c.h.b16 %v655
      %v740 = vunpack.c.l.b16 %v656
      %v741 = vunpack.c.h.b16 %v656
      %v742 = vunpack.c.l.b16 %v657
      %v743 = vunpack.c.h.b16 %v657
      %v744 = vunpack.c.l.b16 %v658
      %v745 = vunpack.c.h.b16 %v658
      %v746 = vunpack.c.l.b16 %v659
      %v747 = vunpack.c.h.b16 %v659
      %v748 = vunpack.c.l.b16 %v660
      %v749 = vunpack.c.h.b16 %v660
      %v750 = vunpack.c.l.b16 %v661
      %v751 = vunpack.c.h.b16 %v661
      %v752 = vunpack.c.l.b16 %v662
      %v753 = vunpack.c.h.b16 %v662
      %v754 = vunpack.c.l.b16 %v663
      %v755 = vunpack.c.h.b16 %v663
      %v756 = vunpack.c.l.b16 %v664
      %v757 = vunpack.c.h.b16 %v664
      %v758 = vunpack.c.l.b16 %v665
      %v759 = vunpack.c.h.b16 %v665
      %v760 = vunpack.c.l.b16 %v666
      %v761 = vunpack.c.h.b16 %v666
      %v762 = vunpack.c.l.b16 %v667
      %v763 = vunpack.c.h.b16 %v667
      %v764 = vpack.c.b16 %v700, %v700
      %v765 = vpack.c.b16 %v701, %v701
      %v766 = vpack.c.b16 %v702, %v702
      %v767 = vpack.c.b16 %v703, %v703
      %v768 = vpack.c.b16 %v704, %v704
      %v769 = vpack.c.b16 %v705, %v705
      %v770 = vpack.c.b16 %v706, %v706
      %v771 = vpack.c.b16 %v707, %v707
      %v772 = vpack.c.b16 %v708, %v708
      %v773 = vpack.c.b16 %v709, %v709
      %v774 = vpack.c.b16 %v710, %v710
      %v775 = vpack.c.b16 %v711, %v711
      %v776 = vpack.c.b16 %v712, %v712
      %v777 = vpack.c.b16 %v713, %v713
      %v778 = vpack.c.b16 %v714, %v714
      %v779 = vpack.c.b16 %v715, %v715
      %v780 = vpack.c.b16 %v716, %v716
      %v781 = vpack.c.b16 %v717, %v717
      %v782 = vpack.c.b16 %v718, %v718
      %v783 = vpack.c.b16 %v719, %v719
      %v784 = vpack.c.b16 %v720, %v720
      %v785 = vpack.c.b16 %v721, %v721
      %v786 = vpack.c.b16 %v722, %v722
      %v787 = vpack.c.b16 %v723, %v723
      %v788 = vpack.c.b16 %v724, %v724
      %v789 = vpack.c.b16 %v725, %v725
      %v790 = vpack.c.b16 %v726, %v726
      %v791 = vpack.c.b16 %v727, %v727
      %v792 = vpack.c.b16 %v728, %v728
      %v793 = vpack.c.b16 %v729, %v729
      %v794 = vpack.c.b16 %v730, %v730
      %v795 = vpack.c.b16 %v731, %v731
      %v796 = vpack.c.b16 %v732, %v732
      %v797 = vpack.c.b16 %v733, %v733
      %v798 = vpack.c.b16 %v734, %v734
      %v799 = vpack.c.b16 %v735, %v735
      %v800 = vpack.c.b16 %v736, %v736
      %v801 = vpack.c.b16 %v737, %v737
      %v802 = vpack.c.b16 %v738, %v738
      %v803 = vpack.c.b16 %v739, %v739
      %v804 = vpack.c.b16 %v740, %v740
      %v805 = vpack.c.b16 %v741, %v741
      %v806 = vpack.c.b16 %v742, %v742
      %v807 = vpack.c.b16 %v743, %v743
      %v808 = vpack.c.b16 %v744, %v744
      %v809 = vpack.c.b16 %v745, %v745
      %v810 = vpack.c.b16 %v746, %v746
      %v811 = vpack.c.b16 %v747, %v747
      %v812 = vpack.c.b16 %v748, %v748
      %v813 = vpack.c.b16 %v749, %v749
      %v814 = vpack.c.b16 %v750, %v750
      %v815 = vpack.c.b16 %v751, %v751
      %v816 = vpack.c.b16 %v752, %v752
      %v817 = vpack.c.b16 %v753, %v753
      %v818 = vpack.c.b16 %v754, %v754
      %v819 = vpack.c.b16 %v755, %v755
      %v820 = vpack.c.b16 %v756, %v756
      %v821 = vpack.c.b16 %v757, %v757
      %v822 = vpack.c.b16 %v758, %v758
      %v823 = vpack.c.b16 %v759, %v759
      %v824 = vpack.c.b16 %v760, %v760
      %v825 = vpack.c.b16 %v761, %v761
      %v826 = vpack.c.b16 %v762, %v762
      %v827 = vpack.c.b16 %v763, %v763
      %vm892 = vcmask 60416
      %893 = vst.msk [vmem:[%s172] sm:$0xf] %vm892, %v764
      %894 = vst.msk [vmem:[%s172 + $0x4] sm:$0xf] %vm892, %v765
      %895 = vst.msk [vmem:[%s172 + $0x8] sm:$0xf] %vm892, %v766
      %896 = vst.msk [vmem:[%s172 + $0xc] sm:$0xf] %vm892, %v767
      %897 = vst.msk [vmem:[%s172 + $0x10] sm:$0xf] %vm892, %v768
      %898 = vst.msk [vmem:[%s172 + $0x14] sm:$0xf] %vm892, %v769
      %899 = vst.msk [vmem:[%s172 + $0x18] sm:$0xf] %vm892, %v770
      %900 = vst.msk [vmem:[%s172 + $0x1c] sm:$0xf] %vm892, %v771
      %901 = vst.msk [vmem:[%s172 + $0x20] sm:$0xf] %vm892, %v772
      %902 = vst.msk [vmem:[%s172 + $0x24] sm:$0xf] %vm892, %v773
      %903 = vst.msk [vmem:[%s172 + $0x28] sm:$0xf] %vm892, %v774
      %904 = vst.msk [vmem:[%s172 + $0x2c] sm:$0xf] %vm892, %v775
      %905 = vst.msk [vmem:[%s172 + $0x30] sm:$0xf] %vm892, %v776
      %906 = vst.msk [vmem:[%s172 + $0x34] sm:$0xf] %vm892, %v777
      %907 = vst.msk [vmem:[%s172 + $0x38] sm:$0xf] %vm892, %v778
      %908 = vst.msk [vmem:[%s172 + $0x3c] sm:$0xf] %vm892, %v779
      %909 = vst.msk [vmem:[%s172 + $0x40] sm:$0xf] %vm892, %v780
      %910 = vst.msk [vmem:[%s172 + $0x44] sm:$0xf] %vm892, %v781
      %911 = vst.msk [vmem:[%s172 + $0x48] sm:$0xf] %vm892, %v782
      %912 = vst.msk [vmem:[%s172 + $0x4c] sm:$0xf] %vm892, %v783
      %913 = vst.msk [vmem:[%s172 + $0x50] sm:$0xf] %vm892, %v784
      %914 = vst.msk [vmem:[%s172 + $0x54] sm:$0xf] %vm892, %v785
      %915 = vst.msk [vmem:[%s172 + $0x58] sm:$0xf] %vm892, %v786
      %916 = vst.msk [vmem:[%s172 + $0x5c] sm:$0xf] %vm892, %v787
      %917 = vst.msk [vmem:[%s172 + $0x60] sm:$0xf] %vm892, %v788
      %918 = vst.msk [vmem:[%s172 + $0x64] sm:$0xf] %vm892, %v789
      %919 = vst.msk [vmem:[%s172 + $0x68] sm:$0xf] %vm892, %v790
      %920 = vst.msk [vmem:[%s172 + $0x6c] sm:$0xf] %vm892, %v791
      %921 = vst.msk [vmem:[%s172 + $0x70] sm:$0xf] %vm892, %v792
      %922 = vst.msk [vmem:[%s172 + $0x74] sm:$0xf] %vm892, %v793
      %923 = vst.msk [vmem:[%s172 + $0x78] sm:$0xf] %vm892, %v794
      %924 = vst.msk [vmem:[%s172 + $0x7c] sm:$0xf] %vm892, %v795
      %925 = vst.msk [vmem:[%s172 + $0x80] sm:$0xf] %vm892, %v796
      %926 = vst.msk [vmem:[%s172 + $0x84] sm:$0xf] %vm892, %v797
      %927 = vst.msk [vmem:[%s172 + $0x88] sm:$0xf] %vm892, %v798
      %928 = vst.msk [vmem:[%s172 + $0x8c] sm:$0xf] %vm892, %v799
      %929 = vst.msk [vmem:[%s172 + $0x90] sm:$0xf] %vm892, %v800
      %930 = vst.msk [vmem:[%s172 + $0x94] sm:$0xf] %vm892, %v801
      %931 = vst.msk [vmem:[%s172 + $0x98] sm:$0xf] %vm892, %v802
      %932 = vst.msk [vmem:[%s172 + $0x9c] sm:$0xf] %vm892, %v803
      %933 = vst.msk [vmem:[%s172 + $0xa0] sm:$0xf] %vm892, %v804
      %934 = vst.msk [vmem:[%s172 + $0xa4] sm:$0xf] %vm892, %v805
      %935 = vst.msk [vmem:[%s172 + $0xa8] sm:$0xf] %vm892, %v806
      %936 = vst.msk [vmem:[%s172 + $0xac] sm:$0xf] %vm892, %v807
      %937 = vst.msk [vmem:[%s172 + $0xb0] sm:$0xf] %vm892, %v808
      %938 = vst.msk [vmem:[%s172 + $0xb4] sm:$0xf] %vm892, %v809
      %939 = vst.msk [vmem:[%s172 + $0xb8] sm:$0xf] %vm892, %v810
      %940 = vst.msk [vmem:[%s172 + $0xbc] sm:$0xf] %vm892, %v811
      %941 = vst.msk [vmem:[%s172 + $0xc0] sm:$0xf] %vm892, %v812
      %942 = vst.msk [vmem:[%s172 + $0xc4] sm:$0xf] %vm892, %v813
      %943 = vst.msk [vmem:[%s172 + $0xc8] sm:$0xf] %vm892, %v814
      %944 = vst.msk [vmem:[%s172 + $0xcc] sm:$0xf] %vm892, %v815
      %945 = vst.msk [vmem:[%s172 + $0xd0] sm:$0xf] %vm892, %v816
      %946 = vst.msk [vmem:[%s172 + $0xd4] sm:$0xf] %vm892, %v817
      %947 = vst.msk [vmem:[%s172 + $0xd8] sm:$0xf] %vm892, %v818
      %948 = vst.msk [vmem:[%s172 + $0xdc] sm:$0xf] %vm892, %v819
      %949 = vst.msk [vmem:[%s172 + $0xe0] sm:$0xf] %vm892, %v820
      %950 = vst.msk [vmem:[%s172 + $0xe4] sm:$0xf] %vm892, %v821
      %951 = vst.msk [vmem:[%s172 + $0xe8] sm:$0xf] %vm892, %v822
      %952 = vst.msk [vmem:[%s172 + $0xec] sm:$0xf] %vm892, %v823
      %953 = vst.msk [vmem:[%s172 + $0xf0] sm:$0xf] %vm892, %v824
      %954 = vst.msk [vmem:[%s172 + $0xf4] sm:$0xf] %vm892, %v825
      %955 = vst.msk [vmem:[%s172 + $0xf8] sm:$0xf] %vm892, %v826
      %956 = vst.msk [vmem:[%s172 + $0xfc] sm:$0xf] %vm892, %v827
      %s957 = smul.u32 64, %s14
      %p958 = scmp.lt.s32.totalorder %s957, 127
      %s959 = scalar_select %p958, %s957, 127
      %s960 = smul.addr %s959, 4
      %s961 = scalar_lea.vmem %s3, %s960
      // Predicated region
      $region33: #{_lambda_.10} parent=31 // pred_check
        %p962 = pneg %p100
      $region34: #{_lambda_.10} parent=31 // pred_check_branch
        %964 = sbr.rel (%p962) target = $region36
      $region35: #{_lambda_.10} parent=31 // pred_region
        %s965 = smul.u32 64, %s14
      $region36: #{_lambda_.10} parent=31 // pred_fallthru
        _
    $region32: #{_lambda_.10} parent=5 // pred_fallthru
      _
    %p966 = scmp.le.s32.totalorder 2, %s9
    // Predicated region
    $region37: #{_lambda_.10} parent=5 // pred_check
      %p967 = pneg %p966
    $region38: #{_lambda_.10} parent=5 // pred_check_branch
      %969 = sbr.rel (%p967) target = $region40
    $region39: #{_lambda_.10} parent=5 // pred_region
      %s970 = ssub.s32 %s9, 2
      // Predicated region
      $region41: #{_lambda_.10} parent=39 // pred_check
        %p971 = pneg %p106
      $region42: #{_lambda_.10} parent=39 // pred_check_branch
        %973 = sbr.rel (%p971) target = $region44
      $region43: #{_lambda_.10} parent=39 // pred_region
        %s974 = smul.u32 64, %s15
        %p975 = scmp.lt.s32.totalorder %s974, 127
        %s976 = scalar_select %p975, %s974, 127
        %s977 = smul.addr %s976, 4
        %s978 = scalar_lea.vmem %s3, %s977
      $region44: #{_lambda_.10} parent=39 // pred_fallthru
        _
    $region40: #{_lambda_.10} parent=5 // pred_fallthru
      _
  $region6: #{_lambda_.10} parent=0 // loop_footer
    %s13 = sadd.s32 1, %s9
  $region7: #{_lambda_.10} parent=0 // loop_footer_branch
    %8 = sbr.rel target = $region3
  $region8: #{_lambda_.10} parent=0 // loop_exit
    _

// kernel: _lambda_.11
$region0: #{_lambda_.11}
  #allocation0 [shape = 'u32[]', space=smem, size = 0x4, offset = 0x4, fixed_abs, tag = 'smem constant byte address 0x4 - core index']
  #allocation1 [shape = 'u32[144,128]{1,0:T(1,128)}', space=vmem, size = 0x12000, scoped, tag = 'internal scratch']
  #allocation2 [shape = 'f32[128,16]{1,0:T(8,128)}', space=vmem, size = 0x10000, scoped, tag = 'scratch operand']
  %s0 = inlined_call_operand.vmem [shape: bf16[128,512], index: 0, kind: input, shape index: {}]
  %s1 = inlined_call_operand.vmem [shape: bf16[512,16], index: 1, kind: input, shape index: {}]
  %s2 = inlined_call_operand.vmem [shape: f32[1,16], index: 2, kind: input, shape index: {}]
  %s3 = inlined_call_operand.vmem [shape: bf16[128,16], index: 3, kind: output, shape index: {0}]
  %s4 = inlined_call_operand.vmem [shape: f32[1,2,16], index: 4, kind: output, shape index: {1}]
  %5 = xla_tuple %s3, %s4
  %s6 = sld [smem:[#allocation0]]
  $region38: #{_lambda_.11} parent=0
    _
  %s8 = ssub.s32 1, %s6
  %s9 = scalar_select 0, %s8, %s6
  // Predicated region
  $region2: #{_lambda_.11} parent=0 // pred_check
    _
  $region3: #{_lambda_.11} parent=0 // pred_check_branch
    %11 = sbr.rel (0) target = $region5
  $region4: #{_lambda_.11} parent=0 // pred_region
    _
  $region5: #{_lambda_.11} parent=0 // pred_fallthru
    _
  // Predicated region
  $region6: #{_lambda_.11} parent=0 // pred_check
    _
  $region7: #{_lambda_.11} parent=0 // pred_check_branch
    %13 = sbr.rel (0) target = $region9
  $region8: #{_lambda_.11} parent=0 // pred_region
    _
  $region9: #{_lambda_.11} parent=0 // pred_fallthru
    _
  // Predicated region
  $region10: #{_lambda_.11} parent=0 // pred_check
    _
  $region11: #{_lambda_.11} parent=0 // pred_check_branch
    %15 = sbr.rel (0) target = $region13
  $region12: #{_lambda_.11} parent=0 // pred_region
    _
  $region13: #{_lambda_.11} parent=0 // pred_fallthru
    _
  %p17 = scmp.eq.s32.totalorder 0, 0
  // Predicated region
  $region14: #{_lambda_.11} parent=0 // pred_check
    %p18 = pneg %p17
  $region15: #{_lambda_.11} parent=0 // pred_check_branch
    %20 = sbr.rel (%p18) target = $region17
  $region16: #{_lambda_.11} parent=0 // pred_region
    %vm21 = vcmask 130048
    %22 = vst.msk [vmem:[#allocation2] sm:$0xff] %vm21, 0.0
    %23 = vst.msk [vmem:[#allocation2 + $0x8] sm:$0xff] %vm21, 0.0
    %24 = vst.msk [vmem:[#allocation2 + $0x10] sm:$0xff] %vm21, 0.0
    %25 = vst.msk [vmem:[#allocation2 + $0x18] sm:$0xff] %vm21, 0.0
    %26 = vst.msk [vmem:[#allocation2 + $0x20] sm:$0xff] %vm21, 0.0
    %27 = vst.msk [vmem:[#allocation2 + $0x28] sm:$0xff] %vm21, 0.0
    %28 = vst.msk [vmem:[#allocation2 + $0x30] sm:$0xff] %vm21, 0.0
    %29 = vst.msk [vmem:[#allocation2 + $0x38] sm:$0xff] %vm21, 0.0
    %30 = vst.msk [vmem:[#allocation2 + $0x40] sm:$0xff] %vm21, 0.0
    %31 = vst.msk [vmem:[#allocation2 + $0x48] sm:$0xff] %vm21, 0.0
    %32 = vst.msk [vmem:[#allocation2 + $0x50] sm:$0xff] %vm21, 0.0
    %33 = vst.msk [vmem:[#allocation2 + $0x58] sm:$0xff] %vm21, 0.0
    %34 = vst.msk [vmem:[#allocation2 + $0x60] sm:$0xff] %vm21, 0.0
    %35 = vst.msk [vmem:[#allocation2 + $0x68] sm:$0xff] %vm21, 0.0
    %36 = vst.msk [vmem:[#allocation2 + $0x70] sm:$0xff] %vm21, 0.0
    %37 = vst.msk [vmem:[#allocation2 + $0x78] sm:$0xff] %vm21, 0.0
  $region17: #{_lambda_.11} parent=0 // pred_fallthru
    _
  %s38 = smul.u32 0, 512
  %s39 = sshra.s32 %s38, 3
  %s40 = sand.u32 %s38, 7
  %s41 = smul.addr %s39, 4
  %s42 = scalar_lea.vmem %s1, %s41
  %v43 = vld [vmem:[%s42] sm:$0xf]
  %v44 = vld [vmem:[%s42 + $0x4] sm:$0xf]
  %v45 = vld [vmem:[%s42 + $0x8] sm:$0xf]
  %v46 = vld [vmem:[%s42 + $0xc] sm:$0xf]
  %v47 = vld [vmem:[%s42 + $0x10] sm:$0xf]
  %v48 = vld [vmem:[%s42 + $0x14] sm:$0xf]
  %v49 = vld [vmem:[%s42 + $0x18] sm:$0xf]
  %v50 = vld [vmem:[%s42 + $0x1c] sm:$0xf]
  %v51 = vld [vmem:[%s42 + $0x20] sm:$0xf]
  %v52 = vld [vmem:[%s42 + $0x24] sm:$0xf]
  %v53 = vld [vmem:[%s42 + $0x28] sm:$0xf]
  %v54 = vld [vmem:[%s42 + $0x2c] sm:$0xf]
  %v55 = vld [vmem:[%s42 + $0x30] sm:$0xf]
  %v56 = vld [vmem:[%s42 + $0x34] sm:$0xf]
  %v57 = vld [vmem:[%s42 + $0x38] sm:$0xf]
  %v58 = vld [vmem:[%s42 + $0x3c] sm:$0xf]
  %v59 = vld [vmem:[%s42 + $0x40] sm:$0xf]
  %v60 = vld [vmem:[%s42 + $0x44] sm:$0xf]
  %v61 = vld [vmem:[%s42 + $0x48] sm:$0xf]
  %v62 = vld [vmem:[%s42 + $0x4c] sm:$0xf]
  %v63 = vld [vmem:[%s42 + $0x50] sm:$0xf]
  %v64 = vld [vmem:[%s42 + $0x54] sm:$0xf]
  %v65 = vld [vmem:[%s42 + $0x58] sm:$0xf]
  %v66 = vld [vmem:[%s42 + $0x5c] sm:$0xf]
  %v67 = vld [vmem:[%s42 + $0x60] sm:$0xf]
  %v68 = vld [vmem:[%s42 + $0x64] sm:$0xf]
  %v69 = vld [vmem:[%s42 + $0x68] sm:$0xf]
  %v70 = vld [vmem:[%s42 + $0x6c] sm:$0xf]
  %v71 = vld [vmem:[%s42 + $0x70] sm:$0xf]
  %v72 = vld [vmem:[%s42 + $0x74] sm:$0xf]
  %v73 = vld [vmem:[%s42 + $0x78] sm:$0xf]
  %v74 = vld [vmem:[%s42 + $0x7c] sm:$0xf]
  %v75 = vld [vmem:[%s42 + $0x80] sm:$0xf]
  %v76 = vld [vmem:[%s42 + $0x84] sm:$0xf]
  %v77 = vld [vmem:[%s42 + $0x88] sm:$0xf]
  %v78 = vld [vmem:[%s42 + $0x8c] sm:$0xf]
  %v79 = vld [vmem:[%s42 + $0x90] sm:$0xf]
  %v80 = vld [vmem:[%s42 + $0x94] sm:$0xf]
  %v81 = vld [vmem:[%s42 + $0x98] sm:$0xf]
  %v82 = vld [vmem:[%s42 + $0x9c] sm:$0xf]
  %v83 = vld [vmem:[%s42 + $0xa0] sm:$0xf]
  %v84 = vld [vmem:[%s42 + $0xa4] sm:$0xf]
  %v85 = vld [vmem:[%s42 + $0xa8] sm:$0xf]
  %v86 = vld [vmem:[%s42 + $0xac] sm:$0xf]
  %v87 = vld [vmem:[%s42 + $0xb0] sm:$0xf]
  %v88 = vld [vmem:[%s42 + $0xb4] sm:$0xf]
  %v89 = vld [vmem:[%s42 + $0xb8] sm:$0xf]
  %v90 = vld [vmem:[%s42 + $0xbc] sm:$0xf]
  %v91 = vld [vmem:[%s42 + $0xc0] sm:$0xf]
  %v92 = vld [vmem:[%s42 + $0xc4] sm:$0xf]
  %v93 = vld [vmem:[%s42 + $0xc8] sm:$0xf]
  %v94 = vld [vmem:[%s42 + $0xcc] sm:$0xf]
  %v95 = vld [vmem:[%s42 + $0xd0] sm:$0xf]
  %v96 = vld [vmem:[%s42 + $0xd4] sm:$0xf]
  %v97 = vld [vmem:[%s42 + $0xd8] sm:$0xf]
  %v98 = vld [vmem:[%s42 + $0xdc] sm:$0xf]
  %v99 = vld [vmem:[%s42 + $0xe0] sm:$0xf]
  %v100 = vld [vmem:[%s42 + $0xe4] sm:$0xf]
  %v101 = vld [vmem:[%s42 + $0xe8] sm:$0xf]
  %v102 = vld [vmem:[%s42 + $0xec] sm:$0xf]
  %v103 = vld [vmem:[%s42 + $0xf0] sm:$0xf]
  %v104 = vld [vmem:[%s42 + $0xf4] sm:$0xf]
  %v105 = vld [vmem:[%s42 + $0xf8] sm:$0xf]
  %v106 = vld [vmem:[%s42 + $0xfc] sm:$0xf]
  %v107 = vld [vmem:[#allocation2] sm:$0xff]
  %v108 = vld [vmem:[#allocation2 + $0x8] sm:$0xff]
  %v109 = vld [vmem:[#allocation2 + $0x10] sm:$0xff]
  %v110 = vld [vmem:[#allocation2 + $0x18] sm:$0xff]
  %v111 = vld [vmem:[#allocation2 + $0x20] sm:$0xff]
  %v112 = vld [vmem:[#allocation2 + $0x28] sm:$0xff]
  %v113 = vld [vmem:[#allocation2 + $0x30] sm:$0xff]
  %v114 = vld [vmem:[#allocation2 + $0x38] sm:$0xff]
  %v115 = vld [vmem:[#allocation2 + $0x40] sm:$0xff]
  %v116 = vld [vmem:[#allocation2 + $0x48] sm:$0xff]
  %v117 = vld [vmem:[#allocation2 + $0x50] sm:$0xff]
  %v118 = vld [vmem:[#allocation2 + $0x58] sm:$0xff]
  %v119 = vld [vmem:[#allocation2 + $0x60] sm:$0xff]
  %v120 = vld [vmem:[#allocation2 + $0x68] sm:$0xff]
  %v121 = vld [vmem:[#allocation2 + $0x70] sm:$0xff]
  %v122 = vld [vmem:[#allocation2 + $0x78] sm:$0xff]
  %v123 = vld [vmem:[%s0] sm:$0xff]
  %v124 = vld [vmem:[%s0 + $0x8] sm:$0xff]
  %v125 = vld [vmem:[%s0 + $0x10] sm:$0xff]
  %v126 = vld [vmem:[%s0 + $0x18] sm:$0xff]
  %v127 = vld [vmem:[%s0 + $0x20] sm:$0xff]
  %v128 = vld [vmem:[%s0 + $0x28] sm:$0xff]
  %v129 = vld [vmem:[%s0 + $0x30] sm:$0xff]
  %v130 = vld [vmem:[%s0 + $0x38] sm:$0xff]
  %v131 = vld [vmem:[%s0 + $0x40] sm:$0xff]
  %v132 = vld [vmem:[%s0 + $0x48] sm:$0xff]
  %v133 = vld [vmem:[%s0 + $0x50] sm:$0xff]
  %v134 = vld [vmem:[%s0 + $0x58] sm:$0xff]
  %v135 = vld [vmem:[%s0 + $0x60] sm:$0xff]
  %v136 = vld [vmem:[%s0 + $0x68] sm:$0xff]
  %v137 = vld [vmem:[%s0 + $0x70] sm:$0xff]
  %v138 = vld [vmem:[%s0 + $0x78] sm:$0xff]
  %v139 = vld [vmem:[%s0 + $0x80] sm:$0xff]
  %v140 = vld [vmem:[%s0 + $0x88] sm:$0xff]
  %v141 = vld [vmem:[%s0 + $0x90] sm:$0xff]
  %v142 = vld [vmem:[%s0 + $0x98] sm:$0xff]
  %v143 = vld [vmem:[%s0 + $0xa0] sm:$0xff]
  %v144 = vld [vmem:[%s0 + $0xa8] sm:$0xff]
  %v145 = vld [vmem:[%s0 + $0xb0] sm:$0xff]
  %v146 = vld [vmem:[%s0 + $0xb8] sm:$0xff]
  %v147 = vld [vmem:[%s0 + $0xc0] sm:$0xff]
  %v148 = vld [vmem:[%s0 + $0xc8] sm:$0xff]
  %v149 = vld [vmem:[%s0 + $0xd0] sm:$0xff]
  %v150 = vld [vmem:[%s0 + $0xd8] sm:$0xff]
  %v151 = vld [vmem:[%s0 + $0xe0] sm:$0xff]
  %v152 = vld [vmem:[%s0 + $0xe8] sm:$0xff]
  %v153 = vld [vmem:[%s0 + $0xf0] sm:$0xff]
  %v154 = vld [vmem:[%s0 + $0xf8] sm:$0xff]
  %v187 = vunpack.c.l.b16 %v123
  %v188 = vunpack.c.h.b16 %v123
  %v189 = vunpack.c.l.b16 %v124
  %v190 = vunpack.c.h.b16 %v124
  %v191 = vunpack.c.l.b16 %v125
  %v192 = vunpack.c.h.b16 %v125
  %v193 = vunpack.c.l.b16 %v126
  %v194 = vunpack.c.h.b16 %v126
  %v195 = vunpack.c.l.b16 %v127
  %v196 = vunpack.c.h.b16 %v127
  %v197 = vunpack.c.l.b16 %v128
  %v198 = vunpack.c.h.b16 %v128
  %v199 = vunpack.c.l.b16 %v129
  %v200 = vunpack.c.h.b16 %v129
  %v201 = vunpack.c.l.b16 %v130
  %v202 = vunpack.c.h.b16 %v130
  %v203 = vunpack.c.l.b16 %v131
  %v204 = vunpack.c.h.b16 %v131
  %v205 = vunpack.c.l.b16 %v132
  %v206 = vunpack.c.h.b16 %v132
  %v207 = vunpack.c.l.b16 %v133
  %v208 = vunpack.c.h.b16 %v133
  %v209 = vunpack.c.l.b16 %v134
  %v210 = vunpack.c.h.b16 %v134
  %v211 = vunpack.c.l.b16 %v135
  %v212 = vunpack.c.h.b16 %v135
  %v213 = vunpack.c.l.b16 %v136
  %v214 = vunpack.c.h.b16 %v136
  %v215 = vunpack.c.l.b16 %v137
  %v216 = vunpack.c.h.b16 %v137
  %v217 = vunpack.c.l.b16 %v138
  %v218 = vunpack.c.h.b16 %v138
  %v219 = vunpack.c.l.b16 %v139
  %v220 = vunpack.c.h.b16 %v139
  %v221 = vunpack.c.l.b16 %v140
  %v222 = vunpack.c.h.b16 %v140
  %v223 = vunpack.c.l.b16 %v141
  %v224 = vunpack.c.h.b16 %v141
  %v225 = vunpack.c.l.b16 %v142
  %v226 = vunpack.c.h.b16 %v142
  %v227 = vunpack.c.l.b16 %v143
  %v228 = vunpack.c.h.b16 %v143
  %v229 = vunpack.c.l.b16 %v144
  %v230 = vunpack.c.h.b16 %v144
  %v231 = vunpack.c.l.b16 %v145
  %v232 = vunpack.c.h.b16 %v145
  %v233 = vunpack.c.l.b16 %v146
  %v234 = vunpack.c.h.b16 %v146
  %v235 = vunpack.c.l.b16 %v147
  %v236 = vunpack.c.h.b16 %v147
  %v237 = vunpack.c.l.b16 %v148
  %v238 = vunpack.c.h.b16 %v148
  %v239 = vunpack.c.l.b16 %v149
  %v240 = vunpack.c.h.b16 %v149
  %v241 = vunpack.c.l.b16 %v150
  %v242 = vunpack.c.h.b16 %v150
  %v243 = vunpack.c.l.b16 %v151
  %v244 = vunpack.c.h.b16 %v151
  %v245 = vunpack.c.l.b16 %v152
  %v246 = vunpack.c.h.b16 %v152
  %v247 = vunpack.c.l.b16 %v153
  %v248 = vunpack.c.h.b16 %v153
  %v249 = vunpack.c.l.b16 %v154
  %v250 = vunpack.c.h.b16 %v154
  %v251 = vpack.c.b16 %v191, %v187
  %v252 = vpack.c.b16 %v192, %v188
  %v253 = vpack.c.b16 %v193, %v189
  %v254 = vpack.c.b16 %v194, %v190
  %v255 = vpack.c.b16 %v199, %v195
  %v256 = vpack.c.b16 %v200, %v196
  %v257 = vpack.c.b16 %v201, %v197
  %v258 = vpack.c.b16 %v202, %v198
  %v259 = vpack.c.b16 %v207, %v203
  %v260 = vpack.c.b16 %v208, %v204
  %v261 = vpack.c.b16 %v209, %v205
  %v262 = vpack.c.b16 %v210, %v206
  %v263 = vpack.c.b16 %v215, %v211
  %v264 = vpack.c.b16 %v216, %v212
  %v265 = vpack.c.b16 %v217, %v213
  %v266 = vpack.c.b16 %v218, %v214
  %v267 = vpack.c.b16 %v223, %v219
  %v268 = vpack.c.b16 %v224, %v220
  %v269 = vpack.c.b16 %v225, %v221
  %v270 = vpack.c.b16 %v226, %v222
  %v271 = vpack.c.b16 %v231, %v227
  %v272 = vpack.c.b16 %v232, %v228
  %v273 = vpack.c.b16 %v233, %v229
  %v274 = vpack.c.b16 %v234, %v230
  %v275 = vpack.c.b16 %v239, %v235
  %v276 = vpack.c.b16 %v240, %v236
  %v277 = vpack.c.b16 %v241, %v237
  %v278 = vpack.c.b16 %v242, %v238
  %v279 = vpack.c.b16 %v247, %v243
  %v280 = vpack.c.b16 %v248, %v244
  %v281 = vpack.c.b16 %v249, %v245
  %v282 = vpack.c.b16 %v250, %v246
  %v379 = vunpack.c.l.b16 %v43
  %v380 = vunpack.c.l.b16 %v44
  %v381 = vunpack.c.l.b16 %v45
  %v382 = vunpack.c.l.b16 %v46
  %v383 = vunpack.c.l.b16 %v47
  %v384 = vunpack.c.l.b16 %v48
  %v385 = vunpack.c.l.b16 %v49
  %v386 = vunpack.c.l.b16 %v50
  %v387 = vunpack.c.l.b16 %v51
  %v388 = vunpack.c.l.b16 %v52
  %v389 = vunpack.c.l.b16 %v53
  %v390 = vunpack.c.l.b16 %v54
  %v391 = vunpack.c.l.b16 %v55
  %v392 = vunpack.c.l.b16 %v56
  %v393 = vunpack.c.l.b16 %v57
  %v394 = vunpack.c.l.b16 %v58
  %v395 = vunpack.c.l.b16 %v59
  %v396 = vunpack.c.l.b16 %v60
  %v397 = vunpack.c.l.b16 %v61
  %v398 = vunpack.c.l.b16 %v62
  %v399 = vunpack.c.l.b16 %v63
  %v400 = vunpack.c.l.b16 %v64
  %v401 = vunpack.c.l.b16 %v65
  %v402 = vunpack.c.l.b16 %v66
  %v403 = vunpack.c.l.b16 %v67
  %v404 = vunpack.c.l.b16 %v68
  %v405 = vunpack.c.l.b16 %v69
  %v406 = vunpack.c.l.b16 %v70
  %v407 = vunpack.c.l.b16 %v71
  %v408 = vunpack.c.l.b16 %v72
  %v409 = vunpack.c.l.b16 %v73
  %v410 = vunpack.c.l.b16 %v74
  %v411 = vunpack.c.l.b16 %v75
  %v412 = vunpack.c.l.b16 %v76
  %v413 = vunpack.c.l.b16 %v77
  %v414 = vunpack.c.l.b16 %v78
  %v415 = vunpack.c.l.b16 %v79
  %v416 = vunpack.c.l.b16 %v80
  %v417 = vunpack.c.l.b16 %v81
  %v418 = vunpack.c.l.b16 %v82
  %v419 = vunpack.c.l.b16 %v83
  %v420 = vunpack.c.l.b16 %v84
  %v421 = vunpack.c.l.b16 %v85
  %v422 = vunpack.c.l.b16 %v86
  %v423 = vunpack.c.l.b16 %v87
  %v424 = vunpack.c.l.b16 %v88
  %v425 = vunpack.c.l.b16 %v89
  %v426 = vunpack.c.l.b16 %v90
  %v427 = vunpack.c.l.b16 %v91
  %v428 = vunpack.c.l.b16 %v92
  %v429 = vunpack.c.l.b16 %v93
  %v430 = vunpack.c.l.b16 %v94
  %v431 = vunpack.c.l.b16 %v95
  %v432 = vunpack.c.l.b16 %v96
  %v433 = vunpack.c.l.b16 %v97
  %v434 = vunpack.c.l.b16 %v98
  %v435 = vunpack.c.l.b16 %v99
  %v436 = vunpack.c.l.b16 %v100
  %v437 = vunpack.c.l.b16 %v101
  %v438 = vunpack.c.l.b16 %v102
  %v439 = vunpack.c.l.b16 %v103
  %v440 = vunpack.c.l.b16 %v104
  %v441 = vunpack.c.l.b16 %v105
  %v442 = vunpack.c.l.b16 %v106
  %v443 = vpack.c.b16 %v380, %v379
  %v444 = vpack.c.b16 %v382, %v381
  %v445 = vpack.c.b16 %v384, %v383
  %v446 = vpack.c.b16 %v386, %v385
  %v447 = vpack.c.b16 %v388, %v387
  %v448 = vpack.c.b16 %v390, %v389
  %v449 = vpack.c.b16 %v392, %v391
  %v450 = vpack.c.b16 %v394, %v393
  %v451 = vpack.c.b16 %v396, %v395
  %v452 = vpack.c.b16 %v398, %v397
  %v453 = vpack.c.b16 %v400, %v399
  %v454 = vpack.c.b16 %v402, %v401
  %v455 = vpack.c.b16 %v404, %v403
  %v456 = vpack.c.b16 %v406, %v405
  %v457 = vpack.c.b16 %v408, %v407
  %v458 = vpack.c.b16 %v410, %v409
  %v459 = vpack.c.b16 %v412, %v411
  %v460 = vpack.c.b16 %v414, %v413
  %v461 = vpack.c.b16 %v416, %v415
  %v462 = vpack.c.b16 %v418, %v417
  %v463 = vpack.c.b16 %v420, %v419
  %v464 = vpack.c.b16 %v422, %v421
  %v465 = vpack.c.b16 %v424, %v423
  %v466 = vpack.c.b16 %v426, %v425
  %v467 = vpack.c.b16 %v428, %v427
  %v468 = vpack.c.b16 %v430, %v429
  %v469 = vpack.c.b16 %v432, %v431
  %v470 = vpack.c.b16 %v434, %v433
  %v471 = vpack.c.b16 %v436, %v435
  %v472 = vpack.c.b16 %v438, %v437
  %v473 = vpack.c.b16 %v440, %v439
  %v474 = vpack.c.b16 %v442, %v441
  %507 = vmatprep.subr.bf16.mxu0 0
  %508 = vmatpush1.bf16.msra.mxu0 %v450
  %509 = vmatprep.subr.bf16.mxu0 0
  %510 = vmatpush1.bf16.msra.mxu0 %v449
  %511 = vmatprep.subr.bf16.mxu0 0
  %512 = vmatpush1.bf16.msra.mxu0 %v448
  %513 = vmatprep.subr.bf16.mxu0 0
  %514 = vmatpush1.bf16.msra.mxu0 %v447
  %515 = vmatprep.subr.bf16.mxu0 0
  %516 = vmatpush1.bf16.msra.mxu0 %v446
  %517 = vmatprep.subr.bf16.mxu0 0
  %518 = vmatpush1.bf16.msra.mxu0 %v445
  %519 = vmatprep.subr.bf16.mxu0 0
  %520 = vmatpush1.bf16.msra.mxu0 %v444
  %521 = vmatprep.subr.bf16.mxu0 0
  %522 = vmatpush1.bf16.msra.mxu0 %v443
  %523 = vmatprep.subr.bf16.mxu0 0
  %524 = vmatpush2.bf16.msra.mxu0 %v458
  %525 = vmatprep.subr.bf16.mxu0 0
  %526 = vmatpush2.bf16.msra.mxu0 %v457
  %527 = vmatprep.subr.bf16.mxu0 0
  %528 = vmatpush2.bf16.msra.mxu0 %v456
  %529 = vmatprep.subr.bf16.mxu0 0
  %530 = vmatpush2.bf16.msra.mxu0 %v455
  %531 = vmatprep.subr.bf16.mxu0 0
  %532 = vmatpush2.bf16.msra.mxu0 %v454
  %533 = vmatprep.subr.bf16.mxu0 0
  %534 = vmatpush2.bf16.msra.mxu0 %v453
  %535 = vmatprep.subr.bf16.mxu0 0
  %536 = vmatpush2.bf16.msra.mxu0 %v452
  %537 = vmatprep.subr.bf16.mxu0 0
  %538 = vmatpush2.bf16.msra.mxu0 %v451
  %539 = vmatprep.mubr.bf16.mxu0 %v252
  %540 = vmatmul.mubr.bf16.gmra.mxu0 %v251
  %v541 = vpop.f32.mrf.mxu0
  %v542 = vadd.f32 0.0, %v541
  %v543 = vpop.f32.mrf.mxu0
  %v544 = vpop.f32.mrf.mxu0
  %v545 = vadd.f32 0.0, %v544
  %v546 = vpop.f32.mrf.mxu0
  %547 = vmatprep.mubr.bf16.mxu0 %v256
  %548 = vmatmul.mubr.bf16.gmra.mxu0 %v255
  %v549 = vpop.f32.mrf.mxu0
  %v550 = vadd.f32 0.0, %v549
  %v551 = vpop.f32.mrf.mxu0
  %v552 = vpop.f32.mrf.mxu0
  %v553 = vadd.f32 0.0, %v552
  %v554 = vpop.f32.mrf.mxu0
  %555 = vmatprep.mubr.bf16.mxu0 %v260
  %556 = vmatmul.mubr.bf16.gmra.mxu0 %v259
  %v557 = vpop.f32.mrf.mxu0
  %v558 = vadd.f32 0.0, %v557
  %v559 = vpop.f32.mrf.mxu0
  %v560 = vpop.f32.mrf.mxu0
  %v561 = vadd.f32 0.0, %v560
  %v562 = vpop.f32.mrf.mxu0
  %563 = vmatprep.mubr.bf16.mxu0 %v264
  %564 = vmatmul.mubr.bf16.gmra.mxu0 %v263
  %v565 = vpop.f32.mrf.mxu0
  %v566 = vadd.f32 0.0, %v565
  %v567 = vpop.f32.mrf.mxu0
  %v568 = vpop.f32.mrf.mxu0
  %v569 = vadd.f32 0.0, %v568
  %v570 = vpop.f32.mrf.mxu0
  %571 = vmatprep.mubr.bf16.mxu0 %v268
  %572 = vmatmul.mubr.bf16.gmra.mxu0 %v267
  %v573 = vpop.f32.mrf.mxu0
  %v574 = vadd.f32 0.0, %v573
  %v575 = vpop.f32.mrf.mxu0
  %v576 = vpop.f32.mrf.mxu0
  %v577 = vadd.f32 0.0, %v576
  %v578 = vpop.f32.mrf.mxu0
  %579 = vmatprep.mubr.bf16.mxu0 %v272
  %580 = vmatmul.mubr.bf16.gmra.mxu0 %v271
  %v581 = vpop.f32.mrf.mxu0
  %v582 = vadd.f32 0.0, %v581
  %v583 = vpop.f32.mrf.mxu0
  %v584 = vpop.f32.mrf.mxu0
  %v585 = vadd.f32 0.0, %v584
  %v586 = vpop.f32.mrf.mxu0
  %587 = vmatprep.mubr.bf16.mxu0 %v276
  %588 = vmatmul.mubr.bf16.gmra.mxu0 %v275
  %v589 = vpop.f32.mrf.mxu0
  %v590 = vadd.f32 0.0, %v589
  %v591 = vpop.f32.mrf.mxu0
  %v592 = vpop.f32.mrf.mxu0
  %v593 = vadd.f32 0.0, %v592
  %v594 = vpop.f32.mrf.mxu0
  %595 = vmatprep.mubr.bf16.mxu0 %v280
  %596 = vmatmul.mubr.bf16.gmra.mxu0 %v279
  %v597 = vpop.f32.mrf.mxu0
  %v598 = vadd.f32 0.0, %v597
  %v599 = vpop.f32.mrf.mxu0
  %v600 = vpop.f32.mrf.mxu0
  %v601 = vadd.f32 0.0, %v600
  %v602 = vpop.f32.mrf.mxu0
  %603 = vdwg.mxu0
  %604 = vmatprep.subr.bf16.mxu0 0
  %605 = vmatpush1.bf16.msra.mxu0 %v466
  %606 = vmatprep.subr.bf16.mxu0 0
  %607 = vmatpush1.bf16.msra.mxu0 %v465
  %608 = vmatprep.subr.bf16.mxu0 0
  %609 = vmatpush1.bf16.msra.mxu0 %v464
  %610 = vmatprep.subr.bf16.mxu0 0
  %611 = vmatpush1.bf16.msra.mxu0 %v463
  %612 = vmatprep.subr.bf16.mxu0 0
  %613 = vmatpush1.bf16.msra.mxu0 %v462
  %614 = vmatprep.subr.bf16.mxu0 0
  %615 = vmatpush1.bf16.msra.mxu0 %v461
  %616 = vmatprep.subr.bf16.mxu0 0
  %617 = vmatpush1.bf16.msra.mxu0 %v460
  %618 = vmatprep.subr.bf16.mxu0 0
  %619 = vmatpush1.bf16.msra.mxu0 %v459
  %620 = vmatprep.subr.bf16.mxu0 0
  %621 = vmatpush2.bf16.msra.mxu0 %v474
  %622 = vmatprep.subr.bf16.mxu0 0
  %623 = vmatpush2.bf16.msra.mxu0 %v473
  %624 = vmatprep.subr.bf16.mxu0 0
  %625 = vmatpush2.bf16.msra.mxu0 %v472
  %626 = vmatprep.subr.bf16.mxu0 0
  %627 = vmatpush2.bf16.msra.mxu0 %v471
  %628 = vmatprep.subr.bf16.mxu0 0
  %629 = vmatpush2.bf16.msra.mxu0 %v470
  %630 = vmatprep.subr.bf16.mxu0 0
  %631 = vmatpush2.bf16.msra.mxu0 %v469
  %632 = vmatprep.subr.bf16.mxu0 0
  %633 = vmatpush2.bf16.msra.mxu0 %v468
  %634 = vmatprep.subr.bf16.mxu0 0
  %635 = vmatpush2.bf16.msra.mxu0 %v467
  %636 = vmatprep.mubr.bf16.mxu0 %v254
  %637 = vmatmul.mubr.bf16.gmra.mxu0 %v253
  %v638 = vpop.f32.mrf.mxu0
  %v639 = vadd.f32 %v542, %v638
  %v640 = vpop.f32.mrf.mxu0
  %v641 = vpop.f32.mrf.mxu0
  %v642 = vadd.f32 %v545, %v641
  %v643 = vpop.f32.mrf.mxu0
  %644 = vmatprep.mubr.bf16.mxu0 %v258
  %645 = vmatmul.mubr.bf16.gmra.mxu0 %v257
  %v646 = vpop.f32.mrf.mxu0
  %v647 = vadd.f32 %v550, %v646
  %v648 = vpop.f32.mrf.mxu0
  %v649 = vpop.f32.mrf.mxu0
  %v650 = vadd.f32 %v553, %v649
  %v651 = vpop.f32.mrf.mxu0
  %652 = vmatprep.mubr.bf16.mxu0 %v262
  %653 = vmatmul.mubr.bf16.gmra.mxu0 %v261
  %v654 = vpop.f32.mrf.mxu0
  %v655 = vadd.f32 %v558, %v654
  %v656 = vpop.f32.mrf.mxu0
  %v657 = vpop.f32.mrf.mxu0
  %v658 = vadd.f32 %v561, %v657
  %v659 = vpop.f32.mrf.mxu0
  %660 = vmatprep.mubr.bf16.mxu0 %v266
  %661 = vmatmul.mubr.bf16.gmra.mxu0 %v265
  %v662 = vpop.f32.mrf.mxu0
  %v663 = vadd.f32 %v566, %v662
  %v664 = vpop.f32.mrf.mxu0
  %v665 = vpop.f32.mrf.mxu0
  %v666 = vadd.f32 %v569, %v665
  %v667 = vpop.f32.mrf.mxu0
  %668 = vmatprep.mubr.bf16.mxu0 %v270
  %669 = vmatmul.mubr.bf16.gmra.mxu0 %v269
  %v670 = vpop.f32.mrf.mxu0
  %v671 = vadd.f32 %v574, %v670
  %v672 = vpop.f32.mrf.mxu0
  %v673 = vpop.f32.mrf.mxu0
  %v674 = vadd.f32 %v577, %v673
  %v675 = vpop.f32.mrf.mxu0
  %676 = vmatprep.mubr.bf16.mxu0 %v274
  %677 = vmatmul.mubr.bf16.gmra.mxu0 %v273
  %v678 = vpop.f32.mrf.mxu0
  %v679 = vadd.f32 %v582, %v678
  %v680 = vpop.f32.mrf.mxu0
  %v681 = vpop.f32.mrf.mxu0
  %v682 = vadd.f32 %v585, %v681
  %v683 = vpop.f32.mrf.mxu0
  %684 = vmatprep.mubr.bf16.mxu0 %v278
  %685 = vmatmul.mubr.bf16.gmra.mxu0 %v277
  %v686 = vpop.f32.mrf.mxu0
  %v687 = vadd.f32 %v590, %v686
  %v688 = vpop.f32.mrf.mxu0
  %v689 = vpop.f32.mrf.mxu0
  %v690 = vadd.f32 %v593, %v689
  %v691 = vpop.f32.mrf.mxu0
  %692 = vmatprep.mubr.bf16.mxu0 %v282
  %693 = vmatmul.mubr.bf16.gmra.mxu0 %v281
  %v694 = vpop.f32.mrf.mxu0
  %v695 = vadd.f32 %v598, %v694
  %v696 = vpop.f32.mrf.mxu0
  %v697 = vpop.f32.mrf.mxu0
  %v698 = vadd.f32 %v601, %v697
  %v699 = vpop.f32.mrf.mxu0
  %700 = vdwg.mxu0
  %v701 = vadd.f32 %v107, %v639
  %v702 = vadd.f32 %v108, %v642
  %v703 = vadd.f32 %v109, %v647
  %v704 = vadd.f32 %v110, %v650
  %v705 = vadd.f32 %v111, %v655
  %v706 = vadd.f32 %v112, %v658
  %v707 = vadd.f32 %v113, %v663
  %v708 = vadd.f32 %v114, %v666
  %v709 = vadd.f32 %v115, %v671
  %v710 = vadd.f32 %v116, %v674
  %v711 = vadd.f32 %v117, %v679
  %v712 = vadd.f32 %v118, %v682
  %v713 = vadd.f32 %v119, %v687
  %v714 = vadd.f32 %v120, %v690
  %v715 = vadd.f32 %v121, %v695
  %v716 = vadd.f32 %v122, %v698
  %vm717 = vcmask 130048
  %718 = vst.msk [vmem:[#allocation2] sm:$0xff] %vm717, %v701
  %719 = vst.msk [vmem:[#allocation2 + $0x8] sm:$0xff] %vm717, %v702
  %720 = vst.msk [vmem:[#allocation2 + $0x10] sm:$0xff] %vm717, %v703
  %721 = vst.msk [vmem:[#allocation2 + $0x18] sm:$0xff] %vm717, %v704
  %722 = vst.msk [vmem:[#allocation2 + $0x20] sm:$0xff] %vm717, %v705
  %723 = vst.msk [vmem:[#allocation2 + $0x28] sm:$0xff] %vm717, %v706
  %724 = vst.msk [vmem:[#allocation2 + $0x30] sm:$0xff] %vm717, %v707
  %725 = vst.msk [vmem:[#allocation2 + $0x38] sm:$0xff] %vm717, %v708
  %726 = vst.msk [vmem:[#allocation2 + $0x40] sm:$0xff] %vm717, %v709
  %727 = vst.msk [vmem:[#allocation2 + $0x48] sm:$0xff] %vm717, %v710
  %728 = vst.msk [vmem:[#allocation2 + $0x50] sm:$0xff] %vm717, %v711
  %729 = vst.msk [vmem:[#allocation2 + $0x58] sm:$0xff] %vm717, %v712
  %730 = vst.msk [vmem:[#allocation2 + $0x60] sm:$0xff] %vm717, %v713
  %731 = vst.msk [vmem:[#allocation2 + $0x68] sm:$0xff] %vm717, %v714
  %732 = vst.msk [vmem:[#allocation2 + $0x70] sm:$0xff] %vm717, %v715
  %733 = vst.msk [vmem:[#allocation2 + $0x78] sm:$0xff] %vm717, %v716
  // Predicated region
  $region18: #{_lambda_.11} parent=0 // pred_check
    %p734 = pneg %p17
  $region19: #{_lambda_.11} parent=0 // pred_check_branch
    %736 = sbr.rel (%p734) target = $region21
  $region20: #{_lambda_.11} parent=0 // pred_region
    %v737 = vld [vmem:[#allocation2] sm:$0xff]
    %v738 = vld [vmem:[#allocation2 + $0x8] sm:$0xff]
    %v739 = vld [vmem:[#allocation2 + $0x10] sm:$0xff]
    %v740 = vld [vmem:[#allocation2 + $0x18] sm:$0xff]
    %v741 = vld [vmem:[#allocation2 + $0x20] sm:$0xff]
    %v742 = vld [vmem:[#allocation2 + $0x28] sm:$0xff]
    %v743 = vld [vmem:[#allocation2 + $0x30] sm:$0xff]
    %v744 = vld [vmem:[#allocation2 + $0x38] sm:$0xff]
    %v745 = vld [vmem:[#allocation2 + $0x40] sm:$0xff]
    %v746 = vld [vmem:[#allocation2 + $0x48] sm:$0xff]
    %v747 = vld [vmem:[#allocation2 + $0x50] sm:$0xff]
    %v748 = vld [vmem:[#allocation2 + $0x58] sm:$0xff]
    %v749 = vld [vmem:[#allocation2 + $0x60] sm:$0xff]
    %v750 = vld [vmem:[#allocation2 + $0x68] sm:$0xff]
    %v751 = vld [vmem:[#allocation2 + $0x70] sm:$0xff]
    %v752 = vld [vmem:[#allocation2 + $0x78] sm:$0xff]
    %v753 = vld [vmem:[%s2] sm:$0x1]
    %v755 = vlaneseq
    %v756 = vshrl.u32 %v755, 7
    %v757 = vsub.s32 0, %v756
    %v758 = vrot.slane %v753, %v757
    %v760 = vadd.f32 %v737, %v758
    %v761 = vadd.f32 %v738, %v758
    %v762 = vadd.f32 %v739, %v758
    %v763 = vadd.f32 %v740, %v758
    %v764 = vadd.f32 %v741, %v758
    %v765 = vadd.f32 %v742, %v758
    %v766 = vadd.f32 %v743, %v758
    %v767 = vadd.f32 %v744, %v758
    %v768 = vadd.f32 %v745, %v758
    %v769 = vadd.f32 %v746, %v758
    %v770 = vadd.f32 %v747, %v758
    %v771 = vadd.f32 %v748, %v758
    %v772 = vadd.f32 %v749, %v758
    %v773 = vadd.f32 %v750, %v758
    %v774 = vadd.f32 %v751, %v758
    %v775 = vadd.f32 %v752, %v758
    %v776 = vpack.c.bf16 %v761, %v760
    %v777 = vpack.c.bf16 %v763, %v762
    %v778 = vpack.c.bf16 %v765, %v764
    %v779 = vpack.c.bf16 %v767, %v766
    %v780 = vpack.c.bf16 %v769, %v768
    %v781 = vpack.c.bf16 %v771, %v770
    %v782 = vpack.c.bf16 %v773, %v772
    %v783 = vpack.c.bf16 %v775, %v774
    %v792 = vunpack.c.l.b16 %v776
    %v793 = vunpack.c.h.b16 %v776
    %v794 = vunpack.c.l.b16 %v777
    %v795 = vunpack.c.h.b16 %v777
    %v796 = vunpack.c.l.b16 %v778
    %v797 = vunpack.c.h.b16 %v778
    %v798 = vunpack.c.l.b16 %v779
    %v799 = vunpack.c.h.b16 %v779
    %v800 = vunpack.c.l.b16 %v780
    %v801 = vunpack.c.h.b16 %v780
    %v802 = vunpack.c.l.b16 %v781
    %v803 = vunpack.c.h.b16 %v781
    %v804 = vunpack.c.l.b16 %v782
    %v805 = vunpack.c.h.b16 %v782
    %v806 = vunpack.c.l.b16 %v783
    %v807 = vunpack.c.h.b16 %v783
    %v808 = vpack.c.b16 %v792, %v792
    %v809 = vpack.c.b16 %v793, %v793
    %v810 = vpack.c.b16 %v794, %v794
    %v811 = vpack.c.b16 %v795, %v795
    %v812 = vpack.c.b16 %v796, %v796
    %v813 = vpack.c.b16 %v797, %v797
    %v814 = vpack.c.b16 %v798, %v798
    %v815 = vpack.c.b16 %v799, %v799
    %v816 = vpack.c.b16 %v800, %v800
    %v817 = vpack.c.b16 %v801, %v801
    %v818 = vpack.c.b16 %v802, %v802
    %v819 = vpack.c.b16 %v803, %v803
    %v820 = vpack.c.b16 %v804, %v804
    %v821 = vpack.c.b16 %v805, %v805
    %v822 = vpack.c.b16 %v806, %v806
    %v823 = vpack.c.b16 %v807, %v807
    %vm840 = vcmask 125952
    %841 = vst.msk [vmem:[%s3] sm:$0xf] %vm840, %v808
    %842 = vst.msk [vmem:[%s3 + $0x4] sm:$0xf] %vm840, %v809
    %843 = vst.msk [vmem:[%s3 + $0x8] sm:$0xf] %vm840, %v810
    %844 = vst.msk [vmem:[%s3 + $0xc] sm:$0xf] %vm840, %v811
    %845 = vst.msk [vmem:[%s3 + $0x10] sm:$0xf] %vm840, %v812
    %846 = vst.msk [vmem:[%s3 + $0x14] sm:$0xf] %vm840, %v813
    %847 = vst.msk [vmem:[%s3 + $0x18] sm:$0xf] %vm840, %v814
    %848 = vst.msk [vmem:[%s3 + $0x1c] sm:$0xf] %vm840, %v815
    %849 = vst.msk [vmem:[%s3 + $0x20] sm:$0xf] %vm840, %v816
    %850 = vst.msk [vmem:[%s3 + $0x24] sm:$0xf] %vm840, %v817
    %851 = vst.msk [vmem:[%s3 + $0x28] sm:$0xf] %vm840, %v818
    %852 = vst.msk [vmem:[%s3 + $0x2c] sm:$0xf] %vm840, %v819
    %853 = vst.msk [vmem:[%s3 + $0x30] sm:$0xf] %vm840, %v820
    %854 = vst.msk [vmem:[%s3 + $0x34] sm:$0xf] %vm840, %v821
    %855 = vst.msk [vmem:[%s3 + $0x38] sm:$0xf] %vm840, %v822
    %856 = vst.msk [vmem:[%s3 + $0x3c] sm:$0xf] %vm840, %v823
    %v857 = vsel %vm717, %v760, 0.0
    %v858 = vsel %vm717, %v761, 0.0
    %v859 = vadd.f32 %v857, %v858
    %v860 = vsel %vm717, %v762, 0.0
    %v861 = vadd.f32 %v859, %v860
    %v862 = vsel %vm717, %v763, 0.0
    %v863 = vadd.f32 %v861, %v862
    %v864 = vsel %vm717, %v764, 0.0
    %v865 = vadd.f32 %v863, %v864
    %v866 = vsel %vm717, %v765, 0.0
    %v867 = vadd.f32 %v865, %v866
    %v868 = vsel %vm717, %v766, 0.0
    %v869 = vadd.f32 %v867, %v868
    %v870 = vsel %vm717, %v767, 0.0
    %v871 = vadd.f32 %v869, %v870
    %v872 = vsel %vm717, %v768, 0.0
    %v873 = vadd.f32 %v871, %v872
    %v874 = vsel %vm717, %v769, 0.0
    %v875 = vadd.f32 %v873, %v874
    %v876 = vsel %vm717, %v770, 0.0
    %v877 = vadd.f32 %v875, %v876
    %v878 = vsel %vm717, %v771, 0.0
    %v879 = vadd.f32 %v877, %v878
    %v880 = vsel %vm717, %v772, 0.0
    %v881 = vadd.f32 %v879, %v880
    %v882 = vsel %vm717, %v773, 0.0
    %v883 = vadd.f32 %v881, %v882
    %v884 = vsel %vm717, %v774, 0.0
    %v885 = vadd.f32 %v883, %v884
    %v886 = vsel %vm717, %v775, 0.0
    %v887 = vadd.f32 %v885, %v886
    %v888 = vrot.slane %v887, 4
    %v889 = vadd.f32 %v887, %v888
    %v890 = vrot.slane %v889, 2
    %v891 = vadd.f32 %v889, %v890
    %v892 = vrot.slane %v891, 1
    %v893 = vadd.f32 %v891, %v892
    %v894 = vrcp.pop 128.0
    %v895 = vmul.f32 %v893, %v894
    %v896 = vsub.f32 %v760, %v895
    %v897 = vsub.f32 %v761, %v895
    %v898 = vsub.f32 %v762, %v895
    %v899 = vsub.f32 %v763, %v895
    %v900 = vsub.f32 %v764, %v895
    %v901 = vsub.f32 %v765, %v895
    %v902 = vsub.f32 %v766, %v895
    %v903 = vsub.f32 %v767, %v895
    %v904 = vsub.f32 %v768, %v895
    %v905 = vsub.f32 %v769, %v895
    %v906 = vsub.f32 %v770, %v895
    %v907 = vsub.f32 %v771, %v895
    %v908 = vsub.f32 %v772, %v895
    %v909 = vsub.f32 %v773, %v895
    %v910 = vsub.f32 %v774, %v895
    %v911 = vsub.f32 %v775, %v895
    %v912 = vmul.f32 %v896, %v896
    %v913 = vmul.f32 %v897, %v897
    %v914 = vmul.f32 %v898, %v898
    %v915 = vmul.f32 %v899, %v899
    %v916 = vmul.f32 %v900, %v900
    %v917 = vmul.f32 %v901, %v901
    %v918 = vmul.f32 %v902, %v902
    %v919 = vmul.f32 %v903, %v903
    %v920 = vmul.f32 %v904, %v904
    %v921 = vmul.f32 %v905, %v905
    %v922 = vmul.f32 %v906, %v906
    %v923 = vmul.f32 %v907, %v907
    %v924 = vmul.f32 %v908, %v908
    %v925 = vmul.f32 %v909, %v909
    %v926 = vmul.f32 %v910, %v910
    %v927 = vmul.f32 %v911, %v911
    %v928 = vsel %vm717, %v912, 0.0
    %v929 = vsel %vm717, %v913, 0.0
    %v930 = vadd.f32 %v928, %v929
    %v931 = vsel %vm717, %v914, 0.0
    %v932 = vadd.f32 %v930, %v931
    %v933 = vsel %vm717, %v915, 0.0
    %v934 = vadd.f32 %v932, %v933
    %v935 = vsel %vm717, %v916, 0.0
    %v936 = vadd.f32 %v934, %v935
    %v937 = vsel %vm717, %v917, 0.0
    %v938 = vadd.f32 %v936, %v937
    %v939 = vsel %vm717, %v918, 0.0
    %v940 = vadd.f32 %v938, %v939
    %v941 = vsel %vm717, %v919, 0.0
    %v942 = vadd.f32 %v940, %v941
    %v943 = vsel %vm717, %v920, 0.0
    %v944 = vadd.f32 %v942, %v943
    %v945 = vsel %vm717, %v921, 0.0
    %v946 = vadd.f32 %v944, %v945
    %v947 = vsel %vm717, %v922, 0.0
    %v948 = vadd.f32 %v946, %v947
    %v949 = vsel %vm717, %v923, 0.0
    %v950 = vadd.f32 %v948, %v949
    %v951 = vsel %vm717, %v924, 0.0
    %v952 = vadd.f32 %v950, %v951
    %v953 = vsel %vm717, %v925, 0.0
    %v954 = vadd.f32 %v952, %v953
    %v955 = vsel %vm717, %v926, 0.0
    %v956 = vadd.f32 %v954, %v955
    %v957 = vsel %vm717, %v927, 0.0
    %v958 = vadd.f32 %v956, %v957
    %v959 = vrot.slane %v958, 4
    %v960 = vadd.f32 %v958, %v959
    %v961 = vrot.slane %v960, 2
    %v962 = vadd.f32 %v960, %v961
    %v963 = vrot.slane %v962, 1
    %v964 = vadd.f32 %v962, %v963
    %vm965 = vcmask 122880
    %966 = vst.msk [vmem:[%s4] sm:$0x1] %vm965, %v893
    %967 = vst.msk [vmem:[%s4 + $0x1] sm:$0x1] %vm965, %v964
  $region21: #{_lambda_.11} parent=0 // pred_fallthru
    _
  // Predicated region
  $region22: #{_lambda_.11} parent=0 // pred_check
    _
  $region23: #{_lambda_.11} parent=0 // pred_check_branch
    %969 = sbr.rel (0) target = $region25
  $region24: #{_lambda_.11} parent=0 // pred_region
    _
  $region25: #{_lambda_.11} parent=0 // pred_fallthru
    _
  // Predicated region
  $region26: #{_lambda_.11} parent=0 // pred_check
    _
  $region27: #{_lambda_.11} parent=0 // pred_check_branch
    %971 = sbr.rel (0) target = $region29
  $region28: #{_lambda_.11} parent=0 // pred_region
    _
  $region29: #{_lambda_.11} parent=0 // pred_fallthru
    _
  // Predicated region
  $region30: #{_lambda_.11} parent=0 // pred_check
    _
  $region31: #{_lambda_.11} parent=0 // pred_check_branch
    %973 = sbr.rel (0) target = $region33
  $region32: #{_lambda_.11} parent=0 // pred_region
    _
  $region33: #{_lambda_.11} parent=0 // pred_fallthru
    _
  // Predicated region
  $region34: #{_lambda_.11} parent=0 // pred_check
    _
  $region35: #{_lambda_.11} parent=0 // pred_check_branch
    %975 = sbr.rel (0) target = $region37
  $region36: #{_lambda_.11} parent=0 // pred_region
    _
  $region37: #{_lambda_.11} parent=0 // pred_fallthru
    _

// kernel: _lambda_.12
$region0: #{_lambda_.12}
  #allocation0 [shape = 'u32[]', space=smem, size = 0x4, offset = 0x4, fixed_abs, tag = 'smem constant byte address 0x4 - core index']
  #allocation1 [shape = 'u32[144,128]{1,0:T(1,128)}', space=vmem, size = 0x12000, scoped, tag = 'internal scratch']
  %s0 = inlined_call_operand.vmem [shape: bf16[128,16], index: 0, kind: input, shape index: {}]
  %s1 = inlined_call_operand.vmem [shape: f32[1,16], index: 1, kind: input, shape index: {}]
  %s2 = inlined_call_operand.vmem [shape: f32[1,16], index: 2, kind: input, shape index: {}]
  %s3 = inlined_call_operand.vmem [shape: bf16[128,16], index: 3, kind: output, shape index: {}]
  %s4 = sld [smem:[#allocation0]]
  $region22: #{_lambda_.12} parent=0
    _
  %s6 = ssub.s32 1, %s4
  %s7 = scalar_select 0, %s6, %s4
  // Predicated region
  $region2: #{_lambda_.12} parent=0 // pred_check
    _
  $region3: #{_lambda_.12} parent=0 // pred_check_branch
    %9 = sbr.rel (0) target = $region5
  $region4: #{_lambda_.12} parent=0 // pred_region
    _
  $region5: #{_lambda_.12} parent=0 // pred_fallthru
    _
  // Predicated region
  $region6: #{_lambda_.12} parent=0 // pred_check
    _
  $region7: #{_lambda_.12} parent=0 // pred_check_branch
    %11 = sbr.rel (0) target = $region9
  $region8: #{_lambda_.12} parent=0 // pred_region
    _
  $region9: #{_lambda_.12} parent=0 // pred_fallthru
    _
  // Predicated region
  $region10: #{_lambda_.12} parent=0 // pred_check
    _
  $region11: #{_lambda_.12} parent=0 // pred_check_branch
    %13 = sbr.rel (0) target = $region13
  $region12: #{_lambda_.12} parent=0 // pred_region
    _
  $region13: #{_lambda_.12} parent=0 // pred_fallthru
    _
  %v14 = vld [vmem:[%s0] sm:$0xf]
  %v15 = vld [vmem:[%s0 + $0x4] sm:$0xf]
  %v16 = vld [vmem:[%s0 + $0x8] sm:$0xf]
  %v17 = vld [vmem:[%s0 + $0xc] sm:$0xf]
  %v18 = vld [vmem:[%s0 + $0x10] sm:$0xf]
  %v19 = vld [vmem:[%s0 + $0x14] sm:$0xf]
  %v20 = vld [vmem:[%s0 + $0x18] sm:$0xf]
  %v21 = vld [vmem:[%s0 + $0x1c] sm:$0xf]
  %v22 = vld [vmem:[%s0 + $0x20] sm:$0xf]
  %v23 = vld [vmem:[%s0 + $0x24] sm:$0xf]
  %v24 = vld [vmem:[%s0 + $0x28] sm:$0xf]
  %v25 = vld [vmem:[%s0 + $0x2c] sm:$0xf]
  %v26 = vld [vmem:[%s0 + $0x30] sm:$0xf]
  %v27 = vld [vmem:[%s0 + $0x34] sm:$0xf]
  %v28 = vld [vmem:[%s0 + $0x38] sm:$0xf]
  %v29 = vld [vmem:[%s0 + $0x3c] sm:$0xf]
  %v30 = vunpack.c.l.bf16 %v14
  %v31 = vunpack.c.l.bf16 %v15
  %v32 = vunpack.c.l.bf16 %v16
  %v33 = vunpack.c.l.bf16 %v17
  %v34 = vunpack.c.l.bf16 %v18
  %v35 = vunpack.c.l.bf16 %v19
  %v36 = vunpack.c.l.bf16 %v20
  %v37 = vunpack.c.l.bf16 %v21
  %v38 = vunpack.c.l.bf16 %v22
  %v39 = vunpack.c.l.bf16 %v23
  %v40 = vunpack.c.l.bf16 %v24
  %v41 = vunpack.c.l.bf16 %v25
  %v42 = vunpack.c.l.bf16 %v26
  %v43 = vunpack.c.l.bf16 %v27
  %v44 = vunpack.c.l.bf16 %v28
  %v45 = vunpack.c.l.bf16 %v29
  %v46 = vld [vmem:[%s1] sm:$0x1]
  %v48 = vlaneseq
  %v49 = vshrl.u32 %v48, 7
  %v50 = vsub.s32 0, %v49
  %v51 = vrot.slane %v46, %v50
  %v53 = vmul.f32 %v30, %v51
  %v54 = vmul.f32 %v31, %v51
  %v55 = vmul.f32 %v32, %v51
  %v56 = vmul.f32 %v33, %v51
  %v57 = vmul.f32 %v34, %v51
  %v58 = vmul.f32 %v35, %v51
  %v59 = vmul.f32 %v36, %v51
  %v60 = vmul.f32 %v37, %v51
  %v61 = vmul.f32 %v38, %v51
  %v62 = vmul.f32 %v39, %v51
  %v63 = vmul.f32 %v40, %v51
  %v64 = vmul.f32 %v41, %v51
  %v65 = vmul.f32 %v42, %v51
  %v66 = vmul.f32 %v43, %v51
  %v67 = vmul.f32 %v44, %v51
  %v68 = vmul.f32 %v45, %v51
  %v69 = vld [vmem:[%s2] sm:$0x1]
  %v71 = vlaneseq
  %v72 = vshrl.u32 %v71, 7
  %v73 = vsub.s32 0, %v72
  %v74 = vrot.slane %v69, %v73
  %v76 = vadd.f32 %v53, %v74
  %v77 = vadd.f32 %v54, %v74
  %v78 = vadd.f32 %v55, %v74
  %v79 = vadd.f32 %v56, %v74
  %v80 = vadd.f32 %v57, %v74
  %v81 = vadd.f32 %v58, %v74
  %v82 = vadd.f32 %v59, %v74
  %v83 = vadd.f32 %v60, %v74
  %v84 = vadd.f32 %v61, %v74
  %v85 = vadd.f32 %v62, %v74
  %v86 = vadd.f32 %v63, %v74
  %v87 = vadd.f32 %v64, %v74
  %v88 = vadd.f32 %v65, %v74
  %v89 = vadd.f32 %v66, %v74
  %v90 = vadd.f32 %v67, %v74
  %v91 = vadd.f32 %v68, %v74
  %vm92 = vcmp.ge.f32.partialorder %v76, 0.0
  %vm93 = vcmp.ge.f32.partialorder %v77, 0.0
  %vm94 = vcmp.ge.f32.partialorder %v78, 0.0
  %vm95 = vcmp.ge.f32.partialorder %v79, 0.0
  %vm96 = vcmp.ge.f32.partialorder %v80, 0.0
  %vm97 = vcmp.ge.f32.partialorder %v81, 0.0
  %vm98 = vcmp.ge.f32.partialorder %v82, 0.0
  %vm99 = vcmp.ge.f32.partialorder %v83, 0.0
  %vm100 = vcmp.ge.f32.partialorder %v84, 0.0
  %vm101 = vcmp.ge.f32.partialorder %v85, 0.0
  %vm102 = vcmp.ge.f32.partialorder %v86, 0.0
  %vm103 = vcmp.ge.f32.partialorder %v87, 0.0
  %vm104 = vcmp.ge.f32.partialorder %v88, 0.0
  %vm105 = vcmp.ge.f32.partialorder %v89, 0.0
  %vm106 = vcmp.ge.f32.partialorder %v90, 0.0
  %vm107 = vcmp.ge.f32.partialorder %v91, 0.0
  %v108 = vmul.f32 %v76, 0.2
  %v109 = vmul.f32 %v77, 0.2
  %v110 = vmul.f32 %v78, 0.2
  %v111 = vmul.f32 %v79, 0.2
  %v112 = vmul.f32 %v80, 0.2
  %v113 = vmul.f32 %v81, 0.2
  %v114 = vmul.f32 %v82, 0.2
  %v115 = vmul.f32 %v83, 0.2
  %v116 = vmul.f32 %v84, 0.2
  %v117 = vmul.f32 %v85, 0.2
  %v118 = vmul.f32 %v86, 0.2
  %v119 = vmul.f32 %v87, 0.2
  %v120 = vmul.f32 %v88, 0.2
  %v121 = vmul.f32 %v89, 0.2
  %v122 = vmul.f32 %v90, 0.2
  %v123 = vmul.f32 %v91, 0.2
  %v124 = vsel %vm92, %v76, %v108
  %v125 = vsel %vm93, %v77, %v109
  %v126 = vsel %vm94, %v78, %v110
  %v127 = vsel %vm95, %v79, %v111
  %v128 = vsel %vm96, %v80, %v112
  %v129 = vsel %vm97, %v81, %v113
  %v130 = vsel %vm98, %v82, %v114
  %v131 = vsel %vm99, %v83, %v115
  %v132 = vsel %vm100, %v84, %v116
  %v133 = vsel %vm101, %v85, %v117
  %v134 = vsel %vm102, %v86, %v118
  %v135 = vsel %vm103, %v87, %v119
  %v136 = vsel %vm104, %v88, %v120
  %v137 = vsel %vm105, %v89, %v121
  %v138 = vsel %vm106, %v90, %v122
  %v139 = vsel %vm107, %v91, %v123
  %v140 = vpack.c.bf16 %v125, %v124
  %v141 = vpack.c.bf16 %v127, %v126
  %v142 = vpack.c.bf16 %v129, %v128
  %v143 = vpack.c.bf16 %v131, %v130
  %v144 = vpack.c.bf16 %v133, %v132
  %v145 = vpack.c.bf16 %v135, %v134
  %v146 = vpack.c.bf16 %v137, %v136
  %v147 = vpack.c.bf16 %v139, %v138
  %v156 = vunpack.c.l.b16 %v140
  %v157 = vunpack.c.h.b16 %v140
  %v158 = vunpack.c.l.b16 %v141
  %v159 = vunpack.c.h.b16 %v141
  %v160 = vunpack.c.l.b16 %v142
  %v161 = vunpack.c.h.b16 %v142
  %v162 = vunpack.c.l.b16 %v143
  %v163 = vunpack.c.h.b16 %v143
  %v164 = vunpack.c.l.b16 %v144
  %v165 = vunpack.c.h.b16 %v144
  %v166 = vunpack.c.l.b16 %v145
  %v167 = vunpack.c.h.b16 %v145
  %v168 = vunpack.c.l.b16 %v146
  %v169 = vunpack.c.h.b16 %v146
  %v170 = vunpack.c.l.b16 %v147
  %v171 = vunpack.c.h.b16 %v147
  %v172 = vpack.c.b16 %v156, %v156
  %v173 = vpack.c.b16 %v157, %v157
  %v174 = vpack.c.b16 %v158, %v158
  %v175 = vpack.c.b16 %v159, %v159
  %v176 = vpack.c.b16 %v160, %v160
  %v177 = vpack.c.b16 %v161, %v161
  %v178 = vpack.c.b16 %v162, %v162
  %v179 = vpack.c.b16 %v163, %v163
  %v180 = vpack.c.b16 %v164, %v164
  %v181 = vpack.c.b16 %v165, %v165
  %v182 = vpack.c.b16 %v166, %v166
  %v183 = vpack.c.b16 %v167, %v167
  %v184 = vpack.c.b16 %v168, %v168
  %v185 = vpack.c.b16 %v169, %v169
  %v186 = vpack.c.b16 %v170, %v170
  %v187 = vpack.c.b16 %v171, %v171
  %vm204 = vcmask 125952
  %205 = vst.msk [vmem:[%s3] sm:$0xf] %vm204, %v172
  %206 = vst.msk [vmem:[%s3 + $0x4] sm:$0xf] %vm204, %v173
  %207 = vst.msk [vmem:[%s3 + $0x8] sm:$0xf] %vm204, %v174
  %208 = vst.msk [vmem:[%s3 + $0xc] sm:$0xf] %vm204, %v175
  %209 = vst.msk [vmem:[%s3 + $0x10] sm:$0xf] %vm204, %v176
  %210 = vst.msk [vmem:[%s3 + $0x14] sm:$0xf] %vm204, %v177
  %211 = vst.msk [vmem:[%s3 + $0x18] sm:$0xf] %vm204, %v178
  %212 = vst.msk [vmem:[%s3 + $0x1c] sm:$0xf] %vm204, %v179
  %213 = vst.msk [vmem:[%s3 + $0x20] sm:$0xf] %vm204, %v180
  %214 = vst.msk [vmem:[%s3 + $0x24] sm:$0xf] %vm204, %v181
  %215 = vst.msk [vmem:[%s3 + $0x28] sm:$0xf] %vm204, %v182
  %216 = vst.msk [vmem:[%s3 + $0x2c] sm:$0xf] %vm204, %v183
  %217 = vst.msk [vmem:[%s3 + $0x30] sm:$0xf] %vm204, %v184
  %218 = vst.msk [vmem:[%s3 + $0x34] sm:$0xf] %vm204, %v185
  %219 = vst.msk [vmem:[%s3 + $0x38] sm:$0xf] %vm204, %v186
  %220 = vst.msk [vmem:[%s3 + $0x3c] sm:$0xf] %vm204, %v187
  // Predicated region
  $region14: #{_lambda_.12} parent=0 // pred_check
    _
  $region15: #{_lambda_.12} parent=0 // pred_check_branch
    %222 = sbr.rel (0) target = $region17
  $region16: #{_lambda_.12} parent=0 // pred_region
    _
  $region17: #{_lambda_.12} parent=0 // pred_fallthru
    _
  // Predicated region
  $region18: #{_lambda_.12} parent=0 // pred_check
    _
  $region19: #{_lambda_.12} parent=0 // pred_check_branch
    %224 = sbr.rel (0) target = $region21
  $region20: #{_lambda_.12} parent=0 // pred_region
    _
  $region21: #{_lambda_.12} parent=0 // pred_fallthru
    _

// kernel: _lambda_.13
$region0: #{_lambda_.13}
  #allocation0 [shape = 'u32[]', space=smem, size = 0x4, offset = 0x4, fixed_abs, tag = 'smem constant byte address 0x4 - core index']
  #allocation1 [shape = 'u32[144,128]{1,0:T(1,128)}', space=vmem, size = 0x12000, scoped, tag = 'internal scratch']
  #allocation2 [shape = 'f32[16,32]{1,0:T(8,128)}', space=vmem, size = 0x2000, scoped, tag = 'scratch operand']
  %s0 = inlined_call_operand.vmem [shape: bf16[16,1024], index: 0, kind: input, shape index: {}]
  %s1 = inlined_call_operand.vmem [shape: bf16[1024,32], index: 1, kind: input, shape index: {}]
  %s2 = inlined_call_operand.vmem [shape: f32[1,32], index: 2, kind: input, shape index: {}]
  %s3 = inlined_call_operand.vmem [shape: bf16[16,32], index: 3, kind: output, shape index: {0}]
  %s4 = inlined_call_operand.vmem [shape: f32[1,2,32], index: 4, kind: output, shape index: {1}]
  %5 = xla_tuple %s3, %s4
  %s6 = sld [smem:[#allocation0]]
  $region38: #{_lambda_.13} parent=0
    _
  %s8 = ssub.s32 1, %s6
  %s9 = scalar_select 0, %s8, %s6
  // Predicated region
  $region2: #{_lambda_.13} parent=0 // pred_check
    _
  $region3: #{_lambda_.13} parent=0 // pred_check_branch
    %11 = sbr.rel (0) target = $region5
  $region4: #{_lambda_.13} parent=0 // pred_region
    _
  $region5: #{_lambda_.13} parent=0 // pred_fallthru
    _
  // Predicated region
  $region6: #{_lambda_.13} parent=0 // pred_check
    _
  $region7: #{_lambda_.13} parent=0 // pred_check_branch
    %13 = sbr.rel (0) target = $region9
  $region8: #{_lambda_.13} parent=0 // pred_region
    _
  $region9: #{_lambda_.13} parent=0 // pred_fallthru
    _
  // Predicated region
  $region10: #{_lambda_.13} parent=0 // pred_check
    _
  $region11: #{_lambda_.13} parent=0 // pred_check_branch
    %15 = sbr.rel (0) target = $region13
  $region12: #{_lambda_.13} parent=0 // pred_region
    _
  $region13: #{_lambda_.13} parent=0 // pred_fallthru
    _
  %p17 = scmp.eq.s32.totalorder 0, 0
  // Predicated region
  $region14: #{_lambda_.13} parent=0 // pred_check
    %p18 = pneg %p17
  $region15: #{_lambda_.13} parent=0 // pred_check_branch
    %20 = sbr.rel (%p18) target = $region17
  $region16: #{_lambda_.13} parent=0 // pred_region
    %vm21 = vcmask 261120
    %22 = vst.msk [vmem:[#allocation2] sm:$0xff] %vm21, 0.0
    %23 = vst.msk [vmem:[#allocation2 + $0x8] sm:$0xff] %vm21, 0.0
  $region17: #{_lambda_.13} parent=0 // pred_fallthru
    _
  %s24 = smul.u32 0, 1024
  %s25 = sshra.s32 %s24, 3
  %s26 = sand.u32 %s24, 7
  %s27 = smul.addr %s25, 4
  %s28 = scalar_lea.vmem %s1, %s27
  %v29 = vld [vmem:[%s28] sm:$0xf]
  %v30 = vld [vmem:[%s28 + $0x4] sm:$0xf]
  %v31 = vld [vmem:[%s28 + $0x8] sm:$0xf]
  %v32 = vld [vmem:[%s28 + $0xc] sm:$0xf]
  %v33 = vld [vmem:[%s28 + $0x10] sm:$0xf]
  %v34 = vld [vmem:[%s28 + $0x14] sm:$0xf]
  %v35 = vld [vmem:[%s28 + $0x18] sm:$0xf]
  %v36 = vld [vmem:[%s28 + $0x1c] sm:$0xf]
  %v37 = vld [vmem:[%s28 + $0x20] sm:$0xf]
  %v38 = vld [vmem:[%s28 + $0x24] sm:$0xf]
  %v39 = vld [vmem:[%s28 + $0x28] sm:$0xf]
  %v40 = vld [vmem:[%s28 + $0x2c] sm:$0xf]
  %v41 = vld [vmem:[%s28 + $0x30] sm:$0xf]
  %v42 = vld [vmem:[%s28 + $0x34] sm:$0xf]
  %v43 = vld [vmem:[%s28 + $0x38] sm:$0xf]
  %v44 = vld [vmem:[%s28 + $0x3c] sm:$0xf]
  %v45 = vld [vmem:[%s28 + $0x40] sm:$0xf]
  %v46 = vld [vmem:[%s28 + $0x44] sm:$0xf]
  %v47 = vld [vmem:[%s28 + $0x48] sm:$0xf]
  %v48 = vld [vmem:[%s28 + $0x4c] sm:$0xf]
  %v49 = vld [vmem:[%s28 + $0x50] sm:$0xf]
  %v50 = vld [vmem:[%s28 + $0x54] sm:$0xf]
  %v51 = vld [vmem:[%s28 + $0x58] sm:$0xf]
  %v52 = vld [vmem:[%s28 + $0x5c] sm:$0xf]
  %v53 = vld [vmem:[%s28 + $0x60] sm:$0xf]
  %v54 = vld [vmem:[%s28 + $0x64] sm:$0xf]
  %v55 = vld [vmem:[%s28 + $0x68] sm:$0xf]
  %v56 = vld [vmem:[%s28 + $0x6c] sm:$0xf]
  %v57 = vld [vmem:[%s28 + $0x70] sm:$0xf]
  %v58 = vld [vmem:[%s28 + $0x74] sm:$0xf]
  %v59 = vld [vmem:[%s28 + $0x78] sm:$0xf]
  %v60 = vld [vmem:[%s28 + $0x7c] sm:$0xf]
  %v61 = vld [vmem:[%s28 + $0x80] sm:$0xf]
  %v62 = vld [vmem:[%s28 + $0x84] sm:$0xf]
  %v63 = vld [vmem:[%s28 + $0x88] sm:$0xf]
  %v64 = vld [vmem:[%s28 + $0x8c] sm:$0xf]
  %v65 = vld [vmem:[%s28 + $0x90] sm:$0xf]
  %v66 = vld [vmem:[%s28 + $0x94] sm:$0xf]
  %v67 = vld [vmem:[%s28 + $0x98] sm:$0xf]
  %v68 = vld [vmem:[%s28 + $0x9c] sm:$0xf]
  %v69 = vld [vmem:[%s28 + $0xa0] sm:$0xf]
  %v70 = vld [vmem:[%s28 + $0xa4] sm:$0xf]
  %v71 = vld [vmem:[%s28 + $0xa8] sm:$0xf]
  %v72 = vld [vmem:[%s28 + $0xac] sm:$0xf]
  %v73 = vld [vmem:[%s28 + $0xb0] sm:$0xf]
  %v74 = vld [vmem:[%s28 + $0xb4] sm:$0xf]
  %v75 = vld [vmem:[%s28 + $0xb8] sm:$0xf]
  %v76 = vld [vmem:[%s28 + $0xbc] sm:$0xf]
  %v77 = vld [vmem:[%s28 + $0xc0] sm:$0xf]
  %v78 = vld [vmem:[%s28 + $0xc4] sm:$0xf]
  %v79 = vld [vmem:[%s28 + $0xc8] sm:$0xf]
  %v80 = vld [vmem:[%s28 + $0xcc] sm:$0xf]
  %v81 = vld [vmem:[%s28 + $0xd0] sm:$0xf]
  %v82 = vld [vmem:[%s28 + $0xd4] sm:$0xf]
  %v83 = vld [vmem:[%s28 + $0xd8] sm:$0xf]
  %v84 = vld [vmem:[%s28 + $0xdc] sm:$0xf]
  %v85 = vld [vmem:[%s28 + $0xe0] sm:$0xf]
  %v86 = vld [vmem:[%s28 + $0xe4] sm:$0xf]
  %v87 = vld [vmem:[%s28 + $0xe8] sm:$0xf]
  %v88 = vld [vmem:[%s28 + $0xec] sm:$0xf]
  %v89 = vld [vmem:[%s28 + $0xf0] sm:$0xf]
  %v90 = vld [vmem:[%s28 + $0xf4] sm:$0xf]
  %v91 = vld [vmem:[%s28 + $0xf8] sm:$0xf]
  %v92 = vld [vmem:[%s28 + $0xfc] sm:$0xf]
  %v93 = vld [vmem:[%s28 + $0x100] sm:$0xf]
  %v94 = vld [vmem:[%s28 + $0x104] sm:$0xf]
  %v95 = vld [vmem:[%s28 + $0x108] sm:$0xf]
  %v96 = vld [vmem:[%s28 + $0x10c] sm:$0xf]
  %v97 = vld [vmem:[%s28 + $0x110] sm:$0xf]
  %v98 = vld [vmem:[%s28 + $0x114] sm:$0xf]
  %v99 = vld [vmem:[%s28 + $0x118] sm:$0xf]
  %v100 = vld [vmem:[%s28 + $0x11c] sm:$0xf]
  %v101 = vld [vmem:[%s28 + $0x120] sm:$0xf]
  %v102 = vld [vmem:[%s28 + $0x124] sm:$0xf]
  %v103 = vld [vmem:[%s28 + $0x128] sm:$0xf]
  %v104 = vld [vmem:[%s28 + $0x12c] sm:$0xf]
  %v105 = vld [vmem:[%s28 + $0x130] sm:$0xf]
  %v106 = vld [vmem:[%s28 + $0x134] sm:$0xf]
  %v107 = vld [vmem:[%s28 + $0x138] sm:$0xf]
  %v108 = vld [vmem:[%s28 + $0x13c] sm:$0xf]
  %v109 = vld [vmem:[%s28 + $0x140] sm:$0xf]
  %v110 = vld [vmem:[%s28 + $0x144] sm:$0xf]
  %v111 = vld [vmem:[%s28 + $0x148] sm:$0xf]
  %v112 = vld [vmem:[%s28 + $0x14c] sm:$0xf]
  %v113 = vld [vmem:[%s28 + $0x150] sm:$0xf]
  %v114 = vld [vmem:[%s28 + $0x154] sm:$0xf]
  %v115 = vld [vmem:[%s28 + $0x158] sm:$0xf]
  %v116 = vld [vmem:[%s28 + $0x15c] sm:$0xf]
  %v117 = vld [vmem:[%s28 + $0x160] sm:$0xf]
  %v118 = vld [vmem:[%s28 + $0x164] sm:$0xf]
  %v119 = vld [vmem:[%s28 + $0x168] sm:$0xf]
  %v120 = vld [vmem:[%s28 + $0x16c] sm:$0xf]
  %v121 = vld [vmem:[%s28 + $0x170] sm:$0xf]
  %v122 = vld [vmem:[%s28 + $0x174] sm:$0xf]
  %v123 = vld [vmem:[%s28 + $0x178] sm:$0xf]
  %v124 = vld [vmem:[%s28 + $0x17c] sm:$0xf]
  %v125 = vld [vmem:[%s28 + $0x180] sm:$0xf]
  %v126 = vld [vmem:[%s28 + $0x184] sm:$0xf]
  %v127 = vld [vmem:[%s28 + $0x188] sm:$0xf]
  %v128 = vld [vmem:[%s28 + $0x18c] sm:$0xf]
  %v129 = vld [vmem:[%s28 + $0x190] sm:$0xf]
  %v130 = vld [vmem:[%s28 + $0x194] sm:$0xf]
  %v131 = vld [vmem:[%s28 + $0x198] sm:$0xf]
  %v132 = vld [vmem:[%s28 + $0x19c] sm:$0xf]
  %v133 = vld [vmem:[%s28 + $0x1a0] sm:$0xf]
  %v134 = vld [vmem:[%s28 + $0x1a4] sm:$0xf]
  %v135 = vld [vmem:[%s28 + $0x1a8] sm:$0xf]
  %v136 = vld [vmem:[%s28 + $0x1ac] sm:$0xf]
  %v137 = vld [vmem:[%s28 + $0x1b0] sm:$0xf]
  %v138 = vld [vmem:[%s28 + $0x1b4] sm:$0xf]
  %v139 = vld [vmem:[%s28 + $0x1b8] sm:$0xf]
  %v140 = vld [vmem:[%s28 + $0x1bc] sm:$0xf]
  %v141 = vld [vmem:[%s28 + $0x1c0] sm:$0xf]
  %v142 = vld [vmem:[%s28 + $0x1c4] sm:$0xf]
  %v143 = vld [vmem:[%s28 + $0x1c8] sm:$0xf]
  %v144 = vld [vmem:[%s28 + $0x1cc] sm:$0xf]
  %v145 = vld [vmem:[%s28 + $0x1d0] sm:$0xf]
  %v146 = vld [vmem:[%s28 + $0x1d4] sm:$0xf]
  %v147 = vld [vmem:[%s28 + $0x1d8] sm:$0xf]
  %v148 = vld [vmem:[%s28 + $0x1dc] sm:$0xf]
  %v149 = vld [vmem:[%s28 + $0x1e0] sm:$0xf]
  %v150 = vld [vmem:[%s28 + $0x1e4] sm:$0xf]
  %v151 = vld [vmem:[%s28 + $0x1e8] sm:$0xf]
  %v152 = vld [vmem:[%s28 + $0x1ec] sm:$0xf]
  %v153 = vld [vmem:[%s28 + $0x1f0] sm:$0xf]
  %v154 = vld [vmem:[%s28 + $0x1f4] sm:$0xf]
  %v155 = vld [vmem:[%s28 + $0x1f8] sm:$0xf]
  %v156 = vld [vmem:[%s28 + $0x1fc] sm:$0xf]
  %v157 = vld [vmem:[#allocation2] sm:$0xff]
  %v158 = vld [vmem:[#allocation2 + $0x8] sm:$0xff]
  %v159 = vld [vmem:[%s0] sm:$0xff]
  %v160 = vld [vmem:[%s0 + $0x8] sm:$0xff]
  %v161 = vld [vmem:[%s0 + $0x10] sm:$0xff]
  %v162 = vld [vmem:[%s0 + $0x18] sm:$0xff]
  %v163 = vld [vmem:[%s0 + $0x20] sm:$0xff]
  %v164 = vld [vmem:[%s0 + $0x28] sm:$0xff]
  %v165 = vld [vmem:[%s0 + $0x30] sm:$0xff]
  %v166 = vld [vmem:[%s0 + $0x38] sm:$0xff]
  %v175 = vunpack.c.l.b16 %v159
  %v176 = vunpack.c.h.b16 %v159
  %v177 = vunpack.c.l.b16 %v160
  %v178 = vunpack.c.h.b16 %v160
  %v179 = vunpack.c.l.b16 %v161
  %v180 = vunpack.c.h.b16 %v161
  %v181 = vunpack.c.l.b16 %v162
  %v182 = vunpack.c.h.b16 %v162
  %v183 = vunpack.c.l.b16 %v163
  %v184 = vunpack.c.h.b16 %v163
  %v185 = vunpack.c.l.b16 %v164
  %v186 = vunpack.c.h.b16 %v164
  %v187 = vunpack.c.l.b16 %v165
  %v188 = vunpack.c.h.b16 %v165
  %v189 = vunpack.c.l.b16 %v166
  %v190 = vunpack.c.h.b16 %v166
  %v191 = vpack.c.b16 %v183, %v175
  %v192 = vpack.c.b16 %v184, %v176
  %v193 = vpack.c.b16 %v185, %v177
  %v194 = vpack.c.b16 %v186, %v178
  %v195 = vpack.c.b16 %v187, %v179
  %v196 = vpack.c.b16 %v188, %v180
  %v197 = vpack.c.b16 %v189, %v181
  %v198 = vpack.c.b16 %v190, %v182
  %v335 = vunpack.c.l.b16 %v29
  %v336 = vunpack.c.l.b16 %v30
  %v337 = vunpack.c.l.b16 %v31
  %v338 = vunpack.c.l.b16 %v32
  %v339 = vunpack.c.l.b16 %v33
  %v340 = vunpack.c.l.b16 %v34
  %v341 = vunpack.c.l.b16 %v35
  %v342 = vunpack.c.l.b16 %v36
  %v343 = vunpack.c.l.b16 %v37
  %v344 = vunpack.c.l.b16 %v38
  %v345 = vunpack.c.l.b16 %v39
  %v346 = vunpack.c.l.b16 %v40
  %v347 = vunpack.c.l.b16 %v41
  %v348 = vunpack.c.l.b16 %v42
  %v349 = vunpack.c.l.b16 %v43
  %v350 = vunpack.c.l.b16 %v44
  %v351 = vunpack.c.l.b16 %v45
  %v352 = vunpack.c.l.b16 %v46
  %v353 = vunpack.c.l.b16 %v47
  %v354 = vunpack.c.l.b16 %v48
  %v355 = vunpack.c.l.b16 %v49
  %v356 = vunpack.c.l.b16 %v50
  %v357 = vunpack.c.l.b16 %v51
  %v358 = vunpack.c.l.b16 %v52
  %v359 = vunpack.c.l.b16 %v53
  %v360 = vunpack.c.l.b16 %v54
  %v361 = vunpack.c.l.b16 %v55
  %v362 = vunpack.c.l.b16 %v56
  %v363 = vunpack.c.l.b16 %v57
  %v364 = vunpack.c.l.b16 %v58
  %v365 = vunpack.c.l.b16 %v59
  %v366 = vunpack.c.l.b16 %v60
  %v367 = vunpack.c.l.b16 %v61
  %v368 = vunpack.c.l.b16 %v62
  %v369 = vunpack.c.l.b16 %v63
  %v370 = vunpack.c.l.b16 %v64
  %v371 = vunpack.c.l.b16 %v65
  %v372 = vunpack.c.l.b16 %v66
  %v373 = vunpack.c.l.b16 %v67
  %v374 = vunpack.c.l.b16 %v68
  %v375 = vunpack.c.l.b16 %v69
  %v376 = vunpack.c.l.b16 %v70
  %v377 = vunpack.c.l.b16 %v71
  %v378 = vunpack.c.l.b16 %v72
  %v379 = vunpack.c.l.b16 %v73
  %v380 = vunpack.c.l.b16 %v74
  %v381 = vunpack.c.l.b16 %v75
  %v382 = vunpack.c.l.b16 %v76
  %v383 = vunpack.c.l.b16 %v77
  %v384 = vunpack.c.l.b16 %v78
  %v385 = vunpack.c.l.b16 %v79
  %v386 = vunpack.c.l.b16 %v80
  %v387 = vunpack.c.l.b16 %v81
  %v388 = vunpack.c.l.b16 %v82
  %v389 = vunpack.c.l.b16 %v83
  %v390 = vunpack.c.l.b16 %v84
  %v391 = vunpack.c.l.b16 %v85
  %v392 = vunpack.c.l.b16 %v86
  %v393 = vunpack.c.l.b16 %v87
  %v394 = vunpack.c.l.b16 %v88
  %v395 = vunpack.c.l.b16 %v89
  %v396 = vunpack.c.l.b16 %v90
  %v397 = vunpack.c.l.b16 %v91
  %v398 = vunpack.c.l.b16 %v92
  %v399 = vunpack.c.l.b16 %v93
  %v400 = vunpack.c.l.b16 %v94
  %v401 = vunpack.c.l.b16 %v95
  %v402 = vunpack.c.l.b16 %v96
  %v403 = vunpack.c.l.b16 %v97
  %v404 = vunpack.c.l.b16 %v98
  %v405 = vunpack.c.l.b16 %v99
  %v406 = vunpack.c.l.b16 %v100
  %v407 = vunpack.c.l.b16 %v101
  %v408 = vunpack.c.l.b16 %v102
  %v409 = vunpack.c.l.b16 %v103
  %v410 = vunpack.c.l.b16 %v104
  %v411 = vunpack.c.l.b16 %v105
  %v412 = vunpack.c.l.b16 %v106
  %v413 = vunpack.c.l.b16 %v107
  %v414 = vunpack.c.l.b16 %v108
  %v415 = vunpack.c.l.b16 %v109
  %v416 = vunpack.c.l.b16 %v110
  %v417 = vunpack.c.l.b16 %v111
  %v418 = vunpack.c.l.b16 %v112
  %v419 = vunpack.c.l.b16 %v113
  %v420 = vunpack.c.l.b16 %v114
  %v421 = vunpack.c.l.b16 %v115
  %v422 = vunpack.c.l.b16 %v116
  %v423 = vunpack.c.l.b16 %v117
  %v424 = vunpack.c.l.b16 %v118
  %v425 = vunpack.c.l.b16 %v119
  %v426 = vunpack.c.l.b16 %v120
  %v427 = vunpack.c.l.b16 %v121
  %v428 = vunpack.c.l.b16 %v122
  %v429 = vunpack.c.l.b16 %v123
  %v430 = vunpack.c.l.b16 %v124
  %v431 = vunpack.c.l.b16 %v125
  %v432 = vunpack.c.l.b16 %v126
  %v433 = vunpack.c.l.b16 %v127
  %v434 = vunpack.c.l.b16 %v128
  %v435 = vunpack.c.l.b16 %v129
  %v436 = vunpack.c.l.b16 %v130
  %v437 = vunpack.c.l.b16 %v131
  %v438 = vunpack.c.l.b16 %v132
  %v439 = vunpack.c.l.b16 %v133
  %v440 = vunpack.c.l.b16 %v134
  %v441 = vunpack.c.l.b16 %v135
  %v442 = vunpack.c.l.b16 %v136
  %v443 = vunpack.c.l.b16 %v137
  %v444 = vunpack.c.l.b16 %v138
  %v445 = vunpack.c.l.b16 %v139
  %v446 = vunpack.c.l.b16 %v140
  %v447 = vunpack.c.l.b16 %v141
  %v448 = vunpack.c.l.b16 %v142
  %v449 = vunpack.c.l.b16 %v143
  %v450 = vunpack.c.l.b16 %v144
  %v451 = vunpack.c.l.b16 %v145
  %v452 = vunpack.c.l.b16 %v146
  %v453 = vunpack.c.l.b16 %v147
  %v454 = vunpack.c.l.b16 %v148
  %v455 = vunpack.c.l.b16 %v149
  %v456 = vunpack.c.l.b16 %v150
  %v457 = vunpack.c.l.b16 %v151
  %v458 = vunpack.c.l.b16 %v152
  %v459 = vunpack.c.l.b16 %v153
  %v460 = vunpack.c.l.b16 %v154
  %v461 = vunpack.c.l.b16 %v155
  %v462 = vunpack.c.l.b16 %v156
  %v463 = vpack.c.b16 %v336, %v335
  %v464 = vpack.c.b16 %v338, %v337
  %v465 = vpack.c.b16 %v340, %v339
  %v466 = vpack.c.b16 %v342, %v341
  %v467 = vpack.c.b16 %v344, %v343
  %v468 = vpack.c.b16 %v346, %v345
  %v469 = vpack.c.b16 %v348, %v347
  %v470 = vpack.c.b16 %v350, %v349
  %v471 = vpack.c.b16 %v352, %v351
  %v472 = vpack.c.b16 %v354, %v353
  %v473 = vpack.c.b16 %v356, %v355
  %v474 = vpack.c.b16 %v358, %v357
  %v475 = vpack.c.b16 %v360, %v359
  %v476 = vpack.c.b16 %v362, %v361
  %v477 = vpack.c.b16 %v364, %v363
  %v478 = vpack.c.b16 %v366, %v365
  %v479 = vpack.c.b16 %v368, %v367
  %v480 = vpack.c.b16 %v370, %v369
  %v481 = vpack.c.b16 %v372, %v371
  %v482 = vpack.c.b16 %v374, %v373
  %v483 = vpack.c.b16 %v376, %v375
  %v484 = vpack.c.b16 %v378, %v377
  %v485 = vpack.c.b16 %v380, %v379
  %v486 = vpack.c.b16 %v382, %v381
  %v487 = vpack.c.b16 %v384, %v383
  %v488 = vpack.c.b16 %v386, %v385
  %v489 = vpack.c.b16 %v388, %v387
  %v490 = vpack.c.b16 %v390, %v389
  %v491 = vpack.c.b16 %v392, %v391
  %v492 = vpack.c.b16 %v394, %v393
  %v493 = vpack.c.b16 %v396, %v395
  %v494 = vpack.c.b16 %v398, %v397
  %v495 = vpack.c.b16 %v400, %v399
  %v496 = vpack.c.b16 %v402, %v401
  %v497 = vpack.c.b16 %v404, %v403
  %v498 = vpack.c.b16 %v406, %v405
  %v499 = vpack.c.b16 %v408, %v407
  %v500 = vpack.c.b16 %v410, %v409
  %v501 = vpack.c.b16 %v412, %v411
  %v502 = vpack.c.b16 %v414, %v413
  %v503 = vpack.c.b16 %v416, %v415
  %v504 = vpack.c.b16 %v418, %v417
  %v505 = vpack.c.b16 %v420, %v419
  %v506 = vpack.c.b16 %v422, %v421
  %v507 = vpack.c.b16 %v424, %v423
  %v508 = vpack.c.b16 %v426, %v425
  %v509 = vpack.c.b16 %v428, %v427
  %v510 = vpack.c.b16 %v430, %v429
  %v511 = vpack.c.b16 %v432, %v431
  %v512 = vpack.c.b16 %v434, %v433
  %v513 = vpack.c.b16 %v436, %v435
  %v514 = vpack.c.b16 %v438, %v437
  %v515 = vpack.c.b16 %v440, %v439
  %v516 = vpack.c.b16 %v442, %v441
  %v517 = vpack.c.b16 %v444, %v443
  %v518 = vpack.c.b16 %v446, %v445
  %v519 = vpack.c.b16 %v448, %v447
  %v520 = vpack.c.b16 %v450, %v449
  %v521 = vpack.c.b16 %v452, %v451
  %v522 = vpack.c.b16 %v454, %v453
  %v523 = vpack.c.b16 %v456, %v455
  %v524 = vpack.c.b16 %v458, %v457
  %v525 = vpack.c.b16 %v460, %v459
  %v526 = vpack.c.b16 %v462, %v461
  %591 = vmatprep.subr.bf16.mxu0 0
  %592 = vmatpush1.bf16.msra.mxu0 %v470
  %593 = vmatprep.subr.bf16.mxu0 0
  %594 = vmatpush1.bf16.msra.mxu0 %v469
  %595 = vmatprep.subr.bf16.mxu0 0
  %596 = vmatpush1.bf16.msra.mxu0 %v468
  %597 = vmatprep.subr.bf16.mxu0 0
  %598 = vmatpush1.bf16.msra.mxu0 %v467
  %599 = vmatprep.subr.bf16.mxu0 0
  %600 = vmatpush1.bf16.msra.mxu0 %v466
  %601 = vmatprep.subr.bf16.mxu0 0
  %602 = vmatpush1.bf16.msra.mxu0 %v465
  %603 = vmatprep.subr.bf16.mxu0 0
  %604 = vmatpush1.bf16.msra.mxu0 %v464
  %605 = vmatprep.subr.bf16.mxu0 0
  %606 = vmatpush1.bf16.msra.mxu0 %v463
  %607 = vmatprep.subr.bf16.mxu0 0
  %608 = vmatpush2.bf16.msra.mxu0 %v478
  %609 = vmatprep.subr.bf16.mxu0 0
  %610 = vmatpush2.bf16.msra.mxu0 %v477
  %611 = vmatprep.subr.bf16.mxu0 0
  %612 = vmatpush2.bf16.msra.mxu0 %v476
  %613 = vmatprep.subr.bf16.mxu0 0
  %614 = vmatpush2.bf16.msra.mxu0 %v475
  %615 = vmatprep.subr.bf16.mxu0 0
  %616 = vmatpush2.bf16.msra.mxu0 %v474
  %617 = vmatprep.subr.bf16.mxu0 0
  %618 = vmatpush2.bf16.msra.mxu0 %v473
  %619 = vmatprep.subr.bf16.mxu0 0
  %620 = vmatpush2.bf16.msra.mxu0 %v472
  %621 = vmatprep.subr.bf16.mxu0 0
  %622 = vmatpush2.bf16.msra.mxu0 %v471
  %623 = vmatprep.mubr.bf16.mxu0 %v192
  %624 = vmatmul.mubr.bf16.gmra.mxu0 %v191
  %v625 = vpop.f32.mrf.mxu0
  %v626 = vadd.f32 0.0, %v625
  %v627 = vpop.f32.mrf.mxu0
  %v628 = vpop.f32.mrf.mxu0
  %v629 = vadd.f32 0.0, %v628
  %v630 = vpop.f32.mrf.mxu0
  %631 = vdwg.mxu0
  %632 = vmatprep.subr.bf16.mxu0 0
  %633 = vmatpush1.bf16.msra.mxu0 %v486
  %634 = vmatprep.subr.bf16.mxu0 0
  %635 = vmatpush1.bf16.msra.mxu0 %v485
  %636 = vmatprep.subr.bf16.mxu0 0
  %637 = vmatpush1.bf16.msra.mxu0 %v484
  %638 = vmatprep.subr.bf16.mxu0 0
  %639 = vmatpush1.bf16.msra.mxu0 %v483
  %640 = vmatprep.subr.bf16.mxu0 0
  %641 = vmatpush1.bf16.msra.mxu0 %v482
  %642 = vmatprep.subr.bf16.mxu0 0
  %643 = vmatpush1.bf16.msra.mxu0 %v481
  %644 = vmatprep.subr.bf16.mxu0 0
  %645 = vmatpush1.bf16.msra.mxu0 %v480
  %646 = vmatprep.subr.bf16.mxu0 0
  %647 = vmatpush1.bf16.msra.mxu0 %v479
  %648 = vmatprep.subr.bf16.mxu0 0
  %649 = vmatpush2.bf16.msra.mxu0 %v494
  %650 = vmatprep.subr.bf16.mxu0 0
  %651 = vmatpush2.bf16.msra.mxu0 %v493
  %652 = vmatprep.subr.bf16.mxu0 0
  %653 = vmatpush2.bf16.msra.mxu0 %v492
  %654 = vmatprep.subr.bf16.mxu0 0
  %655 = vmatpush2.bf16.msra.mxu0 %v491
  %656 = vmatprep.subr.bf16.mxu0 0
  %657 = vmatpush2.bf16.msra.mxu0 %v490
  %658 = vmatprep.subr.bf16.mxu0 0
  %659 = vmatpush2.bf16.msra.mxu0 %v489
  %660 = vmatprep.subr.bf16.mxu0 0
  %661 = vmatpush2.bf16.msra.mxu0 %v488
  %662 = vmatprep.subr.bf16.mxu0 0
  %663 = vmatpush2.bf16.msra.mxu0 %v487
  %664 = vmatprep.mubr.bf16.mxu0 %v194
  %665 = vmatmul.mubr.bf16.gmra.mxu0 %v193
  %v666 = vpop.f32.mrf.mxu0
  %v667 = vadd.f32 %v626, %v666
  %v668 = vpop.f32.mrf.mxu0
  %v669 = vpop.f32.mrf.mxu0
  %v670 = vadd.f32 %v629, %v669
  %v671 = vpop.f32.mrf.mxu0
  %672 = vdwg.mxu0
  %673 = vmatprep.subr.bf16.mxu0 0
  %674 = vmatpush1.bf16.msra.mxu0 %v502
  %675 = vmatprep.subr.bf16.mxu0 0
  %676 = vmatpush1.bf16.msra.mxu0 %v501
  %677 = vmatprep.subr.bf16.mxu0 0
  %678 = vmatpush1.bf16.msra.mxu0 %v500
  %679 = vmatprep.subr.bf16.mxu0 0
  %680 = vmatpush1.bf16.msra.mxu0 %v499
  %681 = vmatprep.subr.bf16.mxu0 0
  %682 = vmatpush1.bf16.msra.mxu0 %v498
  %683 = vmatprep.subr.bf16.mxu0 0
  %684 = vmatpush1.bf16.msra.mxu0 %v497
  %685 = vmatprep.subr.bf16.mxu0 0
  %686 = vmatpush1.bf16.msra.mxu0 %v496
  %687 = vmatprep.subr.bf16.mxu0 0
  %688 = vmatpush1.bf16.msra.mxu0 %v495
  %689 = vmatprep.subr.bf16.mxu0 0
  %690 = vmatpush2.bf16.msra.mxu0 %v510
  %691 = vmatprep.subr.bf16.mxu0 0
  %692 = vmatpush2.bf16.msra.mxu0 %v509
  %693 = vmatprep.subr.bf16.mxu0 0
  %694 = vmatpush2.bf16.msra.mxu0 %v508
  %695 = vmatprep.subr.bf16.mxu0 0
  %696 = vmatpush2.bf16.msra.mxu0 %v507
  %697 = vmatprep.subr.bf16.mxu0 0
  %698 = vmatpush2.bf16.msra.mxu0 %v506
  %699 = vmatprep.subr.bf16.mxu0 0
  %700 = vmatpush2.bf16.msra.mxu0 %v505
  %701 = vmatprep.subr.bf16.mxu0 0
  %702 = vmatpush2.bf16.msra.mxu0 %v504
  %703 = vmatprep.subr.bf16.mxu0 0
  %704 = vmatpush2.bf16.msra.mxu0 %v503
  %705 = vmatprep.mubr.bf16.mxu0 %v196
  %706 = vmatmul.mubr.bf16.gmra.mxu0 %v195
  %v707 = vpop.f32.mrf.mxu0
  %v708 = vadd.f32 %v667, %v707
  %v709 = vpop.f32.mrf.mxu0
  %v710 = vpop.f32.mrf.mxu0
  %v711 = vadd.f32 %v670, %v710
  %v712 = vpop.f32.mrf.mxu0
  %713 = vdwg.mxu0
  %714 = vmatprep.subr.bf16.mxu0 0
  %715 = vmatpush1.bf16.msra.mxu0 %v518
  %716 = vmatprep.subr.bf16.mxu0 0
  %717 = vmatpush1.bf16.msra.mxu0 %v517
  %718 = vmatprep.subr.bf16.mxu0 0
  %719 = vmatpush1.bf16.msra.mxu0 %v516
  %720 = vmatprep.subr.bf16.mxu0 0
  %721 = vmatpush1.bf16.msra.mxu0 %v515
  %722 = vmatprep.subr.bf16.mxu0 0
  %723 = vmatpush1.bf16.msra.mxu0 %v514
  %724 = vmatprep.subr.bf16.mxu0 0
  %725 = vmatpush1.bf16.msra.mxu0 %v513
  %726 = vmatprep.subr.bf16.mxu0 0
  %727 = vmatpush1.bf16.msra.mxu0 %v512
  %728 = vmatprep.subr.bf16.mxu0 0
  %729 = vmatpush1.bf16.msra.mxu0 %v511
  %730 = vmatprep.subr.bf16.mxu0 0
  %731 = vmatpush2.bf16.msra.mxu0 %v526
  %732 = vmatprep.subr.bf16.mxu0 0
  %733 = vmatpush2.bf16.msra.mxu0 %v525
  %734 = vmatprep.subr.bf16.mxu0 0
  %735 = vmatpush2.bf16.msra.mxu0 %v524
  %736 = vmatprep.subr.bf16.mxu0 0
  %737 = vmatpush2.bf16.msra.mxu0 %v523
  %738 = vmatprep.subr.bf16.mxu0 0
  %739 = vmatpush2.bf16.msra.mxu0 %v522
  %740 = vmatprep.subr.bf16.mxu0 0
  %741 = vmatpush2.bf16.msra.mxu0 %v521
  %742 = vmatprep.subr.bf16.mxu0 0
  %743 = vmatpush2.bf16.msra.mxu0 %v520
  %744 = vmatprep.subr.bf16.mxu0 0
  %745 = vmatpush2.bf16.msra.mxu0 %v519
  %746 = vmatprep.mubr.bf16.mxu0 %v198
  %747 = vmatmul.mubr.bf16.gmra.mxu0 %v197
  %v748 = vpop.f32.mrf.mxu0
  %v749 = vadd.f32 %v708, %v748
  %v750 = vpop.f32.mrf.mxu0
  %v751 = vpop.f32.mrf.mxu0
  %v752 = vadd.f32 %v711, %v751
  %v753 = vpop.f32.mrf.mxu0
  %754 = vdwg.mxu0
  %v755 = vadd.f32 %v157, %v749
  %v756 = vadd.f32 %v158, %v752
  %vm757 = vcmask 261120
  %758 = vst.msk [vmem:[#allocation2] sm:$0xff] %vm757, %v755
  %759 = vst.msk [vmem:[#allocation2 + $0x8] sm:$0xff] %vm757, %v756
  // Predicated region
  $region18: #{_lambda_.13} parent=0 // pred_check
    %p760 = pneg %p17
  $region19: #{_lambda_.13} parent=0 // pred_check_branch
    %762 = sbr.rel (%p760) target = $region21
  $region20: #{_lambda_.13} parent=0 // pred_region
    %v763 = vld [vmem:[#allocation2] sm:$0xff]
    %v764 = vld [vmem:[#allocation2 + $0x8] sm:$0xff]
    %v765 = vld [vmem:[%s2] sm:$0x1]
    %v767 = vlaneseq
    %v768 = vshrl.u32 %v767, 7
    %v769 = vsub.s32 0, %v768
    %v770 = vrot.slane %v765, %v769
    %v772 = vadd.f32 %v763, %v770
    %v773 = vadd.f32 %v764, %v770
    %v774 = vpack.c.bf16 %v773, %v772
    %v776 = vunpack.c.l.b16 %v774
    %v777 = vunpack.c.h.b16 %v774
    %v778 = vpack.c.b16 %v776, %v776
    %v779 = vpack.c.b16 %v777, %v777
    %vm782 = vcmask 257024
    %783 = vst.msk [vmem:[%s3] sm:$0xf] %vm782, %v778
    %784 = vst.msk [vmem:[%s3 + $0x4] sm:$0xf] %vm782, %v779
    %v785 = vsel %vm757, %v772, 0.0
    %v786 = vsel %vm757, %v773, 0.0
    %v787 = vadd.f32 %v785, %v786
    %v788 = vrot.slane %v787, 4
    %v789 = vadd.f32 %v787, %v788
    %v790 = vrot.slane %v789, 2
    %v791 = vadd.f32 %v789, %v790
    %v792 = vrot.slane %v791, 1
    %v793 = vadd.f32 %v791, %v792
    %v794 = vrcp.pop 16.0
    %v795 = vmul.f32 %v793, %v794
    %v796 = vsub.f32 %v772, %v795
    %v797 = vsub.f32 %v773, %v795
    %v798 = vmul.f32 %v796, %v796
    %v799 = vmul.f32 %v797, %v797
    %v800 = vsel %vm757, %v798, 0.0
    %v801 = vsel %vm757, %v799, 0.0
    %v802 = vadd.f32 %v800, %v801
    %v803 = vrot.slane %v802, 4
    %v804 = vadd.f32 %v802, %v803
    %v805 = vrot.slane %v804, 2
    %v806 = vadd.f32 %v804, %v805
    %v807 = vrot.slane %v806, 1
    %v808 = vadd.f32 %v806, %v807
    %vm809 = vcmask 253952
    %810 = vst.msk [vmem:[%s4] sm:$0x1] %vm809, %v793
    %811 = vst.msk [vmem:[%s4 + $0x1] sm:$0x1] %vm809, %v808
  $region21: #{_lambda_.13} parent=0 // pred_fallthru
    _
  // Predicated region
  $region22: #{_lambda_.13} parent=0 // pred_check
    _
  $region23: #{_lambda_.13} parent=0 // pred_check_branch
    %813 = sbr.rel (0) target = $region25
  $region24: #{_lambda_.13} parent=0 // pred_region
    _
  $region25: #{_lambda_.13} parent=0 // pred_fallthru
    _
  // Predicated region
  $region26: #{_lambda_.13} parent=0 // pred_check
    _
  $region27: #{_lambda_.13} parent=0 // pred_check_branch
    %815 = sbr.rel (0) target = $region29
  $region28: #{_lambda_.13} parent=0 // pred_region
    _
  $region29: #{_lambda_.13} parent=0 // pred_fallthru
    _
  // Predicated region
  $region30: #{_lambda_.13} parent=0 // pred_check
    _
  $region31: #{_lambda_.13} parent=0 // pred_check_branch
    %817 = sbr.rel (0) target = $region33
  $region32: #{_lambda_.13} parent=0 // pred_region
    _
  $region33: #{_lambda_.13} parent=0 // pred_fallthru
    _
  // Predicated region
  $region34: #{_lambda_.13} parent=0 // pred_check
    _
  $region35: #{_lambda_.13} parent=0 // pred_check_branch
    %819 = sbr.rel (0) target = $region37
  $region36: #{_lambda_.13} parent=0 // pred_region
    _
  $region37: #{_lambda_.13} parent=0 // pred_fallthru
    _

// kernel: _lambda_.14
$region0: #{_lambda_.14}
  #allocation0 [shape = 'u32[]', space=smem, size = 0x4, offset = 0x4, fixed_abs, tag = 'smem constant byte address 0x4 - core index']
  #allocation1 [shape = 'u32[144,128]{1,0:T(1,128)}', space=vmem, size = 0x12000, scoped, tag = 'internal scratch']
  %s0 = inlined_call_operand.vmem [shape: bf16[16,32], index: 0, kind: input, shape index: {}]
  %s1 = inlined_call_operand.vmem [shape: f32[1,32], index: 1, kind: input, shape index: {}]
  %s2 = inlined_call_operand.vmem [shape: f32[1,32], index: 2, kind: input, shape index: {}]
  %s3 = inlined_call_operand.vmem [shape: bf16[16,32], index: 3, kind: output, shape index: {}]
  %s4 = sld [smem:[#allocation0]]
  $region22: #{_lambda_.14} parent=0
    _
  %s6 = ssub.s32 1, %s4
  %s7 = scalar_select 0, %s6, %s4
  // Predicated region
  $region2: #{_lambda_.14} parent=0 // pred_check
    _
  $region3: #{_lambda_.14} parent=0 // pred_check_branch
    %9 = sbr.rel (0) target = $region5
  $region4: #{_lambda_.14} parent=0 // pred_region
    _
  $region5: #{_lambda_.14} parent=0 // pred_fallthru
    _
  // Predicated region
  $region6: #{_lambda_.14} parent=0 // pred_check
    _
  $region7: #{_lambda_.14} parent=0 // pred_check_branch
    %11 = sbr.rel (0) target = $region9
  $region8: #{_lambda_.14} parent=0 // pred_region
    _
  $region9: #{_lambda_.14} parent=0 // pred_fallthru
    _
  // Predicated region
  $region10: #{_lambda_.14} parent=0 // pred_check
    _
  $region11: #{_lambda_.14} parent=0 // pred_check_branch
    %13 = sbr.rel (0) target = $region13
  $region12: #{_lambda_.14} parent=0 // pred_region
    _
  $region13: #{_lambda_.14} parent=0 // pred_fallthru
    _
  %v14 = vld [vmem:[%s0] sm:$0xf]
  %v15 = vld [vmem:[%s0 + $0x4] sm:$0xf]
  %v16 = vunpack.c.l.bf16 %v14
  %v17 = vunpack.c.l.bf16 %v15
  %v18 = vld [vmem:[%s1] sm:$0x1]
  %v20 = vlaneseq
  %v21 = vshrl.u32 %v20, 7
  %v22 = vsub.s32 0, %v21
  %v23 = vrot.slane %v18, %v22
  %v25 = vmul.f32 %v16, %v23
  %v26 = vmul.f32 %v17, %v23
  %v27 = vld [vmem:[%s2] sm:$0x1]
  %v29 = vlaneseq
  %v30 = vshrl.u32 %v29, 7
  %v31 = vsub.s32 0, %v30
  %v32 = vrot.slane %v27, %v31
  %v34 = vadd.f32 %v25, %v32
  %v35 = vadd.f32 %v26, %v32
  %vm36 = vcmp.ge.f32.partialorder %v34, 0.0
  %vm37 = vcmp.ge.f32.partialorder %v35, 0.0
  %v38 = vmul.f32 %v34, 0.2
  %v39 = vmul.f32 %v35, 0.2
  %v40 = vsel %vm36, %v34, %v38
  %v41 = vsel %vm37, %v35, %v39
  %v42 = vpack.c.bf16 %v41, %v40
  %v44 = vunpack.c.l.b16 %v42
  %v45 = vunpack.c.h.b16 %v42
  %v46 = vpack.c.b16 %v44, %v44
  %v47 = vpack.c.b16 %v45, %v45
  %vm50 = vcmask 257024
  %51 = vst.msk [vmem:[%s3] sm:$0xf] %vm50, %v46
  %52 = vst.msk [vmem:[%s3 + $0x4] sm:$0xf] %vm50, %v47
  // Predicated region
  $region14: #{_lambda_.14} parent=0 // pred_check
    _
  $region15: #{_lambda_.14} parent=0 // pred_check_branch
    %54 = sbr.rel (0) target = $region17
  $region16: #{_lambda_.14} parent=0 // pred_region
    _
  $region17: #{_lambda_.14} parent=0 // pred_fallthru
    _
  // Predicated region
  $region18: #{_lambda_.14} parent=0 // pred_check
    _
  $region19: #{_lambda_.14} parent=0 // pred_check_branch
    %56 = sbr.rel (0) target = $region21
  $region20: #{_lambda_.14} parent=0 // pred_region
    _
  $region21: #{_lambda_.14} parent=0 // pred_fallthru
    _

// kernel: _lambda_.15
$region0: #{_lambda_.15}
  #allocation0 [shape = 'u32[]', space=smem, size = 0x4, offset = 0x4, fixed_abs, tag = 'smem constant byte address 0x4 - core index']
  #allocation1 [shape = 'u32[144,128]{1,0:T(1,128)}', space=vmem, size = 0x12000, scoped, tag = 'internal scratch']
  #allocation2 [shape = 'f32[16,128]{1,0:T(8,128)}', space=vmem, size = 0x2000, scoped, tag = 'scratch operand']
  %s0 = inlined_call_operand.vmem [shape: bf16[16,2048], index: 0, kind: input, shape index: {}]
  %s1 = inlined_call_operand.vmem [shape: bf16[2048,128], index: 1, kind: input, shape index: {}]
  %s2 = inlined_call_operand.vmem [shape: f32[1,128], index: 2, kind: input, shape index: {}]
  %s3 = inlined_call_operand.vmem [shape: f32[16,128], index: 3, kind: output, shape index: {}]
  %s4 = sld [smem:[#allocation0]]
  $region30: #{_lambda_.15} parent=0
    _
  %s6 = ssub.s32 1, %s4
  %s7 = scalar_select 0, %s6, %s4
  // Predicated region
  $region2: #{_lambda_.15} parent=0 // pred_check
    _
  $region3: #{_lambda_.15} parent=0 // pred_check_branch
    %9 = sbr.rel (0) target = $region5
  $region4: #{_lambda_.15} parent=0 // pred_region
    _
  $region5: #{_lambda_.15} parent=0 // pred_fallthru
    _
  // Predicated region
  $region6: #{_lambda_.15} parent=0 // pred_check
    _
  $region7: #{_lambda_.15} parent=0 // pred_check_branch
    %11 = sbr.rel (0) target = $region9
  $region8: #{_lambda_.15} parent=0 // pred_region
    _
  $region9: #{_lambda_.15} parent=0 // pred_fallthru
    _
  // Predicated region
  $region10: #{_lambda_.15} parent=0 // pred_check
    _
  $region11: #{_lambda_.15} parent=0 // pred_check_branch
    %13 = sbr.rel (0) target = $region13
  $region12: #{_lambda_.15} parent=0 // pred_region
    _
  $region13: #{_lambda_.15} parent=0 // pred_fallthru
    _
  %p15 = scmp.eq.s32.totalorder 0, 0
  // Predicated region
  $region14: #{_lambda_.15} parent=0 // pred_check
    %p16 = pneg %p15
  $region15: #{_lambda_.15} parent=0 // pred_check_branch
    %18 = sbr.rel (%p16) target = $region17
  $region16: #{_lambda_.15} parent=0 // pred_region
    %19 = vst [vmem:[#allocation2] sm:$0xff] 0.0
    %20 = vst [vmem:[#allocation2 + $0x8] sm:$0xff] 0.0
  $region17: #{_lambda_.15} parent=0 // pred_fallthru
    _
  %s21 = smul.u32 0, 2048
  %s22 = sshra.s32 %s21, 3
  %s23 = sand.u32 %s21, 7
  %s24 = smul.addr %s22, 4
  %s25 = scalar_lea.vmem %s1, %s24
  %v26 = vld [vmem:[%s25] sm:$0xf]
  %v27 = vld [vmem:[%s25 + $0x4] sm:$0xf]
  %v28 = vld [vmem:[%s25 + $0x8] sm:$0xf]
  %v29 = vld [vmem:[%s25 + $0xc] sm:$0xf]
  %v30 = vld [vmem:[%s25 + $0x10] sm:$0xf]
  %v31 = vld [vmem:[%s25 + $0x14] sm:$0xf]
  %v32 = vld [vmem:[%s25 + $0x18] sm:$0xf]
  %v33 = vld [vmem:[%s25 + $0x1c] sm:$0xf]
  %v34 = vld [vmem:[%s25 + $0x20] sm:$0xf]
  %v35 = vld [vmem:[%s25 + $0x24] sm:$0xf]
  %v36 = vld [vmem:[%s25 + $0x28] sm:$0xf]
  %v37 = vld [vmem:[%s25 + $0x2c] sm:$0xf]
  %v38 = vld [vmem:[%s25 + $0x30] sm:$0xf]
  %v39 = vld [vmem:[%s25 + $0x34] sm:$0xf]
  %v40 = vld [vmem:[%s25 + $0x38] sm:$0xf]
  %v41 = vld [vmem:[%s25 + $0x3c] sm:$0xf]
  %v42 = vld [vmem:[%s25 + $0x40] sm:$0xf]
  %v43 = vld [vmem:[%s25 + $0x44] sm:$0xf]
  %v44 = vld [vmem:[%s25 + $0x48] sm:$0xf]
  %v45 = vld [vmem:[%s25 + $0x4c] sm:$0xf]
  %v46 = vld [vmem:[%s25 + $0x50] sm:$0xf]
  %v47 = vld [vmem:[%s25 + $0x54] sm:$0xf]
  %v48 = vld [vmem:[%s25 + $0x58] sm:$0xf]
  %v49 = vld [vmem:[%s25 + $0x5c] sm:$0xf]
  %v50 = vld [vmem:[%s25 + $0x60] sm:$0xf]
  %v51 = vld [vmem:[%s25 + $0x64] sm:$0xf]
  %v52 = vld [vmem:[%s25 + $0x68] sm:$0xf]
  %v53 = vld [vmem:[%s25 + $0x6c] sm:$0xf]
  %v54 = vld [vmem:[%s25 + $0x70] sm:$0xf]
  %v55 = vld [vmem:[%s25 + $0x74] sm:$0xf]
  %v56 = vld [vmem:[%s25 + $0x78] sm:$0xf]
  %v57 = vld [vmem:[%s25 + $0x7c] sm:$0xf]
  %v58 = vld [vmem:[%s25 + $0x80] sm:$0xf]
  %v59 = vld [vmem:[%s25 + $0x84] sm:$0xf]
  %v60 = vld [vmem:[%s25 + $0x88] sm:$0xf]
  %v61 = vld [vmem:[%s25 + $0x8c] sm:$0xf]
  %v62 = vld [vmem:[%s25 + $0x90] sm:$0xf]
  %v63 = vld [vmem:[%s25 + $0x94] sm:$0xf]
  %v64 = vld [vmem:[%s25 + $0x98] sm:$0xf]
  %v65 = vld [vmem:[%s25 + $0x9c] sm:$0xf]
  %v66 = vld [vmem:[%s25 + $0xa0] sm:$0xf]
  %v67 = vld [vmem:[%s25 + $0xa4] sm:$0xf]
  %v68 = vld [vmem:[%s25 + $0xa8] sm:$0xf]
  %v69 = vld [vmem:[%s25 + $0xac] sm:$0xf]
  %v70 = vld [vmem:[%s25 + $0xb0] sm:$0xf]
  %v71 = vld [vmem:[%s25 + $0xb4] sm:$0xf]
  %v72 = vld [vmem:[%s25 + $0xb8] sm:$0xf]
  %v73 = vld [vmem:[%s25 + $0xbc] sm:$0xf]
  %v74 = vld [vmem:[%s25 + $0xc0] sm:$0xf]
  %v75 = vld [vmem:[%s25 + $0xc4] sm:$0xf]
  %v76 = vld [vmem:[%s25 + $0xc8] sm:$0xf]
  %v77 = vld [vmem:[%s25 + $0xcc] sm:$0xf]
  %v78 = vld [vmem:[%s25 + $0xd0] sm:$0xf]
  %v79 = vld [vmem:[%s25 + $0xd4] sm:$0xf]
  %v80 = vld [vmem:[%s25 + $0xd8] sm:$0xf]
  %v81 = vld [vmem:[%s25 + $0xdc] sm:$0xf]
  %v82 = vld [vmem:[%s25 + $0xe0] sm:$0xf]
  %v83 = vld [vmem:[%s25 + $0xe4] sm:$0xf]
  %v84 = vld [vmem:[%s25 + $0xe8] sm:$0xf]
  %v85 = vld [vmem:[%s25 + $0xec] sm:$0xf]
  %v86 = vld [vmem:[%s25 + $0xf0] sm:$0xf]
  %v87 = vld [vmem:[%s25 + $0xf4] sm:$0xf]
  %v88 = vld [vmem:[%s25 + $0xf8] sm:$0xf]
  %v89 = vld [vmem:[%s25 + $0xfc] sm:$0xf]
  %v90 = vld [vmem:[%s25 + $0x100] sm:$0xf]
  %v91 = vld [vmem:[%s25 + $0x104] sm:$0xf]
  %v92 = vld [vmem:[%s25 + $0x108] sm:$0xf]
  %v93 = vld [vmem:[%s25 + $0x10c] sm:$0xf]
  %v94 = vld [vmem:[%s25 + $0x110] sm:$0xf]
  %v95 = vld [vmem:[%s25 + $0x114] sm:$0xf]
  %v96 = vld [vmem:[%s25 + $0x118] sm:$0xf]
  %v97 = vld [vmem:[%s25 + $0x11c] sm:$0xf]
  %v98 = vld [vmem:[%s25 + $0x120] sm:$0xf]
  %v99 = vld [vmem:[%s25 + $0x124] sm:$0xf]
  %v100 = vld [vmem:[%s25 + $0x128] sm:$0xf]
  %v101 = vld [vmem:[%s25 + $0x12c] sm:$0xf]
  %v102 = vld [vmem:[%s25 + $0x130] sm:$0xf]
  %v103 = vld [vmem:[%s25 + $0x134] sm:$0xf]
  %v104 = vld [vmem:[%s25 + $0x138] sm:$0xf]
  %v105 = vld [vmem:[%s25 + $0x13c] sm:$0xf]
  %v106 = vld [vmem:[%s25 + $0x140] sm:$0xf]
  %v107 = vld [vmem:[%s25 + $0x144] sm:$0xf]
  %v108 = vld [vmem:[%s25 + $0x148] sm:$0xf]
  %v109 = vld [vmem:[%s25 + $0x14c] sm:$0xf]
  %v110 = vld [vmem:[%s25 + $0x150] sm:$0xf]
  %v111 = vld [vmem:[%s25 + $0x154] sm:$0xf]
  %v112 = vld [vmem:[%s25 + $0x158] sm:$0xf]
  %v113 = vld [vmem:[%s25 + $0x15c] sm:$0xf]
  %v114 = vld [vmem:[%s25 + $0x160] sm:$0xf]
  %v115 = vld [vmem:[%s25 + $0x164] sm:$0xf]
  %v116 = vld [vmem:[%s25 + $0x168] sm:$0xf]
  %v117 = vld [vmem:[%s25 + $0x16c] sm:$0xf]
  %v118 = vld [vmem:[%s25 + $0x170] sm:$0xf]
  %v119 = vld [vmem:[%s25 + $0x174] sm:$0xf]
  %v120 = vld [vmem:[%s25 + $0x178] sm:$0xf]
  %v121 = vld [vmem:[%s25 + $0x17c] sm:$0xf]
  %v122 = vld [vmem:[%s25 + $0x180] sm:$0xf]
  %v123 = vld [vmem:[%s25 + $0x184] sm:$0xf]
  %v124 = vld [vmem:[%s25 + $0x188] sm:$0xf]
  %v125 = vld [vmem:[%s25 + $0x18c] sm:$0xf]
  %v126 = vld [vmem:[%s25 + $0x190] sm:$0xf]
  %v127 = vld [vmem:[%s25 + $0x194] sm:$0xf]
  %v128 = vld [vmem:[%s25 + $0x198] sm:$0xf]
  %v129 = vld [vmem:[%s25 + $0x19c] sm:$0xf]
  %v130 = vld [vmem:[%s25 + $0x1a0] sm:$0xf]
  %v131 = vld [vmem:[%s25 + $0x1a4] sm:$0xf]
  %v132 = vld [vmem:[%s25 + $0x1a8] sm:$0xf]
  %v133 = vld [vmem:[%s25 + $0x1ac] sm:$0xf]
  %v134 = vld [vmem:[%s25 + $0x1b0] sm:$0xf]
  %v135 = vld [vmem:[%s25 + $0x1b4] sm:$0xf]
  %v136 = vld [vmem:[%s25 + $0x1b8] sm:$0xf]
  %v137 = vld [vmem:[%s25 + $0x1bc] sm:$0xf]
  %v138 = vld [vmem:[%s25 + $0x1c0] sm:$0xf]
  %v139 = vld [vmem:[%s25 + $0x1c4] sm:$0xf]
  %v140 = vld [vmem:[%s25 + $0x1c8] sm:$0xf]
  %v141 = vld [vmem:[%s25 + $0x1cc] sm:$0xf]
  %v142 = vld [vmem:[%s25 + $0x1d0] sm:$0xf]
  %v143 = vld [vmem:[%s25 + $0x1d4] sm:$0xf]
  %v144 = vld [vmem:[%s25 + $0x1d8] sm:$0xf]
  %v145 = vld [vmem:[%s25 + $0x1dc] sm:$0xf]
  %v146 = vld [vmem:[%s25 + $0x1e0] sm:$0xf]
  %v147 = vld [vmem:[%s25 + $0x1e4] sm:$0xf]
  %v148 = vld [vmem:[%s25 + $0x1e8] sm:$0xf]
  %v149 = vld [vmem:[%s25 + $0x1ec] sm:$0xf]
  %v150 = vld [vmem:[%s25 + $0x1f0] sm:$0xf]
  %v151 = vld [vmem:[%s25 + $0x1f4] sm:$0xf]
  %v152 = vld [vmem:[%s25 + $0x1f8] sm:$0xf]
  %v153 = vld [vmem:[%s25 + $0x1fc] sm:$0xf]
  %v154 = vld [vmem:[%s25 + $0x200] sm:$0xf]
  %v155 = vld [vmem:[%s25 + $0x204] sm:$0xf]
  %v156 = vld [vmem:[%s25 + $0x208] sm:$0xf]
  %v157 = vld [vmem:[%s25 + $0x20c] sm:$0xf]
  %v158 = vld [vmem:[%s25 + $0x210] sm:$0xf]
  %v159 = vld [vmem:[%s25 + $0x214] sm:$0xf]
  %v160 = vld [vmem:[%s25 + $0x218] sm:$0xf]
  %v161 = vld [vmem:[%s25 + $0x21c] sm:$0xf]
  %v162 = vld [vmem:[%s25 + $0x220] sm:$0xf]
  %v163 = vld [vmem:[%s25 + $0x224] sm:$0xf]
  %v164 = vld [vmem:[%s25 + $0x228] sm:$0xf]
  %v165 = vld [vmem:[%s25 + $0x22c] sm:$0xf]
  %v166 = vld [vmem:[%s25 + $0x230] sm:$0xf]
  %v167 = vld [vmem:[%s25 + $0x234] sm:$0xf]
  %v168 = vld [vmem:[%s25 + $0x238] sm:$0xf]
  %v169 = vld [vmem:[%s25 + $0x23c] sm:$0xf]
  %v170 = vld [vmem:[%s25 + $0x240] sm:$0xf]
  %v171 = vld [vmem:[%s25 + $0x244] sm:$0xf]
  %v172 = vld [vmem:[%s25 + $0x248] sm:$0xf]
  %v173 = vld [vmem:[%s25 + $0x24c] sm:$0xf]
  %v174 = vld [vmem:[%s25 + $0x250] sm:$0xf]
  %v175 = vld [vmem:[%s25 + $0x254] sm:$0xf]
  %v176 = vld [vmem:[%s25 + $0x258] sm:$0xf]
  %v177 = vld [vmem:[%s25 + $0x25c] sm:$0xf]
  %v178 = vld [vmem:[%s25 + $0x260] sm:$0xf]
  %v179 = vld [vmem:[%s25 + $0x264] sm:$0xf]
  %v180 = vld [vmem:[%s25 + $0x268] sm:$0xf]
  %v181 = vld [vmem:[%s25 + $0x26c] sm:$0xf]
  %v182 = vld [vmem:[%s25 + $0x270] sm:$0xf]
  %v183 = vld [vmem:[%s25 + $0x274] sm:$0xf]
  %v184 = vld [vmem:[%s25 + $0x278] sm:$0xf]
  %v185 = vld [vmem:[%s25 + $0x27c] sm:$0xf]
  %v186 = vld [vmem:[%s25 + $0x280] sm:$0xf]
  %v187 = vld [vmem:[%s25 + $0x284] sm:$0xf]
  %v188 = vld [vmem:[%s25 + $0x288] sm:$0xf]
  %v189 = vld [vmem:[%s25 + $0x28c] sm:$0xf]
  %v190 = vld [vmem:[%s25 + $0x290] sm:$0xf]
  %v191 = vld [vmem:[%s25 + $0x294] sm:$0xf]
  %v192 = vld [vmem:[%s25 + $0x298] sm:$0xf]
  %v193 = vld [vmem:[%s25 + $0x29c] sm:$0xf]
  %v194 = vld [vmem:[%s25 + $0x2a0] sm:$0xf]
  %v195 = vld [vmem:[%s25 + $0x2a4] sm:$0xf]
  %v196 = vld [vmem:[%s25 + $0x2a8] sm:$0xf]
  %v197 = vld [vmem:[%s25 + $0x2ac] sm:$0xf]
  %v198 = vld [vmem:[%s25 + $0x2b0] sm:$0xf]
  %v199 = vld [vmem:[%s25 + $0x2b4] sm:$0xf]
  %v200 = vld [vmem:[%s25 + $0x2b8] sm:$0xf]
  %v201 = vld [vmem:[%s25 + $0x2bc] sm:$0xf]
  %v202 = vld [vmem:[%s25 + $0x2c0] sm:$0xf]
  %v203 = vld [vmem:[%s25 + $0x2c4] sm:$0xf]
  %v204 = vld [vmem:[%s25 + $0x2c8] sm:$0xf]
  %v205 = vld [vmem:[%s25 + $0x2cc] sm:$0xf]
  %v206 = vld [vmem:[%s25 + $0x2d0] sm:$0xf]
  %v207 = vld [vmem:[%s25 + $0x2d4] sm:$0xf]
  %v208 = vld [vmem:[%s25 + $0x2d8] sm:$0xf]
  %v209 = vld [vmem:[%s25 + $0x2dc] sm:$0xf]
  %v210 = vld [vmem:[%s25 + $0x2e0] sm:$0xf]
  %v211 = vld [vmem:[%s25 + $0x2e4] sm:$0xf]
  %v212 = vld [vmem:[%s25 + $0x2e8] sm:$0xf]
  %v213 = vld [vmem:[%s25 + $0x2ec] sm:$0xf]
  %v214 = vld [vmem:[%s25 + $0x2f0] sm:$0xf]
  %v215 = vld [vmem:[%s25 + $0x2f4] sm:$0xf]
  %v216 = vld [vmem:[%s25 + $0x2f8] sm:$0xf]
  %v217 = vld [vmem:[%s25 + $0x2fc] sm:$0xf]
  %v218 = vld [vmem:[%s25 + $0x300] sm:$0xf]
  %v219 = vld [vmem:[%s25 + $0x304] sm:$0xf]
  %v220 = vld [vmem:[%s25 + $0x308] sm:$0xf]
  %v221 = vld [vmem:[%s25 + $0x30c] sm:$0xf]
  %v222 = vld [vmem:[%s25 + $0x310] sm:$0xf]
  %v223 = vld [vmem:[%s25 + $0x314] sm:$0xf]
  %v224 = vld [vmem:[%s25 + $0x318] sm:$0xf]
  %v225 = vld [vmem:[%s25 + $0x31c] sm:$0xf]
  %v226 = vld [vmem:[%s25 + $0x320] sm:$0xf]
  %v227 = vld [vmem:[%s25 + $0x324] sm:$0xf]
  %v228 = vld [vmem:[%s25 + $0x328] sm:$0xf]
  %v229 = vld [vmem:[%s25 + $0x32c] sm:$0xf]
  %v230 = vld [vmem:[%s25 + $0x330] sm:$0xf]
  %v231 = vld [vmem:[%s25 + $0x334] sm:$0xf]
  %v232 = vld [vmem:[%s25 + $0x338] sm:$0xf]
  %v233 = vld [vmem:[%s25 + $0x33c] sm:$0xf]
  %v234 = vld [vmem:[%s25 + $0x340] sm:$0xf]
  %v235 = vld [vmem:[%s25 + $0x344] sm:$0xf]
  %v236 = vld [vmem:[%s25 + $0x348] sm:$0xf]
  %v237 = vld [vmem:[%s25 + $0x34c] sm:$0xf]
  %v238 = vld [vmem:[%s25 + $0x350] sm:$0xf]
  %v239 = vld [vmem:[%s25 + $0x354] sm:$0xf]
  %v240 = vld [vmem:[%s25 + $0x358] sm:$0xf]
  %v241 = vld [vmem:[%s25 + $0x35c] sm:$0xf]
  %v242 = vld [vmem:[%s25 + $0x360] sm:$0xf]
  %v243 = vld [vmem:[%s25 + $0x364] sm:$0xf]
  %v244 = vld [vmem:[%s25 + $0x368] sm:$0xf]
  %v245 = vld [vmem:[%s25 + $0x36c] sm:$0xf]
  %v246 = vld [vmem:[%s25 + $0x370] sm:$0xf]
  %v247 = vld [vmem:[%s25 + $0x374] sm:$0xf]
  %v248 = vld [vmem:[%s25 + $0x378] sm:$0xf]
  %v249 = vld [vmem:[%s25 + $0x37c] sm:$0xf]
  %v250 = vld [vmem:[%s25 + $0x380] sm:$0xf]
  %v251 = vld [vmem:[%s25 + $0x384] sm:$0xf]
  %v252 = vld [vmem:[%s25 + $0x388] sm:$0xf]
  %v253 = vld [vmem:[%s25 + $0x38c] sm:$0xf]
  %v254 = vld [vmem:[%s25 + $0x390] sm:$0xf]
  %v255 = vld [vmem:[%s25 + $0x394] sm:$0xf]
  %v256 = vld [vmem:[%s25 + $0x398] sm:$0xf]
  %v257 = vld [vmem:[%s25 + $0x39c] sm:$0xf]
  %v258 = vld [vmem:[%s25 + $0x3a0] sm:$0xf]
  %v259 = vld [vmem:[%s25 + $0x3a4] sm:$0xf]
  %v260 = vld [vmem:[%s25 + $0x3a8] sm:$0xf]
  %v261 = vld [vmem:[%s25 + $0x3ac] sm:$0xf]
  %v262 = vld [vmem:[%s25 + $0x3b0] sm:$0xf]
  %v263 = vld [vmem:[%s25 + $0x3b4] sm:$0xf]
  %v264 = vld [vmem:[%s25 + $0x3b8] sm:$0xf]
  %v265 = vld [vmem:[%s25 + $0x3bc] sm:$0xf]
  %v266 = vld [vmem:[%s25 + $0x3c0] sm:$0xf]
  %v267 = vld [vmem:[%s25 + $0x3c4] sm:$0xf]
  %v268 = vld [vmem:[%s25 + $0x3c8] sm:$0xf]
  %v269 = vld [vmem:[%s25 + $0x3cc] sm:$0xf]
  %v270 = vld [vmem:[%s25 + $0x3d0] sm:$0xf]
  %v271 = vld [vmem:[%s25 + $0x3d4] sm:$0xf]
  %v272 = vld [vmem:[%s25 + $0x3d8] sm:$0xf]
  %v273 = vld [vmem:[%s25 + $0x3dc] sm:$0xf]
  %v274 = vld [vmem:[%s25 + $0x3e0] sm:$0xf]
  %v275 = vld [vmem:[%s25 + $0x3e4] sm:$0xf]
  %v276 = vld [vmem:[%s25 + $0x3e8] sm:$0xf]
  %v277 = vld [vmem:[%s25 + $0x3ec] sm:$0xf]
  %v278 = vld [vmem:[%s25 + $0x3f0] sm:$0xf]
  %v279 = vld [vmem:[%s25 + $0x3f4] sm:$0xf]
  %v280 = vld [vmem:[%s25 + $0x3f8] sm:$0xf]
  %v281 = vld [vmem:[%s25 + $0x3fc] sm:$0xf]
  %v282 = vld [vmem:[#allocation2] sm:$0xff]
  %v283 = vld [vmem:[#allocation2 + $0x8] sm:$0xff]
  %v284 = vld [vmem:[%s0] sm:$0xff]
  %v285 = vld [vmem:[%s0 + $0x8] sm:$0xff]
  %v286 = vld [vmem:[%s0 + $0x10] sm:$0xff]
  %v287 = vld [vmem:[%s0 + $0x18] sm:$0xff]
  %v288 = vld [vmem:[%s0 + $0x20] sm:$0xff]
  %v289 = vld [vmem:[%s0 + $0x28] sm:$0xff]
  %v290 = vld [vmem:[%s0 + $0x30] sm:$0xff]
  %v291 = vld [vmem:[%s0 + $0x38] sm:$0xff]
  %v292 = vld [vmem:[%s0 + $0x40] sm:$0xff]
  %v293 = vld [vmem:[%s0 + $0x48] sm:$0xff]
  %v294 = vld [vmem:[%s0 + $0x50] sm:$0xff]
  %v295 = vld [vmem:[%s0 + $0x58] sm:$0xff]
  %v296 = vld [vmem:[%s0 + $0x60] sm:$0xff]
  %v297 = vld [vmem:[%s0 + $0x68] sm:$0xff]
  %v298 = vld [vmem:[%s0 + $0x70] sm:$0xff]
  %v299 = vld [vmem:[%s0 + $0x78] sm:$0xff]
  %v316 = vunpack.c.l.b16 %v284
  %v317 = vunpack.c.h.b16 %v284
  %v318 = vunpack.c.l.b16 %v285
  %v319 = vunpack.c.h.b16 %v285
  %v320 = vunpack.c.l.b16 %v286
  %v321 = vunpack.c.h.b16 %v286
  %v322 = vunpack.c.l.b16 %v287
  %v323 = vunpack.c.h.b16 %v287
  %v324 = vunpack.c.l.b16 %v288
  %v325 = vunpack.c.h.b16 %v288
  %v326 = vunpack.c.l.b16 %v289
  %v327 = vunpack.c.h.b16 %v289
  %v328 = vunpack.c.l.b16 %v290
  %v329 = vunpack.c.h.b16 %v290
  %v330 = vunpack.c.l.b16 %v291
  %v331 = vunpack.c.h.b16 %v291
  %v332 = vunpack.c.l.b16 %v292
  %v333 = vunpack.c.h.b16 %v292
  %v334 = vunpack.c.l.b16 %v293
  %v335 = vunpack.c.h.b16 %v293
  %v336 = vunpack.c.l.b16 %v294
  %v337 = vunpack.c.h.b16 %v294
  %v338 = vunpack.c.l.b16 %v295
  %v339 = vunpack.c.h.b16 %v295
  %v340 = vunpack.c.l.b16 %v296
  %v341 = vunpack.c.h.b16 %v296
  %v342 = vunpack.c.l.b16 %v297
  %v343 = vunpack.c.h.b16 %v297
  %v344 = vunpack.c.l.b16 %v298
  %v345 = vunpack.c.h.b16 %v298
  %v346 = vunpack.c.l.b16 %v299
  %v347 = vunpack.c.h.b16 %v299
  %v348 = vpack.c.b16 %v332, %v316
  %v349 = vpack.c.b16 %v333, %v317
  %v350 = vpack.c.b16 %v334, %v318
  %v351 = vpack.c.b16 %v335, %v319
  %v352 = vpack.c.b16 %v336, %v320
  %v353 = vpack.c.b16 %v337, %v321
  %v354 = vpack.c.b16 %v338, %v322
  %v355 = vpack.c.b16 %v339, %v323
  %v356 = vpack.c.b16 %v340, %v324
  %v357 = vpack.c.b16 %v341, %v325
  %v358 = vpack.c.b16 %v342, %v326
  %v359 = vpack.c.b16 %v343, %v327
  %v360 = vpack.c.b16 %v344, %v328
  %v361 = vpack.c.b16 %v345, %v329
  %v362 = vpack.c.b16 %v346, %v330
  %v363 = vpack.c.b16 %v347, %v331
  %v636 = vunpack.c.l.b16 %v26
  %v637 = vunpack.c.l.b16 %v27
  %v638 = vunpack.c.l.b16 %v28
  %v639 = vunpack.c.l.b16 %v29
  %v640 = vunpack.c.l.b16 %v30
  %v641 = vunpack.c.l.b16 %v31
  %v642 = vunpack.c.l.b16 %v32
  %v643 = vunpack.c.l.b16 %v33
  %v644 = vunpack.c.l.b16 %v34
  %v645 = vunpack.c.l.b16 %v35
  %v646 = vunpack.c.l.b16 %v36
  %v647 = vunpack.c.l.b16 %v37
  %v648 = vunpack.c.l.b16 %v38
  %v649 = vunpack.c.l.b16 %v39
  %v650 = vunpack.c.l.b16 %v40
  %v651 = vunpack.c.l.b16 %v41
  %v652 = vunpack.c.l.b16 %v42
  %v653 = vunpack.c.l.b16 %v43
  %v654 = vunpack.c.l.b16 %v44
  %v655 = vunpack.c.l.b16 %v45
  %v656 = vunpack.c.l.b16 %v46
  %v657 = vunpack.c.l.b16 %v47
  %v658 = vunpack.c.l.b16 %v48
  %v659 = vunpack.c.l.b16 %v49
  %v660 = vunpack.c.l.b16 %v50
  %v661 = vunpack.c.l.b16 %v51
  %v662 = vunpack.c.l.b16 %v52
  %v663 = vunpack.c.l.b16 %v53
  %v664 = vunpack.c.l.b16 %v54
  %v665 = vunpack.c.l.b16 %v55
  %v666 = vunpack.c.l.b16 %v56
  %v667 = vunpack.c.l.b16 %v57
  %v668 = vunpack.c.l.b16 %v58
  %v669 = vunpack.c.l.b16 %v59
  %v670 = vunpack.c.l.b16 %v60
  %v671 = vunpack.c.l.b16 %v61
  %v672 = vunpack.c.l.b16 %v62
  %v673 = vunpack.c.l.b16 %v63
  %v674 = vunpack.c.l.b16 %v64
  %v675 = vunpack.c.l.b16 %v65
  %v676 = vunpack.c.l.b16 %v66
  %v677 = vunpack.c.l.b16 %v67
  %v678 = vunpack.c.l.b16 %v68
  %v679 = vunpack.c.l.b16 %v69
  %v680 = vunpack.c.l.b16 %v70
  %v681 = vunpack.c.l.b16 %v71
  %v682 = vunpack.c.l.b16 %v72
  %v683 = vunpack.c.l.b16 %v73
  %v684 = vunpack.c.l.b16 %v74
  %v685 = vunpack.c.l.b16 %v75
  %v686 = vunpack.c.l.b16 %v76
  %v687 = vunpack.c.l.b16 %v77
  %v688 = vunpack.c.l.b16 %v78
  %v689 = vunpack.c.l.b16 %v79
  %v690 = vunpack.c.l.b16 %v80
  %v691 = vunpack.c.l.b16 %v81
  %v692 = vunpack.c.l.b16 %v82
  %v693 = vunpack.c.l.b16 %v83
  %v694 = vunpack.c.l.b16 %v84
  %v695 = vunpack.c.l.b16 %v85
  %v696 = vunpack.c.l.b16 %v86
  %v697 = vunpack.c.l.b16 %v87
  %v698 = vunpack.c.l.b16 %v88
  %v699 = vunpack.c.l.b16 %v89
  %v700 = vunpack.c.l.b16 %v90
  %v701 = vunpack.c.l.b16 %v91
  %v702 = vunpack.c.l.b16 %v92
  %v703 = vunpack.c.l.b16 %v93
  %v704 = vunpack.c.l.b16 %v94
  %v705 = vunpack.c.l.b16 %v95
  %v706 = vunpack.c.l.b16 %v96
  %v707 = vunpack.c.l.b16 %v97
  %v708 = vunpack.c.l.b16 %v98
  %v709 = vunpack.c.l.b16 %v99
  %v710 = vunpack.c.l.b16 %v100
  %v711 = vunpack.c.l.b16 %v101
  %v712 = vunpack.c.l.b16 %v102
  %v713 = vunpack.c.l.b16 %v103
  %v714 = vunpack.c.l.b16 %v104
  %v715 = vunpack.c.l.b16 %v105
  %v716 = vunpack.c.l.b16 %v106
  %v717 = vunpack.c.l.b16 %v107
  %v718 = vunpack.c.l.b16 %v108
  %v719 = vunpack.c.l.b16 %v109
  %v720 = vunpack.c.l.b16 %v110
  %v721 = vunpack.c.l.b16 %v111
  %v722 = vunpack.c.l.b16 %v112
  %v723 = vunpack.c.l.b16 %v113
  %v724 = vunpack.c.l.b16 %v114
  %v725 = vunpack.c.l.b16 %v115
  %v726 = vunpack.c.l.b16 %v116
  %v727 = vunpack.c.l.b16 %v117
  %v728 = vunpack.c.l.b16 %v118
  %v729 = vunpack.c.l.b16 %v119
  %v730 = vunpack.c.l.b16 %v120
  %v731 = vunpack.c.l.b16 %v121
  %v732 = vunpack.c.l.b16 %v122
  %v733 = vunpack.c.l.b16 %v123
  %v734 = vunpack.c.l.b16 %v124
  %v735 = vunpack.c.l.b16 %v125
  %v736 = vunpack.c.l.b16 %v126
  %v737 = vunpack.c.l.b16 %v127
  %v738 = vunpack.c.l.b16 %v128
  %v739 = vunpack.c.l.b16 %v129
  %v740 = vunpack.c.l.b16 %v130
  %v741 = vunpack.c.l.b16 %v131
  %v742 = vunpack.c.l.b16 %v132
  %v743 = vunpack.c.l.b16 %v133
  %v744 = vunpack.c.l.b16 %v134
  %v745 = vunpack.c.l.b16 %v135
  %v746 = vunpack.c.l.b16 %v136
  %v747 = vunpack.c.l.b16 %v137
  %v748 = vunpack.c.l.b16 %v138
  %v749 = vunpack.c.l.b16 %v139
  %v750 = vunpack.c.l.b16 %v140
  %v751 = vunpack.c.l.b16 %v141
  %v752 = vunpack.c.l.b16 %v142
  %v753 = vunpack.c.l.b16 %v143
  %v754 = vunpack.c.l.b16 %v144
  %v755 = vunpack.c.l.b16 %v145
  %v756 = vunpack.c.l.b16 %v146
  %v757 = vunpack.c.l.b16 %v147
  %v758 = vunpack.c.l.b16 %v148
  %v759 = vunpack.c.l.b16 %v149
  %v760 = vunpack.c.l.b16 %v150
  %v761 = vunpack.c.l.b16 %v151
  %v762 = vunpack.c.l.b16 %v152
  %v763 = vunpack.c.l.b16 %v153
  %v764 = vunpack.c.l.b16 %v154
  %v765 = vunpack.c.l.b16 %v155
  %v766 = vunpack.c.l.b16 %v156
  %v767 = vunpack.c.l.b16 %v157
  %v768 = vunpack.c.l.b16 %v158
  %v769 = vunpack.c.l.b16 %v159
  %v770 = vunpack.c.l.b16 %v160
  %v771 = vunpack.c.l.b16 %v161
  %v772 = vunpack.c.l.b16 %v162
  %v773 = vunpack.c.l.b16 %v163
  %v774 = vunpack.c.l.b16 %v164
  %v775 = vunpack.c.l.b16 %v165
  %v776 = vunpack.c.l.b16 %v166
  %v777 = vunpack.c.l.b16 %v167
  %v778 = vunpack.c.l.b16 %v168
  %v779 = vunpack.c.l.b16 %v169
  %v780 = vunpack.c.l.b16 %v170
  %v781 = vunpack.c.l.b16 %v171
  %v782 = vunpack.c.l.b16 %v172
  %v783 = vunpack.c.l.b16 %v173
  %v784 = vunpack.c.l.b16 %v174
  %v785 = vunpack.c.l.b16 %v175
  %v786 = vunpack.c.l.b16 %v176
  %v787 = vunpack.c.l.b16 %v177
  %v788 = vunpack.c.l.b16 %v178
  %v789 = vunpack.c.l.b16 %v179
  %v790 = vunpack.c.l.b16 %v180
  %v791 = vunpack.c.l.b16 %v181
  %v792 = vunpack.c.l.b16 %v182
  %v793 = vunpack.c.l.b16 %v183
  %v794 = vunpack.c.l.b16 %v184
  %v795 = vunpack.c.l.b16 %v185
  %v796 = vunpack.c.l.b16 %v186
  %v797 = vunpack.c.l.b16 %v187
  %v798 = vunpack.c.l.b16 %v188
  %v799 = vunpack.c.l.b16 %v189
  %v800 = vunpack.c.l.b16 %v190
  %v801 = vunpack.c.l.b16 %v191
  %v802 = vunpack.c.l.b16 %v192
  %v803 = vunpack.c.l.b16 %v193
  %v804 = vunpack.c.l.b16 %v194
  %v805 = vunpack.c.l.b16 %v195
  %v806 = vunpack.c.l.b16 %v196
  %v807 = vunpack.c.l.b16 %v197
  %v808 = vunpack.c.l.b16 %v198
  %v809 = vunpack.c.l.b16 %v199
  %v810 = vunpack.c.l.b16 %v200
  %v811 = vunpack.c.l.b16 %v201
  %v812 = vunpack.c.l.b16 %v202
  %v813 = vunpack.c.l.b16 %v203
  %v814 = vunpack.c.l.b16 %v204
  %v815 = vunpack.c.l.b16 %v205
  %v816 = vunpack.c.l.b16 %v206
  %v817 = vunpack.c.l.b16 %v207
  %v818 = vunpack.c.l.b16 %v208
  %v819 = vunpack.c.l.b16 %v209
  %v820 = vunpack.c.l.b16 %v210
  %v821 = vunpack.c.l.b16 %v211
  %v822 = vunpack.c.l.b16 %v212
  %v823 = vunpack.c.l.b16 %v213
  %v824 = vunpack.c.l.b16 %v214
  %v825 = vunpack.c.l.b16 %v215
  %v826 = vunpack.c.l.b16 %v216
  %v827 = vunpack.c.l.b16 %v217
  %v828 = vunpack.c.l.b16 %v218
  %v829 = vunpack.c.l.b16 %v219
  %v830 = vunpack.c.l.b16 %v220
  %v831 = vunpack.c.l.b16 %v221
  %v832 = vunpack.c.l.b16 %v222
  %v833 = vunpack.c.l.b16 %v223
  %v834 = vunpack.c.l.b16 %v224
  %v835 = vunpack.c.l.b16 %v225
  %v836 = vunpack.c.l.b16 %v226
  %v837 = vunpack.c.l.b16 %v227
  %v838 = vunpack.c.l.b16 %v228
  %v839 = vunpack.c.l.b16 %v229
  %v840 = vunpack.c.l.b16 %v230
  %v841 = vunpack.c.l.b16 %v231
  %v842 = vunpack.c.l.b16 %v232
  %v843 = vunpack.c.l.b16 %v233
  %v844 = vunpack.c.l.b16 %v234
  %v845 = vunpack.c.l.b16 %v235
  %v846 = vunpack.c.l.b16 %v236
  %v847 = vunpack.c.l.b16 %v237
  %v848 = vunpack.c.l.b16 %v238
  %v849 = vunpack.c.l.b16 %v239
  %v850 = vunpack.c.l.b16 %v240
  %v851 = vunpack.c.l.b16 %v241
  %v852 = vunpack.c.l.b16 %v242
  %v853 = vunpack.c.l.b16 %v243
  %v854 = vunpack.c.l.b16 %v244
  %v855 = vunpack.c.l.b16 %v245
  %v856 = vunpack.c.l.b16 %v246
  %v857 = vunpack.c.l.b16 %v247
  %v858 = vunpack.c.l.b16 %v248
  %v859 = vunpack.c.l.b16 %v249
  %v860 = vunpack.c.l.b16 %v250
  %v861 = vunpack.c.l.b16 %v251
  %v862 = vunpack.c.l.b16 %v252
  %v863 = vunpack.c.l.b16 %v253
  %v864 = vunpack.c.l.b16 %v254
  %v865 = vunpack.c.l.b16 %v255
  %v866 = vunpack.c.l.b16 %v256
  %v867 = vunpack.c.l.b16 %v257
  %v868 = vunpack.c.l.b16 %v258
  %v869 = vunpack.c.l.b16 %v259
  %v870 = vunpack.c.l.b16 %v260
  %v871 = vunpack.c.l.b16 %v261
  %v872 = vunpack.c.l.b16 %v262
  %v873 = vunpack.c.l.b16 %v263
  %v874 = vunpack.c.l.b16 %v264
  %v875 = vunpack.c.l.b16 %v265
  %v876 = vunpack.c.l.b16 %v266
  %v877 = vunpack.c.l.b16 %v267
  %v878 = vunpack.c.l.b16 %v268
  %v879 = vunpack.c.l.b16 %v269
  %v880 = vunpack.c.l.b16 %v270
  %v881 = vunpack.c.l.b16 %v271
  %v882 = vunpack.c.l.b16 %v272
  %v883 = vunpack.c.l.b16 %v273
  %v884 = vunpack.c.l.b16 %v274
  %v885 = vunpack.c.l.b16 %v275
  %v886 = vunpack.c.l.b16 %v276
  %v887 = vunpack.c.l.b16 %v277
  %v888 = vunpack.c.l.b16 %v278
  %v889 = vunpack.c.l.b16 %v279
  %v890 = vunpack.c.l.b16 %v280
  %v891 = vunpack.c.l.b16 %v281
  %v892 = vpack.c.b16 %v637, %v636
  %v893 = vpack.c.b16 %v639, %v638
  %v894 = vpack.c.b16 %v641, %v640
  %v895 = vpack.c.b16 %v643, %v642
  %v896 = vpack.c.b16 %v645, %v644
  %v897 = vpack.c.b16 %v647, %v646
  %v898 = vpack.c.b16 %v649, %v648
  %v899 = vpack.c.b16 %v651, %v650
  %v900 = vpack.c.b16 %v653, %v652
  %v901 = vpack.c.b16 %v655, %v654
  %v902 = vpack.c.b16 %v657, %v656
  %v903 = vpack.c.b16 %v659, %v658
  %v904 = vpack.c.b16 %v661, %v660
  %v905 = vpack.c.b16 %v663, %v662
  %v906 = vpack.c.b16 %v665, %v664
  %v907 = vpack.c.b16 %v667, %v666
  %v908 = vpack.c.b16 %v669, %v668
  %v909 = vpack.c.b16 %v671, %v670
  %v910 = vpack.c.b16 %v673, %v672
  %v911 = vpack.c.b16 %v675, %v674
  %v912 = vpack.c.b16 %v677, %v676
  %v913 = vpack.c.b16 %v679, %v678
  %v914 = vpack.c.b16 %v681, %v680
  %v915 = vpack.c.b16 %v683, %v682
  %v916 = vpack.c.b16 %v685, %v684
  %v917 = vpack.c.b16 %v687, %v686
  %v918 = vpack.c.b16 %v689, %v688
  %v919 = vpack.c.b16 %v691, %v690
  %v920 = vpack.c.b16 %v693, %v692
  %v921 = vpack.c.b16 %v695, %v694
  %v922 = vpack.c.b16 %v697, %v696
  %v923 = vpack.c.b16 %v699, %v698
  %v924 = vpack.c.b16 %v701, %v700
  %v925 = vpack.c.b16 %v703, %v702
  %v926 = vpack.c.b16 %v705, %v704
  %v927 = vpack.c.b16 %v707, %v706
  %v928 = vpack.c.b16 %v709, %v708
  %v929 = vpack.c.b16 %v711, %v710
  %v930 = vpack.c.b16 %v713, %v712
  %v931 = vpack.c.b16 %v715, %v714
  %v932 = vpack.c.b16 %v717, %v716
  %v933 = vpack.c.b16 %v719, %v718
  %v934 = vpack.c.b16 %v721, %v720
  %v935 = vpack.c.b16 %v723, %v722
  %v936 = vpack.c.b16 %v725, %v724
  %v937 = vpack.c.b16 %v727, %v726
  %v938 = vpack.c.b16 %v729, %v728
  %v939 = vpack.c.b16 %v731, %v730
  %v940 = vpack.c.b16 %v733, %v732
  %v941 = vpack.c.b16 %v735, %v734
  %v942 = vpack.c.b16 %v737, %v736
  %v943 = vpack.c.b16 %v739, %v738
  %v944 = vpack.c.b16 %v741, %v740
  %v945 = vpack.c.b16 %v743, %v742
  %v946 = vpack.c.b16 %v745, %v744
  %v947 = vpack.c.b16 %v747, %v746
  %v948 = vpack.c.b16 %v749, %v748
  %v949 = vpack.c.b16 %v751, %v750
  %v950 = vpack.c.b16 %v753, %v752
  %v951 = vpack.c.b16 %v755, %v754
  %v952 = vpack.c.b16 %v757, %v756
  %v953 = vpack.c.b16 %v759, %v758
  %v954 = vpack.c.b16 %v761, %v760
  %v955 = vpack.c.b16 %v763, %v762
  %v956 = vpack.c.b16 %v765, %v764
  %v957 = vpack.c.b16 %v767, %v766
  %v958 = vpack.c.b16 %v769, %v768
  %v959 = vpack.c.b16 %v771, %v770
  %v960 = vpack.c.b16 %v773, %v772
  %v961 = vpack.c.b16 %v775, %v774
  %v962 = vpack.c.b16 %v777, %v776
  %v963 = vpack.c.b16 %v779, %v778
  %v964 = vpack.c.b16 %v781, %v780
  %v965 = vpack.c.b16 %v783, %v782
  %v966 = vpack.c.b16 %v785, %v784
  %v967 = vpack.c.b16 %v787, %v786
  %v968 = vpack.c.b16 %v789, %v788
  %v969 = vpack.c.b16 %v791, %v790
  %v970 = vpack.c.b16 %v793, %v792
  %v971 = vpack.c.b16 %v795, %v794
  %v972 = vpack.c.b16 %v797, %v796
  %v973 = vpack.c.b16 %v799, %v798
  %v974 = vpack.c.b16 %v801, %v800
  %v975 = vpack.c.b16 %v803, %v802
  %v976 = vpack.c.b16 %v805, %v804
  %v977 = vpack.c.b16 %v807, %v806
  %v978 = vpack.c.b16 %v809, %v808
  %v979 = vpack.c.b16 %v811, %v810
  %v980 = vpack.c.b16 %v813, %v812
  %v981 = vpack.c.b16 %v815, %v814
  %v982 = vpack.c.b16 %v817, %v816
  %v983 = vpack.c.b16 %v819, %v818
  %v984 = vpack.c.b16 %v821, %v820
  %v985 = vpack.c.b16 %v823, %v822
  %v986 = vpack.c.b16 %v825, %v824
  %v987 = vpack.c.b16 %v827, %v826
  %v988 = vpack.c.b16 %v829, %v828
  %v989 = vpack.c.b16 %v831, %v830
  %v990 = vpack.c.b16 %v833, %v832
  %v991 = vpack.c.b16 %v835, %v834
  %v992 = vpack.c.b16 %v837, %v836
  %v993 = vpack.c.b16 %v839, %v838
  %v994 = vpack.c.b16 %v841, %v840
  %v995 = vpack.c.b16 %v843, %v842
  %v996 = vpack.c.b16 %v845, %v844
  %v997 = vpack.c.b16 %v847, %v846
  %v998 = vpack.c.b16 %v849, %v848
  %v999 = vpack.c.b16 %v851, %v850
  %v1000 = vpack.c.b16 %v853, %v852
  %v1001 = vpack.c.b16 %v855, %v854
  %v1002 = vpack.c.b16 %v857, %v856
  %v1003 = vpack.c.b16 %v859, %v858
  %v1004 = vpack.c.b16 %v861, %v860
  %v1005 = vpack.c.b16 %v863, %v862
  %v1006 = vpack.c.b16 %v865, %v864
  %v1007 = vpack.c.b16 %v867, %v866
  %v1008 = vpack.c.b16 %v869, %v868
  %v1009 = vpack.c.b16 %v871, %v870
  %v1010 = vpack.c.b16 %v873, %v872
  %v1011 = vpack.c.b16 %v875, %v874
  %v1012 = vpack.c.b16 %v877, %v876
  %v1013 = vpack.c.b16 %v879, %v878
  %v1014 = vpack.c.b16 %v881, %v880
  %v1015 = vpack.c.b16 %v883, %v882
  %v1016 = vpack.c.b16 %v885, %v884
  %v1017 = vpack.c.b16 %v887, %v886
  %v1018 = vpack.c.b16 %v889, %v888
  %v1019 = vpack.c.b16 %v891, %v890
  %1148 = vmatprep.subr.bf16.mxu0 0
  %1149 = vmatpush1.bf16.msra.mxu0 %v899
  %1150 = vmatprep.subr.bf16.mxu0 0
  %1151 = vmatpush1.bf16.msra.mxu0 %v898
  %1152 = vmatprep.subr.bf16.mxu0 0
  %1153 = vmatpush1.bf16.msra.mxu0 %v897
  %1154 = vmatprep.subr.bf16.mxu0 0
  %1155 = vmatpush1.bf16.msra.mxu0 %v896
  %1156 = vmatprep.subr.bf16.mxu0 0
  %1157 = vmatpush1.bf16.msra.mxu0 %v895
  %1158 = vmatprep.subr.bf16.mxu0 0
  %1159 = vmatpush1.bf16.msra.mxu0 %v894
  %1160 = vmatprep.subr.bf16.mxu0 0
  %1161 = vmatpush1.bf16.msra.mxu0 %v893
  %1162 = vmatprep.subr.bf16.mxu0 0
  %1163 = vmatpush1.bf16.msra.mxu0 %v892
  %1164 = vmatprep.subr.bf16.mxu0 0
  %1165 = vmatpush2.bf16.msra.mxu0 %v907
  %1166 = vmatprep.subr.bf16.mxu0 0
  %1167 = vmatpush2.bf16.msra.mxu0 %v906
  %1168 = vmatprep.subr.bf16.mxu0 0
  %1169 = vmatpush2.bf16.msra.mxu0 %v905
  %1170 = vmatprep.subr.bf16.mxu0 0
  %1171 = vmatpush2.bf16.msra.mxu0 %v904
  %1172 = vmatprep.subr.bf16.mxu0 0
  %1173 = vmatpush2.bf16.msra.mxu0 %v903
  %1174 = vmatprep.subr.bf16.mxu0 0
  %1175 = vmatpush2.bf16.msra.mxu0 %v902
  %1176 = vmatprep.subr.bf16.mxu0 0
  %1177 = vmatpush2.bf16.msra.mxu0 %v901
  %1178 = vmatprep.subr.bf16.mxu0 0
  %1179 = vmatpush2.bf16.msra.mxu0 %v900
  %1180 = vmatprep.mubr.bf16.mxu0 %v349
  %1181 = vmatmul.mubr.bf16.gmra.mxu0 %v348
  %v1182 = vpop.f32.mrf.mxu0
  %v1183 = vadd.f32 0.0, %v1182
  %v1184 = vpop.f32.mrf.mxu0
  %v1185 = vpop.f32.mrf.mxu0
  %v1186 = vadd.f32 0.0, %v1185
  %v1187 = vpop.f32.mrf.mxu0
  %1188 = vdwg.mxu0
  %1189 = vmatprep.subr.bf16.mxu0 0
  %1190 = vmatpush1.bf16.msra.mxu0 %v915
  %1191 = vmatprep.subr.bf16.mxu0 0
  %1192 = vmatpush1.bf16.msra.mxu0 %v914
  %1193 = vmatprep.subr.bf16.mxu0 0
  %1194 = vmatpush1.bf16.msra.mxu0 %v913
  %1195 = vmatprep.subr.bf16.mxu0 0
  %1196 = vmatpush1.bf16.msra.mxu0 %v912
  %1197 = vmatprep.subr.bf16.mxu0 0
  %1198 = vmatpush1.bf16.msra.mxu0 %v911
  %1199 = vmatprep.subr.bf16.mxu0 0
  %1200 = vmatpush1.bf16.msra.mxu0 %v910
  %1201 = vmatprep.subr.bf16.mxu0 0
  %1202 = vmatpush1.bf16.msra.mxu0 %v909
  %1203 = vmatprep.subr.bf16.mxu0 0
  %1204 = vmatpush1.bf16.msra.mxu0 %v908
  %1205 = vmatprep.subr.bf16.mxu0 0
  %1206 = vmatpush2.bf16.msra.mxu0 %v923
  %1207 = vmatprep.subr.bf16.mxu0 0
  %1208 = vmatpush2.bf16.msra.mxu0 %v922
  %1209 = vmatprep.subr.bf16.mxu0 0
  %1210 = vmatpush2.bf16.msra.mxu0 %v921
  %1211 = vmatprep.subr.bf16.mxu0 0
  %1212 = vmatpush2.bf16.msra.mxu0 %v920
  %1213 = vmatprep.subr.bf16.mxu0 0
  %1214 = vmatpush2.bf16.msra.mxu0 %v919
  %1215 = vmatprep.subr.bf16.mxu0 0
  %1216 = vmatpush2.bf16.msra.mxu0 %v918
  %1217 = vmatprep.subr.bf16.mxu0 0
  %1218 = vmatpush2.bf16.msra.mxu0 %v917
  %1219 = vmatprep.subr.bf16.mxu0 0
  %1220 = vmatpush2.bf16.msra.mxu0 %v916
  %1221 = vmatprep.mubr.bf16.mxu0 %v351
  %1222 = vmatmul.mubr.bf16.gmra.mxu0 %v350
  %v1223 = vpop.f32.mrf.mxu0
  %v1224 = vadd.f32 %v1183, %v1223
  %v1225 = vpop.f32.mrf.mxu0
  %v1226 = vpop.f32.mrf.mxu0
  %v1227 = vadd.f32 %v1186, %v1226
  %v1228 = vpop.f32.mrf.mxu0
  %1229 = vdwg.mxu0
  %1230 = vmatprep.subr.bf16.mxu0 0
  %1231 = vmatpush1.bf16.msra.mxu0 %v931
  %1232 = vmatprep.subr.bf16.mxu0 0
  %1233 = vmatpush1.bf16.msra.mxu0 %v930
  %1234 = vmatprep.subr.bf16.mxu0 0
  %1235 = vmatpush1.bf16.msra.mxu0 %v929
  %1236 = vmatprep.subr.bf16.mxu0 0
  %1237 = vmatpush1.bf16.msra.mxu0 %v928
  %1238 = vmatprep.subr.bf16.mxu0 0
  %1239 = vmatpush1.bf16.msra.mxu0 %v927
  %1240 = vmatprep.subr.bf16.mxu0 0
  %1241 = vmatpush1.bf16.msra.mxu0 %v926
  %1242 = vmatprep.subr.bf16.mxu0 0
  %1243 = vmatpush1.bf16.msra.mxu0 %v925
  %1244 = vmatprep.subr.bf16.mxu0 0
  %1245 = vmatpush1.bf16.msra.mxu0 %v924
  %1246 = vmatprep.subr.bf16.mxu0 0
  %1247 = vmatpush2.bf16.msra.mxu0 %v939
  %1248 = vmatprep.subr.bf16.mxu0 0
  %1249 = vmatpush2.bf16.msra.mxu0 %v938
  %1250 = vmatprep.subr.bf16.mxu0 0
  %1251 = vmatpush2.bf16.msra.mxu0 %v937
  %1252 = vmatprep.subr.bf16.mxu0 0
  %1253 = vmatpush2.bf16.msra.mxu0 %v936
  %1254 = vmatprep.subr.bf16.mxu0 0
  %1255 = vmatpush2.bf16.msra.mxu0 %v935
  %1256 = vmatprep.subr.bf16.mxu0 0
  %1257 = vmatpush2.bf16.msra.mxu0 %v934
  %1258 = vmatprep.subr.bf16.mxu0 0
  %1259 = vmatpush2.bf16.msra.mxu0 %v933
  %1260 = vmatprep.subr.bf16.mxu0 0
  %1261 = vmatpush2.bf16.msra.mxu0 %v932
  %1262 = vmatprep.mubr.bf16.mxu0 %v353
  %1263 = vmatmul.mubr.bf16.gmra.mxu0 %v352
  %v1264 = vpop.f32.mrf.mxu0
  %v1265 = vadd.f32 %v1224, %v1264
  %v1266 = vpop.f32.mrf.mxu0
  %v1267 = vpop.f32.mrf.mxu0
  %v1268 = vadd.f32 %v1227, %v1267
  %v1269 = vpop.f32.mrf.mxu0
  %1270 = vdwg.mxu0
  %1271 = vmatprep.subr.bf16.mxu0 0
  %1272 = vmatpush1.bf16.msra.mxu0 %v947
  %1273 = vmatprep.subr.bf16.mxu0 0
  %1274 = vmatpush1.bf16.msra.mxu0 %v946
  %1275 = vmatprep.subr.bf16.mxu0 0
  %1276 = vmatpush1.bf16.msra.mxu0 %v945
  %1277 = vmatprep.subr.bf16.mxu0 0
  %1278 = vmatpush1.bf16.msra.mxu0 %v944
  %1279 = vmatprep.subr.bf16.mxu0 0
  %1280 = vmatpush1.bf16.msra.mxu0 %v943
  %1281 = vmatprep.subr.bf16.mxu0 0
  %1282 = vmatpush1.bf16.msra.mxu0 %v942
  %1283 = vmatprep.subr.bf16.mxu0 0
  %1284 = vmatpush1.bf16.msra.mxu0 %v941
  %1285 = vmatprep.subr.bf16.mxu0 0
  %1286 = vmatpush1.bf16.msra.mxu0 %v940
  %1287 = vmatprep.subr.bf16.mxu0 0
  %1288 = vmatpush2.bf16.msra.mxu0 %v955
  %1289 = vmatprep.subr.bf16.mxu0 0
  %1290 = vmatpush2.bf16.msra.mxu0 %v954
  %1291 = vmatprep.subr.bf16.mxu0 0
  %1292 = vmatpush2.bf16.msra.mxu0 %v953
  %1293 = vmatprep.subr.bf16.mxu0 0
  %1294 = vmatpush2.bf16.msra.mxu0 %v952
  %1295 = vmatprep.subr.bf16.mxu0 0
  %1296 = vmatpush2.bf16.msra.mxu0 %v951
  %1297 = vmatprep.subr.bf16.mxu0 0
  %1298 = vmatpush2.bf16.msra.mxu0 %v950
  %1299 = vmatprep.subr.bf16.mxu0 0
  %1300 = vmatpush2.bf16.msra.mxu0 %v949
  %1301 = vmatprep.subr.bf16.mxu0 0
  %1302 = vmatpush2.bf16.msra.mxu0 %v948
  %1303 = vmatprep.mubr.bf16.mxu0 %v355
  %1304 = vmatmul.mubr.bf16.gmra.mxu0 %v354
  %v1305 = vpop.f32.mrf.mxu0
  %v1306 = vadd.f32 %v1265, %v1305
  %v1307 = vpop.f32.mrf.mxu0
  %v1308 = vpop.f32.mrf.mxu0
  %v1309 = vadd.f32 %v1268, %v1308
  %v1310 = vpop.f32.mrf.mxu0
  %1311 = vdwg.mxu0
  %1312 = vmatprep.subr.bf16.mxu0 0
  %1313 = vmatpush1.bf16.msra.mxu0 %v963
  %1314 = vmatprep.subr.bf16.mxu0 0
  %1315 = vmatpush1.bf16.msra.mxu0 %v962
  %1316 = vmatprep.subr.bf16.mxu0 0
  %1317 = vmatpush1.bf16.msra.mxu0 %v961
  %1318 = vmatprep.subr.bf16.mxu0 0
  %1319 = vmatpush1.bf16.msra.mxu0 %v960
  %1320 = vmatprep.subr.bf16.mxu0 0
  %1321 = vmatpush1.bf16.msra.mxu0 %v959
  %1322 = vmatprep.subr.bf16.mxu0 0
  %1323 = vmatpush1.bf16.msra.mxu0 %v958
  %1324 = vmatprep.subr.bf16.mxu0 0
  %1325 = vmatpush1.bf16.msra.mxu0 %v957
  %1326 = vmatprep.subr.bf16.mxu0 0
  %1327 = vmatpush1.bf16.msra.mxu0 %v956
  %1328 = vmatprep.subr.bf16.mxu0 0
  %1329 = vmatpush2.bf16.msra.mxu0 %v971
  %1330 = vmatprep.subr.bf16.mxu0 0
  %1331 = vmatpush2.bf16.msra.mxu0 %v970
  %1332 = vmatprep.subr.bf16.mxu0 0
  %1333 = vmatpush2.bf16.msra.mxu0 %v969
  %1334 = vmatprep.subr.bf16.mxu0 0
  %1335 = vmatpush2.bf16.msra.mxu0 %v968
  %1336 = vmatprep.subr.bf16.mxu0 0
  %1337 = vmatpush2.bf16.msra.mxu0 %v967
  %1338 = vmatprep.subr.bf16.mxu0 0
  %1339 = vmatpush2.bf16.msra.mxu0 %v966
  %1340 = vmatprep.subr.bf16.mxu0 0
  %1341 = vmatpush2.bf16.msra.mxu0 %v965
  %1342 = vmatprep.subr.bf16.mxu0 0
  %1343 = vmatpush2.bf16.msra.mxu0 %v964
  %1344 = vmatprep.mubr.bf16.mxu0 %v357
  %1345 = vmatmul.mubr.bf16.gmra.mxu0 %v356
  %v1346 = vpop.f32.mrf.mxu0
  %v1347 = vadd.f32 %v1306, %v1346
  %v1348 = vpop.f32.mrf.mxu0
  %v1349 = vpop.f32.mrf.mxu0
  %v1350 = vadd.f32 %v1309, %v1349
  %v1351 = vpop.f32.mrf.mxu0
  %1352 = vdwg.mxu0
  %1353 = vmatprep.subr.bf16.mxu0 0
  %1354 = vmatpush1.bf16.msra.mxu0 %v979
  %1355 = vmatprep.subr.bf16.mxu0 0
  %1356 = vmatpush1.bf16.msra.mxu0 %v978
  %1357 = vmatprep.subr.bf16.mxu0 0
  %1358 = vmatpush1.bf16.msra.mxu0 %v977
  %1359 = vmatprep.subr.bf16.mxu0 0
  %1360 = vmatpush1.bf16.msra.mxu0 %v976
  %1361 = vmatprep.subr.bf16.mxu0 0
  %1362 = vmatpush1.bf16.msra.mxu0 %v975
  %1363 = vmatprep.subr.bf16.mxu0 0
  %1364 = vmatpush1.bf16.msra.mxu0 %v974
  %1365 = vmatprep.subr.bf16.mxu0 0
  %1366 = vmatpush1.bf16.msra.mxu0 %v973
  %1367 = vmatprep.subr.bf16.mxu0 0
  %1368 = vmatpush1.bf16.msra.mxu0 %v972
  %1369 = vmatprep.subr.bf16.mxu0 0
  %1370 = vmatpush2.bf16.msra.mxu0 %v987
  %1371 = vmatprep.subr.bf16.mxu0 0
  %1372 = vmatpush2.bf16.msra.mxu0 %v986
  %1373 = vmatprep.subr.bf16.mxu0 0
  %1374 = vmatpush2.bf16.msra.mxu0 %v985
  %1375 = vmatprep.subr.bf16.mxu0 0
  %1376 = vmatpush2.bf16.msra.mxu0 %v984
  %1377 = vmatprep.subr.bf16.mxu0 0
  %1378 = vmatpush2.bf16.msra.mxu0 %v983
  %1379 = vmatprep.subr.bf16.mxu0 0
  %1380 = vmatpush2.bf16.msra.mxu0 %v982
  %1381 = vmatprep.subr.bf16.mxu0 0
  %1382 = vmatpush2.bf16.msra.mxu0 %v981
  %1383 = vmatprep.subr.bf16.mxu0 0
  %1384 = vmatpush2.bf16.msra.mxu0 %v980
  %1385 = vmatprep.mubr.bf16.mxu0 %v359
  %1386 = vmatmul.mubr.bf16.gmra.mxu0 %v358
  %v1387 = vpop.f32.mrf.mxu0
  %v1388 = vadd.f32 %v1347, %v1387
  %v1389 = vpop.f32.mrf.mxu0
  %v1390 = vpop.f32.mrf.mxu0
  %v1391 = vadd.f32 %v1350, %v1390
  %v1392 = vpop.f32.mrf.mxu0
  %1393 = vdwg.mxu0
  %1394 = vmatprep.subr.bf16.mxu0 0
  %1395 = vmatpush1.bf16.msra.mxu0 %v995
  %1396 = vmatprep.subr.bf16.mxu0 0
  %1397 = vmatpush1.bf16.msra.mxu0 %v994
  %1398 = vmatprep.subr.bf16.mxu0 0
  %1399 = vmatpush1.bf16.msra.mxu0 %v993
  %1400 = vmatprep.subr.bf16.mxu0 0
  %1401 = vmatpush1.bf16.msra.mxu0 %v992
  %1402 = vmatprep.subr.bf16.mxu0 0
  %1403 = vmatpush1.bf16.msra.mxu0 %v991
  %1404 = vmatprep.subr.bf16.mxu0 0
  %1405 = vmatpush1.bf16.msra.mxu0 %v990
  %1406 = vmatprep.subr.bf16.mxu0 0
  %1407 = vmatpush1.bf16.msra.mxu0 %v989
  %1408 = vmatprep.subr.bf16.mxu0 0
  %1409 = vmatpush1.bf16.msra.mxu0 %v988
  %1410 = vmatprep.subr.bf16.mxu0 0
  %1411 = vmatpush2.bf16.msra.mxu0 %v1003
  %1412 = vmatprep.subr.bf16.mxu0 0
  %1413 = vmatpush2.bf16.msra.mxu0 %v1002
  %1414 = vmatprep.subr.bf16.mxu0 0
  %1415 = vmatpush2.bf16.msra.mxu0 %v1001
  %1416 = vmatprep.subr.bf16.mxu0 0
  %1417 = vmatpush2.bf16.msra.mxu0 %v1000
  %1418 = vmatprep.subr.bf16.mxu0 0
  %1419 = vmatpush2.bf16.msra.mxu0 %v999
  %1420 = vmatprep.subr.bf16.mxu0 0
  %1421 = vmatpush2.bf16.msra.mxu0 %v998
  %1422 = vmatprep.subr.bf16.mxu0 0
  %1423 = vmatpush2.bf16.msra.mxu0 %v997
  %1424 = vmatprep.subr.bf16.mxu0 0
  %1425 = vmatpush2.bf16.msra.mxu0 %v996
  %1426 = vmatprep.mubr.bf16.mxu0 %v361
  %1427 = vmatmul.mubr.bf16.gmra.mxu0 %v360
  %v1428 = vpop.f32.mrf.mxu0
  %v1429 = vadd.f32 %v1388, %v1428
  %v1430 = vpop.f32.mrf.mxu0
  %v1431 = vpop.f32.mrf.mxu0
  %v1432 = vadd.f32 %v1391, %v1431
  %v1433 = vpop.f32.mrf.mxu0
  %1434 = vdwg.mxu0
  %1435 = vmatprep.subr.bf16.mxu0 0
  %1436 = vmatpush1.bf16.msra.mxu0 %v1011
  %1437 = vmatprep.subr.bf16.mxu0 0
  %1438 = vmatpush1.bf16.msra.mxu0 %v1010
  %1439 = vmatprep.subr.bf16.mxu0 0
  %1440 = vmatpush1.bf16.msra.mxu0 %v1009
  %1441 = vmatprep.subr.bf16.mxu0 0
  %1442 = vmatpush1.bf16.msra.mxu0 %v1008
  %1443 = vmatprep.subr.bf16.mxu0 0
  %1444 = vmatpush1.bf16.msra.mxu0 %v1007
  %1445 = vmatprep.subr.bf16.mxu0 0
  %1446 = vmatpush1.bf16.msra.mxu0 %v1006
  %1447 = vmatprep.subr.bf16.mxu0 0
  %1448 = vmatpush1.bf16.msra.mxu0 %v1005
  %1449 = vmatprep.subr.bf16.mxu0 0
  %1450 = vmatpush1.bf16.msra.mxu0 %v1004
  %1451 = vmatprep.subr.bf16.mxu0 0
  %1452 = vmatpush2.bf16.msra.mxu0 %v1019
  %1453 = vmatprep.subr.bf16.mxu0 0
  %1454 = vmatpush2.bf16.msra.mxu0 %v1018
  %1455 = vmatprep.subr.bf16.mxu0 0
  %1456 = vmatpush2.bf16.msra.mxu0 %v1017
  %1457 = vmatprep.subr.bf16.mxu0 0
  %1458 = vmatpush2.bf16.msra.mxu0 %v1016
  %1459 = vmatprep.subr.bf16.mxu0 0
  %1460 = vmatpush2.bf16.msra.mxu0 %v1015
  %1461 = vmatprep.subr.bf16.mxu0 0
  %1462 = vmatpush2.bf16.msra.mxu0 %v1014
  %1463 = vmatprep.subr.bf16.mxu0 0
  %1464 = vmatpush2.bf16.msra.mxu0 %v1013
  %1465 = vmatprep.subr.bf16.mxu0 0
  %1466 = vmatpush2.bf16.msra.mxu0 %v1012
  %1467 = vmatprep.mubr.bf16.mxu0 %v363
  %1468 = vmatmul.mubr.bf16.gmra.mxu0 %v362
  %v1469 = vpop.f32.mrf.mxu0
  %v1470 = vadd.f32 %v1429, %v1469
  %v1471 = vpop.f32.mrf.mxu0
  %v1472 = vpop.f32.mrf.mxu0
  %v1473 = vadd.f32 %v1432, %v1472
  %v1474 = vpop.f32.mrf.mxu0
  %1475 = vdwg.mxu0
  %v1476 = vadd.f32 %v282, %v1470
  %v1477 = vadd.f32 %v283, %v1473
  %1478 = vst [vmem:[#allocation2] sm:$0xff] %v1476
  %1479 = vst [vmem:[#allocation2 + $0x8] sm:$0xff] %v1477
  // Predicated region
  $region18: #{_lambda_.15} parent=0 // pred_check
    %p1480 = pneg %p15
  $region19: #{_lambda_.15} parent=0 // pred_check_branch
    %1482 = sbr.rel (%p1480) target = $region21
  $region20: #{_lambda_.15} parent=0 // pred_region
    %v1483 = vld [vmem:[#allocation2] sm:$0xff]
    %v1484 = vld [vmem:[#allocation2 + $0x8] sm:$0xff]
    %v1485 = vld [vmem:[%s2] sm:$0x1]
    %v1487 = vlaneseq
    %v1488 = vshrl.u32 %v1487, 7
    %v1489 = vsub.s32 0, %v1488
    %v1490 = vrot.slane %v1485, %v1489
    %v1492 = vadd.f32 %v1483, %v1490
    %v1493 = vadd.f32 %v1484, %v1490
    %1494 = vst [vmem:[%s3] sm:$0xff] %v1492
    %1495 = vst [vmem:[%s3 + $0x8] sm:$0xff] %v1493
  $region21: #{_lambda_.15} parent=0 // pred_fallthru
    _
  // Predicated region
  $region22: #{_lambda_.15} parent=0 // pred_check
    _
  $region23: #{_lambda_.15} parent=0 // pred_check_branch
    %1497 = sbr.rel (0) target = $region25
  $region24: #{_lambda_.15} parent=0 // pred_region
    _
  $region25: #{_lambda_.15} parent=0 // pred_fallthru
    _
  // Predicated region
  $region26: #{_lambda_.15} parent=0 // pred_check
    _
  $region27: #{_lambda_.15} parent=0 // pred_check_branch
    %1499 = sbr.rel (0) target = $region29
  $region28: #{_lambda_.15} parent=0 // pred_region
    _
  $region29: #{_lambda_.15} parent=0 // pred_fallthru
    _

</llo_original>
